<compile_context>
chip_gen: v7x
topology: tpu7x:2x2x1
jax: 0.10.0
libtpu: 0.0.40
codegen_flags: <defaults>
</compile_context>

<pallas_src>
import numpy as np

import jax
import jax.numpy as jnp
from jax.experimental import pallas as pl
from jax.experimental.pallas import tpu as pltpu


# ----------------------------------------------------------------------------
# Fused kernel: the whole discriminator, one invocation, VMEM-resident.
#   refs = [x2d, (Gq, Lr, N, bias) * n_layers, out]
#     x2d : (B*H, C*W)                 f32   rows=(b,h), cols=(c,w)
#     Gq  : (C*S, 4*C*So)              bf16  column-tap selector (pad+stride folded)
#     Lr  : (4, B*So, B*S)             bf16  row-tap selectors, one per kh
#     N   : (4, 4*C*So, Cout*So)       bf16  BN-folded weights kron I_So, one per kh
#     bias: (1, Cout*So)               f32   folded BN bias (zeros if no BN)
#     out : (B, 1)                     f32
# ----------------------------------------------------------------------------
def _disc_kernel(*refs):
    x_ref = refs[0]
    o_ref = refs[-1]
    layer_refs = refs[1:-1]
    n_layers = len(layer_refs) // 4

    a = x_ref[...].astype(jnp.bfloat16)                 # (B*H, C*W)
    for li in range(n_layers):
        gq_ref, lr_ref, n_ref, b_ref = layer_refs[4 * li:4 * li + 4]

        # Column (kw) taps + zero-padding: cols (c, w) -> (kw, c, ow).
        y = jnp.dot(a, gq_ref[...],
                    preferred_element_type=jnp.float32).astype(jnp.bfloat16)

        # Row (kh) taps + channel contraction with BN-folded weights.
        acc = None
        for kh in range(lr_ref.shape[0]):
            zk = jnp.dot(lr_ref[kh], y,
                         preferred_element_type=jnp.float32).astype(jnp.bfloat16)
            t = jnp.dot(zk, n_ref[kh], preferred_element_type=jnp.float32)
            acc = t if acc is None else acc + t

        acc = acc + b_ref[...]                           # (1, Cout*So) broadcast

        if li < n_layers - 1:
            a = jnp.where(acc > 0.0, acc, 0.2 * acc).astype(jnp.bfloat16)  # LeakyReLU(0.2)
        else:
            o_ref[...] = 1.0 / (1.0 + jnp.exp(-acc))     # Sigmoid, exact, f32


def discriminator_forward(x, mats):
    """x: (B, C, H, W) NCHW f32.  `mats` from prepare_params(..., batch=B, ...)."""
    B, C, H, W = x.shape
    # Only remaining XLA glue: put batch+rows on sublanes, channels+cols on lanes.
    x2d = jnp.transpose(x, (0, 2, 1, 3)).reshape(B * H, C * W)

    flat = [x2d]
    for (gq, lr, nmat, brow) in mats:
        flat += [gq, lr, nmat, brow]

    out = pl.pallas_call(
        _disc_kernel,
        out_shape=jax.ShapeDtypeStruct((B, 1), jnp.float32),
        in_specs=[pl.BlockSpec(memory_space=pltpu.MemorySpace.VMEM)] * len(flat),
        out_specs=pl.BlockSpec(memory_space=pltpu.MemorySpace.VMEM),
        compiler_params=pltpu.CompilerParams(vmem_limit_bytes=32 * 1024 * 1024),
    )(*flat)
    return out.reshape(-1)


# ----------------------------------------------------------------------------
# One-time (outside jit) prep: fold BN, build tap-selector and weight matrices.
# ----------------------------------------------------------------------------
def prepare_params(params, batch, height, width, eps=1e-5):
    assert height == width, "square inputs assumed (DCGAN discriminator)"
    cfgs = [
        ("w1", None, 2, 1),
        ("w2", ("bn2_gamma", "bn2_beta", "bn2_mean", "bn2_var"), 2, 1),
        ("w3", None, 2, 1),
        ("w4", ("bn4_gamma", "bn4_beta", "bn4_mean", "bn4_var"), 2, 1),
        ("w5", None, 1, 0),
    ]
    B, S = batch, height
    mats = []
    for (wk, bnk, stride, pad) in cfgs:
        Wt = np.asarray(params[wk], np.float32)
        Cout, Cin, k, _ = Wt.shape
        if bnk is None:
            scale = np.ones((Cout,), np.float32)
            bias = np.zeros((Cout,), np.float32)
        else:
            g, bt, mu, var = (np.asarray(params[key], np.float32) for key in bnk)
            scale = g / np.sqrt(var + eps)
            bias = bt - mu * scale
        Wf = Wt * scale[:, None, None, None]             # BN folded into weights

        So = (S + 2 * pad - k) // stride + 1
        # taps[kk, r, o] = 1  iff padded-input index stride*o + kk - pad == r
        taps = np.zeros((k, S, So), np.float32)
        for kk in range(k):
            for o in range(So):
                r = stride * o + kk - pad
                if 0 <= r < S:
                    taps[kk, r, o] = 1.0

        # Gq[(c',q), (kw,c,ow)] = delta(c,c') * taps[kw, q, ow]
        Gq = np.einsum("ce,kqo->cqkeo", np.eye(Cin, dtype=np.float32), taps)
        Gq = Gq.reshape(Cin * S, k * Cin * So)
        # Lr[kh, (b,oh), (b',h)] = delta(b,b') * taps[kh, h, oh]
        Lr = np.einsum("bd,kro->kbodr", np.eye(B, dtype=np.float32), taps)
        Lr = Lr.reshape(k, B * So, B * S)
        # N[kh, (kw,c,ow), (co,ow')] = Wf[co,c,kh,kw] * delta(ow,ow')
        N = np.einsum("fckq,ij->kqcifj", Wf, np.eye(So, dtype=np.float32))
        N = N.reshape(k, k * Cin * So, Cout * So)
        brow = np.repeat(bias, So)[None, :].astype(np.float32)

        mats.append((jnp.asarray(Gq, jnp.bfloat16),
                     jnp.asarray(Lr, jnp.bfloat16),
                     jnp.asarray(N, jnp.bfloat16),
                     jnp.asarray(brow, jnp.float32)))
        S = So
    return mats


def init_params(key, input_channels=3, base_filters=8):
    bf = base_filters
    ks = jax.random.split(key, 10)
    return {
        "w1": jax.random.normal(ks[0], (bf, input_channels, 4, 4), jnp.float32) * 0.05,
        "w2": jax.random.normal(ks[1], (bf * 2, bf, 4, 4), jnp.float32) * 0.05,
        "w3": jax.random.normal(ks[2], (bf * 4, bf * 2, 4, 4), jnp.float32) * 0.05,
        "w4": jax.random.normal(ks[3], (bf * 8, bf * 4, 4, 4), jnp.float32) * 0.05,
        "w5": jax.random.normal(ks[4], (1, bf * 8, 4, 4), jnp.float32) * 0.05,
        "bn2_gamma": 1.0 + 0.1 * jax.random.normal(ks[5], (bf * 2,), jnp.float32),
        "bn2_beta": 0.1 * jax.random.normal(ks[6], (bf * 2,), jnp.float32),
        "bn2_mean": 0.05 * jax.random.normal(ks[7], (bf * 2,), jnp.float32),
        "bn2_var": jnp.abs(1.0 + 0.1 * jax.random.normal(ks[8], (bf * 2,), jnp.float32)),
        "bn4_gamma": 1.0 + 0.1 * jax.random.normal(ks[9], (bf * 8,), jnp.float32),
        "bn4_beta": jnp.zeros((bf * 8,), jnp.float32),
        "bn4_mean": jnp.zeros((bf * 8,), jnp.float32),
        "bn4_var": jnp.ones((bf * 8,), jnp.float32),
    }


# Pure-JAX f32 reference (eval mode) for a loose correctness check.
def _reference_forward(x, params, eps=1e-5):
    def conv(h, w, stride, pad):
        return jax.lax.conv_general_dilated(
            h, w, window_strides=(stride, stride),
            padding=((pad, pad), (pad, pad)),
            dimension_numbers=("NCHW", "OIHW", "NCHW"))

    def bn(h, g, b, m, v):
        inv = (g / jnp.sqrt(v + eps))[None, :, None, None]
        return (h - m[None, :, None, None]) * inv + b[None, :, None, None]

    lrelu = lambda t: jnp.where(t > 0, t, 0.2 * t)
    h = lrelu(conv(x, params["w1"], 2, 1))
    h = lrelu(bn(conv(h, params["w2"], 2, 1), params["bn2_gamma"], params["bn2_beta"],
                 params["bn2_mean"], params["bn2_var"]))
    h = lrelu(conv(h, params["w3"], 2, 1))
    h = lrelu(bn(conv(h, params["w4"], 2, 1), params["bn4_gamma"], params["bn4_beta"],
                 params["bn4_mean"], params["bn4_var"]))
    h = jax.nn.sigmoid(conv(h, params["w5"], 1, 0))
    return h.reshape(-1)


if __name__ == "__main__":
    key = jax.random.PRNGKey(0)
    k_x, k_p = jax.random.split(key)

    # 64x64 input so conv5 (4x4, stride 1, pad 0) yields one logit per sample,
    # exactly as the DCGAN-style module implies.
    B, C, H, W = 2, 3, 64, 64
    x = jax.random.normal(k_x, (B, C, H, W), jnp.float32)
    params = init_params(k_p, input_channels=C, base_filters=8)
    mats = prepare_params(params, batch=B, height=H, width=W)  # once, outside jit

    fwd = jax.jit(discriminator_forward)
    out = fwd(x, mats)
    jax.block_until_ready(out)

    assert out.shape == (B,), out.shape
    assert bool(jnp.all(jnp.isfinite(out)))
    assert bool(jnp.all((out >= 0.0) & (out <= 1.0)))

    ref = _reference_forward(x, params)
    assert bool(jnp.allclose(out, ref, atol=5e-2)), (out, ref)

    print("KERNEL_OK")
</pallas_src>

<mosaic_0001>
module attributes {stable_mosaic.version = 11 : i64} {
  func.func @_disc_kernel(%arg0: memref<128x192xf32, #tpu.memory_space<vmem>>, %arg1: memref<192x384xbf16, #tpu.memory_space<vmem>>, %arg2: memref<4x64x128xbf16, #tpu.memory_space<vmem>>, %arg3: memref<4x384x256xbf16, #tpu.memory_space<vmem>>, %arg4: memref<1x256xf32, #tpu.memory_space<vmem>>, %arg5: memref<256x512xbf16, #tpu.memory_space<vmem>>, %arg6: memref<4x32x64xbf16, #tpu.memory_space<vmem>>, %arg7: memref<4x512x256xbf16, #tpu.memory_space<vmem>>, %arg8: memref<1x256xf32, #tpu.memory_space<vmem>>, %arg9: memref<256x512xbf16, #tpu.memory_space<vmem>>, %arg10: memref<4x16x32xbf16, #tpu.memory_space<vmem>>, %arg11: memref<4x512x256xbf16, #tpu.memory_space<vmem>>, %arg12: memref<1x256xf32, #tpu.memory_space<vmem>>, %arg13: memref<256x512xbf16, #tpu.memory_space<vmem>>, %arg14: memref<4x8x16xbf16, #tpu.memory_space<vmem>>, %arg15: memref<4x512x256xbf16, #tpu.memory_space<vmem>>, %arg16: memref<1x256xf32, #tpu.memory_space<vmem>>, %arg17: memref<256x256xbf16, #tpu.memory_space<vmem>>, %arg18: memref<4x2x8xbf16, #tpu.memory_space<vmem>>, %arg19: memref<4x256x1xbf16, #tpu.memory_space<vmem>>, %arg20: memref<1x1xf32, #tpu.memory_space<vmem>>, %arg21: memref<2x1xf32, #tpu.memory_space<vmem>>) attributes {dimension_semantics = [], scalar_prefetch = 0 : i64, scratch_operands = 0 : i64, tpu.core_type = #tpu.core_type<tc>} {
    %c0 = arith.constant 0 : index
    %c0_0 = arith.constant 0 : index
    %0 = vector.load %arg0[%c0, %c0_0] : memref<128x192xf32, #tpu.memory_space<vmem>>, vector<128x192xf32>
    %1 = arith.truncf %0 : vector<128x192xf32> to vector<128x192xbf16>
    %c0_1 = arith.constant 0 : index
    %c0_2 = arith.constant 0 : index
    %2 = vector.load %arg1[%c0_1, %c0_2] : memref<192x384xbf16, #tpu.memory_space<vmem>>, vector<192x384xbf16>
    %cst = arith.constant dense<0.000000e+00> : vector<128x384xf32>
    %3 = tpu.matmul %1, %2, %cst {dimension_numbers = #tpu.dot_dimension_numbers<[1], [0], [0], [1], [0, 0, 1, 1], [], []>} : vector<128x192xbf16>, vector<192x384xbf16>, vector<128x384xf32> -> vector<128x384xf32>
    %4 = arith.truncf %3 : vector<128x384xf32> to vector<128x384xbf16>
    %c0_3 = arith.constant 0 : index
    %c0_4 = arith.constant 0 : index
    %c0_5 = arith.constant 0 : index
    %5 = vector.load %arg2[%c0_3, %c0_4, %c0_5] : memref<4x64x128xbf16, #tpu.memory_space<vmem>>, vector<1x64x128xbf16>
    %6 = vector.shape_cast %5 : vector<1x64x128xbf16> to vector<64x128xbf16>
    %cst_6 = arith.constant dense<0.000000e+00> : vector<64x384xf32>
    %7 = tpu.matmul %6, %4, %cst_6 {dimension_numbers = #tpu.dot_dimension_numbers<[1], [0], [0], [1], [0, 0, 1, 1], [], []>} : vector<64x128xbf16>, vector<128x384xbf16>, vector<64x384xf32> -> vector<64x384xf32>
    %8 = arith.truncf %7 : vector<64x384xf32> to vector<64x384xbf16>
    %c0_7 = arith.constant 0 : index
    %c0_8 = arith.constant 0 : index
    %c0_9 = arith.constant 0 : index
    %9 = vector.load %arg3[%c0_7, %c0_8, %c0_9] : memref<4x384x256xbf16, #tpu.memory_space<vmem>>, vector<1x384x256xbf16>
    %10 = vector.shape_cast %9 : vector<1x384x256xbf16> to vector<384x256xbf16>
    %cst_10 = arith.constant dense<0.000000e+00> : vector<64x256xf32>
    %11 = tpu.matmul %8, %10, %cst_10 {dimension_numbers = #tpu.dot_dimension_numbers<[1], [0], [0], [1], [0, 0, 1, 1], [], []>} : vector<64x384xbf16>, vector<384x256xbf16>, vector<64x256xf32> -> vector<64x256xf32>
    %c1 = arith.constant 1 : index
    %c0_11 = arith.constant 0 : index
    %c0_12 = arith.constant 0 : index
    %12 = vector.load %arg2[%c1, %c0_11, %c0_12] : memref<4x64x128xbf16, #tpu.memory_space<vmem>>, vector<1x64x128xbf16>
    %13 = vector.shape_cast %12 : vector<1x64x128xbf16> to vector<64x128xbf16>
    %cst_13 = arith.constant dense<0.000000e+00> : vector<64x384xf32>
    %14 = tpu.matmul %13, %4, %cst_13 {dimension_numbers = #tpu.dot_dimension_numbers<[1], [0], [0], [1], [0, 0, 1, 1], [], []>} : vector<64x128xbf16>, vector<128x384xbf16>, vector<64x384xf32> -> vector<64x384xf32>
    %15 = arith.truncf %14 : vector<64x384xf32> to vector<64x384xbf16>
    %c1_14 = arith.constant 1 : index
    %c0_15 = arith.constant 0 : index
    %c0_16 = arith.constant 0 : index
    %16 = vector.load %arg3[%c1_14, %c0_15, %c0_16] : memref<4x384x256xbf16, #tpu.memory_space<vmem>>, vector<1x384x256xbf16>
    %17 = vector.shape_cast %16 : vector<1x384x256xbf16> to vector<384x256xbf16>
    %cst_17 = arith.constant dense<0.000000e+00> : vector<64x256xf32>
    %18 = tpu.matmul %15, %17, %cst_17 {dimension_numbers = #tpu.dot_dimension_numbers<[1], [0], [0], [1], [0, 0, 1, 1], [], []>} : vector<64x384xbf16>, vector<384x256xbf16>, vector<64x256xf32> -> vector<64x256xf32>
    %19 = arith.addf %11, %18 : vector<64x256xf32>
    %c2 = arith.constant 2 : index
    %c0_18 = arith.constant 0 : index
    %c0_19 = arith.constant 0 : index
    %20 = vector.load %arg2[%c2, %c0_18, %c0_19] : memref<4x64x128xbf16, #tpu.memory_space<vmem>>, vector<1x64x128xbf16>
    %21 = vector.shape_cast %20 : vector<1x64x128xbf16> to vector<64x128xbf16>
    %cst_20 = arith.constant dense<0.000000e+00> : vector<64x384xf32>
    %22 = tpu.matmul %21, %4, %cst_20 {dimension_numbers = #tpu.dot_dimension_numbers<[1], [0], [0], [1], [0, 0, 1, 1], [], []>} : vector<64x128xbf16>, vector<128x384xbf16>, vector<64x384xf32> -> vector<64x384xf32>
    %23 = arith.truncf %22 : vector<64x384xf32> to vector<64x384xbf16>
    %c2_21 = arith.constant 2 : index
    %c0_22 = arith.constant 0 : index
    %c0_23 = arith.constant 0 : index
    %24 = vector.load %arg3[%c2_21, %c0_22, %c0_23] : memref<4x384x256xbf16, #tpu.memory_space<vmem>>, vector<1x384x256xbf16>
    %25 = vector.shape_cast %24 : vector<1x384x256xbf16> to vector<384x256xbf16>
    %cst_24 = arith.constant dense<0.000000e+00> : vector<64x256xf32>
    %26 = tpu.matmul %23, %25, %cst_24 {dimension_numbers = #tpu.dot_dimension_numbers<[1], [0], [0], [1], [0, 0, 1, 1], [], []>} : vector<64x384xbf16>, vector<384x256xbf16>, vector<64x256xf32> -> vector<64x256xf32>
    %27 = arith.addf %19, %26 : vector<64x256xf32>
    %c3 = arith.constant 3 : index
    %c0_25 = arith.constant 0 : index
    %c0_26 = arith.constant 0 : index
    %28 = vector.load %arg2[%c3, %c0_25, %c0_26] : memref<4x64x128xbf16, #tpu.memory_space<vmem>>, vector<1x64x128xbf16>
    %29 = vector.shape_cast %28 : vector<1x64x128xbf16> to vector<64x128xbf16>
    %cst_27 = arith.constant dense<0.000000e+00> : vector<64x384xf32>
    %30 = tpu.matmul %29, %4, %cst_27 {dimension_numbers = #tpu.dot_dimension_numbers<[1], [0], [0], [1], [0, 0, 1, 1], [], []>} : vector<64x128xbf16>, vector<128x384xbf16>, vector<64x384xf32> -> vector<64x384xf32>
    %31 = arith.truncf %30 : vector<64x384xf32> to vector<64x384xbf16>
    %c3_28 = arith.constant 3 : index
    %c0_29 = arith.constant 0 : index
    %c0_30 = arith.constant 0 : index
    %32 = vector.load %arg3[%c3_28, %c0_29, %c0_30] : memref<4x384x256xbf16, #tpu.memory_space<vmem>>, vector<1x384x256xbf16>
    %33 = vector.shape_cast %32 : vector<1x384x256xbf16> to vector<384x256xbf16>
    %cst_31 = arith.constant dense<0.000000e+00> : vector<64x256xf32>
    %34 = tpu.matmul %31, %33, %cst_31 {dimension_numbers = #tpu.dot_dimension_numbers<[1], [0], [0], [1], [0, 0, 1, 1], [], []>} : vector<64x384xbf16>, vector<384x256xbf16>, vector<64x256xf32> -> vector<64x256xf32>
    %35 = arith.addf %27, %34 : vector<64x256xf32>
    %c0_32 = arith.constant 0 : index
    %c0_33 = arith.constant 0 : index
    %36 = vector.load %arg4[%c0_32, %c0_33] : memref<1x256xf32, #tpu.memory_space<vmem>>, vector<1x256xf32>
    %37 = vector.broadcast %36 : vector<1x256xf32> to vector<64x256xf32>
    %38 = arith.addf %35, %37 : vector<64x256xf32>
    %cst_34 = arith.constant 0.000000e+00 : f32
    %39 = vector.broadcast %cst_34 : f32 to vector<64x256xf32>
    %40 = arith.cmpf ogt, %38, %39 : vector<64x256xf32>
    %cst_35 = arith.constant 2.000000e-01 : f32
    %41 = vector.broadcast %cst_35 : f32 to vector<64x256xf32>
    %42 = arith.mulf %41, %38 : vector<64x256xf32>
    %43 = arith.select %40, %38, %42 : vector<64x256xi1>, vector<64x256xf32>
    %44 = arith.truncf %43 : vector<64x256xf32> to vector<64x256xbf16>
    %c0_36 = arith.constant 0 : index
    %c0_37 = arith.constant 0 : index
    %45 = vector.load %arg5[%c0_36, %c0_37] : memref<256x512xbf16, #tpu.memory_space<vmem>>, vector<256x512xbf16>
    %cst_38 = arith.constant dense<0.000000e+00> : vector<64x512xf32>
    %46 = tpu.matmul %44, %45, %cst_38 {dimension_numbers = #tpu.dot_dimension_numbers<[1], [0], [0], [1], [0, 0, 1, 1], [], []>} : vector<64x256xbf16>, vector<256x512xbf16>, vector<64x512xf32> -> vector<64x512xf32>
    %47 = arith.truncf %46 : vector<64x512xf32> to vector<64x512xbf16>
    %c0_39 = arith.constant 0 : index
    %c0_40 = arith.constant 0 : index
    %c0_41 = arith.constant 0 : index
    %48 = vector.load %arg6[%c0_39, %c0_40, %c0_41] : memref<4x32x64xbf16, #tpu.memory_space<vmem>>, vector<1x32x64xbf16>
    %49 = vector.shape_cast %48 : vector<1x32x64xbf16> to vector<32x64xbf16>
    %cst_42 = arith.constant dense<0.000000e+00> : vector<32x512xf32>
    %50 = tpu.matmul %49, %47, %cst_42 {dimension_numbers = #tpu.dot_dimension_numbers<[1], [0], [0], [1], [0, 0, 1, 1], [], []>} : vector<32x64xbf16>, vector<64x512xbf16>, vector<32x512xf32> -> vector<32x512xf32>
    %51 = arith.truncf %50 : vector<32x512xf32> to vector<32x512xbf16>
    %c0_43 = arith.constant 0 : index
    %c0_44 = arith.constant 0 : index
    %c0_45 = arith.constant 0 : index
    %52 = vector.load %arg7[%c0_43, %c0_44, %c0_45] : memref<4x512x256xbf16, #tpu.memory_space<vmem>>, vector<1x512x256xbf16>
    %53 = vector.shape_cast %52 : vector<1x512x256xbf16> to vector<512x256xbf16>
    %cst_46 = arith.constant dense<0.000000e+00> : vector<32x256xf32>
    %54 = tpu.matmul %51, %53, %cst_46 {dimension_numbers = #tpu.dot_dimension_numbers<[1], [0], [0], [1], [0, 0, 1, 1], [], []>} : vector<32x512xbf16>, vector<512x256xbf16>, vector<32x256xf32> -> vector<32x256xf32>
    %c1_47 = arith.constant 1 : index
    %c0_48 = arith.constant 0 : index
    %c0_49 = arith.constant 0 : index
    %55 = vector.load %arg6[%c1_47, %c0_48, %c0_49] : memref<4x32x64xbf16, #tpu.memory_space<vmem>>, vector<1x32x64xbf16>
    %56 = vector.shape_cast %55 : vector<1x32x64xbf16> to vector<32x64xbf16>
    %cst_50 = arith.constant dense<0.000000e+00> : vector<32x512xf32>
    %57 = tpu.matmul %56, %47, %cst_50 {dimension_numbers = #tpu.dot_dimension_numbers<[1], [0], [0], [1], [0, 0, 1, 1], [], []>} : vector<32x64xbf16>, vector<64x512xbf16>, vector<32x512xf32> -> vector<32x512xf32>
    %58 = arith.truncf %57 : vector<32x512xf32> to vector<32x512xbf16>
    %c1_51 = arith.constant 1 : index
    %c0_52 = arith.constant 0 : index
    %c0_53 = arith.constant 0 : index
    %59 = vector.load %arg7[%c1_51, %c0_52, %c0_53] : memref<4x512x256xbf16, #tpu.memory_space<vmem>>, vector<1x512x256xbf16>
    %60 = vector.shape_cast %59 : vector<1x512x256xbf16> to vector<512x256xbf16>
    %cst_54 = arith.constant dense<0.000000e+00> : vector<32x256xf32>
    %61 = tpu.matmul %58, %60, %cst_54 {dimension_numbers = #tpu.dot_dimension_numbers<[1], [0], [0], [1], [0, 0, 1, 1], [], []>} : vector<32x512xbf16>, vector<512x256xbf16>, vector<32x256xf32> -> vector<32x256xf32>
    %62 = arith.addf %54, %61 : vector<32x256xf32>
    %c2_55 = arith.constant 2 : index
    %c0_56 = arith.constant 0 : index
    %c0_57 = arith.constant 0 : index
    %63 = vector.load %arg6[%c2_55, %c0_56, %c0_57] : memref<4x32x64xbf16, #tpu.memory_space<vmem>>, vector<1x32x64xbf16>
    %64 = vector.shape_cast %63 : vector<1x32x64xbf16> to vector<32x64xbf16>
    %cst_58 = arith.constant dense<0.000000e+00> : vector<32x512xf32>
    %65 = tpu.matmul %64, %47, %cst_58 {dimension_numbers = #tpu.dot_dimension_numbers<[1], [0], [0], [1], [0, 0, 1, 1], [], []>} : vector<32x64xbf16>, vector<64x512xbf16>, vector<32x512xf32> -> vector<32x512xf32>
    %66 = arith.truncf %65 : vector<32x512xf32> to vector<32x512xbf16>
    %c2_59 = arith.constant 2 : index
    %c0_60 = arith.constant 0 : index
    %c0_61 = arith.constant 0 : index
    %67 = vector.load %arg7[%c2_59, %c0_60, %c0_61] : memref<4x512x256xbf16, #tpu.memory_space<vmem>>, vector<1x512x256xbf16>
    %68 = vector.shape_cast %67 : vector<1x512x256xbf16> to vector<512x256xbf16>
    %cst_62 = arith.constant dense<0.000000e+00> : vector<32x256xf32>
    %69 = tpu.matmul %66, %68, %cst_62 {dimension_numbers = #tpu.dot_dimension_numbers<[1], [0], [0], [1], [0, 0, 1, 1], [], []>} : vector<32x512xbf16>, vector<512x256xbf16>, vector<32x256xf32> -> vector<32x256xf32>
    %70 = arith.addf %62, %69 : vector<32x256xf32>
    %c3_63 = arith.constant 3 : index
    %c0_64 = arith.constant 0 : index
    %c0_65 = arith.constant 0 : index
    %71 = vector.load %arg6[%c3_63, %c0_64, %c0_65] : memref<4x32x64xbf16, #tpu.memory_space<vmem>>, vector<1x32x64xbf16>
    %72 = vector.shape_cast %71 : vector<1x32x64xbf16> to vector<32x64xbf16>
    %cst_66 = arith.constant dense<0.000000e+00> : vector<32x512xf32>
    %73 = tpu.matmul %72, %47, %cst_66 {dimension_numbers = #tpu.dot_dimension_numbers<[1], [0], [0], [1], [0, 0, 1, 1], [], []>} : vector<32x64xbf16>, vector<64x512xbf16>, vector<32x512xf32> -> vector<32x512xf32>
    %74 = arith.truncf %73 : vector<32x512xf32> to vector<32x512xbf16>
    %c3_67 = arith.constant 3 : index
    %c0_68 = arith.constant 0 : index
    %c0_69 = arith.constant 0 : index
    %75 = vector.load %arg7[%c3_67, %c0_68, %c0_69] : memref<4x512x256xbf16, #tpu.memory_space<vmem>>, vector<1x512x256xbf16>
    %76 = vector.shape_cast %75 : vector<1x512x256xbf16> to vector<512x256xbf16>
    %cst_70 = arith.constant dense<0.000000e+00> : vector<32x256xf32>
    %77 = tpu.matmul %74, %76, %cst_70 {dimension_numbers = #tpu.dot_dimension_numbers<[1], [0], [0], [1], [0, 0, 1, 1], [], []>} : vector<32x512xbf16>, vector<512x256xbf16>, vector<32x256xf32> -> vector<32x256xf32>
    %78 = arith.addf %70, %77 : vector<32x256xf32>
    %c0_71 = arith.constant 0 : index
    %c0_72 = arith.constant 0 : index
    %79 = vector.load %arg8[%c0_71, %c0_72] : memref<1x256xf32, #tpu.memory_space<vmem>>, vector<1x256xf32>
    %80 = vector.broadcast %79 : vector<1x256xf32> to vector<32x256xf32>
    %81 = arith.addf %78, %80 : vector<32x256xf32>
    %cst_73 = arith.constant 0.000000e+00 : f32
    %82 = vector.broadcast %cst_73 : f32 to vector<32x256xf32>
    %83 = arith.cmpf ogt, %81, %82 : vector<32x256xf32>
    %cst_74 = arith.constant 2.000000e-01 : f32
    %84 = vector.broadcast %cst_74 : f32 to vector<32x256xf32>
    %85 = arith.mulf %84, %81 : vector<32x256xf32>
    %86 = arith.select %83, %81, %85 : vector<32x256xi1>, vector<32x256xf32>
    %87 = arith.truncf %86 : vector<32x256xf32> to vector<32x256xbf16>
    %c0_75 = arith.constant 0 : index
    %c0_76 = arith.constant 0 : index
    %88 = vector.load %arg9[%c0_75, %c0_76] : memref<256x512xbf16, #tpu.memory_space<vmem>>, vector<256x512xbf16>
    %cst_77 = arith.constant dense<0.000000e+00> : vector<32x512xf32>
    %89 = tpu.matmul %87, %88, %cst_77 {dimension_numbers = #tpu.dot_dimension_numbers<[1], [0], [0], [1], [0, 0, 1, 1], [], []>} : vector<32x256xbf16>, vector<256x512xbf16>, vector<32x512xf32> -> vector<32x512xf32>
    %90 = arith.truncf %89 : vector<32x512xf32> to vector<32x512xbf16>
    %c0_78 = arith.constant 0 : index
    %c0_79 = arith.constant 0 : index
    %c0_80 = arith.constant 0 : index
    %91 = vector.load %arg10[%c0_78, %c0_79, %c0_80] : memref<4x16x32xbf16, #tpu.memory_space<vmem>>, vector<1x16x32xbf16>
    %92 = vector.shape_cast %91 : vector<1x16x32xbf16> to vector<16x32xbf16>
    %cst_81 = arith.constant dense<0.000000e+00> : vector<16x512xf32>
    %93 = tpu.matmul %92, %90, %cst_81 {dimension_numbers = #tpu.dot_dimension_numbers<[1], [0], [0], [1], [0, 0, 1, 1], [], []>} : vector<16x32xbf16>, vector<32x512xbf16>, vector<16x512xf32> -> vector<16x512xf32>
    %94 = arith.truncf %93 : vector<16x512xf32> to vector<16x512xbf16>
    %c0_82 = arith.constant 0 : index
    %c0_83 = arith.constant 0 : index
    %c0_84 = arith.constant 0 : index
    %95 = vector.load %arg11[%c0_82, %c0_83, %c0_84] : memref<4x512x256xbf16, #tpu.memory_space<vmem>>, vector<1x512x256xbf16>
    %96 = vector.shape_cast %95 : vector<1x512x256xbf16> to vector<512x256xbf16>
    %cst_85 = arith.constant dense<0.000000e+00> : vector<16x256xf32>
    %97 = tpu.matmul %94, %96, %cst_85 {dimension_numbers = #tpu.dot_dimension_numbers<[1], [0], [0], [1], [0, 0, 1, 1], [], []>} : vector<16x512xbf16>, vector<512x256xbf16>, vector<16x256xf32> -> vector<16x256xf32>
    %c1_86 = arith.constant 1 : index
    %c0_87 = arith.constant 0 : index
    %c0_88 = arith.constant 0 : index
    %98 = vector.load %arg10[%c1_86, %c0_87, %c0_88] : memref<4x16x32xbf16, #tpu.memory_space<vmem>>, vector<1x16x32xbf16>
    %99 = vector.shape_cast %98 : vector<1x16x32xbf16> to vector<16x32xbf16>
    %cst_89 = arith.constant dense<0.000000e+00> : vector<16x512xf32>
    %100 = tpu.matmul %99, %90, %cst_89 {dimension_numbers = #tpu.dot_dimension_numbers<[1], [0], [0], [1], [0, 0, 1, 1], [], []>} : vector<16x32xbf16>, vector<32x512xbf16>, vector<16x512xf32> -> vector<16x512xf32>
    %101 = arith.truncf %100 : vector<16x512xf32> to vector<16x512xbf16>
    %c1_90 = arith.constant 1 : index
    %c0_91 = arith.constant 0 : index
    %c0_92 = arith.constant 0 : index
    %102 = vector.load %arg11[%c1_90, %c0_91, %c0_92] : memref<4x512x256xbf16, #tpu.memory_space<vmem>>, vector<1x512x256xbf16>
    %103 = vector.shape_cast %102 : vector<1x512x256xbf16> to vector<512x256xbf16>
    %cst_93 = arith.constant dense<0.000000e+00> : vector<16x256xf32>
    %104 = tpu.matmul %101, %103, %cst_93 {dimension_numbers = #tpu.dot_dimension_numbers<[1], [0], [0], [1], [0, 0, 1, 1], [], []>} : vector<16x512xbf16>, vector<512x256xbf16>, vector<16x256xf32> -> vector<16x256xf32>
    %105 = arith.addf %97, %104 : vector<16x256xf32>
    %c2_94 = arith.constant 2 : index
    %c0_95 = arith.constant 0 : index
    %c0_96 = arith.constant 0 : index
    %106 = vector.load %arg10[%c2_94, %c0_95, %c0_96] : memref<4x16x32xbf16, #tpu.memory_space<vmem>>, vector<1x16x32xbf16>
    %107 = vector.shape_cast %106 : vector<1x16x32xbf16> to vector<16x32xbf16>
    %cst_97 = arith.constant dense<0.000000e+00> : vector<16x512xf32>
    %108 = tpu.matmul %107, %90, %cst_97 {dimension_numbers = #tpu.dot_dimension_numbers<[1], [0], [0], [1], [0, 0, 1, 1], [], []>} : vector<16x32xbf16>, vector<32x512xbf16>, vector<16x512xf32> -> vector<16x512xf32>
    %109 = arith.truncf %108 : vector<16x512xf32> to vector<16x512xbf16>
    %c2_98 = arith.constant 2 : index
    %c0_99 = arith.constant 0 : index
    %c0_100 = arith.constant 0 : index
    %110 = vector.load %arg11[%c2_98, %c0_99, %c0_100] : memref<4x512x256xbf16, #tpu.memory_space<vmem>>, vector<1x512x256xbf16>
    %111 = vector.shape_cast %110 : vector<1x512x256xbf16> to vector<512x256xbf16>
    %cst_101 = arith.constant dense<0.000000e+00> : vector<16x256xf32>
    %112 = tpu.matmul %109, %111, %cst_101 {dimension_numbers = #tpu.dot_dimension_numbers<[1], [0], [0], [1], [0, 0, 1, 1], [], []>} : vector<16x512xbf16>, vector<512x256xbf16>, vector<16x256xf32> -> vector<16x256xf32>
    %113 = arith.addf %105, %112 : vector<16x256xf32>
    %c3_102 = arith.constant 3 : index
    %c0_103 = arith.constant 0 : index
    %c0_104 = arith.constant 0 : index
    %114 = vector.load %arg10[%c3_102, %c0_103, %c0_104] : memref<4x16x32xbf16, #tpu.memory_space<vmem>>, vector<1x16x32xbf16>
    %115 = vector.shape_cast %114 : vector<1x16x32xbf16> to vector<16x32xbf16>
    %cst_105 = arith.constant dense<0.000000e+00> : vector<16x512xf32>
    %116 = tpu.matmul %115, %90, %cst_105 {dimension_numbers = #tpu.dot_dimension_numbers<[1], [0], [0], [1], [0, 0, 1, 1], [], []>} : vector<16x32xbf16>, vector<32x512xbf16>, vector<16x512xf32> -> vector<16x512xf32>
    %117 = arith.truncf %116 : vector<16x512xf32> to vector<16x512xbf16>
    %c3_106 = arith.constant 3 : index
    %c0_107 = arith.constant 0 : index
    %c0_108 = arith.constant 0 : index
    %118 = vector.load %arg11[%c3_106, %c0_107, %c0_108] : memref<4x512x256xbf16, #tpu.memory_space<vmem>>, vector<1x512x256xbf16>
    %119 = vector.shape_cast %118 : vector<1x512x256xbf16> to vector<512x256xbf16>
    %cst_109 = arith.constant dense<0.000000e+00> : vector<16x256xf32>
    %120 = tpu.matmul %117, %119, %cst_109 {dimension_numbers = #tpu.dot_dimension_numbers<[1], [0], [0], [1], [0, 0, 1, 1], [], []>} : vector<16x512xbf16>, vector<512x256xbf16>, vector<16x256xf32> -> vector<16x256xf32>
    %121 = arith.addf %113, %120 : vector<16x256xf32>
    %c0_110 = arith.constant 0 : index
    %c0_111 = arith.constant 0 : index
    %122 = vector.load %arg12[%c0_110, %c0_111] : memref<1x256xf32, #tpu.memory_space<vmem>>, vector<1x256xf32>
    %123 = vector.broadcast %122 : vector<1x256xf32> to vector<16x256xf32>
    %124 = arith.addf %121, %123 : vector<16x256xf32>
    %cst_112 = arith.constant 0.000000e+00 : f32
    %125 = vector.broadcast %cst_112 : f32 to vector<16x256xf32>
    %126 = arith.cmpf ogt, %124, %125 : vector<16x256xf32>
    %cst_113 = arith.constant 2.000000e-01 : f32
    %127 = vector.broadcast %cst_113 : f32 to vector<16x256xf32>
    %128 = arith.mulf %127, %124 : vector<16x256xf32>
    %129 = arith.select %126, %124, %128 : vector<16x256xi1>, vector<16x256xf32>
    %130 = arith.truncf %129 : vector<16x256xf32> to vector<16x256xbf16>
    %c0_114 = arith.constant 0 : index
    %c0_115 = arith.constant 0 : index
    %131 = vector.load %arg13[%c0_114, %c0_115] : memref<256x512xbf16, #tpu.memory_space<vmem>>, vector<256x512xbf16>
    %cst_116 = arith.constant dense<0.000000e+00> : vector<16x512xf32>
    %132 = tpu.matmul %130, %131, %cst_116 {dimension_numbers = #tpu.dot_dimension_numbers<[1], [0], [0], [1], [0, 0, 1, 1], [], []>} : vector<16x256xbf16>, vector<256x512xbf16>, vector<16x512xf32> -> vector<16x512xf32>
    %133 = arith.truncf %132 : vector<16x512xf32> to vector<16x512xbf16>
    %c0_117 = arith.constant 0 : index
    %c0_118 = arith.constant 0 : index
    %c0_119 = arith.constant 0 : index
    %134 = vector.load %arg14[%c0_117, %c0_118, %c0_119] : memref<4x8x16xbf16, #tpu.memory_space<vmem>>, vector<1x8x16xbf16>
    %135 = vector.shape_cast %134 : vector<1x8x16xbf16> to vector<8x16xbf16>
    %cst_120 = arith.constant dense<0.000000e+00> : vector<8x512xf32>
    %136 = tpu.matmul %135, %133, %cst_120 {dimension_numbers = #tpu.dot_dimension_numbers<[1], [0], [0], [1], [0, 0, 1, 1], [], []>} : vector<8x16xbf16>, vector<16x512xbf16>, vector<8x512xf32> -> vector<8x512xf32>
    %137 = arith.truncf %136 : vector<8x512xf32> to vector<8x512xbf16>
    %c0_121 = arith.constant 0 : index
    %c0_122 = arith.constant 0 : index
    %c0_123 = arith.constant 0 : index
    %138 = vector.load %arg15[%c0_121, %c0_122, %c0_123] : memref<4x512x256xbf16, #tpu.memory_space<vmem>>, vector<1x512x256xbf16>
    %139 = vector.shape_cast %138 : vector<1x512x256xbf16> to vector<512x256xbf16>
    %cst_124 = arith.constant dense<0.000000e+00> : vector<8x256xf32>
    %140 = tpu.matmul %137, %139, %cst_124 {dimension_numbers = #tpu.dot_dimension_numbers<[1], [0], [0], [1], [0, 0, 1, 1], [], []>} : vector<8x512xbf16>, vector<512x256xbf16>, vector<8x256xf32> -> vector<8x256xf32>
    %c1_125 = arith.constant 1 : index
    %c0_126 = arith.constant 0 : index
    %c0_127 = arith.constant 0 : index
    %141 = vector.load %arg14[%c1_125, %c0_126, %c0_127] : memref<4x8x16xbf16, #tpu.memory_space<vmem>>, vector<1x8x16xbf16>
    %142 = vector.shape_cast %141 : vector<1x8x16xbf16> to vector<8x16xbf16>
    %cst_128 = arith.constant dense<0.000000e+00> : vector<8x512xf32>
    %143 = tpu.matmul %142, %133, %cst_128 {dimension_numbers = #tpu.dot_dimension_numbers<[1], [0], [0], [1], [0, 0, 1, 1], [], []>} : vector<8x16xbf16>, vector<16x512xbf16>, vector<8x512xf32> -> vector<8x512xf32>
    %144 = arith.truncf %143 : vector<8x512xf32> to vector<8x512xbf16>
    %c1_129 = arith.constant 1 : index
    %c0_130 = arith.constant 0 : index
    %c0_131 = arith.constant 0 : index
    %145 = vector.load %arg15[%c1_129, %c0_130, %c0_131] : memref<4x512x256xbf16, #tpu.memory_space<vmem>>, vector<1x512x256xbf16>
    %146 = vector.shape_cast %145 : vector<1x512x256xbf16> to vector<512x256xbf16>
    %cst_132 = arith.constant dense<0.000000e+00> : vector<8x256xf32>
    %147 = tpu.matmul %144, %146, %cst_132 {dimension_numbers = #tpu.dot_dimension_numbers<[1], [0], [0], [1], [0, 0, 1, 1], [], []>} : vector<8x512xbf16>, vector<512x256xbf16>, vector<8x256xf32> -> vector<8x256xf32>
    %148 = arith.addf %140, %147 : vector<8x256xf32>
    %c2_133 = arith.constant 2 : index
    %c0_134 = arith.constant 0 : index
    %c0_135 = arith.constant 0 : index
    %149 = vector.load %arg14[%c2_133, %c0_134, %c0_135] : memref<4x8x16xbf16, #tpu.memory_space<vmem>>, vector<1x8x16xbf16>
    %150 = vector.shape_cast %149 : vector<1x8x16xbf16> to vector<8x16xbf16>
    %cst_136 = arith.constant dense<0.000000e+00> : vector<8x512xf32>
    %151 = tpu.matmul %150, %133, %cst_136 {dimension_numbers = #tpu.dot_dimension_numbers<[1], [0], [0], [1], [0, 0, 1, 1], [], []>} : vector<8x16xbf16>, vector<16x512xbf16>, vector<8x512xf32> -> vector<8x512xf32>
    %152 = arith.truncf %151 : vector<8x512xf32> to vector<8x512xbf16>
    %c2_137 = arith.constant 2 : index
    %c0_138 = arith.constant 0 : index
    %c0_139 = arith.constant 0 : index
    %153 = vector.load %arg15[%c2_137, %c0_138, %c0_139] : memref<4x512x256xbf16, #tpu.memory_space<vmem>>, vector<1x512x256xbf16>
    %154 = vector.shape_cast %153 : vector<1x512x256xbf16> to vector<512x256xbf16>
    %cst_140 = arith.constant dense<0.000000e+00> : vector<8x256xf32>
    %155 = tpu.matmul %152, %154, %cst_140 {dimension_numbers = #tpu.dot_dimension_numbers<[1], [0], [0], [1], [0, 0, 1, 1], [], []>} : vector<8x512xbf16>, vector<512x256xbf16>, vector<8x256xf32> -> vector<8x256xf32>
    %156 = arith.addf %148, %155 : vector<8x256xf32>
    %c3_141 = arith.constant 3 : index
    %c0_142 = arith.constant 0 : index
    %c0_143 = arith.constant 0 : index
    %157 = vector.load %arg14[%c3_141, %c0_142, %c0_143] : memref<4x8x16xbf16, #tpu.memory_space<vmem>>, vector<1x8x16xbf16>
    %158 = vector.shape_cast %157 : vector<1x8x16xbf16> to vector<8x16xbf16>
    %cst_144 = arith.constant dense<0.000000e+00> : vector<8x512xf32>
    %159 = tpu.matmul %158, %133, %cst_144 {dimension_numbers = #tpu.dot_dimension_numbers<[1], [0], [0], [1], [0, 0, 1, 1], [], []>} : vector<8x16xbf16>, vector<16x512xbf16>, vector<8x512xf32> -> vector<8x512xf32>
    %160 = arith.truncf %159 : vector<8x512xf32> to vector<8x512xbf16>
    %c3_145 = arith.constant 3 : index
    %c0_146 = arith.constant 0 : index
    %c0_147 = arith.constant 0 : index
    %161 = vector.load %arg15[%c3_145, %c0_146, %c0_147] : memref<4x512x256xbf16, #tpu.memory_space<vmem>>, vector<1x512x256xbf16>
    %162 = vector.shape_cast %161 : vector<1x512x256xbf16> to vector<512x256xbf16>
    %cst_148 = arith.constant dense<0.000000e+00> : vector<8x256xf32>
    %163 = tpu.matmul %160, %162, %cst_148 {dimension_numbers = #tpu.dot_dimension_numbers<[1], [0], [0], [1], [0, 0, 1, 1], [], []>} : vector<8x512xbf16>, vector<512x256xbf16>, vector<8x256xf32> -> vector<8x256xf32>
    %164 = arith.addf %156, %163 : vector<8x256xf32>
    %c0_149 = arith.constant 0 : index
    %c0_150 = arith.constant 0 : index
    %165 = vector.load %arg16[%c0_149, %c0_150] : memref<1x256xf32, #tpu.memory_space<vmem>>, vector<1x256xf32>
    %166 = vector.broadcast %165 : vector<1x256xf32> to vector<8x256xf32>
    %167 = arith.addf %164, %166 : vector<8x256xf32>
    %cst_151 = arith.constant 0.000000e+00 : f32
    %168 = vector.broadcast %cst_151 : f32 to vector<8x256xf32>
    %169 = arith.cmpf ogt, %167, %168 : vector<8x256xf32>
    %cst_152 = arith.constant 2.000000e-01 : f32
    %170 = vector.broadcast %cst_152 : f32 to vector<8x256xf32>
    %171 = arith.mulf %170, %167 : vector<8x256xf32>
    %172 = arith.select %169, %167, %171 : vector<8x256xi1>, vector<8x256xf32>
    %173 = arith.truncf %172 : vector<8x256xf32> to vector<8x256xbf16>
    %c0_153 = arith.constant 0 : index
    %c0_154 = arith.constant 0 : index
    %174 = vector.load %arg17[%c0_153, %c0_154] : memref<256x256xbf16, #tpu.memory_space<vmem>>, vector<256x256xbf16>
    %cst_155 = arith.constant dense<0.000000e+00> : vector<8x256xf32>
    %175 = tpu.matmul %173, %174, %cst_155 {dimension_numbers = #tpu.dot_dimension_numbers<[1], [0], [0], [1], [0, 0, 1, 1], [], []>} : vector<8x256xbf16>, vector<256x256xbf16>, vector<8x256xf32> -> vector<8x256xf32>
    %176 = arith.truncf %175 : vector<8x256xf32> to vector<8x256xbf16>
    %c0_156 = arith.constant 0 : index
    %c0_157 = arith.constant 0 : index
    %c0_158 = arith.constant 0 : index
    %177 = vector.load %arg18[%c0_156, %c0_157, %c0_158] : memref<4x2x8xbf16, #tpu.memory_space<vmem>>, vector<1x2x8xbf16>
    %178 = vector.shape_cast %177 : vector<1x2x8xbf16> to vector<2x8xbf16>
    %cst_159 = arith.constant dense<0.000000e+00> : vector<2x256xf32>
    %179 = tpu.matmul %178, %176, %cst_159 {dimension_numbers = #tpu.dot_dimension_numbers<[1], [0], [0], [1], [0, 0, 1, 1], [], []>} : vector<2x8xbf16>, vector<8x256xbf16>, vector<2x256xf32> -> vector<2x256xf32>
    %180 = arith.truncf %179 : vector<2x256xf32> to vector<2x256xbf16>
    %c0_160 = arith.constant 0 : index
    %c0_161 = arith.constant 0 : index
    %c0_162 = arith.constant 0 : index
    %181 = vector.load %arg19[%c0_160, %c0_161, %c0_162] : memref<4x256x1xbf16, #tpu.memory_space<vmem>>, vector<1x256x1xbf16>
    %182 = vector.shape_cast %181 : vector<1x256x1xbf16> to vector<256x1xbf16>
    %cst_163 = arith.constant dense<0.000000e+00> : vector<2x1xf32>
    %183 = tpu.matmul %180, %182, %cst_163 {dimension_numbers = #tpu.dot_dimension_numbers<[1], [0], [0], [1], [0, 0, 1, 1], [], []>} : vector<2x256xbf16>, vector<256x1xbf16>, vector<2x1xf32> -> vector<2x1xf32>
    %c1_164 = arith.constant 1 : index
    %c0_165 = arith.constant 0 : index
    %c0_166 = arith.constant 0 : index
    %184 = vector.load %arg18[%c1_164, %c0_165, %c0_166] : memref<4x2x8xbf16, #tpu.memory_space<vmem>>, vector<1x2x8xbf16>
    %185 = vector.shape_cast %184 : vector<1x2x8xbf16> to vector<2x8xbf16>
    %cst_167 = arith.constant dense<0.000000e+00> : vector<2x256xf32>
    %186 = tpu.matmul %185, %176, %cst_167 {dimension_numbers = #tpu.dot_dimension_numbers<[1], [0], [0], [1], [0, 0, 1, 1], [], []>} : vector<2x8xbf16>, vector<8x256xbf16>, vector<2x256xf32> -> vector<2x256xf32>
    %187 = arith.truncf %186 : vector<2x256xf32> to vector<2x256xbf16>
    %c1_168 = arith.constant 1 : index
    %c0_169 = arith.constant 0 : index
    %c0_170 = arith.constant 0 : index
    %188 = vector.load %arg19[%c1_168, %c0_169, %c0_170] : memref<4x256x1xbf16, #tpu.memory_space<vmem>>, vector<1x256x1xbf16>
    %189 = vector.shape_cast %188 : vector<1x256x1xbf16> to vector<256x1xbf16>
    %cst_171 = arith.constant dense<0.000000e+00> : vector<2x1xf32>
    %190 = tpu.matmul %187, %189, %cst_171 {dimension_numbers = #tpu.dot_dimension_numbers<[1], [0], [0], [1], [0, 0, 1, 1], [], []>} : vector<2x256xbf16>, vector<256x1xbf16>, vector<2x1xf32> -> vector<2x1xf32>
    %191 = arith.addf %183, %190 : vector<2x1xf32>
    %c2_172 = arith.constant 2 : index
    %c0_173 = arith.constant 0 : index
    %c0_174 = arith.constant 0 : index
    %192 = vector.load %arg18[%c2_172, %c0_173, %c0_174] : memref<4x2x8xbf16, #tpu.memory_space<vmem>>, vector<1x2x8xbf16>
    %193 = vector.shape_cast %192 : vector<1x2x8xbf16> to vector<2x8xbf16>
    %cst_175 = arith.constant dense<0.000000e+00> : vector<2x256xf32>
    %194 = tpu.matmul %193, %176, %cst_175 {dimension_numbers = #tpu.dot_dimension_numbers<[1], [0], [0], [1], [0, 0, 1, 1], [], []>} : vector<2x8xbf16>, vector<8x256xbf16>, vector<2x256xf32> -> vector<2x256xf32>
    %195 = arith.truncf %194 : vector<2x256xf32> to vector<2x256xbf16>
    %c2_176 = arith.constant 2 : index
    %c0_177 = arith.constant 0 : index
    %c0_178 = arith.constant 0 : index
    %196 = vector.load %arg19[%c2_176, %c0_177, %c0_178] : memref<4x256x1xbf16, #tpu.memory_space<vmem>>, vector<1x256x1xbf16>
    %197 = vector.shape_cast %196 : vector<1x256x1xbf16> to vector<256x1xbf16>
    %cst_179 = arith.constant dense<0.000000e+00> : vector<2x1xf32>
    %198 = tpu.matmul %195, %197, %cst_179 {dimension_numbers = #tpu.dot_dimension_numbers<[1], [0], [0], [1], [0, 0, 1, 1], [], []>} : vector<2x256xbf16>, vector<256x1xbf16>, vector<2x1xf32> -> vector<2x1xf32>
    %199 = arith.addf %191, %198 : vector<2x1xf32>
    %c3_180 = arith.constant 3 : index
    %c0_181 = arith.constant 0 : index
    %c0_182 = arith.constant 0 : index
    %200 = vector.load %arg18[%c3_180, %c0_181, %c0_182] : memref<4x2x8xbf16, #tpu.memory_space<vmem>>, vector<1x2x8xbf16>
    %201 = vector.shape_cast %200 : vector<1x2x8xbf16> to vector<2x8xbf16>
    %cst_183 = arith.constant dense<0.000000e+00> : vector<2x256xf32>
    %202 = tpu.matmul %201, %176, %cst_183 {dimension_numbers = #tpu.dot_dimension_numbers<[1], [0], [0], [1], [0, 0, 1, 1], [], []>} : vector<2x8xbf16>, vector<8x256xbf16>, vector<2x256xf32> -> vector<2x256xf32>
    %203 = arith.truncf %202 : vector<2x256xf32> to vector<2x256xbf16>
    %c3_184 = arith.constant 3 : index
    %c0_185 = arith.constant 0 : index
    %c0_186 = arith.constant 0 : index
    %204 = vector.load %arg19[%c3_184, %c0_185, %c0_186] : memref<4x256x1xbf16, #tpu.memory_space<vmem>>, vector<1x256x1xbf16>
    %205 = vector.shape_cast %204 : vector<1x256x1xbf16> to vector<256x1xbf16>
    %cst_187 = arith.constant dense<0.000000e+00> : vector<2x1xf32>
    %206 = tpu.matmul %203, %205, %cst_187 {dimension_numbers = #tpu.dot_dimension_numbers<[1], [0], [0], [1], [0, 0, 1, 1], [], []>} : vector<2x256xbf16>, vector<256x1xbf16>, vector<2x1xf32> -> vector<2x1xf32>
    %207 = arith.addf %199, %206 : vector<2x1xf32>
    %c0_188 = arith.constant 0 : index
    %c0_189 = arith.constant 0 : index
    %208 = vector.load %arg20[%c0_188, %c0_189] : memref<1x1xf32, #tpu.memory_space<vmem>>, vector<1x1xf32>
    %209 = vector.broadcast %208 : vector<1x1xf32> to vector<2x1xf32>
    %210 = arith.addf %207, %209 : vector<2x1xf32>
    %cst_190 = arith.constant 0.000000e+00 : f32
    %211 = vector.broadcast %cst_190 : f32 to vector<2x1xf32>
    %212 = arith.subf %211, %210 : vector<2x1xf32>
    %213 = math.exp %212 : vector<2x1xf32>
    %cst_191 = arith.constant 1.000000e+00 : f32
    %214 = vector.broadcast %cst_191 : f32 to vector<2x1xf32>
    %215 = arith.addf %214, %213 : vector<2x1xf32>
    %cst_192 = arith.constant 1.000000e+00 : f32
    %216 = vector.broadcast %cst_192 : f32 to vector<2x1xf32>
    %217 = arith.divf %216, %215 : vector<2x1xf32>
    %c0_193 = arith.constant 0 : index
    %c0_194 = arith.constant 0 : index
    %218 = vector.load %arg21[%c0_193, %c0_194] : memref<2x1xf32, #tpu.memory_space<vmem>>, vector<2x1xf32>
    tpu.vector_store %arg21[%c0_193, %c0_194], %217 {strides = array<i32>} : memref<2x1xf32, #tpu.memory_space<vmem>>, vector<2x1xf32>,
    return
  }
}

</mosaic_0001>

<llo_original>
// kernel: discriminator_forward.1
$region0: #{discriminator_forward.1}
  #allocation0 [shape = 'u32[]', space=smem, size = 0x4, offset = 0x4, fixed_abs, tag = 'smem constant byte address 0x4 - core index']
  #allocation1 [shape = 'u32[144,128]{1,0:T(1,128)}', space=vmem, size = 0x12000, scoped, tag = 'internal scratch']
  #allocation2 [shape = 'f32[1,1]{1,0:T(1,128)S(1)}', space=vmem, size = 0x200, scoped, tag = 'scoped memory for discriminator_forward.1']
  %s0 = inlined_call_operand.vmem [shape: f32[128,192], index: 0, kind: input, shape index: {}]
  %s1 = inlined_call_operand.hbm [shape: bf16[192,384], index: 1, kind: input, shape index: {}]
  %s2 = inlined_call_operand.vmem [shape: bf16[4,64,128], index: 2, kind: input, shape index: {}]
  %s3 = inlined_call_operand.hbm [shape: bf16[4,384,256], index: 3, kind: input, shape index: {}]
  %s4 = inlined_call_operand.hbm [shape: f32[1,256], index: 4, kind: input, shape index: {}]
  %s5 = inlined_call_operand.hbm [shape: bf16[256,512], index: 5, kind: input, shape index: {}]
  %s6 = inlined_call_operand.hbm [shape: bf16[4,32,64], index: 6, kind: input, shape index: {}]
  %s7 = inlined_call_operand.vmem [shape: bf16[4,512,256], index: 7, kind: input, shape index: {}]
  %s8 = inlined_call_operand.hbm [shape: f32[1,256], index: 8, kind: input, shape index: {}]
  %s9 = inlined_call_operand.hbm [shape: bf16[256,512], index: 9, kind: input, shape index: {}]
  %s10 = inlined_call_operand.vmem [shape: bf16[4,16,32], index: 10, kind: input, shape index: {}]
  %s11 = inlined_call_operand.hbm [shape: bf16[4,512,256], index: 11, kind: input, shape index: {}]
  %s12 = inlined_call_operand.hbm [shape: f32[1,256], index: 12, kind: input, shape index: {}]
  %s13 = inlined_call_operand.hbm [shape: bf16[256,512], index: 13, kind: input, shape index: {}]
  %s14 = inlined_call_operand.vmem [shape: bf16[4,8,16], index: 14, kind: input, shape index: {}]
  %s15 = inlined_call_operand.hbm [shape: bf16[4,512,256], index: 15, kind: input, shape index: {}]
  %s16 = inlined_call_operand.vmem [shape: f32[1,256], index: 16, kind: input, shape index: {}]
  %s17 = inlined_call_operand.hbm [shape: bf16[256,256], index: 17, kind: input, shape index: {}]
  %s18 = inlined_call_operand.vmem [shape: bf16[4,2,8], index: 18, kind: input, shape index: {}]
  %s19 = inlined_call_operand.vmem [shape: bf16[4,256,1], index: 19, kind: input, shape index: {}]
  %s20 = inlined_call_operand.<no memory space> [shape: f32[1,1], index: 20, kind: input, shape index: {}]
  %s21 = inlined_call_operand.vmem [shape: f32[2,1], index: 21, kind: output, shape index: {}]
  %s22 = sld [smem:[#allocation0]]
  $region142: #{discriminator_forward.1} parent=0
    _
  %s24 = ssub.s32 1, %s22
  %s25 = scalar_select 0, %s24, %s22
  %v26 = vstv %s20
  %27 = vst [vmem:[#allocation2] sm:$0x1] %v26
  $region1: #{discriminator_forward.1} parent=0
    #allocation3 [shape = 'u8[147456]{0}', space=vmem, size = 0x24000, scoped, tag = 'input window, operand 1, single buffered']
    #allocation4 [shape = 's32[1]{0}', space=sflag, size = 0x4, scoped, tag = 'scoped memory for discriminator_forward.1']
    #allocation5 [shape = 'u8[786432]{0}', space=vmem, size = 0xc0000, scoped, tag = 'input window, operand 3, single buffered']
    #allocation6 [shape = 's32[1]{0}', space=sflag, size = 0x4, scoped, tag = 'scoped memory for discriminator_forward.1']
    #allocation7 [shape = 'u8[1024]{0}', space=vmem, size = 0x400, scoped, tag = 'input window, operand 4, single buffered']
    #allocation8 [shape = 'u8[262144]{0}', space=vmem, size = 0x40000, scoped, tag = 'input window, operand 5, single buffered']
    #allocation9 [shape = 's32[1]{0}', space=sflag, size = 0x4, scoped, tag = 'scoped memory for discriminator_forward.1']
    #allocation10 [shape = 'u8[32768]{0}', space=vmem, size = 0x8000, scoped, tag = 'input window, operand 6, single buffered']
    #allocation11 [shape = 'u8[1024]{0}', space=vmem, size = 0x400, scoped, tag = 'input window, operand 8, single buffered']
    #allocation12 [shape = 's32[1]{0}', space=sflag, size = 0x4, scoped, tag = 'scoped memory for discriminator_forward.1']
    #allocation13 [shape = 'u8[262144]{0}', space=vmem, size = 0x40000, scoped, tag = 'input window, operand 9, single buffered']
    #allocation14 [shape = 'u8[1048576]{0}', space=vmem, size = 0x100000, scoped, tag = 'input window, operand 11, single buffered']
    #allocation15 [shape = 's32[1]{0}', space=sflag, size = 0x4, scoped, tag = 'scoped memory for discriminator_forward.1']
    #allocation16 [shape = 'u8[1024]{0}', space=vmem, size = 0x400, scoped, tag = 'input window, operand 12, single buffered']
    #allocation17 [shape = 'u8[262144]{0}', space=vmem, size = 0x40000, scoped, tag = 'input window, operand 13, single buffered']
    #allocation18 [shape = 's32[1]{0}', space=sflag, size = 0x4, scoped, tag = 'scoped memory for discriminator_forward.1']
    #allocation19 [shape = 'u8[1048576]{0}', space=vmem, size = 0x100000, scoped, tag = 'input window, operand 15, single buffered']
    #allocation20 [shape = 'u8[131072]{0}', space=vmem, size = 0x20000, scoped, tag = 'input window, operand 17, single buffered']
    #allocation21 [shape = 's32[1]{0}', space=sflag, size = 0x4, scoped, tag = 'scoped memory for discriminator_forward.1']
    %28 = vsyncpa [#allocation4], 0
    %29 = vsyncpa [#allocation6], 0
    %30 = vsyncpa [#allocation9], 0
    %31 = vsyncpa [#allocation12], 0
    %32 = vsyncpa [#allocation15], 0
    %33 = vsyncpa [#allocation18], 0
    %34 = vsyncpa [#allocation21], 0
    // Predicated region
    $region2: #{discriminator_forward.1} parent=1 // pred_check
      _
    $region3: #{discriminator_forward.1} parent=1 // pred_check_branch
      %36 = sbr.rel (0) target = $region5
    $region4: #{discriminator_forward.1} parent=1 // pred_region
      _
    $region5: #{discriminator_forward.1} parent=1 // pred_fallthru
      _
    // Predicated region
    $region6: #{discriminator_forward.1} parent=1 // pred_check
      _
    $region7: #{discriminator_forward.1} parent=1 // pred_check_branch
      %38 = sbr.rel (0) target = $region9
    $region8: #{discriminator_forward.1} parent=1 // pred_region
      %s40 = ssub.s32 4608, 4608
      %41 = vsyncadd [#allocation4], %s40
      %s42 = sshll.u32 [#allocation3], 4
      %s43 = int_to_ptr.vmem [resolvable:$true] %s42
      %48 = dma.hbm_to_vmem [thread:$0]  %s1, 4608, %s43, [#allocation4], 192, 192, 12
    $region9: #{discriminator_forward.1} parent=1 // pred_fallthru
      _
    // Predicated region
    $region10: #{discriminator_forward.1} parent=1 // pred_check
      _
    $region11: #{discriminator_forward.1} parent=1 // pred_check_branch
      %50 = sbr.rel (0) target = $region13
    $region12: #{discriminator_forward.1} parent=1 // pred_region
      _
    $region13: #{discriminator_forward.1} parent=1 // pred_fallthru
      _
    // Predicated region
    $region14: #{discriminator_forward.1} parent=1 // pred_check
      _
    $region15: #{discriminator_forward.1} parent=1 // pred_check_branch
      %52 = sbr.rel (0) target = $region17
    $region16: #{discriminator_forward.1} parent=1 // pred_region
      %s54 = ssub.s32 24576, 24576
      %55 = vsyncadd [#allocation6], %s54
      %s56 = sshll.u32 [#allocation5], 4
      %s57 = int_to_ptr.vmem [resolvable:$true] %s56
      %62 = dma.hbm_to_vmem [thread:$0]  %s3, 24576, %s57, [#allocation6], 128, 128, 8
    $region17: #{discriminator_forward.1} parent=1 // pred_fallthru
      _
    // Predicated region
    $region18: #{discriminator_forward.1} parent=1 // pred_check
      _
    $region19: #{discriminator_forward.1} parent=1 // pred_check_branch
      %64 = sbr.rel (0) target = $region21
    $region20: #{discriminator_forward.1} parent=1 // pred_region
      %s66 = ssub.s32 32, 32
      %67 = vsyncadd [#allocation6], %s66
      %s69 = sshll.u32 [#allocation7], 4
      %s70 = int_to_ptr.vmem [resolvable:$true] %s69
      %72 = dma.hbm_to_vmem [thread:$0]  %s4, 32, %s70, [#allocation6]
    $region21: #{discriminator_forward.1} parent=1 // pred_fallthru
      _
    // Predicated region
    $region22: #{discriminator_forward.1} parent=1 // pred_check
      _
    $region23: #{discriminator_forward.1} parent=1 // pred_check_branch
      %74 = sbr.rel (0) target = $region25
    $region24: #{discriminator_forward.1} parent=1 // pred_region
      %s76 = ssub.s32 8192, 8192
      %77 = vsyncadd [#allocation9], %s76
      %s78 = sshll.u32 [#allocation8], 4
      %s79 = int_to_ptr.vmem [resolvable:$true] %s78
      %84 = dma.hbm_to_vmem [thread:$0]  %s5, 8192, %s79, [#allocation9], 256, 256, 16
    $region25: #{discriminator_forward.1} parent=1 // pred_fallthru
      _
    // Predicated region
    $region26: #{discriminator_forward.1} parent=1 // pred_check
      _
    $region27: #{discriminator_forward.1} parent=1 // pred_check_branch
      %86 = sbr.rel (0) target = $region29
    $region28: #{discriminator_forward.1} parent=1 // pred_region
      %s88 = ssub.s32 1024, 1024
      %89 = vsyncadd [#allocation9], %s88
      %s90 = sshll.u32 [#allocation10], 4
      %s91 = int_to_ptr.vmem [resolvable:$true] %s90
      %96 = dma.hbm_to_vmem [thread:$0]  %s6, 1024, %s91, [#allocation9], 64, 64, 4
    $region29: #{discriminator_forward.1} parent=1 // pred_fallthru
      _
    // Predicated region
    $region30: #{discriminator_forward.1} parent=1 // pred_check
      _
    $region31: #{discriminator_forward.1} parent=1 // pred_check_branch
      %98 = sbr.rel (0) target = $region33
    $region32: #{discriminator_forward.1} parent=1 // pred_region
      _
    $region33: #{discriminator_forward.1} parent=1 // pred_fallthru
      _
    // Predicated region
    $region34: #{discriminator_forward.1} parent=1 // pred_check
      _
    $region35: #{discriminator_forward.1} parent=1 // pred_check_branch
      %100 = sbr.rel (0) target = $region37
    $region36: #{discriminator_forward.1} parent=1 // pred_region
      %s102 = ssub.s32 32, 32
      %103 = vsyncadd [#allocation12], %s102
      %s105 = sshll.u32 [#allocation11], 4
      %s106 = int_to_ptr.vmem [resolvable:$true] %s105
      %108 = dma.hbm_to_vmem [thread:$0]  %s8, 32, %s106, [#allocation12]
    $region37: #{discriminator_forward.1} parent=1 // pred_fallthru
      _
    // Predicated region
    $region38: #{discriminator_forward.1} parent=1 // pred_check
      _
    $region39: #{discriminator_forward.1} parent=1 // pred_check_branch
      %110 = sbr.rel (0) target = $region41
    $region40: #{discriminator_forward.1} parent=1 // pred_region
      %s112 = ssub.s32 8192, 8192
      %113 = vsyncadd [#allocation12], %s112
      %s114 = sshll.u32 [#allocation13], 4
      %s115 = int_to_ptr.vmem [resolvable:$true] %s114
      %120 = dma.hbm_to_vmem [thread:$0]  %s9, 8192, %s115, [#allocation12], 256, 256, 16
    $region41: #{discriminator_forward.1} parent=1 // pred_fallthru
      _
    // Predicated region
    $region42: #{discriminator_forward.1} parent=1 // pred_check
      _
    $region43: #{discriminator_forward.1} parent=1 // pred_check_branch
      %122 = sbr.rel (0) target = $region45
    $region44: #{discriminator_forward.1} parent=1 // pred_region
      _
    $region45: #{discriminator_forward.1} parent=1 // pred_fallthru
      _
    // Predicated region
    $region46: #{discriminator_forward.1} parent=1 // pred_check
      _
    $region47: #{discriminator_forward.1} parent=1 // pred_check_branch
      %124 = sbr.rel (0) target = $region49
    $region48: #{discriminator_forward.1} parent=1 // pred_region
      %s126 = ssub.s32 32768, 32768
      %127 = vsyncadd [#allocation15], %s126
      %s128 = sshll.u32 [#allocation14], 4
      %s129 = int_to_ptr.vmem [resolvable:$true] %s128
      %134 = dma.hbm_to_vmem [thread:$0]  %s11, 32768, %s129, [#allocation15], 128, 128, 8
    $region49: #{discriminator_forward.1} parent=1 // pred_fallthru
      _
    // Predicated region
    $region50: #{discriminator_forward.1} parent=1 // pred_check
      _
    $region51: #{discriminator_forward.1} parent=1 // pred_check_branch
      %136 = sbr.rel (0) target = $region53
    $region52: #{discriminator_forward.1} parent=1 // pred_region
      %s138 = ssub.s32 32, 32
      %139 = vsyncadd [#allocation15], %s138
      %s141 = sshll.u32 [#allocation16], 4
      %s142 = int_to_ptr.vmem [resolvable:$true] %s141
      %144 = dma.hbm_to_vmem [thread:$0]  %s12, 32, %s142, [#allocation15]
    $region53: #{discriminator_forward.1} parent=1 // pred_fallthru
      _
    // Predicated region
    $region54: #{discriminator_forward.1} parent=1 // pred_check
      _
    $region55: #{discriminator_forward.1} parent=1 // pred_check_branch
      %146 = sbr.rel (0) target = $region57
    $region56: #{discriminator_forward.1} parent=1 // pred_region
      %s148 = ssub.s32 8192, 8192
      %149 = vsyncadd [#allocation18], %s148
      %s150 = sshll.u32 [#allocation17], 4
      %s151 = int_to_ptr.vmem [resolvable:$true] %s150
      %156 = dma.hbm_to_vmem [thread:$0]  %s13, 8192, %s151, [#allocation18], 256, 256, 16
    $region57: #{discriminator_forward.1} parent=1 // pred_fallthru
      _
    // Predicated region
    $region58: #{discriminator_forward.1} parent=1 // pred_check
      _
    $region59: #{discriminator_forward.1} parent=1 // pred_check_branch
      %158 = sbr.rel (0) target = $region61
    $region60: #{discriminator_forward.1} parent=1 // pred_region
      _
    $region61: #{discriminator_forward.1} parent=1 // pred_fallthru
      _
    // Predicated region
    $region62: #{discriminator_forward.1} parent=1 // pred_check
      _
    $region63: #{discriminator_forward.1} parent=1 // pred_check_branch
      %160 = sbr.rel (0) target = $region65
    $region64: #{discriminator_forward.1} parent=1 // pred_region
      %s162 = ssub.s32 32768, 32768
      %163 = vsyncadd [#allocation18], %s162
      %s164 = sshll.u32 [#allocation19], 4
      %s165 = int_to_ptr.vmem [resolvable:$true] %s164
      %170 = dma.hbm_to_vmem [thread:$0]  %s15, 32768, %s165, [#allocation18], 128, 128, 8
    $region65: #{discriminator_forward.1} parent=1 // pred_fallthru
      _
    // Predicated region
    $region66: #{discriminator_forward.1} parent=1 // pred_check
      _
    $region67: #{discriminator_forward.1} parent=1 // pred_check_branch
      %172 = sbr.rel (0) target = $region69
    $region68: #{discriminator_forward.1} parent=1 // pred_region
      _
    $region69: #{discriminator_forward.1} parent=1 // pred_fallthru
      _
    // Predicated region
    $region70: #{discriminator_forward.1} parent=1 // pred_check
      _
    $region71: #{discriminator_forward.1} parent=1 // pred_check_branch
      %174 = sbr.rel (0) target = $region73
    $region72: #{discriminator_forward.1} parent=1 // pred_region
      %s176 = ssub.s32 4096, 4096
      %177 = vsyncadd [#allocation21], %s176
      %s178 = sshll.u32 [#allocation20], 4
      %s179 = int_to_ptr.vmem [resolvable:$true] %s178
      %184 = dma.hbm_to_vmem [thread:$0]  %s17, 4096, %s179, [#allocation21], 128, 128, 8
    $region73: #{discriminator_forward.1} parent=1 // pred_fallthru
      _
    // Predicated region
    $region74: #{discriminator_forward.1} parent=1 // pred_check
      _
    $region75: #{discriminator_forward.1} parent=1 // pred_check_branch
      %186 = sbr.rel (0) target = $region77
    $region76: #{discriminator_forward.1} parent=1 // pred_region
      _
    $region77: #{discriminator_forward.1} parent=1 // pred_fallthru
      _
    // Predicated region
    $region78: #{discriminator_forward.1} parent=1 // pred_check
      _
    $region79: #{discriminator_forward.1} parent=1 // pred_check_branch
      %188 = sbr.rel (0) target = $region81
    $region80: #{discriminator_forward.1} parent=1 // pred_region
      _
    $region81: #{discriminator_forward.1} parent=1 // pred_fallthru
      _
    // Predicated region
    $region82: #{discriminator_forward.1} parent=1 // pred_check
      _
    $region83: #{discriminator_forward.1} parent=1 // pred_check_branch
      %190 = sbr.rel (0) target = $region85
    $region84: #{discriminator_forward.1} parent=1 // pred_region
      _
    $region85: #{discriminator_forward.1} parent=1 // pred_fallthru
      _
    // Predicated region
    $region86: #{discriminator_forward.1} parent=1 // pred_check
      _
    $region87: #{discriminator_forward.1} parent=1 // pred_check_branch
      %192 = sbr.rel (0) target = $region89
    $region88: #{discriminator_forward.1} parent=1 // pred_region
      %193 = dma.done [#allocation4], 4608
    $region89: #{discriminator_forward.1} parent=1 // pred_fallthru
      _
    // Predicated region
    $region90: #{discriminator_forward.1} parent=1 // pred_check
      _
    $region91: #{discriminator_forward.1} parent=1 // pred_check_branch
      %195 = sbr.rel (0) target = $region93
    $region92: #{discriminator_forward.1} parent=1 // pred_region
      %196 = dma.done [#allocation6], 24576
    $region93: #{discriminator_forward.1} parent=1 // pred_fallthru
      _
    // Predicated region
    $region94: #{discriminator_forward.1} parent=1 // pred_check
      _
    $region95: #{discriminator_forward.1} parent=1 // pred_check_branch
      %198 = sbr.rel (0) target = $region97
    $region96: #{discriminator_forward.1} parent=1 // pred_region
      %199 = dma.done [#allocation6], 32
    $region97: #{discriminator_forward.1} parent=1 // pred_fallthru
      _
    // Predicated region
    $region98: #{discriminator_forward.1} parent=1 // pred_check
      _
    $region99: #{discriminator_forward.1} parent=1 // pred_check_branch
      %201 = sbr.rel (0) target = $region101
    $region100: #{discriminator_forward.1} parent=1 // pred_region
      %202 = dma.done [#allocation9], 8192
    $region101: #{discriminator_forward.1} parent=1 // pred_fallthru
      _
    // Predicated region
    $region102: #{discriminator_forward.1} parent=1 // pred_check
      _
    $region103: #{discriminator_forward.1} parent=1 // pred_check_branch
      %204 = sbr.rel (0) target = $region105
    $region104: #{discriminator_forward.1} parent=1 // pred_region
      %205 = dma.done [#allocation9], 1024
    $region105: #{discriminator_forward.1} parent=1 // pred_fallthru
      _
    // Predicated region
    $region106: #{discriminator_forward.1} parent=1 // pred_check
      _
    $region107: #{discriminator_forward.1} parent=1 // pred_check_branch
      %207 = sbr.rel (0) target = $region109
    $region108: #{discriminator_forward.1} parent=1 // pred_region
      %208 = dma.done [#allocation12], 32
    $region109: #{discriminator_forward.1} parent=1 // pred_fallthru
      _
    // Predicated region
    $region110: #{discriminator_forward.1} parent=1 // pred_check
      _
    $region111: #{discriminator_forward.1} parent=1 // pred_check_branch
      %210 = sbr.rel (0) target = $region113
    $region112: #{discriminator_forward.1} parent=1 // pred_region
      %211 = dma.done [#allocation12], 8192
    $region113: #{discriminator_forward.1} parent=1 // pred_fallthru
      _
    // Predicated region
    $region114: #{discriminator_forward.1} parent=1 // pred_check
      _
    $region115: #{discriminator_forward.1} parent=1 // pred_check_branch
      %213 = sbr.rel (0) target = $region117
    $region116: #{discriminator_forward.1} parent=1 // pred_region
      %214 = dma.done [#allocation15], 32768
    $region117: #{discriminator_forward.1} parent=1 // pred_fallthru
      _
    // Predicated region
    $region118: #{discriminator_forward.1} parent=1 // pred_check
      _
    $region119: #{discriminator_forward.1} parent=1 // pred_check_branch
      %216 = sbr.rel (0) target = $region121
    $region120: #{discriminator_forward.1} parent=1 // pred_region
      %217 = dma.done [#allocation15], 32
    $region121: #{discriminator_forward.1} parent=1 // pred_fallthru
      _
    // Predicated region
    $region122: #{discriminator_forward.1} parent=1 // pred_check
      _
    $region123: #{discriminator_forward.1} parent=1 // pred_check_branch
      %219 = sbr.rel (0) target = $region125
    $region124: #{discriminator_forward.1} parent=1 // pred_region
      %220 = dma.done [#allocation18], 8192
    $region125: #{discriminator_forward.1} parent=1 // pred_fallthru
      _
    // Predicated region
    $region126: #{discriminator_forward.1} parent=1 // pred_check
      _
    $region127: #{discriminator_forward.1} parent=1 // pred_check_branch
      %222 = sbr.rel (0) target = $region129
    $region128: #{discriminator_forward.1} parent=1 // pred_region
      %223 = dma.done [#allocation18], 32768
    $region129: #{discriminator_forward.1} parent=1 // pred_fallthru
      _
    // Predicated region
    $region130: #{discriminator_forward.1} parent=1 // pred_check
      _
    $region131: #{discriminator_forward.1} parent=1 // pred_check_branch
      %225 = sbr.rel (0) target = $region133
    $region132: #{discriminator_forward.1} parent=1 // pred_region
      %226 = dma.done [#allocation21], 4096
    $region133: #{discriminator_forward.1} parent=1 // pred_fallthru
      _
    %v228 = vld [vmem:[%s0] sm:$0xff]
    %v229 = vld [vmem:[%s0 + $0x8] sm:$0xff]
    %v230 = vld [vmem:[%s0 + $0x10] sm:$0xff]
    %v231 = vld [vmem:[%s0 + $0x18] sm:$0xff]
    %v232 = vld [vmem:[%s0 + $0x20] sm:$0xff]
    %v233 = vld [vmem:[%s0 + $0x28] sm:$0xff]
    %v234 = vld [vmem:[%s0 + $0x30] sm:$0xff]
    %v235 = vld [vmem:[%s0 + $0x38] sm:$0xff]
    %v236 = vld [vmem:[%s0 + $0x40] sm:$0xff]
    %v237 = vld [vmem:[%s0 + $0x48] sm:$0xff]
    %v238 = vld [vmem:[%s0 + $0x50] sm:$0xff]
    %v239 = vld [vmem:[%s0 + $0x58] sm:$0xff]
    %v240 = vld [vmem:[%s0 + $0x60] sm:$0xff]
    %v241 = vld [vmem:[%s0 + $0x68] sm:$0xff]
    %v242 = vld [vmem:[%s0 + $0x70] sm:$0xff]
    %v243 = vld [vmem:[%s0 + $0x78] sm:$0xff]
    %v244 = vld [vmem:[%s0 + $0x80] sm:$0xff]
    %v245 = vld [vmem:[%s0 + $0x88] sm:$0xff]
    %v246 = vld [vmem:[%s0 + $0x90] sm:$0xff]
    %v247 = vld [vmem:[%s0 + $0x98] sm:$0xff]
    %v248 = vld [vmem:[%s0 + $0xa0] sm:$0xff]
    %v249 = vld [vmem:[%s0 + $0xa8] sm:$0xff]
    %v250 = vld [vmem:[%s0 + $0xb0] sm:$0xff]
    %v251 = vld [vmem:[%s0 + $0xb8] sm:$0xff]
    %v252 = vld [vmem:[%s0 + $0xc0] sm:$0xff]
    %v253 = vld [vmem:[%s0 + $0xc8] sm:$0xff]
    %v254 = vld [vmem:[%s0 + $0xd0] sm:$0xff]
    %v255 = vld [vmem:[%s0 + $0xd8] sm:$0xff]
    %v256 = vld [vmem:[%s0 + $0xe0] sm:$0xff]
    %v257 = vld [vmem:[%s0 + $0xe8] sm:$0xff]
    %v258 = vld [vmem:[%s0 + $0xf0] sm:$0xff]
    %v259 = vld [vmem:[%s0 + $0xf8] sm:$0xff]
    %v260 = vpack.c.bf16 %v230, %v228
    %v261 = vpack.c.bf16 %v231, %v229
    %v262 = vpack.c.bf16 %v234, %v232
    %v263 = vpack.c.bf16 %v235, %v233
    %v264 = vpack.c.bf16 %v238, %v236
    %v265 = vpack.c.bf16 %v239, %v237
    %v266 = vpack.c.bf16 %v242, %v240
    %v267 = vpack.c.bf16 %v243, %v241
    %v268 = vpack.c.bf16 %v246, %v244
    %v269 = vpack.c.bf16 %v247, %v245
    %v270 = vpack.c.bf16 %v250, %v248
    %v271 = vpack.c.bf16 %v251, %v249
    %v272 = vpack.c.bf16 %v254, %v252
    %v273 = vpack.c.bf16 %v255, %v253
    %v274 = vpack.c.bf16 %v258, %v256
    %v275 = vpack.c.bf16 %v259, %v257
    %v276 = vld [vmem:[#allocation3] sm:$0xff]
    %v277 = vld [vmem:[#allocation3 + $0x8] sm:$0xf]
    %v278 = vld [vmem:[#allocation3 + $0xc] sm:$0xff]
    %v279 = vld [vmem:[#allocation3 + $0x14] sm:$0xf]
    %v280 = vld [vmem:[#allocation3 + $0x18] sm:$0xff]
    %v281 = vld [vmem:[#allocation3 + $0x20] sm:$0xf]
    %v282 = vld [vmem:[#allocation3 + $0x24] sm:$0xff]
    %v283 = vld [vmem:[#allocation3 + $0x2c] sm:$0xf]
    %v284 = vld [vmem:[#allocation3 + $0x30] sm:$0xff]
    %v285 = vld [vmem:[#allocation3 + $0x38] sm:$0xf]
    %v286 = vld [vmem:[#allocation3 + $0x3c] sm:$0xff]
    %v287 = vld [vmem:[#allocation3 + $0x44] sm:$0xf]
    %v288 = vld [vmem:[#allocation3 + $0x48] sm:$0xff]
    %v289 = vld [vmem:[#allocation3 + $0x50] sm:$0xf]
    %v290 = vld [vmem:[#allocation3 + $0x54] sm:$0xff]
    %v291 = vld [vmem:[#allocation3 + $0x5c] sm:$0xf]
    %v292 = vld [vmem:[#allocation3 + $0x60] sm:$0xff]
    %v293 = vld [vmem:[#allocation3 + $0x68] sm:$0xf]
    %v294 = vld [vmem:[#allocation3 + $0x6c] sm:$0xff]
    %v295 = vld [vmem:[#allocation3 + $0x74] sm:$0xf]
    %v296 = vld [vmem:[#allocation3 + $0x78] sm:$0xff]
    %v297 = vld [vmem:[#allocation3 + $0x80] sm:$0xf]
    %v298 = vld [vmem:[#allocation3 + $0x84] sm:$0xff]
    %v299 = vld [vmem:[#allocation3 + $0x8c] sm:$0xf]
    %v300 = vld [vmem:[#allocation3 + $0x90] sm:$0xff]
    %v301 = vld [vmem:[#allocation3 + $0x98] sm:$0xf]
    %v302 = vld [vmem:[#allocation3 + $0x9c] sm:$0xff]
    %v303 = vld [vmem:[#allocation3 + $0xa4] sm:$0xf]
    %v304 = vld [vmem:[#allocation3 + $0xa8] sm:$0xff]
    %v305 = vld [vmem:[#allocation3 + $0xb0] sm:$0xf]
    %v306 = vld [vmem:[#allocation3 + $0xb4] sm:$0xff]
    %v307 = vld [vmem:[#allocation3 + $0xbc] sm:$0xf]
    %v308 = vld [vmem:[#allocation3 + $0xc0] sm:$0xff]
    %v309 = vld [vmem:[#allocation3 + $0xc8] sm:$0xf]
    %v310 = vld [vmem:[#allocation3 + $0xcc] sm:$0xff]
    %v311 = vld [vmem:[#allocation3 + $0xd4] sm:$0xf]
    %v312 = vld [vmem:[#allocation3 + $0xd8] sm:$0xff]
    %v313 = vld [vmem:[#allocation3 + $0xe0] sm:$0xf]
    %v314 = vld [vmem:[#allocation3 + $0xe4] sm:$0xff]
    %v315 = vld [vmem:[#allocation3 + $0xec] sm:$0xf]
    %v316 = vld [vmem:[#allocation3 + $0xf0] sm:$0xff]
    %v317 = vld [vmem:[#allocation3 + $0xf8] sm:$0xf]
    %v318 = vld [vmem:[#allocation3 + $0xfc] sm:$0xff]
    %v319 = vld [vmem:[#allocation3 + $0x104] sm:$0xf]
    %v320 = vld [vmem:[#allocation3 + $0x108] sm:$0xff]
    %v321 = vld [vmem:[#allocation3 + $0x110] sm:$0xf]
    %v322 = vld [vmem:[#allocation3 + $0x114] sm:$0xff]
    %v323 = vld [vmem:[#allocation3 + $0x11c] sm:$0xf]
    %v372 = vunpack.c.l.b16 %v276
    %v373 = vunpack.c.h.b16 %v276
    %v374 = vunpack.c.l.b16 %v277
    %v375 = vunpack.c.l.b16 %v278
    %v376 = vunpack.c.h.b16 %v278
    %v377 = vunpack.c.l.b16 %v279
    %v378 = vunpack.c.l.b16 %v280
    %v379 = vunpack.c.h.b16 %v280
    %v380 = vunpack.c.l.b16 %v281
    %v381 = vunpack.c.l.b16 %v282
    %v382 = vunpack.c.h.b16 %v282
    %v383 = vunpack.c.l.b16 %v283
    %v384 = vunpack.c.l.b16 %v284
    %v385 = vunpack.c.h.b16 %v284
    %v386 = vunpack.c.l.b16 %v285
    %v387 = vunpack.c.l.b16 %v286
    %v388 = vunpack.c.h.b16 %v286
    %v389 = vunpack.c.l.b16 %v287
    %v390 = vunpack.c.l.b16 %v288
    %v391 = vunpack.c.h.b16 %v288
    %v392 = vunpack.c.l.b16 %v289
    %v393 = vunpack.c.l.b16 %v290
    %v394 = vunpack.c.h.b16 %v290
    %v395 = vunpack.c.l.b16 %v291
    %v396 = vunpack.c.l.b16 %v292
    %v397 = vunpack.c.h.b16 %v292
    %v398 = vunpack.c.l.b16 %v293
    %v399 = vunpack.c.l.b16 %v294
    %v400 = vunpack.c.h.b16 %v294
    %v401 = vunpack.c.l.b16 %v295
    %v402 = vunpack.c.l.b16 %v296
    %v403 = vunpack.c.h.b16 %v296
    %v404 = vunpack.c.l.b16 %v297
    %v405 = vunpack.c.l.b16 %v298
    %v406 = vunpack.c.h.b16 %v298
    %v407 = vunpack.c.l.b16 %v299
    %v408 = vunpack.c.l.b16 %v300
    %v409 = vunpack.c.h.b16 %v300
    %v410 = vunpack.c.l.b16 %v301
    %v411 = vunpack.c.l.b16 %v302
    %v412 = vunpack.c.h.b16 %v302
    %v413 = vunpack.c.l.b16 %v303
    %v414 = vunpack.c.l.b16 %v304
    %v415 = vunpack.c.h.b16 %v304
    %v416 = vunpack.c.l.b16 %v305
    %v417 = vunpack.c.l.b16 %v306
    %v418 = vunpack.c.h.b16 %v306
    %v419 = vunpack.c.l.b16 %v307
    %v420 = vunpack.c.l.b16 %v308
    %v421 = vunpack.c.h.b16 %v308
    %v422 = vunpack.c.l.b16 %v309
    %v423 = vunpack.c.l.b16 %v310
    %v424 = vunpack.c.h.b16 %v310
    %v425 = vunpack.c.l.b16 %v311
    %v426 = vunpack.c.l.b16 %v312
    %v427 = vunpack.c.h.b16 %v312
    %v428 = vunpack.c.l.b16 %v313
    %v429 = vunpack.c.l.b16 %v314
    %v430 = vunpack.c.h.b16 %v314
    %v431 = vunpack.c.l.b16 %v315
    %v432 = vunpack.c.l.b16 %v316
    %v433 = vunpack.c.h.b16 %v316
    %v434 = vunpack.c.l.b16 %v317
    %v435 = vunpack.c.l.b16 %v318
    %v436 = vunpack.c.h.b16 %v318
    %v437 = vunpack.c.l.b16 %v319
    %v438 = vunpack.c.l.b16 %v320
    %v439 = vunpack.c.h.b16 %v320
    %v440 = vunpack.c.l.b16 %v321
    %v441 = vunpack.c.l.b16 %v322
    %v442 = vunpack.c.h.b16 %v322
    %v443 = vunpack.c.l.b16 %v323
    %v444 = vpack.c.b16 %v375, %v372
    %v445 = vpack.c.b16 %v376, %v373
    %v446 = vpack.c.b16 %v377, %v374
    %v447 = vpack.c.b16 %v381, %v378
    %v448 = vpack.c.b16 %v382, %v379
    %v449 = vpack.c.b16 %v383, %v380
    %v450 = vpack.c.b16 %v387, %v384
    %v451 = vpack.c.b16 %v388, %v385
    %v452 = vpack.c.b16 %v389, %v386
    %v453 = vpack.c.b16 %v393, %v390
    %v454 = vpack.c.b16 %v394, %v391
    %v455 = vpack.c.b16 %v395, %v392
    %v456 = vpack.c.b16 %v399, %v396
    %v457 = vpack.c.b16 %v400, %v397
    %v458 = vpack.c.b16 %v401, %v398
    %v459 = vpack.c.b16 %v405, %v402
    %v460 = vpack.c.b16 %v406, %v403
    %v461 = vpack.c.b16 %v407, %v404
    %v462 = vpack.c.b16 %v411, %v408
    %v463 = vpack.c.b16 %v412, %v409
    %v464 = vpack.c.b16 %v413, %v410
    %v465 = vpack.c.b16 %v417, %v414
    %v466 = vpack.c.b16 %v418, %v415
    %v467 = vpack.c.b16 %v419, %v416
    %v468 = vpack.c.b16 %v423, %v420
    %v469 = vpack.c.b16 %v424, %v421
    %v470 = vpack.c.b16 %v425, %v422
    %v471 = vpack.c.b16 %v429, %v426
    %v472 = vpack.c.b16 %v430, %v427
    %v473 = vpack.c.b16 %v431, %v428
    %v474 = vpack.c.b16 %v435, %v432
    %v475 = vpack.c.b16 %v436, %v433
    %v476 = vpack.c.b16 %v437, %v434
    %v477 = vpack.c.b16 %v441, %v438
    %v478 = vpack.c.b16 %v442, %v439
    %v479 = vpack.c.b16 %v443, %v440
    %vm516 = vcmask 523264
    %v518 = vsel %vm516, %v261, 0
    %v521 = vsel %vm516, %v263, 0
    %v524 = vsel %vm516, %v265, 0
    %v527 = vsel %vm516, %v267, 0
    %v530 = vsel %vm516, %v269, 0
    %v533 = vsel %vm516, %v271, 0
    %v536 = vsel %vm516, %v273, 0
    %v539 = vsel %vm516, %v275, 0
    %541 = vmatprep.subr.bf16.mxu0 %v445
    %542 = vmatpush1.bf16.msra.mxu0 %v444
    %543 = vmatprep.subr.bf16.mxu0 %v448
    %544 = vmatpush1.bf16.msra.mxu0 %v447
    %545 = vmatprep.subr.bf16.mxu0 %v451
    %546 = vmatpush1.bf16.msra.mxu0 %v450
    %547 = vmatprep.subr.bf16.mxu0 %v454
    %548 = vmatpush1.bf16.msra.mxu0 %v453
    %549 = vmatprep.subr.bf16.mxu0 %v457
    %550 = vmatpush1.bf16.msra.mxu0 %v456
    %551 = vmatprep.subr.bf16.mxu0 %v460
    %552 = vmatpush1.bf16.msra.mxu0 %v459
    %553 = vmatprep.subr.bf16.mxu0 %v463
    %554 = vmatpush1.bf16.msra.mxu0 %v462
    %555 = vmatprep.subr.bf16.mxu0 %v466
    %556 = vmatpush1.bf16.msra.mxu0 %v465
    %557 = vmatprep.subr.bf16.mxu0 %v469
    %558 = vmatpush1.bf16.msra.mxu0 %v468
    %559 = vmatprep.subr.bf16.mxu0 %v472
    %560 = vmatpush1.bf16.msra.mxu0 %v471
    %561 = vmatprep.subr.bf16.mxu0 %v475
    %562 = vmatpush1.bf16.msra.mxu0 %v474
    %563 = vmatprep.subr.bf16.mxu0 %v478
    %564 = vmatpush1.bf16.msra.mxu0 %v477
    %565 = vmatprep.subr.bf16.mxu0 0
    %566 = vmatpush1.bf16.msra.mxu0 0
    %567 = vmatprep.subr.bf16.mxu0 0
    %568 = vmatpush1.bf16.msra.mxu0 0
    %569 = vmatprep.subr.bf16.mxu0 0
    %570 = vmatpush1.bf16.msra.mxu0 0
    %571 = vmatprep.subr.bf16.mxu0 0
    %572 = vmatpush1.bf16.msra.mxu0 0
    %573 = vmatprep.mubr.bf16.mxu0 %v518
    %574 = vmatmul.mubr.bf16.gmra.mrb[0].mxu0 %v260
    %v575 = vpop.f32.mrb[0].mxu0
    %v576 = vadd.f32 0.0, %v575
    %v577 = vpop.f32.mrb[0].mxu0
    %v578 = vadd.f32 0.0, %v577
    %v579 = vpop.f32.mrb[0].mxu0
    %v580 = vadd.f32 0.0, %v579
    %v581 = vpop.f32.mrb[0].mxu0
    %v582 = vadd.f32 0.0, %v581
    %583 = vmatprep.mubr.bf16.mxu0 %v521
    %584 = vmatmul.mubr.bf16.gmra.mrb[0].mxu0 %v262
    %v585 = vpop.f32.mrb[0].mxu0
    %v586 = vadd.f32 0.0, %v585
    %v587 = vpop.f32.mrb[0].mxu0
    %v588 = vadd.f32 0.0, %v587
    %v589 = vpop.f32.mrb[0].mxu0
    %v590 = vadd.f32 0.0, %v589
    %v591 = vpop.f32.mrb[0].mxu0
    %v592 = vadd.f32 0.0, %v591
    %593 = vmatprep.mubr.bf16.mxu0 %v524
    %594 = vmatmul.mubr.bf16.gmra.mrb[0].mxu0 %v264
    %v595 = vpop.f32.mrb[0].mxu0
    %v596 = vadd.f32 0.0, %v595
    %v597 = vpop.f32.mrb[0].mxu0
    %v598 = vadd.f32 0.0, %v597
    %v599 = vpop.f32.mrb[0].mxu0
    %v600 = vadd.f32 0.0, %v599
    %v601 = vpop.f32.mrb[0].mxu0
    %v602 = vadd.f32 0.0, %v601
    %603 = vmatprep.mubr.bf16.mxu0 %v527
    %604 = vmatmul.mubr.bf16.gmra.mrb[0].mxu0 %v266
    %v605 = vpop.f32.mrb[0].mxu0
    %v606 = vadd.f32 0.0, %v605
    %v607 = vpop.f32.mrb[0].mxu0
    %v608 = vadd.f32 0.0, %v607
    %v609 = vpop.f32.mrb[0].mxu0
    %v610 = vadd.f32 0.0, %v609
    %v611 = vpop.f32.mrb[0].mxu0
    %v612 = vadd.f32 0.0, %v611
    %613 = vmatprep.mubr.bf16.mxu0 %v530
    %614 = vmatmul.mubr.bf16.gmra.mrb[0].mxu0 %v268
    %v615 = vpop.f32.mrb[0].mxu0
    %v616 = vadd.f32 0.0, %v615
    %v617 = vpop.f32.mrb[0].mxu0
    %v618 = vadd.f32 0.0, %v617
    %v619 = vpop.f32.mrb[0].mxu0
    %v620 = vadd.f32 0.0, %v619
    %v621 = vpop.f32.mrb[0].mxu0
    %v622 = vadd.f32 0.0, %v621
    %623 = vmatprep.mubr.bf16.mxu0 %v533
    %624 = vmatmul.mubr.bf16.gmra.mrb[0].mxu0 %v270
    %v625 = vpop.f32.mrb[0].mxu0
    %v626 = vadd.f32 0.0, %v625
    %v627 = vpop.f32.mrb[0].mxu0
    %v628 = vadd.f32 0.0, %v627
    %v629 = vpop.f32.mrb[0].mxu0
    %v630 = vadd.f32 0.0, %v629
    %v631 = vpop.f32.mrb[0].mxu0
    %v632 = vadd.f32 0.0, %v631
    %633 = vmatprep.mubr.bf16.mxu0 %v536
    %634 = vmatmul.mubr.bf16.gmra.mrb[0].mxu0 %v272
    %v635 = vpop.f32.mrb[0].mxu0
    %v636 = vadd.f32 0.0, %v635
    %v637 = vpop.f32.mrb[0].mxu0
    %v638 = vadd.f32 0.0, %v637
    %v639 = vpop.f32.mrb[0].mxu0
    %v640 = vadd.f32 0.0, %v639
    %v641 = vpop.f32.mrb[0].mxu0
    %v642 = vadd.f32 0.0, %v641
    %643 = vmatprep.mubr.bf16.mxu0 %v539
    %644 = vmatmul.mubr.bf16.gmra.mrb[0].mxu0 %v274
    %v645 = vpop.f32.mrb[0].mxu0
    %v646 = vadd.f32 0.0, %v645
    %v647 = vpop.f32.mrb[0].mxu0
    %v648 = vadd.f32 0.0, %v647
    %v649 = vpop.f32.mrb[0].mxu0
    %v650 = vadd.f32 0.0, %v649
    %v651 = vpop.f32.mrb[0].mxu0
    %v652 = vadd.f32 0.0, %v651
    %653 = vdwg.mxu0
    %654 = vmatprep.subr.bf16.mxu0 0
    %655 = vmatpush1.bf16.msra.mxu0 %v446
    %656 = vmatprep.subr.bf16.mxu0 0
    %657 = vmatpush1.bf16.msra.mxu0 %v449
    %658 = vmatprep.subr.bf16.mxu0 0
    %659 = vmatpush1.bf16.msra.mxu0 %v452
    %660 = vmatprep.subr.bf16.mxu0 0
    %661 = vmatpush1.bf16.msra.mxu0 %v455
    %662 = vmatprep.subr.bf16.mxu0 0
    %663 = vmatpush1.bf16.msra.mxu0 %v458
    %664 = vmatprep.subr.bf16.mxu0 0
    %665 = vmatpush1.bf16.msra.mxu0 %v461
    %666 = vmatprep.subr.bf16.mxu0 0
    %667 = vmatpush1.bf16.msra.mxu0 %v464
    %668 = vmatprep.subr.bf16.mxu0 0
    %669 = vmatpush1.bf16.msra.mxu0 %v467
    %670 = vmatprep.subr.bf16.mxu0 0
    %671 = vmatpush1.bf16.msra.mxu0 %v470
    %672 = vmatprep.subr.bf16.mxu0 0
    %673 = vmatpush1.bf16.msra.mxu0 %v473
    %674 = vmatprep.subr.bf16.mxu0 0
    %675 = vmatpush1.bf16.msra.mxu0 %v476
    %676 = vmatprep.subr.bf16.mxu0 0
    %677 = vmatpush1.bf16.msra.mxu0 %v479
    %678 = vmatprep.subr.bf16.mxu0 0
    %679 = vmatpush1.bf16.msra.mxu0 0
    %680 = vmatprep.subr.bf16.mxu0 0
    %681 = vmatpush1.bf16.msra.mxu0 0
    %682 = vmatprep.subr.bf16.mxu0 0
    %683 = vmatpush1.bf16.msra.mxu0 0
    %684 = vmatprep.subr.bf16.mxu0 0
    %685 = vmatpush1.bf16.msra.mxu0 0
    %686 = vmatprep.mubr.bf16.mxu0 %v518
    %687 = vmatmul.mubr.bf16.gmra.mrb[0].mxu0 %v260
    %v688 = vpop.f32.mrb[0].mxu0
    %v689 = vadd.f32 0.0, %v688
    %v690 = vpop.f32.mrb[0].mxu0
    %v691 = vpop.f32.mrb[0].mxu0
    %v692 = vadd.f32 0.0, %v691
    %v693 = vpop.f32.mrb[0].mxu0
    %694 = vmatprep.mubr.bf16.mxu0 %v521
    %695 = vmatmul.mubr.bf16.gmra.mrb[0].mxu0 %v262
    %v696 = vpop.f32.mrb[0].mxu0
    %v697 = vadd.f32 0.0, %v696
    %v698 = vpop.f32.mrb[0].mxu0
    %v699 = vpop.f32.mrb[0].mxu0
    %v700 = vadd.f32 0.0, %v699
    %v701 = vpop.f32.mrb[0].mxu0
    %702 = vmatprep.mubr.bf16.mxu0 %v524
    %703 = vmatmul.mubr.bf16.gmra.mrb[0].mxu0 %v264
    %v704 = vpop.f32.mrb[0].mxu0
    %v705 = vadd.f32 0.0, %v704
    %v706 = vpop.f32.mrb[0].mxu0
    %v707 = vpop.f32.mrb[0].mxu0
    %v708 = vadd.f32 0.0, %v707
    %v709 = vpop.f32.mrb[0].mxu0
    %710 = vmatprep.mubr.bf16.mxu0 %v527
    %711 = vmatmul.mubr.bf16.gmra.mrb[0].mxu0 %v266
    %v712 = vpop.f32.mrb[0].mxu0
    %v713 = vadd.f32 0.0, %v712
    %v714 = vpop.f32.mrb[0].mxu0
    %v715 = vpop.f32.mrb[0].mxu0
    %v716 = vadd.f32 0.0, %v715
    %v717 = vpop.f32.mrb[0].mxu0
    %718 = vmatprep.mubr.bf16.mxu0 %v530
    %719 = vmatmul.mubr.bf16.gmra.mrb[0].mxu0 %v268
    %v720 = vpop.f32.mrb[0].mxu0
    %v721 = vadd.f32 0.0, %v720
    %v722 = vpop.f32.mrb[0].mxu0
    %v723 = vpop.f32.mrb[0].mxu0
    %v724 = vadd.f32 0.0, %v723
    %v725 = vpop.f32.mrb[0].mxu0
    %726 = vmatprep.mubr.bf16.mxu0 %v533
    %727 = vmatmul.mubr.bf16.gmra.mrb[0].mxu0 %v270
    %v728 = vpop.f32.mrb[0].mxu0
    %v729 = vadd.f32 0.0, %v728
    %v730 = vpop.f32.mrb[0].mxu0
    %v731 = vpop.f32.mrb[0].mxu0
    %v732 = vadd.f32 0.0, %v731
    %v733 = vpop.f32.mrb[0].mxu0
    %734 = vmatprep.mubr.bf16.mxu0 %v536
    %735 = vmatmul.mubr.bf16.gmra.mrb[0].mxu0 %v272
    %v736 = vpop.f32.mrb[0].mxu0
    %v737 = vadd.f32 0.0, %v736
    %v738 = vpop.f32.mrb[0].mxu0
    %v739 = vpop.f32.mrb[0].mxu0
    %v740 = vadd.f32 0.0, %v739
    %v741 = vpop.f32.mrb[0].mxu0
    %742 = vmatprep.mubr.bf16.mxu0 %v539
    %743 = vmatmul.mubr.bf16.gmra.mrb[0].mxu0 %v274
    %v744 = vpop.f32.mrb[0].mxu0
    %v745 = vadd.f32 0.0, %v744
    %v746 = vpop.f32.mrb[0].mxu0
    %v747 = vpop.f32.mrb[0].mxu0
    %v748 = vadd.f32 0.0, %v747
    %v749 = vpop.f32.mrb[0].mxu0
    %750 = vdwg.mxu0
    %v751 = vpack.c.bf16 %v580, %v576
    %v752 = vpack.c.bf16 %v582, %v578
    %v753 = vpack.c.bf16 %v692, %v689
    %v754 = vpack.c.bf16 %v590, %v586
    %v755 = vpack.c.bf16 %v592, %v588
    %v756 = vpack.c.bf16 %v700, %v697
    %v757 = vpack.c.bf16 %v600, %v596
    %v758 = vpack.c.bf16 %v602, %v598
    %v759 = vpack.c.bf16 %v708, %v705
    %v760 = vpack.c.bf16 %v610, %v606
    %v761 = vpack.c.bf16 %v612, %v608
    %v762 = vpack.c.bf16 %v716, %v713
    %v763 = vpack.c.bf16 %v620, %v616
    %v764 = vpack.c.bf16 %v622, %v618
    %v765 = vpack.c.bf16 %v724, %v721
    %v766 = vpack.c.bf16 %v630, %v626
    %v767 = vpack.c.bf16 %v632, %v628
    %v768 = vpack.c.bf16 %v732, %v729
    %v769 = vpack.c.bf16 %v640, %v636
    %v770 = vpack.c.bf16 %v642, %v638
    %v771 = vpack.c.bf16 %v740, %v737
    %v772 = vpack.c.bf16 %v650, %v646
    %v773 = vpack.c.bf16 %v652, %v648
    %v774 = vpack.c.bf16 %v748, %v745
    %v775 = vld [vmem:[%s2] sm:$0xf]
    %v776 = vld [vmem:[%s2 + $0x4] sm:$0xf]
    %v777 = vld [vmem:[%s2 + $0x8] sm:$0xf]
    %v778 = vld [vmem:[%s2 + $0xc] sm:$0xf]
    %v779 = vld [vmem:[%s2 + $0x10] sm:$0xf]
    %v780 = vld [vmem:[%s2 + $0x14] sm:$0xf]
    %v781 = vld [vmem:[%s2 + $0x18] sm:$0xf]
    %v782 = vld [vmem:[%s2 + $0x1c] sm:$0xf]
    %v791 = vunpack.c.l.b16 %v775
    %v792 = vunpack.c.l.b16 %v776
    %v793 = vunpack.c.l.b16 %v777
    %v794 = vunpack.c.l.b16 %v778
    %v795 = vunpack.c.l.b16 %v779
    %v796 = vunpack.c.l.b16 %v780
    %v797 = vunpack.c.l.b16 %v781
    %v798 = vunpack.c.l.b16 %v782
    %v799 = vpack.c.b16 %v792, %v791
    %v800 = vpack.c.b16 %v794, %v793
    %v801 = vpack.c.b16 %v796, %v795
    %v802 = vpack.c.b16 %v798, %v797
    %807 = vmatprep.subr.bf16.mxu0 %v752
    %808 = vmatpush1.bf16.msra.mxu0 %v751
    %809 = vmatprep.subr.bf16.mxu0 %v755
    %810 = vmatpush1.bf16.msra.mxu0 %v754
    %811 = vmatprep.subr.bf16.mxu0 %v758
    %812 = vmatpush1.bf16.msra.mxu0 %v757
    %813 = vmatprep.subr.bf16.mxu0 %v761
    %814 = vmatpush1.bf16.msra.mxu0 %v760
    %815 = vmatprep.subr.bf16.mxu0 %v764
    %816 = vmatpush1.bf16.msra.mxu0 %v763
    %817 = vmatprep.subr.bf16.mxu0 %v767
    %818 = vmatpush1.bf16.msra.mxu0 %v766
    %819 = vmatprep.subr.bf16.mxu0 %v770
    %820 = vmatpush1.bf16.msra.mxu0 %v769
    %821 = vmatprep.subr.bf16.mxu0 %v773
    %822 = vmatpush1.bf16.msra.mxu0 %v772
    %823 = vmatprep.subr.bf16.mxu0 0
    %824 = vmatpush1.bf16.msra.mxu0 0
    %825 = vmatprep.subr.bf16.mxu0 0
    %826 = vmatpush1.bf16.msra.mxu0 0
    %827 = vmatprep.subr.bf16.mxu0 0
    %828 = vmatpush1.bf16.msra.mxu0 0
    %829 = vmatprep.subr.bf16.mxu0 0
    %830 = vmatpush1.bf16.msra.mxu0 0
    %831 = vmatprep.subr.bf16.mxu0 0
    %832 = vmatpush1.bf16.msra.mxu0 0
    %833 = vmatprep.subr.bf16.mxu0 0
    %834 = vmatpush1.bf16.msra.mxu0 0
    %835 = vmatprep.subr.bf16.mxu0 0
    %836 = vmatpush1.bf16.msra.mxu0 0
    %837 = vmatprep.subr.bf16.mxu0 0
    %838 = vmatpush1.bf16.msra.mxu0 0
    %839 = vmatprep.mubr.bf16.mxu0 0
    %840 = vmatmul.mubr.bf16.gmra.mrb[0].mxu0 %v799
    %v841 = vpop.f32.mrb[0].mxu0
    %v842 = vadd.f32 0.0, %v841
    %v843 = vpop.f32.mrb[0].mxu0
    %v844 = vadd.f32 0.0, %v843
    %v845 = vpop.f32.mrb[0].mxu0
    %v846 = vadd.f32 0.0, %v845
    %v847 = vpop.f32.mrb[0].mxu0
    %v848 = vadd.f32 0.0, %v847
    %849 = vmatprep.mubr.bf16.mxu0 0
    %850 = vmatmul.mubr.bf16.gmra.mrb[0].mxu0 %v800
    %v851 = vpop.f32.mrb[0].mxu0
    %v852 = vadd.f32 0.0, %v851
    %v853 = vpop.f32.mrb[0].mxu0
    %v854 = vadd.f32 0.0, %v853
    %v855 = vpop.f32.mrb[0].mxu0
    %v856 = vadd.f32 0.0, %v855
    %v857 = vpop.f32.mrb[0].mxu0
    %v858 = vadd.f32 0.0, %v857
    %859 = vmatprep.mubr.bf16.mxu0 0
    %860 = vmatmul.mubr.bf16.gmra.mrb[0].mxu0 %v801
    %v861 = vpop.f32.mrb[0].mxu0
    %v862 = vadd.f32 0.0, %v861
    %v863 = vpop.f32.mrb[0].mxu0
    %v864 = vadd.f32 0.0, %v863
    %v865 = vpop.f32.mrb[0].mxu0
    %v866 = vadd.f32 0.0, %v865
    %v867 = vpop.f32.mrb[0].mxu0
    %v868 = vadd.f32 0.0, %v867
    %869 = vmatprep.mubr.bf16.mxu0 0
    %870 = vmatmul.mubr.bf16.gmra.mrb[0].mxu0 %v802
    %v871 = vpop.f32.mrb[0].mxu0
    %v872 = vadd.f32 0.0, %v871
    %v873 = vpop.f32.mrb[0].mxu0
    %v874 = vadd.f32 0.0, %v873
    %v875 = vpop.f32.mrb[0].mxu0
    %v876 = vadd.f32 0.0, %v875
    %v877 = vpop.f32.mrb[0].mxu0
    %v878 = vadd.f32 0.0, %v877
    %879 = vdwg.mxu0
    %880 = vmatprep.subr.bf16.mxu0 0
    %881 = vmatpush1.bf16.msra.mxu0 %v753
    %882 = vmatprep.subr.bf16.mxu0 0
    %883 = vmatpush1.bf16.msra.mxu0 %v756
    %884 = vmatprep.subr.bf16.mxu0 0
    %885 = vmatpush1.bf16.msra.mxu0 %v759
    %886 = vmatprep.subr.bf16.mxu0 0
    %887 = vmatpush1.bf16.msra.mxu0 %v762
    %888 = vmatprep.subr.bf16.mxu0 0
    %889 = vmatpush1.bf16.msra.mxu0 %v765
    %890 = vmatprep.subr.bf16.mxu0 0
    %891 = vmatpush1.bf16.msra.mxu0 %v768
    %892 = vmatprep.subr.bf16.mxu0 0
    %893 = vmatpush1.bf16.msra.mxu0 %v771
    %894 = vmatprep.subr.bf16.mxu0 0
    %895 = vmatpush1.bf16.msra.mxu0 %v774
    %896 = vmatprep.subr.bf16.mxu0 0
    %897 = vmatpush1.bf16.msra.mxu0 0
    %898 = vmatprep.subr.bf16.mxu0 0
    %899 = vmatpush1.bf16.msra.mxu0 0
    %900 = vmatprep.subr.bf16.mxu0 0
    %901 = vmatpush1.bf16.msra.mxu0 0
    %902 = vmatprep.subr.bf16.mxu0 0
    %903 = vmatpush1.bf16.msra.mxu0 0
    %904 = vmatprep.subr.bf16.mxu0 0
    %905 = vmatpush1.bf16.msra.mxu0 0
    %906 = vmatprep.subr.bf16.mxu0 0
    %907 = vmatpush1.bf16.msra.mxu0 0
    %908 = vmatprep.subr.bf16.mxu0 0
    %909 = vmatpush1.bf16.msra.mxu0 0
    %910 = vmatprep.subr.bf16.mxu0 0
    %911 = vmatpush1.bf16.msra.mxu0 0
    %912 = vmatprep.mubr.bf16.mxu0 0
    %913 = vmatmul.mubr.bf16.gmra.mrb[0].mxu0 %v799
    %v914 = vpop.f32.mrb[0].mxu0
    %v915 = vadd.f32 0.0, %v914
    %v916 = vpop.f32.mrb[0].mxu0
    %v917 = vpop.f32.mrb[0].mxu0
    %v918 = vadd.f32 0.0, %v917
    %v919 = vpop.f32.mrb[0].mxu0
    %920 = vmatprep.mubr.bf16.mxu0 0
    %921 = vmatmul.mubr.bf16.gmra.mrb[0].mxu0 %v800
    %v922 = vpop.f32.mrb[0].mxu0
    %v923 = vadd.f32 0.0, %v922
    %v924 = vpop.f32.mrb[0].mxu0
    %v925 = vpop.f32.mrb[0].mxu0
    %v926 = vadd.f32 0.0, %v925
    %v927 = vpop.f32.mrb[0].mxu0
    %928 = vmatprep.mubr.bf16.mxu0 0
    %929 = vmatmul.mubr.bf16.gmra.mrb[0].mxu0 %v801
    %v930 = vpop.f32.mrb[0].mxu0
    %v931 = vadd.f32 0.0, %v930
    %v932 = vpop.f32.mrb[0].mxu0
    %v933 = vpop.f32.mrb[0].mxu0
    %v934 = vadd.f32 0.0, %v933
    %v935 = vpop.f32.mrb[0].mxu0
    %936 = vmatprep.mubr.bf16.mxu0 0
    %937 = vmatmul.mubr.bf16.gmra.mrb[0].mxu0 %v802
    %v938 = vpop.f32.mrb[0].mxu0
    %v939 = vadd.f32 0.0, %v938
    %v940 = vpop.f32.mrb[0].mxu0
    %v941 = vpop.f32.mrb[0].mxu0
    %v942 = vadd.f32 0.0, %v941
    %v943 = vpop.f32.mrb[0].mxu0
    %944 = vdwg.mxu0
    %v945 = vpack.c.bf16 %v846, %v842
    %v946 = vpack.c.bf16 %v848, %v844
    %v947 = vpack.c.bf16 %v918, %v915
    %v948 = vpack.c.bf16 %v856, %v852
    %v949 = vpack.c.bf16 %v858, %v854
    %v950 = vpack.c.bf16 %v926, %v923
    %v951 = vpack.c.bf16 %v866, %v862
    %v952 = vpack.c.bf16 %v868, %v864
    %v953 = vpack.c.bf16 %v934, %v931
    %v954 = vpack.c.bf16 %v876, %v872
    %v955 = vpack.c.bf16 %v878, %v874
    %v956 = vpack.c.bf16 %v942, %v939
    %v957 = vld [vmem:[#allocation5] sm:$0xff]
    %v958 = vld [vmem:[#allocation5 + $0x8] sm:$0xff]
    %v959 = vld [vmem:[#allocation5 + $0x10] sm:$0xff]
    %v960 = vld [vmem:[#allocation5 + $0x18] sm:$0xff]
    %v961 = vld [vmem:[#allocation5 + $0x20] sm:$0xff]
    %v962 = vld [vmem:[#allocation5 + $0x28] sm:$0xff]
    %v963 = vld [vmem:[#allocation5 + $0x30] sm:$0xff]
    %v964 = vld [vmem:[#allocation5 + $0x38] sm:$0xff]
    %v965 = vld [vmem:[#allocation5 + $0x40] sm:$0xff]
    %v966 = vld [vmem:[#allocation5 + $0x48] sm:$0xff]
    %v967 = vld [vmem:[#allocation5 + $0x50] sm:$0xff]
    %v968 = vld [vmem:[#allocation5 + $0x58] sm:$0xff]
    %v969 = vld [vmem:[#allocation5 + $0x60] sm:$0xff]
    %v970 = vld [vmem:[#allocation5 + $0x68] sm:$0xff]
    %v971 = vld [vmem:[#allocation5 + $0x70] sm:$0xff]
    %v972 = vld [vmem:[#allocation5 + $0x78] sm:$0xff]
    %v973 = vld [vmem:[#allocation5 + $0x80] sm:$0xff]
    %v974 = vld [vmem:[#allocation5 + $0x88] sm:$0xff]
    %v975 = vld [vmem:[#allocation5 + $0x90] sm:$0xff]
    %v976 = vld [vmem:[#allocation5 + $0x98] sm:$0xff]
    %v977 = vld [vmem:[#allocation5 + $0xa0] sm:$0xff]
    %v978 = vld [vmem:[#allocation5 + $0xa8] sm:$0xff]
    %v979 = vld [vmem:[#allocation5 + $0xb0] sm:$0xff]
    %v980 = vld [vmem:[#allocation5 + $0xb8] sm:$0xff]
    %v981 = vld [vmem:[#allocation5 + $0xc0] sm:$0xff]
    %v982 = vld [vmem:[#allocation5 + $0xc8] sm:$0xff]
    %v983 = vld [vmem:[#allocation5 + $0xd0] sm:$0xff]
    %v984 = vld [vmem:[#allocation5 + $0xd8] sm:$0xff]
    %v985 = vld [vmem:[#allocation5 + $0xe0] sm:$0xff]
    %v986 = vld [vmem:[#allocation5 + $0xe8] sm:$0xff]
    %v987 = vld [vmem:[#allocation5 + $0xf0] sm:$0xff]
    %v988 = vld [vmem:[#allocation5 + $0xf8] sm:$0xff]
    %v989 = vld [vmem:[#allocation5 + $0x100] sm:$0xff]
    %v990 = vld [vmem:[#allocation5 + $0x108] sm:$0xff]
    %v991 = vld [vmem:[#allocation5 + $0x110] sm:$0xff]
    %v992 = vld [vmem:[#allocation5 + $0x118] sm:$0xff]
    %v993 = vld [vmem:[#allocation5 + $0x120] sm:$0xff]
    %v994 = vld [vmem:[#allocation5 + $0x128] sm:$0xff]
    %v995 = vld [vmem:[#allocation5 + $0x130] sm:$0xff]
    %v996 = vld [vmem:[#allocation5 + $0x138] sm:$0xff]
    %v997 = vld [vmem:[#allocation5 + $0x140] sm:$0xff]
    %v998 = vld [vmem:[#allocation5 + $0x148] sm:$0xff]
    %v999 = vld [vmem:[#allocation5 + $0x150] sm:$0xff]
    %v1000 = vld [vmem:[#allocation5 + $0x158] sm:$0xff]
    %v1001 = vld [vmem:[#allocation5 + $0x160] sm:$0xff]
    %v1002 = vld [vmem:[#allocation5 + $0x168] sm:$0xff]
    %v1003 = vld [vmem:[#allocation5 + $0x170] sm:$0xff]
    %v1004 = vld [vmem:[#allocation5 + $0x178] sm:$0xff]
    %s1005 = scalar_lea.vmem %s2, 32
    %v1006 = vld [vmem:[%s1005] sm:$0xf]
    %v1007 = vld [vmem:[%s1005 + $0x4] sm:$0xf]
    %v1008 = vld [vmem:[%s1005 + $0x8] sm:$0xf]
    %v1009 = vld [vmem:[%s1005 + $0xc] sm:$0xf]
    %v1010 = vld [vmem:[%s1005 + $0x10] sm:$0xf]
    %v1011 = vld [vmem:[%s1005 + $0x14] sm:$0xf]
    %v1012 = vld [vmem:[%s1005 + $0x18] sm:$0xf]
    %v1013 = vld [vmem:[%s1005 + $0x1c] sm:$0xf]
    %v1022 = vunpack.c.l.b16 %v1006
    %v1023 = vunpack.c.l.b16 %v1007
    %v1024 = vunpack.c.l.b16 %v1008
    %v1025 = vunpack.c.l.b16 %v1009
    %v1026 = vunpack.c.l.b16 %v1010
    %v1027 = vunpack.c.l.b16 %v1011
    %v1028 = vunpack.c.l.b16 %v1012
    %v1029 = vunpack.c.l.b16 %v1013
    %v1030 = vpack.c.b16 %v1023, %v1022
    %v1031 = vpack.c.b16 %v1025, %v1024
    %v1032 = vpack.c.b16 %v1027, %v1026
    %v1033 = vpack.c.b16 %v1029, %v1028
    %1038 = vmatprep.subr.bf16.mxu0 %v752
    %1039 = vmatpush1.bf16.msra.mxu0 %v751
    %1040 = vmatprep.subr.bf16.mxu0 %v755
    %1041 = vmatpush1.bf16.msra.mxu0 %v754
    %1042 = vmatprep.subr.bf16.mxu0 %v758
    %1043 = vmatpush1.bf16.msra.mxu0 %v757
    %1044 = vmatprep.subr.bf16.mxu0 %v761
    %1045 = vmatpush1.bf16.msra.mxu0 %v760
    %1046 = vmatprep.subr.bf16.mxu0 %v764
    %1047 = vmatpush1.bf16.msra.mxu0 %v763
    %1048 = vmatprep.subr.bf16.mxu0 %v767
    %1049 = vmatpush1.bf16.msra.mxu0 %v766
    %1050 = vmatprep.subr.bf16.mxu0 %v770
    %1051 = vmatpush1.bf16.msra.mxu0 %v769
    %1052 = vmatprep.subr.bf16.mxu0 %v773
    %1053 = vmatpush1.bf16.msra.mxu0 %v772
    %1054 = vmatprep.subr.bf16.mxu0 0
    %1055 = vmatpush1.bf16.msra.mxu0 0
    %1056 = vmatprep.subr.bf16.mxu0 0
    %1057 = vmatpush1.bf16.msra.mxu0 0
    %1058 = vmatprep.subr.bf16.mxu0 0
    %1059 = vmatpush1.bf16.msra.mxu0 0
    %1060 = vmatprep.subr.bf16.mxu0 0
    %1061 = vmatpush1.bf16.msra.mxu0 0
    %1062 = vmatprep.subr.bf16.mxu0 0
    %1063 = vmatpush1.bf16.msra.mxu0 0
    %1064 = vmatprep.subr.bf16.mxu0 0
    %1065 = vmatpush1.bf16.msra.mxu0 0
    %1066 = vmatprep.subr.bf16.mxu0 0
    %1067 = vmatpush1.bf16.msra.mxu0 0
    %1068 = vmatprep.subr.bf16.mxu0 0
    %1069 = vmatpush1.bf16.msra.mxu0 0
    %1070 = vmatprep.mubr.bf16.mxu0 0
    %1071 = vmatmul.mubr.bf16.gmra.mrb[0].mxu0 %v1030
    %v1072 = vpop.f32.mrb[0].mxu0
    %v1073 = vadd.f32 0.0, %v1072
    %v1074 = vpop.f32.mrb[0].mxu0
    %v1075 = vadd.f32 0.0, %v1074
    %v1076 = vpop.f32.mrb[0].mxu0
    %v1077 = vadd.f32 0.0, %v1076
    %v1078 = vpop.f32.mrb[0].mxu0
    %v1079 = vadd.f32 0.0, %v1078
    %1080 = vmatprep.mubr.bf16.mxu0 0
    %1081 = vmatmul.mubr.bf16.gmra.mrb[0].mxu0 %v1031
    %v1082 = vpop.f32.mrb[0].mxu0
    %v1083 = vadd.f32 0.0, %v1082
    %v1084 = vpop.f32.mrb[0].mxu0
    %v1085 = vadd.f32 0.0, %v1084
    %v1086 = vpop.f32.mrb[0].mxu0
    %v1087 = vadd.f32 0.0, %v1086
    %v1088 = vpop.f32.mrb[0].mxu0
    %v1089 = vadd.f32 0.0, %v1088
    %1090 = vmatprep.mubr.bf16.mxu0 0
    %1091 = vmatmul.mubr.bf16.gmra.mrb[0].mxu0 %v1032
    %v1092 = vpop.f32.mrb[0].mxu0
    %v1093 = vadd.f32 0.0, %v1092
    %v1094 = vpop.f32.mrb[0].mxu0
    %v1095 = vadd.f32 0.0, %v1094
    %v1096 = vpop.f32.mrb[0].mxu0
    %v1097 = vadd.f32 0.0, %v1096
    %v1098 = vpop.f32.mrb[0].mxu0
    %v1099 = vadd.f32 0.0, %v1098
    %1100 = vmatprep.mubr.bf16.mxu0 0
    %1101 = vmatmul.mubr.bf16.gmra.mrb[0].mxu0 %v1033
    %v1102 = vpop.f32.mrb[0].mxu0
    %v1103 = vadd.f32 0.0, %v1102
    %v1104 = vpop.f32.mrb[0].mxu0
    %v1105 = vadd.f32 0.0, %v1104
    %v1106 = vpop.f32.mrb[0].mxu0
    %v1107 = vadd.f32 0.0, %v1106
    %v1108 = vpop.f32.mrb[0].mxu0
    %v1109 = vadd.f32 0.0, %v1108
    %1110 = vdwg.mxu0
    %1111 = vmatprep.subr.bf16.mxu0 0
    %1112 = vmatpush1.bf16.msra.mxu0 %v753
    %1113 = vmatprep.subr.bf16.mxu0 0
    %1114 = vmatpush1.bf16.msra.mxu0 %v756
    %1115 = vmatprep.subr.bf16.mxu0 0
    %1116 = vmatpush1.bf16.msra.mxu0 %v759
    %1117 = vmatprep.subr.bf16.mxu0 0
    %1118 = vmatpush1.bf16.msra.mxu0 %v762
    %1119 = vmatprep.subr.bf16.mxu0 0
    %1120 = vmatpush1.bf16.msra.mxu0 %v765
    %1121 = vmatprep.subr.bf16.mxu0 0
    %1122 = vmatpush1.bf16.msra.mxu0 %v768
    %1123 = vmatprep.subr.bf16.mxu0 0
    %1124 = vmatpush1.bf16.msra.mxu0 %v771
    %1125 = vmatprep.subr.bf16.mxu0 0
    %1126 = vmatpush1.bf16.msra.mxu0 %v774
    %1127 = vmatprep.subr.bf16.mxu0 0
    %1128 = vmatpush1.bf16.msra.mxu0 0
    %1129 = vmatprep.subr.bf16.mxu0 0
    %1130 = vmatpush1.bf16.msra.mxu0 0
    %1131 = vmatprep.subr.bf16.mxu0 0
    %1132 = vmatpush1.bf16.msra.mxu0 0
    %1133 = vmatprep.subr.bf16.mxu0 0
    %1134 = vmatpush1.bf16.msra.mxu0 0
    %1135 = vmatprep.subr.bf16.mxu0 0
    %1136 = vmatpush1.bf16.msra.mxu0 0
    %1137 = vmatprep.subr.bf16.mxu0 0
    %1138 = vmatpush1.bf16.msra.mxu0 0
    %1139 = vmatprep.subr.bf16.mxu0 0
    %1140 = vmatpush1.bf16.msra.mxu0 0
    %1141 = vmatprep.subr.bf16.mxu0 0
    %1142 = vmatpush1.bf16.msra.mxu0 0
    %1143 = vmatprep.mubr.bf16.mxu0 0
    %1144 = vmatmul.mubr.bf16.gmra.mrb[0].mxu0 %v1030
    %v1145 = vpop.f32.mrb[0].mxu0
    %v1146 = vadd.f32 0.0, %v1145
    %v1147 = vpop.f32.mrb[0].mxu0
    %v1148 = vpop.f32.mrb[0].mxu0
    %v1149 = vadd.f32 0.0, %v1148
    %v1150 = vpop.f32.mrb[0].mxu0
    %1151 = vmatprep.mubr.bf16.mxu0 0
    %1152 = vmatmul.mubr.bf16.gmra.mrb[0].mxu0 %v1031
    %v1153 = vpop.f32.mrb[0].mxu0
    %v1154 = vadd.f32 0.0, %v1153
    %v1155 = vpop.f32.mrb[0].mxu0
    %v1156 = vpop.f32.mrb[0].mxu0
    %v1157 = vadd.f32 0.0, %v1156
    %v1158 = vpop.f32.mrb[0].mxu0
    %1159 = vmatprep.mubr.bf16.mxu0 0
    %1160 = vmatmul.mubr.bf16.gmra.mrb[0].mxu0 %v1032
    %v1161 = vpop.f32.mrb[0].mxu0
    %v1162 = vadd.f32 0.0, %v1161
    %v1163 = vpop.f32.mrb[0].mxu0
    %v1164 = vpop.f32.mrb[0].mxu0
    %v1165 = vadd.f32 0.0, %v1164
    %v1166 = vpop.f32.mrb[0].mxu0
    %1167 = vmatprep.mubr.bf16.mxu0 0
    %1168 = vmatmul.mubr.bf16.gmra.mrb[0].mxu0 %v1033
    %v1169 = vpop.f32.mrb[0].mxu0
    %v1170 = vadd.f32 0.0, %v1169
    %v1171 = vpop.f32.mrb[0].mxu0
    %v1172 = vpop.f32.mrb[0].mxu0
    %v1173 = vadd.f32 0.0, %v1172
    %v1174 = vpop.f32.mrb[0].mxu0
    %1175 = vdwg.mxu0
    %v1176 = vpack.c.bf16 %v1077, %v1073
    %v1177 = vpack.c.bf16 %v1079, %v1075
    %v1178 = vpack.c.bf16 %v1149, %v1146
    %v1179 = vpack.c.bf16 %v1087, %v1083
    %v1180 = vpack.c.bf16 %v1089, %v1085
    %v1181 = vpack.c.bf16 %v1157, %v1154
    %v1182 = vpack.c.bf16 %v1097, %v1093
    %v1183 = vpack.c.bf16 %v1099, %v1095
    %v1184 = vpack.c.bf16 %v1165, %v1162
    %v1185 = vpack.c.bf16 %v1107, %v1103
    %v1186 = vpack.c.bf16 %v1109, %v1105
    %v1187 = vpack.c.bf16 %v1173, %v1170
    %s1188 = scalar_lea.vmem [#allocation5], 384
    %v1189 = vld [vmem:[%s1188] sm:$0xff]
    %v1190 = vld [vmem:[%s1188 + $0x8] sm:$0xff]
    %v1191 = vld [vmem:[%s1188 + $0x10] sm:$0xff]
    %v1192 = vld [vmem:[%s1188 + $0x18] sm:$0xff]
    %v1193 = vld [vmem:[%s1188 + $0x20] sm:$0xff]
    %v1194 = vld [vmem:[%s1188 + $0x28] sm:$0xff]
    %v1195 = vld [vmem:[%s1188 + $0x30] sm:$0xff]
    %v1196 = vld [vmem:[%s1188 + $0x38] sm:$0xff]
    %v1197 = vld [vmem:[%s1188 + $0x40] sm:$0xff]
    %v1198 = vld [vmem:[%s1188 + $0x48] sm:$0xff]
    %v1199 = vld [vmem:[%s1188 + $0x50] sm:$0xff]
    %v1200 = vld [vmem:[%s1188 + $0x58] sm:$0xff]
    %v1201 = vld [vmem:[%s1188 + $0x60] sm:$0xff]
    %v1202 = vld [vmem:[%s1188 + $0x68] sm:$0xff]
    %v1203 = vld [vmem:[%s1188 + $0x70] sm:$0xff]
    %v1204 = vld [vmem:[%s1188 + $0x78] sm:$0xff]
    %v1205 = vld [vmem:[%s1188 + $0x80] sm:$0xff]
    %v1206 = vld [vmem:[%s1188 + $0x88] sm:$0xff]
    %v1207 = vld [vmem:[%s1188 + $0x90] sm:$0xff]
    %v1208 = vld [vmem:[%s1188 + $0x98] sm:$0xff]
    %v1209 = vld [vmem:[%s1188 + $0xa0] sm:$0xff]
    %v1210 = vld [vmem:[%s1188 + $0xa8] sm:$0xff]
    %v1211 = vld [vmem:[%s1188 + $0xb0] sm:$0xff]
    %v1212 = vld [vmem:[%s1188 + $0xb8] sm:$0xff]
    %v1213 = vld [vmem:[%s1188 + $0xc0] sm:$0xff]
    %v1214 = vld [vmem:[%s1188 + $0xc8] sm:$0xff]
    %v1215 = vld [vmem:[%s1188 + $0xd0] sm:$0xff]
    %v1216 = vld [vmem:[%s1188 + $0xd8] sm:$0xff]
    %v1217 = vld [vmem:[%s1188 + $0xe0] sm:$0xff]
    %v1218 = vld [vmem:[%s1188 + $0xe8] sm:$0xff]
    %v1219 = vld [vmem:[%s1188 + $0xf0] sm:$0xff]
    %v1220 = vld [vmem:[%s1188 + $0xf8] sm:$0xff]
    %v1221 = vld [vmem:[%s1188 + $0x100] sm:$0xff]
    %v1222 = vld [vmem:[%s1188 + $0x108] sm:$0xff]
    %v1223 = vld [vmem:[%s1188 + $0x110] sm:$0xff]
    %v1224 = vld [vmem:[%s1188 + $0x118] sm:$0xff]
    %v1225 = vld [vmem:[%s1188 + $0x120] sm:$0xff]
    %v1226 = vld [vmem:[%s1188 + $0x128] sm:$0xff]
    %v1227 = vld [vmem:[%s1188 + $0x130] sm:$0xff]
    %v1228 = vld [vmem:[%s1188 + $0x138] sm:$0xff]
    %v1229 = vld [vmem:[%s1188 + $0x140] sm:$0xff]
    %v1230 = vld [vmem:[%s1188 + $0x148] sm:$0xff]
    %v1231 = vld [vmem:[%s1188 + $0x150] sm:$0xff]
    %v1232 = vld [vmem:[%s1188 + $0x158] sm:$0xff]
    %v1233 = vld [vmem:[%s1188 + $0x160] sm:$0xff]
    %v1234 = vld [vmem:[%s1188 + $0x168] sm:$0xff]
    %v1235 = vld [vmem:[%s1188 + $0x170] sm:$0xff]
    %v1236 = vld [vmem:[%s1188 + $0x178] sm:$0xff]
    %v1285 = vunpack.c.l.b16 %v1189
    %v1286 = vunpack.c.h.b16 %v1189
    %v1287 = vunpack.c.l.b16 %v1190
    %v1288 = vunpack.c.h.b16 %v1190
    %v1289 = vunpack.c.l.b16 %v1191
    %v1290 = vunpack.c.h.b16 %v1191
    %v1291 = vunpack.c.l.b16 %v1192
    %v1292 = vunpack.c.h.b16 %v1192
    %v1293 = vunpack.c.l.b16 %v1193
    %v1294 = vunpack.c.h.b16 %v1193
    %v1295 = vunpack.c.l.b16 %v1194
    %v1296 = vunpack.c.h.b16 %v1194
    %v1297 = vunpack.c.l.b16 %v1195
    %v1298 = vunpack.c.h.b16 %v1195
    %v1299 = vunpack.c.l.b16 %v1196
    %v1300 = vunpack.c.h.b16 %v1196
    %v1301 = vunpack.c.l.b16 %v1197
    %v1302 = vunpack.c.h.b16 %v1197
    %v1303 = vunpack.c.l.b16 %v1198
    %v1304 = vunpack.c.h.b16 %v1198
    %v1305 = vunpack.c.l.b16 %v1199
    %v1306 = vunpack.c.h.b16 %v1199
    %v1307 = vunpack.c.l.b16 %v1200
    %v1308 = vunpack.c.h.b16 %v1200
    %v1309 = vunpack.c.l.b16 %v1201
    %v1310 = vunpack.c.h.b16 %v1201
    %v1311 = vunpack.c.l.b16 %v1202
    %v1312 = vunpack.c.h.b16 %v1202
    %v1313 = vunpack.c.l.b16 %v1203
    %v1314 = vunpack.c.h.b16 %v1203
    %v1315 = vunpack.c.l.b16 %v1204
    %v1316 = vunpack.c.h.b16 %v1204
    %v1317 = vunpack.c.l.b16 %v1205
    %v1318 = vunpack.c.h.b16 %v1205
    %v1319 = vunpack.c.l.b16 %v1206
    %v1320 = vunpack.c.h.b16 %v1206
    %v1321 = vunpack.c.l.b16 %v1207
    %v1322 = vunpack.c.h.b16 %v1207
    %v1323 = vunpack.c.l.b16 %v1208
    %v1324 = vunpack.c.h.b16 %v1208
    %v1325 = vunpack.c.l.b16 %v1209
    %v1326 = vunpack.c.h.b16 %v1209
    %v1327 = vunpack.c.l.b16 %v1210
    %v1328 = vunpack.c.h.b16 %v1210
    %v1329 = vunpack.c.l.b16 %v1211
    %v1330 = vunpack.c.h.b16 %v1211
    %v1331 = vunpack.c.l.b16 %v1212
    %v1332 = vunpack.c.h.b16 %v1212
    %v1333 = vunpack.c.l.b16 %v1213
    %v1334 = vunpack.c.h.b16 %v1213
    %v1335 = vunpack.c.l.b16 %v1214
    %v1336 = vunpack.c.h.b16 %v1214
    %v1337 = vunpack.c.l.b16 %v1215
    %v1338 = vunpack.c.h.b16 %v1215
    %v1339 = vunpack.c.l.b16 %v1216
    %v1340 = vunpack.c.h.b16 %v1216
    %v1341 = vunpack.c.l.b16 %v1217
    %v1342 = vunpack.c.h.b16 %v1217
    %v1343 = vunpack.c.l.b16 %v1218
    %v1344 = vunpack.c.h.b16 %v1218
    %v1345 = vunpack.c.l.b16 %v1219
    %v1346 = vunpack.c.h.b16 %v1219
    %v1347 = vunpack.c.l.b16 %v1220
    %v1348 = vunpack.c.h.b16 %v1220
    %v1349 = vunpack.c.l.b16 %v1221
    %v1350 = vunpack.c.h.b16 %v1221
    %v1351 = vunpack.c.l.b16 %v1222
    %v1352 = vunpack.c.h.b16 %v1222
    %v1353 = vunpack.c.l.b16 %v1223
    %v1354 = vunpack.c.h.b16 %v1223
    %v1355 = vunpack.c.l.b16 %v1224
    %v1356 = vunpack.c.h.b16 %v1224
    %v1357 = vunpack.c.l.b16 %v1225
    %v1358 = vunpack.c.h.b16 %v1225
    %v1359 = vunpack.c.l.b16 %v1226
    %v1360 = vunpack.c.h.b16 %v1226
    %v1361 = vunpack.c.l.b16 %v1227
    %v1362 = vunpack.c.h.b16 %v1227
    %v1363 = vunpack.c.l.b16 %v1228
    %v1364 = vunpack.c.h.b16 %v1228
    %v1365 = vunpack.c.l.b16 %v1229
    %v1366 = vunpack.c.h.b16 %v1229
    %v1367 = vunpack.c.l.b16 %v1230
    %v1368 = vunpack.c.h.b16 %v1230
    %v1369 = vunpack.c.l.b16 %v1231
    %v1370 = vunpack.c.h.b16 %v1231
    %v1371 = vunpack.c.l.b16 %v1232
    %v1372 = vunpack.c.h.b16 %v1232
    %v1373 = vunpack.c.l.b16 %v1233
    %v1374 = vunpack.c.h.b16 %v1233
    %v1375 = vunpack.c.l.b16 %v1234
    %v1376 = vunpack.c.h.b16 %v1234
    %v1377 = vunpack.c.l.b16 %v1235
    %v1378 = vunpack.c.h.b16 %v1235
    %v1379 = vunpack.c.l.b16 %v1236
    %v1380 = vunpack.c.h.b16 %v1236
    %v1381 = vpack.c.b16 %v1287, %v1285
    %v1382 = vpack.c.b16 %v1288, %v1286
    %v1383 = vpack.c.b16 %v1291, %v1289
    %v1384 = vpack.c.b16 %v1292, %v1290
    %v1385 = vpack.c.b16 %v1295, %v1293
    %v1386 = vpack.c.b16 %v1296, %v1294
    %v1387 = vpack.c.b16 %v1299, %v1297
    %v1388 = vpack.c.b16 %v1300, %v1298
    %v1389 = vpack.c.b16 %v1303, %v1301
    %v1390 = vpack.c.b16 %v1304, %v1302
    %v1391 = vpack.c.b16 %v1307, %v1305
    %v1392 = vpack.c.b16 %v1308, %v1306
    %v1393 = vpack.c.b16 %v1311, %v1309
    %v1394 = vpack.c.b16 %v1312, %v1310
    %v1395 = vpack.c.b16 %v1315, %v1313
    %v1396 = vpack.c.b16 %v1316, %v1314
    %v1397 = vpack.c.b16 %v1319, %v1317
    %v1398 = vpack.c.b16 %v1320, %v1318
    %v1399 = vpack.c.b16 %v1323, %v1321
    %v1400 = vpack.c.b16 %v1324, %v1322
    %v1401 = vpack.c.b16 %v1327, %v1325
    %v1402 = vpack.c.b16 %v1328, %v1326
    %v1403 = vpack.c.b16 %v1331, %v1329
    %v1404 = vpack.c.b16 %v1332, %v1330
    %v1405 = vpack.c.b16 %v1335, %v1333
    %v1406 = vpack.c.b16 %v1336, %v1334
    %v1407 = vpack.c.b16 %v1339, %v1337
    %v1408 = vpack.c.b16 %v1340, %v1338
    %v1409 = vpack.c.b16 %v1343, %v1341
    %v1410 = vpack.c.b16 %v1344, %v1342
    %v1411 = vpack.c.b16 %v1347, %v1345
    %v1412 = vpack.c.b16 %v1348, %v1346
    %v1413 = vpack.c.b16 %v1351, %v1349
    %v1414 = vpack.c.b16 %v1352, %v1350
    %v1415 = vpack.c.b16 %v1355, %v1353
    %v1416 = vpack.c.b16 %v1356, %v1354
    %v1417 = vpack.c.b16 %v1359, %v1357
    %v1418 = vpack.c.b16 %v1360, %v1358
    %v1419 = vpack.c.b16 %v1363, %v1361
    %v1420 = vpack.c.b16 %v1364, %v1362
    %v1421 = vpack.c.b16 %v1367, %v1365
    %v1422 = vpack.c.b16 %v1368, %v1366
    %v1423 = vpack.c.b16 %v1371, %v1369
    %v1424 = vpack.c.b16 %v1372, %v1370
    %v1425 = vpack.c.b16 %v1375, %v1373
    %v1426 = vpack.c.b16 %v1376, %v1374
    %v1427 = vpack.c.b16 %v1379, %v1377
    %v1428 = vpack.c.b16 %v1380, %v1378
    %1477 = vmatprep.subr.bf16.mxu0 %v1382
    %1478 = vmatpush1.bf16.msra.mxu0 %v1381
    %1479 = vmatprep.subr.bf16.mxu0 %v1384
    %1480 = vmatpush1.bf16.msra.mxu0 %v1383
    %1481 = vmatprep.subr.bf16.mxu0 %v1386
    %1482 = vmatpush1.bf16.msra.mxu0 %v1385
    %1483 = vmatprep.subr.bf16.mxu0 %v1388
    %1484 = vmatpush1.bf16.msra.mxu0 %v1387
    %1485 = vmatprep.subr.bf16.mxu0 %v1390
    %1486 = vmatpush1.bf16.msra.mxu0 %v1389
    %1487 = vmatprep.subr.bf16.mxu0 %v1392
    %1488 = vmatpush1.bf16.msra.mxu0 %v1391
    %1489 = vmatprep.subr.bf16.mxu0 %v1394
    %1490 = vmatpush1.bf16.msra.mxu0 %v1393
    %1491 = vmatprep.subr.bf16.mxu0 %v1396
    %1492 = vmatpush1.bf16.msra.mxu0 %v1395
    %1493 = vmatprep.subr.bf16.mxu0 %v1398
    %1494 = vmatpush1.bf16.msra.mxu0 %v1397
    %1495 = vmatprep.subr.bf16.mxu0 %v1400
    %1496 = vmatpush1.bf16.msra.mxu0 %v1399
    %1497 = vmatprep.subr.bf16.mxu0 %v1402
    %1498 = vmatpush1.bf16.msra.mxu0 %v1401
    %1499 = vmatprep.subr.bf16.mxu0 %v1404
    %1500 = vmatpush1.bf16.msra.mxu0 %v1403
    %1501 = vmatprep.subr.bf16.mxu0 %v1406
    %1502 = vmatpush1.bf16.msra.mxu0 %v1405
    %1503 = vmatprep.subr.bf16.mxu0 %v1408
    %1504 = vmatpush1.bf16.msra.mxu0 %v1407
    %1505 = vmatprep.subr.bf16.mxu0 %v1410
    %1506 = vmatpush1.bf16.msra.mxu0 %v1409
    %1507 = vmatprep.subr.bf16.mxu0 %v1412
    %1508 = vmatpush1.bf16.msra.mxu0 %v1411
    %1509 = vmatprep.mubr.bf16.mxu0 %v1177
    %1510 = vmatmul.mubr.bf16.gmra.mrb[0].mxu0 %v1176
    %v1511 = vpop.f32.mrb[0].mxu0
    %v1512 = vadd.f32 0.0, %v1511
    %v1513 = vpop.f32.mrb[0].mxu0
    %v1514 = vadd.f32 0.0, %v1513
    %v1515 = vpop.f32.mrb[0].mxu0
    %v1516 = vadd.f32 0.0, %v1515
    %v1517 = vpop.f32.mrb[0].mxu0
    %v1518 = vadd.f32 0.0, %v1517
    %1519 = vmatprep.mubr.bf16.mxu0 %v1180
    %1520 = vmatmul.mubr.bf16.gmra.mrb[0].mxu0 %v1179
    %v1521 = vpop.f32.mrb[0].mxu0
    %v1522 = vadd.f32 0.0, %v1521
    %v1523 = vpop.f32.mrb[0].mxu0
    %v1524 = vadd.f32 0.0, %v1523
    %v1525 = vpop.f32.mrb[0].mxu0
    %v1526 = vadd.f32 0.0, %v1525
    %v1527 = vpop.f32.mrb[0].mxu0
    %v1528 = vadd.f32 0.0, %v1527
    %1529 = vmatprep.mubr.bf16.mxu0 %v1183
    %1530 = vmatmul.mubr.bf16.gmra.mrb[0].mxu0 %v1182
    %v1531 = vpop.f32.mrb[0].mxu0
    %v1532 = vadd.f32 0.0, %v1531
    %v1533 = vpop.f32.mrb[0].mxu0
    %v1534 = vadd.f32 0.0, %v1533
    %v1535 = vpop.f32.mrb[0].mxu0
    %v1536 = vadd.f32 0.0, %v1535
    %v1537 = vpop.f32.mrb[0].mxu0
    %v1538 = vadd.f32 0.0, %v1537
    %1539 = vmatprep.mubr.bf16.mxu0 %v1186
    %1540 = vmatmul.mubr.bf16.gmra.mrb[0].mxu0 %v1185
    %v1541 = vpop.f32.mrb[0].mxu0
    %v1542 = vadd.f32 0.0, %v1541
    %v1543 = vpop.f32.mrb[0].mxu0
    %v1544 = vadd.f32 0.0, %v1543
    %v1545 = vpop.f32.mrb[0].mxu0
    %v1546 = vadd.f32 0.0, %v1545
    %v1547 = vpop.f32.mrb[0].mxu0
    %v1548 = vadd.f32 0.0, %v1547
    %1549 = vdwg.mxu0
    %1550 = vmatprep.subr.bf16.mxu0 %v1414
    %1551 = vmatpush1.bf16.msra.mxu0 %v1413
    %1552 = vmatprep.subr.bf16.mxu0 %v1416
    %1553 = vmatpush1.bf16.msra.mxu0 %v1415
    %1554 = vmatprep.subr.bf16.mxu0 %v1418
    %1555 = vmatpush1.bf16.msra.mxu0 %v1417
    %1556 = vmatprep.subr.bf16.mxu0 %v1420
    %1557 = vmatpush1.bf16.msra.mxu0 %v1419
    %1558 = vmatprep.subr.bf16.mxu0 %v1422
    %1559 = vmatpush1.bf16.msra.mxu0 %v1421
    %1560 = vmatprep.subr.bf16.mxu0 %v1424
    %1561 = vmatpush1.bf16.msra.mxu0 %v1423
    %1562 = vmatprep.subr.bf16.mxu0 %v1426
    %1563 = vmatpush1.bf16.msra.mxu0 %v1425
    %1564 = vmatprep.subr.bf16.mxu0 %v1428
    %1565 = vmatpush1.bf16.msra.mxu0 %v1427
    %1566 = vmatprep.subr.bf16.mxu0 0
    %1567 = vmatpush1.bf16.msra.mxu0 0
    %1568 = vmatprep.subr.bf16.mxu0 0
    %1569 = vmatpush1.bf16.msra.mxu0 0
    %1570 = vmatprep.subr.bf16.mxu0 0
    %1571 = vmatpush1.bf16.msra.mxu0 0
    %1572 = vmatprep.subr.bf16.mxu0 0
    %1573 = vmatpush1.bf16.msra.mxu0 0
    %1574 = vmatprep.subr.bf16.mxu0 0
    %1575 = vmatpush1.bf16.msra.mxu0 0
    %1576 = vmatprep.subr.bf16.mxu0 0
    %1577 = vmatpush1.bf16.msra.mxu0 0
    %1578 = vmatprep.subr.bf16.mxu0 0
    %1579 = vmatpush1.bf16.msra.mxu0 0
    %1580 = vmatprep.subr.bf16.mxu0 0
    %1581 = vmatpush1.bf16.msra.mxu0 0
    %1582 = vmatprep.mubr.bf16.mxu0 0
    %1583 = vmatmul.mubr.bf16.gmra.mrb[0].mxu0 %v1178
    %v1584 = vpop.f32.mrb[0].mxu0
    %v1585 = vadd.f32 %v1512, %v1584
    %v1586 = vpop.f32.mrb[0].mxu0
    %v1587 = vadd.f32 %v1514, %v1586
    %v1588 = vpop.f32.mrb[0].mxu0
    %v1589 = vadd.f32 %v1516, %v1588
    %v1590 = vpop.f32.mrb[0].mxu0
    %v1591 = vadd.f32 %v1518, %v1590
    %1592 = vmatprep.mubr.bf16.mxu0 0
    %1593 = vmatmul.mubr.bf16.gmra.mrb[0].mxu0 %v1181
    %v1594 = vpop.f32.mrb[0].mxu0
    %v1595 = vadd.f32 %v1522, %v1594
    %v1596 = vpop.f32.mrb[0].mxu0
    %v1597 = vadd.f32 %v1524, %v1596
    %v1598 = vpop.f32.mrb[0].mxu0
    %v1599 = vadd.f32 %v1526, %v1598
    %v1600 = vpop.f32.mrb[0].mxu0
    %v1601 = vadd.f32 %v1528, %v1600
    %1602 = vmatprep.mubr.bf16.mxu0 0
    %1603 = vmatmul.mubr.bf16.gmra.mrb[0].mxu0 %v1184
    %v1604 = vpop.f32.mrb[0].mxu0
    %v1605 = vadd.f32 %v1532, %v1604
    %v1606 = vpop.f32.mrb[0].mxu0
    %v1607 = vadd.f32 %v1534, %v1606
    %v1608 = vpop.f32.mrb[0].mxu0
    %v1609 = vadd.f32 %v1536, %v1608
    %v1610 = vpop.f32.mrb[0].mxu0
    %v1611 = vadd.f32 %v1538, %v1610
    %1612 = vmatprep.mubr.bf16.mxu0 0
    %1613 = vmatmul.mubr.bf16.gmra.mrb[0].mxu0 %v1187
    %v1614 = vpop.f32.mrb[0].mxu0
    %v1615 = vadd.f32 %v1542, %v1614
    %v1616 = vpop.f32.mrb[0].mxu0
    %v1617 = vadd.f32 %v1544, %v1616
    %v1618 = vpop.f32.mrb[0].mxu0
    %v1619 = vadd.f32 %v1546, %v1618
    %v1620 = vpop.f32.mrb[0].mxu0
    %v1621 = vadd.f32 %v1548, %v1620
    %1622 = vdwg.mxu0
    %v1671 = vunpack.c.l.b16 %v957
    %v1672 = vunpack.c.h.b16 %v957
    %v1673 = vunpack.c.l.b16 %v958
    %v1674 = vunpack.c.h.b16 %v958
    %v1675 = vunpack.c.l.b16 %v959
    %v1676 = vunpack.c.h.b16 %v959
    %v1677 = vunpack.c.l.b16 %v960
    %v1678 = vunpack.c.h.b16 %v960
    %v1679 = vunpack.c.l.b16 %v961
    %v1680 = vunpack.c.h.b16 %v961
    %v1681 = vunpack.c.l.b16 %v962
    %v1682 = vunpack.c.h.b16 %v962
    %v1683 = vunpack.c.l.b16 %v963
    %v1684 = vunpack.c.h.b16 %v963
    %v1685 = vunpack.c.l.b16 %v964
    %v1686 = vunpack.c.h.b16 %v964
    %v1687 = vunpack.c.l.b16 %v965
    %v1688 = vunpack.c.h.b16 %v965
    %v1689 = vunpack.c.l.b16 %v966
    %v1690 = vunpack.c.h.b16 %v966
    %v1691 = vunpack.c.l.b16 %v967
    %v1692 = vunpack.c.h.b16 %v967
    %v1693 = vunpack.c.l.b16 %v968
    %v1694 = vunpack.c.h.b16 %v968
    %v1695 = vunpack.c.l.b16 %v969
    %v1696 = vunpack.c.h.b16 %v969
    %v1697 = vunpack.c.l.b16 %v970
    %v1698 = vunpack.c.h.b16 %v970
    %v1699 = vunpack.c.l.b16 %v971
    %v1700 = vunpack.c.h.b16 %v971
    %v1701 = vunpack.c.l.b16 %v972
    %v1702 = vunpack.c.h.b16 %v972
    %v1703 = vunpack.c.l.b16 %v973
    %v1704 = vunpack.c.h.b16 %v973
    %v1705 = vunpack.c.l.b16 %v974
    %v1706 = vunpack.c.h.b16 %v974
    %v1707 = vunpack.c.l.b16 %v975
    %v1708 = vunpack.c.h.b16 %v975
    %v1709 = vunpack.c.l.b16 %v976
    %v1710 = vunpack.c.h.b16 %v976
    %v1711 = vunpack.c.l.b16 %v977
    %v1712 = vunpack.c.h.b16 %v977
    %v1713 = vunpack.c.l.b16 %v978
    %v1714 = vunpack.c.h.b16 %v978
    %v1715 = vunpack.c.l.b16 %v979
    %v1716 = vunpack.c.h.b16 %v979
    %v1717 = vunpack.c.l.b16 %v980
    %v1718 = vunpack.c.h.b16 %v980
    %v1719 = vunpack.c.l.b16 %v981
    %v1720 = vunpack.c.h.b16 %v981
    %v1721 = vunpack.c.l.b16 %v982
    %v1722 = vunpack.c.h.b16 %v982
    %v1723 = vunpack.c.l.b16 %v983
    %v1724 = vunpack.c.h.b16 %v983
    %v1725 = vunpack.c.l.b16 %v984
    %v1726 = vunpack.c.h.b16 %v984
    %v1727 = vunpack.c.l.b16 %v985
    %v1728 = vunpack.c.h.b16 %v985
    %v1729 = vunpack.c.l.b16 %v986
    %v1730 = vunpack.c.h.b16 %v986
    %v1731 = vunpack.c.l.b16 %v987
    %v1732 = vunpack.c.h.b16 %v987
    %v1733 = vunpack.c.l.b16 %v988
    %v1734 = vunpack.c.h.b16 %v988
    %v1735 = vunpack.c.l.b16 %v989
    %v1736 = vunpack.c.h.b16 %v989
    %v1737 = vunpack.c.l.b16 %v990
    %v1738 = vunpack.c.h.b16 %v990
    %v1739 = vunpack.c.l.b16 %v991
    %v1740 = vunpack.c.h.b16 %v991
    %v1741 = vunpack.c.l.b16 %v992
    %v1742 = vunpack.c.h.b16 %v992
    %v1743 = vunpack.c.l.b16 %v993
    %v1744 = vunpack.c.h.b16 %v993
    %v1745 = vunpack.c.l.b16 %v994
    %v1746 = vunpack.c.h.b16 %v994
    %v1747 = vunpack.c.l.b16 %v995
    %v1748 = vunpack.c.h.b16 %v995
    %v1749 = vunpack.c.l.b16 %v996
    %v1750 = vunpack.c.h.b16 %v996
    %v1751 = vunpack.c.l.b16 %v997
    %v1752 = vunpack.c.h.b16 %v997
    %v1753 = vunpack.c.l.b16 %v998
    %v1754 = vunpack.c.h.b16 %v998
    %v1755 = vunpack.c.l.b16 %v999
    %v1756 = vunpack.c.h.b16 %v999
    %v1757 = vunpack.c.l.b16 %v1000
    %v1758 = vunpack.c.h.b16 %v1000
    %v1759 = vunpack.c.l.b16 %v1001
    %v1760 = vunpack.c.h.b16 %v1001
    %v1761 = vunpack.c.l.b16 %v1002
    %v1762 = vunpack.c.h.b16 %v1002
    %v1763 = vunpack.c.l.b16 %v1003
    %v1764 = vunpack.c.h.b16 %v1003
    %v1765 = vunpack.c.l.b16 %v1004
    %v1766 = vunpack.c.h.b16 %v1004
    %v1767 = vpack.c.b16 %v1673, %v1671
    %v1768 = vpack.c.b16 %v1674, %v1672
    %v1769 = vpack.c.b16 %v1677, %v1675
    %v1770 = vpack.c.b16 %v1678, %v1676
    %v1771 = vpack.c.b16 %v1681, %v1679
    %v1772 = vpack.c.b16 %v1682, %v1680
    %v1773 = vpack.c.b16 %v1685, %v1683
    %v1774 = vpack.c.b16 %v1686, %v1684
    %v1775 = vpack.c.b16 %v1689, %v1687
    %v1776 = vpack.c.b16 %v1690, %v1688
    %v1777 = vpack.c.b16 %v1693, %v1691
    %v1778 = vpack.c.b16 %v1694, %v1692
    %v1779 = vpack.c.b16 %v1697, %v1695
    %v1780 = vpack.c.b16 %v1698, %v1696
    %v1781 = vpack.c.b16 %v1701, %v1699
    %v1782 = vpack.c.b16 %v1702, %v1700
    %v1783 = vpack.c.b16 %v1705, %v1703
    %v1784 = vpack.c.b16 %v1706, %v1704
    %v1785 = vpack.c.b16 %v1709, %v1707
    %v1786 = vpack.c.b16 %v1710, %v1708
    %v1787 = vpack.c.b16 %v1713, %v1711
    %v1788 = vpack.c.b16 %v1714, %v1712
    %v1789 = vpack.c.b16 %v1717, %v1715
    %v1790 = vpack.c.b16 %v1718, %v1716
    %v1791 = vpack.c.b16 %v1721, %v1719
    %v1792 = vpack.c.b16 %v1722, %v1720
    %v1793 = vpack.c.b16 %v1725, %v1723
    %v1794 = vpack.c.b16 %v1726, %v1724
    %v1795 = vpack.c.b16 %v1729, %v1727
    %v1796 = vpack.c.b16 %v1730, %v1728
    %v1797 = vpack.c.b16 %v1733, %v1731
    %v1798 = vpack.c.b16 %v1734, %v1732
    %v1799 = vpack.c.b16 %v1737, %v1735
    %v1800 = vpack.c.b16 %v1738, %v1736
    %v1801 = vpack.c.b16 %v1741, %v1739
    %v1802 = vpack.c.b16 %v1742, %v1740
    %v1803 = vpack.c.b16 %v1745, %v1743
    %v1804 = vpack.c.b16 %v1746, %v1744
    %v1805 = vpack.c.b16 %v1749, %v1747
    %v1806 = vpack.c.b16 %v1750, %v1748
    %v1807 = vpack.c.b16 %v1753, %v1751
    %v1808 = vpack.c.b16 %v1754, %v1752
    %v1809 = vpack.c.b16 %v1757, %v1755
    %v1810 = vpack.c.b16 %v1758, %v1756
    %v1811 = vpack.c.b16 %v1761, %v1759
    %v1812 = vpack.c.b16 %v1762, %v1760
    %v1813 = vpack.c.b16 %v1765, %v1763
    %v1814 = vpack.c.b16 %v1766, %v1764
    %1863 = vmatprep.subr.bf16.mxu0 %v1768
    %1864 = vmatpush1.bf16.msra.mxu0 %v1767
    %1865 = vmatprep.subr.bf16.mxu0 %v1770
    %1866 = vmatpush1.bf16.msra.mxu0 %v1769
    %1867 = vmatprep.subr.bf16.mxu0 %v1772
    %1868 = vmatpush1.bf16.msra.mxu0 %v1771
    %1869 = vmatprep.subr.bf16.mxu0 %v1774
    %1870 = vmatpush1.bf16.msra.mxu0 %v1773
    %1871 = vmatprep.subr.bf16.mxu0 %v1776
    %1872 = vmatpush1.bf16.msra.mxu0 %v1775
    %1873 = vmatprep.subr.bf16.mxu0 %v1778
    %1874 = vmatpush1.bf16.msra.mxu0 %v1777
    %1875 = vmatprep.subr.bf16.mxu0 %v1780
    %1876 = vmatpush1.bf16.msra.mxu0 %v1779
    %1877 = vmatprep.subr.bf16.mxu0 %v1782
    %1878 = vmatpush1.bf16.msra.mxu0 %v1781
    %1879 = vmatprep.subr.bf16.mxu0 %v1784
    %1880 = vmatpush1.bf16.msra.mxu0 %v1783
    %1881 = vmatprep.subr.bf16.mxu0 %v1786
    %1882 = vmatpush1.bf16.msra.mxu0 %v1785
    %1883 = vmatprep.subr.bf16.mxu0 %v1788
    %1884 = vmatpush1.bf16.msra.mxu0 %v1787
    %1885 = vmatprep.subr.bf16.mxu0 %v1790
    %1886 = vmatpush1.bf16.msra.mxu0 %v1789
    %1887 = vmatprep.subr.bf16.mxu0 %v1792
    %1888 = vmatpush1.bf16.msra.mxu0 %v1791
    %1889 = vmatprep.subr.bf16.mxu0 %v1794
    %1890 = vmatpush1.bf16.msra.mxu0 %v1793
    %1891 = vmatprep.subr.bf16.mxu0 %v1796
    %1892 = vmatpush1.bf16.msra.mxu0 %v1795
    %1893 = vmatprep.subr.bf16.mxu0 %v1798
    %1894 = vmatpush1.bf16.msra.mxu0 %v1797
    %1895 = vmatprep.mubr.bf16.mxu0 %v946
    %1896 = vmatmul.mubr.bf16.gmra.mrb[0].mxu0 %v945
    %v1897 = vpop.f32.mrb[0].mxu0
    %v1898 = vadd.f32 %v1585, %v1897
    %v1899 = vpop.f32.mrb[0].mxu0
    %v1900 = vadd.f32 %v1587, %v1899
    %v1901 = vpop.f32.mrb[0].mxu0
    %v1902 = vadd.f32 %v1589, %v1901
    %v1903 = vpop.f32.mrb[0].mxu0
    %v1904 = vadd.f32 %v1591, %v1903
    %1905 = vmatprep.mubr.bf16.mxu0 %v949
    %1906 = vmatmul.mubr.bf16.gmra.mrb[0].mxu0 %v948
    %v1907 = vpop.f32.mrb[0].mxu0
    %v1908 = vadd.f32 %v1595, %v1907
    %v1909 = vpop.f32.mrb[0].mxu0
    %v1910 = vadd.f32 %v1597, %v1909
    %v1911 = vpop.f32.mrb[0].mxu0
    %v1912 = vadd.f32 %v1599, %v1911
    %v1913 = vpop.f32.mrb[0].mxu0
    %v1914 = vadd.f32 %v1601, %v1913
    %1915 = vmatprep.mubr.bf16.mxu0 %v952
    %1916 = vmatmul.mubr.bf16.gmra.mrb[0].mxu0 %v951
    %v1917 = vpop.f32.mrb[0].mxu0
    %v1918 = vadd.f32 %v1605, %v1917
    %v1919 = vpop.f32.mrb[0].mxu0
    %v1920 = vadd.f32 %v1607, %v1919
    %v1921 = vpop.f32.mrb[0].mxu0
    %v1922 = vadd.f32 %v1609, %v1921
    %v1923 = vpop.f32.mrb[0].mxu0
    %v1924 = vadd.f32 %v1611, %v1923
    %1925 = vmatprep.mubr.bf16.mxu0 %v955
    %1926 = vmatmul.mubr.bf16.gmra.mrb[0].mxu0 %v954
    %v1927 = vpop.f32.mrb[0].mxu0
    %v1928 = vadd.f32 %v1615, %v1927
    %v1929 = vpop.f32.mrb[0].mxu0
    %v1930 = vadd.f32 %v1617, %v1929
    %v1931 = vpop.f32.mrb[0].mxu0
    %v1932 = vadd.f32 %v1619, %v1931
    %v1933 = vpop.f32.mrb[0].mxu0
    %v1934 = vadd.f32 %v1621, %v1933
    %1935 = vdwg.mxu0
    %1936 = vmatprep.subr.bf16.mxu0 %v1800
    %1937 = vmatpush1.bf16.msra.mxu0 %v1799
    %1938 = vmatprep.subr.bf16.mxu0 %v1802
    %1939 = vmatpush1.bf16.msra.mxu0 %v1801
    %1940 = vmatprep.subr.bf16.mxu0 %v1804
    %1941 = vmatpush1.bf16.msra.mxu0 %v1803
    %1942 = vmatprep.subr.bf16.mxu0 %v1806
    %1943 = vmatpush1.bf16.msra.mxu0 %v1805
    %1944 = vmatprep.subr.bf16.mxu0 %v1808
    %1945 = vmatpush1.bf16.msra.mxu0 %v1807
    %1946 = vmatprep.subr.bf16.mxu0 %v1810
    %1947 = vmatpush1.bf16.msra.mxu0 %v1809
    %1948 = vmatprep.subr.bf16.mxu0 %v1812
    %1949 = vmatpush1.bf16.msra.mxu0 %v1811
    %1950 = vmatprep.subr.bf16.mxu0 %v1814
    %1951 = vmatpush1.bf16.msra.mxu0 %v1813
    %1952 = vmatprep.subr.bf16.mxu0 0
    %1953 = vmatpush1.bf16.msra.mxu0 0
    %1954 = vmatprep.subr.bf16.mxu0 0
    %1955 = vmatpush1.bf16.msra.mxu0 0
    %1956 = vmatprep.subr.bf16.mxu0 0
    %1957 = vmatpush1.bf16.msra.mxu0 0
    %1958 = vmatprep.subr.bf16.mxu0 0
    %1959 = vmatpush1.bf16.msra.mxu0 0
    %1960 = vmatprep.subr.bf16.mxu0 0
    %1961 = vmatpush1.bf16.msra.mxu0 0
    %1962 = vmatprep.subr.bf16.mxu0 0
    %1963 = vmatpush1.bf16.msra.mxu0 0
    %1964 = vmatprep.subr.bf16.mxu0 0
    %1965 = vmatpush1.bf16.msra.mxu0 0
    %1966 = vmatprep.subr.bf16.mxu0 0
    %1967 = vmatpush1.bf16.msra.mxu0 0
    %1968 = vmatprep.mubr.bf16.mxu0 0
    %1969 = vmatmul.mubr.bf16.gmra.mrb[0].mxu0 %v947
    %v1970 = vpop.f32.mrb[0].mxu0
    %v1971 = vadd.f32 %v1898, %v1970
    %v1972 = vpop.f32.mrb[0].mxu0
    %v1973 = vadd.f32 %v1900, %v1972
    %v1974 = vpop.f32.mrb[0].mxu0
    %v1975 = vadd.f32 %v1902, %v1974
    %v1976 = vpop.f32.mrb[0].mxu0
    %v1977 = vadd.f32 %v1904, %v1976
    %1978 = vmatprep.mubr.bf16.mxu0 0
    %1979 = vmatmul.mubr.bf16.gmra.mrb[0].mxu0 %v950
    %v1980 = vpop.f32.mrb[0].mxu0
    %v1981 = vadd.f32 %v1908, %v1980
    %v1982 = vpop.f32.mrb[0].mxu0
    %v1983 = vadd.f32 %v1910, %v1982
    %v1984 = vpop.f32.mrb[0].mxu0
    %v1985 = vadd.f32 %v1912, %v1984
    %v1986 = vpop.f32.mrb[0].mxu0
    %v1987 = vadd.f32 %v1914, %v1986
    %1988 = vmatprep.mubr.bf16.mxu0 0
    %1989 = vmatmul.mubr.bf16.gmra.mrb[0].mxu0 %v953
    %v1990 = vpop.f32.mrb[0].mxu0
    %v1991 = vadd.f32 %v1918, %v1990
    %v1992 = vpop.f32.mrb[0].mxu0
    %v1993 = vadd.f32 %v1920, %v1992
    %v1994 = vpop.f32.mrb[0].mxu0
    %v1995 = vadd.f32 %v1922, %v1994
    %v1996 = vpop.f32.mrb[0].mxu0
    %v1997 = vadd.f32 %v1924, %v1996
    %1998 = vmatprep.mubr.bf16.mxu0 0
    %1999 = vmatmul.mubr.bf16.gmra.mrb[0].mxu0 %v956
    %v2000 = vpop.f32.mrb[0].mxu0
    %v2001 = vadd.f32 %v1928, %v2000
    %v2002 = vpop.f32.mrb[0].mxu0
    %v2003 = vadd.f32 %v1930, %v2002
    %v2004 = vpop.f32.mrb[0].mxu0
    %v2005 = vadd.f32 %v1932, %v2004
    %v2006 = vpop.f32.mrb[0].mxu0
    %v2007 = vadd.f32 %v1934, %v2006
    %2008 = vdwg.mxu0
    %s2009 = scalar_lea.vmem %s2, 64
    %v2010 = vld [vmem:[%s2009] sm:$0xf]
    %v2011 = vld [vmem:[%s2009 + $0x4] sm:$0xf]
    %v2012 = vld [vmem:[%s2009 + $0x8] sm:$0xf]
    %v2013 = vld [vmem:[%s2009 + $0xc] sm:$0xf]
    %v2014 = vld [vmem:[%s2009 + $0x10] sm:$0xf]
    %v2015 = vld [vmem:[%s2009 + $0x14] sm:$0xf]
    %v2016 = vld [vmem:[%s2009 + $0x18] sm:$0xf]
    %v2017 = vld [vmem:[%s2009 + $0x1c] sm:$0xf]
    %v2026 = vunpack.c.l.b16 %v2010
    %v2027 = vunpack.c.l.b16 %v2011
    %v2028 = vunpack.c.l.b16 %v2012
    %v2029 = vunpack.c.l.b16 %v2013
    %v2030 = vunpack.c.l.b16 %v2014
    %v2031 = vunpack.c.l.b16 %v2015
    %v2032 = vunpack.c.l.b16 %v2016
    %v2033 = vunpack.c.l.b16 %v2017
    %v2034 = vpack.c.b16 %v2027, %v2026
    %v2035 = vpack.c.b16 %v2029, %v2028
    %v2036 = vpack.c.b16 %v2031, %v2030
    %v2037 = vpack.c.b16 %v2033, %v2032
    %2042 = vmatprep.subr.bf16.mxu0 %v752
    %2043 = vmatpush1.bf16.msra.mxu0 %v751
    %2044 = vmatprep.subr.bf16.mxu0 %v755
    %2045 = vmatpush1.bf16.msra.mxu0 %v754
    %2046 = vmatprep.subr.bf16.mxu0 %v758
    %2047 = vmatpush1.bf16.msra.mxu0 %v757
    %2048 = vmatprep.subr.bf16.mxu0 %v761
    %2049 = vmatpush1.bf16.msra.mxu0 %v760
    %2050 = vmatprep.subr.bf16.mxu0 %v764
    %2051 = vmatpush1.bf16.msra.mxu0 %v763
    %2052 = vmatprep.subr.bf16.mxu0 %v767
    %2053 = vmatpush1.bf16.msra.mxu0 %v766
    %2054 = vmatprep.subr.bf16.mxu0 %v770
    %2055 = vmatpush1.bf16.msra.mxu0 %v769
    %2056 = vmatprep.subr.bf16.mxu0 %v773
    %2057 = vmatpush1.bf16.msra.mxu0 %v772
    %2058 = vmatprep.subr.bf16.mxu0 0
    %2059 = vmatpush1.bf16.msra.mxu0 0
    %2060 = vmatprep.subr.bf16.mxu0 0
    %2061 = vmatpush1.bf16.msra.mxu0 0
    %2062 = vmatprep.subr.bf16.mxu0 0
    %2063 = vmatpush1.bf16.msra.mxu0 0
    %2064 = vmatprep.subr.bf16.mxu0 0
    %2065 = vmatpush1.bf16.msra.mxu0 0
    %2066 = vmatprep.subr.bf16.mxu0 0
    %2067 = vmatpush1.bf16.msra.mxu0 0
    %2068 = vmatprep.subr.bf16.mxu0 0
    %2069 = vmatpush1.bf16.msra.mxu0 0
    %2070 = vmatprep.subr.bf16.mxu0 0
    %2071 = vmatpush1.bf16.msra.mxu0 0
    %2072 = vmatprep.subr.bf16.mxu0 0
    %2073 = vmatpush1.bf16.msra.mxu0 0
    %2074 = vmatprep.mubr.bf16.mxu0 0
    %2075 = vmatmul.mubr.bf16.gmra.mrb[0].mxu0 %v2034
    %v2076 = vpop.f32.mrb[0].mxu0
    %v2077 = vadd.f32 0.0, %v2076
    %v2078 = vpop.f32.mrb[0].mxu0
    %v2079 = vadd.f32 0.0, %v2078
    %v2080 = vpop.f32.mrb[0].mxu0
    %v2081 = vadd.f32 0.0, %v2080
    %v2082 = vpop.f32.mrb[0].mxu0
    %v2083 = vadd.f32 0.0, %v2082
    %2084 = vmatprep.mubr.bf16.mxu0 0
    %2085 = vmatmul.mubr.bf16.gmra.mrb[0].mxu0 %v2035
    %v2086 = vpop.f32.mrb[0].mxu0
    %v2087 = vadd.f32 0.0, %v2086
    %v2088 = vpop.f32.mrb[0].mxu0
    %v2089 = vadd.f32 0.0, %v2088
    %v2090 = vpop.f32.mrb[0].mxu0
    %v2091 = vadd.f32 0.0, %v2090
    %v2092 = vpop.f32.mrb[0].mxu0
    %v2093 = vadd.f32 0.0, %v2092
    %2094 = vmatprep.mubr.bf16.mxu0 0
    %2095 = vmatmul.mubr.bf16.gmra.mrb[0].mxu0 %v2036
    %v2096 = vpop.f32.mrb[0].mxu0
    %v2097 = vadd.f32 0.0, %v2096
    %v2098 = vpop.f32.mrb[0].mxu0
    %v2099 = vadd.f32 0.0, %v2098
    %v2100 = vpop.f32.mrb[0].mxu0
    %v2101 = vadd.f32 0.0, %v2100
    %v2102 = vpop.f32.mrb[0].mxu0
    %v2103 = vadd.f32 0.0, %v2102
    %2104 = vmatprep.mubr.bf16.mxu0 0
    %2105 = vmatmul.mubr.bf16.gmra.mrb[0].mxu0 %v2037
    %v2106 = vpop.f32.mrb[0].mxu0
    %v2107 = vadd.f32 0.0, %v2106
    %v2108 = vpop.f32.mrb[0].mxu0
    %v2109 = vadd.f32 0.0, %v2108
    %v2110 = vpop.f32.mrb[0].mxu0
    %v2111 = vadd.f32 0.0, %v2110
    %v2112 = vpop.f32.mrb[0].mxu0
    %v2113 = vadd.f32 0.0, %v2112
    %2114 = vdwg.mxu0
    %2115 = vmatprep.subr.bf16.mxu0 0
    %2116 = vmatpush1.bf16.msra.mxu0 %v753
    %2117 = vmatprep.subr.bf16.mxu0 0
    %2118 = vmatpush1.bf16.msra.mxu0 %v756
    %2119 = vmatprep.subr.bf16.mxu0 0
    %2120 = vmatpush1.bf16.msra.mxu0 %v759
    %2121 = vmatprep.subr.bf16.mxu0 0
    %2122 = vmatpush1.bf16.msra.mxu0 %v762
    %2123 = vmatprep.subr.bf16.mxu0 0
    %2124 = vmatpush1.bf16.msra.mxu0 %v765
    %2125 = vmatprep.subr.bf16.mxu0 0
    %2126 = vmatpush1.bf16.msra.mxu0 %v768
    %2127 = vmatprep.subr.bf16.mxu0 0
    %2128 = vmatpush1.bf16.msra.mxu0 %v771
    %2129 = vmatprep.subr.bf16.mxu0 0
    %2130 = vmatpush1.bf16.msra.mxu0 %v774
    %2131 = vmatprep.subr.bf16.mxu0 0
    %2132 = vmatpush1.bf16.msra.mxu0 0
    %2133 = vmatprep.subr.bf16.mxu0 0
    %2134 = vmatpush1.bf16.msra.mxu0 0
    %2135 = vmatprep.subr.bf16.mxu0 0
    %2136 = vmatpush1.bf16.msra.mxu0 0
    %2137 = vmatprep.subr.bf16.mxu0 0
    %2138 = vmatpush1.bf16.msra.mxu0 0
    %2139 = vmatprep.subr.bf16.mxu0 0
    %2140 = vmatpush1.bf16.msra.mxu0 0
    %2141 = vmatprep.subr.bf16.mxu0 0
    %2142 = vmatpush1.bf16.msra.mxu0 0
    %2143 = vmatprep.subr.bf16.mxu0 0
    %2144 = vmatpush1.bf16.msra.mxu0 0
    %2145 = vmatprep.subr.bf16.mxu0 0
    %2146 = vmatpush1.bf16.msra.mxu0 0
    %2147 = vmatprep.mubr.bf16.mxu0 0
    %2148 = vmatmul.mubr.bf16.gmra.mrb[0].mxu0 %v2034
    %v2149 = vpop.f32.mrb[0].mxu0
    %v2150 = vadd.f32 0.0, %v2149
    %v2151 = vpop.f32.mrb[0].mxu0
    %v2152 = vpop.f32.mrb[0].mxu0
    %v2153 = vadd.f32 0.0, %v2152
    %v2154 = vpop.f32.mrb[0].mxu0
    %2155 = vmatprep.mubr.bf16.mxu0 0
    %2156 = vmatmul.mubr.bf16.gmra.mrb[0].mxu0 %v2035
    %v2157 = vpop.f32.mrb[0].mxu0
    %v2158 = vadd.f32 0.0, %v2157
    %v2159 = vpop.f32.mrb[0].mxu0
    %v2160 = vpop.f32.mrb[0].mxu0
    %v2161 = vadd.f32 0.0, %v2160
    %v2162 = vpop.f32.mrb[0].mxu0
    %2163 = vmatprep.mubr.bf16.mxu0 0
    %2164 = vmatmul.mubr.bf16.gmra.mrb[0].mxu0 %v2036
    %v2165 = vpop.f32.mrb[0].mxu0
    %v2166 = vadd.f32 0.0, %v2165
    %v2167 = vpop.f32.mrb[0].mxu0
    %v2168 = vpop.f32.mrb[0].mxu0
    %v2169 = vadd.f32 0.0, %v2168
    %v2170 = vpop.f32.mrb[0].mxu0
    %2171 = vmatprep.mubr.bf16.mxu0 0
    %2172 = vmatmul.mubr.bf16.gmra.mrb[0].mxu0 %v2037
    %v2173 = vpop.f32.mrb[0].mxu0
    %v2174 = vadd.f32 0.0, %v2173
    %v2175 = vpop.f32.mrb[0].mxu0
    %v2176 = vpop.f32.mrb[0].mxu0
    %v2177 = vadd.f32 0.0, %v2176
    %v2178 = vpop.f32.mrb[0].mxu0
    %2179 = vdwg.mxu0
    %v2180 = vpack.c.bf16 %v2081, %v2077
    %v2181 = vpack.c.bf16 %v2083, %v2079
    %v2182 = vpack.c.bf16 %v2153, %v2150
    %v2183 = vpack.c.bf16 %v2091, %v2087
    %v2184 = vpack.c.bf16 %v2093, %v2089
    %v2185 = vpack.c.bf16 %v2161, %v2158
    %v2186 = vpack.c.bf16 %v2101, %v2097
    %v2187 = vpack.c.bf16 %v2103, %v2099
    %v2188 = vpack.c.bf16 %v2169, %v2166
    %v2189 = vpack.c.bf16 %v2111, %v2107
    %v2190 = vpack.c.bf16 %v2113, %v2109
    %v2191 = vpack.c.bf16 %v2177, %v2174
    %s2192 = scalar_lea.vmem [#allocation5], 768
    %v2193 = vld [vmem:[%s2192] sm:$0xff]
    %v2194 = vld [vmem:[%s2192 + $0x8] sm:$0xff]
    %v2195 = vld [vmem:[%s2192 + $0x10] sm:$0xff]
    %v2196 = vld [vmem:[%s2192 + $0x18] sm:$0xff]
    %v2197 = vld [vmem:[%s2192 + $0x20] sm:$0xff]
    %v2198 = vld [vmem:[%s2192 + $0x28] sm:$0xff]
    %v2199 = vld [vmem:[%s2192 + $0x30] sm:$0xff]
    %v2200 = vld [vmem:[%s2192 + $0x38] sm:$0xff]
    %v2201 = vld [vmem:[%s2192 + $0x40] sm:$0xff]
    %v2202 = vld [vmem:[%s2192 + $0x48] sm:$0xff]
    %v2203 = vld [vmem:[%s2192 + $0x50] sm:$0xff]
    %v2204 = vld [vmem:[%s2192 + $0x58] sm:$0xff]
    %v2205 = vld [vmem:[%s2192 + $0x60] sm:$0xff]
    %v2206 = vld [vmem:[%s2192 + $0x68] sm:$0xff]
    %v2207 = vld [vmem:[%s2192 + $0x70] sm:$0xff]
    %v2208 = vld [vmem:[%s2192 + $0x78] sm:$0xff]
    %v2209 = vld [vmem:[%s2192 + $0x80] sm:$0xff]
    %v2210 = vld [vmem:[%s2192 + $0x88] sm:$0xff]
    %v2211 = vld [vmem:[%s2192 + $0x90] sm:$0xff]
    %v2212 = vld [vmem:[%s2192 + $0x98] sm:$0xff]
    %v2213 = vld [vmem:[%s2192 + $0xa0] sm:$0xff]
    %v2214 = vld [vmem:[%s2192 + $0xa8] sm:$0xff]
    %v2215 = vld [vmem:[%s2192 + $0xb0] sm:$0xff]
    %v2216 = vld [vmem:[%s2192 + $0xb8] sm:$0xff]
    %v2217 = vld [vmem:[%s2192 + $0xc0] sm:$0xff]
    %v2218 = vld [vmem:[%s2192 + $0xc8] sm:$0xff]
    %v2219 = vld [vmem:[%s2192 + $0xd0] sm:$0xff]
    %v2220 = vld [vmem:[%s2192 + $0xd8] sm:$0xff]
    %v2221 = vld [vmem:[%s2192 + $0xe0] sm:$0xff]
    %v2222 = vld [vmem:[%s2192 + $0xe8] sm:$0xff]
    %v2223 = vld [vmem:[%s2192 + $0xf0] sm:$0xff]
    %v2224 = vld [vmem:[%s2192 + $0xf8] sm:$0xff]
    %v2225 = vld [vmem:[%s2192 + $0x100] sm:$0xff]
    %v2226 = vld [vmem:[%s2192 + $0x108] sm:$0xff]
    %v2227 = vld [vmem:[%s2192 + $0x110] sm:$0xff]
    %v2228 = vld [vmem:[%s2192 + $0x118] sm:$0xff]
    %v2229 = vld [vmem:[%s2192 + $0x120] sm:$0xff]
    %v2230 = vld [vmem:[%s2192 + $0x128] sm:$0xff]
    %v2231 = vld [vmem:[%s2192 + $0x130] sm:$0xff]
    %v2232 = vld [vmem:[%s2192 + $0x138] sm:$0xff]
    %v2233 = vld [vmem:[%s2192 + $0x140] sm:$0xff]
    %v2234 = vld [vmem:[%s2192 + $0x148] sm:$0xff]
    %v2235 = vld [vmem:[%s2192 + $0x150] sm:$0xff]
    %v2236 = vld [vmem:[%s2192 + $0x158] sm:$0xff]
    %v2237 = vld [vmem:[%s2192 + $0x160] sm:$0xff]
    %v2238 = vld [vmem:[%s2192 + $0x168] sm:$0xff]
    %v2239 = vld [vmem:[%s2192 + $0x170] sm:$0xff]
    %v2240 = vld [vmem:[%s2192 + $0x178] sm:$0xff]
    %v2289 = vunpack.c.l.b16 %v2193
    %v2290 = vunpack.c.h.b16 %v2193
    %v2291 = vunpack.c.l.b16 %v2194
    %v2292 = vunpack.c.h.b16 %v2194
    %v2293 = vunpack.c.l.b16 %v2195
    %v2294 = vunpack.c.h.b16 %v2195
    %v2295 = vunpack.c.l.b16 %v2196
    %v2296 = vunpack.c.h.b16 %v2196
    %v2297 = vunpack.c.l.b16 %v2197
    %v2298 = vunpack.c.h.b16 %v2197
    %v2299 = vunpack.c.l.b16 %v2198
    %v2300 = vunpack.c.h.b16 %v2198
    %v2301 = vunpack.c.l.b16 %v2199
    %v2302 = vunpack.c.h.b16 %v2199
    %v2303 = vunpack.c.l.b16 %v2200
    %v2304 = vunpack.c.h.b16 %v2200
    %v2305 = vunpack.c.l.b16 %v2201
    %v2306 = vunpack.c.h.b16 %v2201
    %v2307 = vunpack.c.l.b16 %v2202
    %v2308 = vunpack.c.h.b16 %v2202
    %v2309 = vunpack.c.l.b16 %v2203
    %v2310 = vunpack.c.h.b16 %v2203
    %v2311 = vunpack.c.l.b16 %v2204
    %v2312 = vunpack.c.h.b16 %v2204
    %v2313 = vunpack.c.l.b16 %v2205
    %v2314 = vunpack.c.h.b16 %v2205
    %v2315 = vunpack.c.l.b16 %v2206
    %v2316 = vunpack.c.h.b16 %v2206
    %v2317 = vunpack.c.l.b16 %v2207
    %v2318 = vunpack.c.h.b16 %v2207
    %v2319 = vunpack.c.l.b16 %v2208
    %v2320 = vunpack.c.h.b16 %v2208
    %v2321 = vunpack.c.l.b16 %v2209
    %v2322 = vunpack.c.h.b16 %v2209
    %v2323 = vunpack.c.l.b16 %v2210
    %v2324 = vunpack.c.h.b16 %v2210
    %v2325 = vunpack.c.l.b16 %v2211
    %v2326 = vunpack.c.h.b16 %v2211
    %v2327 = vunpack.c.l.b16 %v2212
    %v2328 = vunpack.c.h.b16 %v2212
    %v2329 = vunpack.c.l.b16 %v2213
    %v2330 = vunpack.c.h.b16 %v2213
    %v2331 = vunpack.c.l.b16 %v2214
    %v2332 = vunpack.c.h.b16 %v2214
    %v2333 = vunpack.c.l.b16 %v2215
    %v2334 = vunpack.c.h.b16 %v2215
    %v2335 = vunpack.c.l.b16 %v2216
    %v2336 = vunpack.c.h.b16 %v2216
    %v2337 = vunpack.c.l.b16 %v2217
    %v2338 = vunpack.c.h.b16 %v2217
    %v2339 = vunpack.c.l.b16 %v2218
    %v2340 = vunpack.c.h.b16 %v2218
    %v2341 = vunpack.c.l.b16 %v2219
    %v2342 = vunpack.c.h.b16 %v2219
    %v2343 = vunpack.c.l.b16 %v2220
    %v2344 = vunpack.c.h.b16 %v2220
    %v2345 = vunpack.c.l.b16 %v2221
    %v2346 = vunpack.c.h.b16 %v2221
    %v2347 = vunpack.c.l.b16 %v2222
    %v2348 = vunpack.c.h.b16 %v2222
    %v2349 = vunpack.c.l.b16 %v2223
    %v2350 = vunpack.c.h.b16 %v2223
    %v2351 = vunpack.c.l.b16 %v2224
    %v2352 = vunpack.c.h.b16 %v2224
    %v2353 = vunpack.c.l.b16 %v2225
    %v2354 = vunpack.c.h.b16 %v2225
    %v2355 = vunpack.c.l.b16 %v2226
    %v2356 = vunpack.c.h.b16 %v2226
    %v2357 = vunpack.c.l.b16 %v2227
    %v2358 = vunpack.c.h.b16 %v2227
    %v2359 = vunpack.c.l.b16 %v2228
    %v2360 = vunpack.c.h.b16 %v2228
    %v2361 = vunpack.c.l.b16 %v2229
    %v2362 = vunpack.c.h.b16 %v2229
    %v2363 = vunpack.c.l.b16 %v2230
    %v2364 = vunpack.c.h.b16 %v2230
    %v2365 = vunpack.c.l.b16 %v2231
    %v2366 = vunpack.c.h.b16 %v2231
    %v2367 = vunpack.c.l.b16 %v2232
    %v2368 = vunpack.c.h.b16 %v2232
    %v2369 = vunpack.c.l.b16 %v2233
    %v2370 = vunpack.c.h.b16 %v2233
    %v2371 = vunpack.c.l.b16 %v2234
    %v2372 = vunpack.c.h.b16 %v2234
    %v2373 = vunpack.c.l.b16 %v2235
    %v2374 = vunpack.c.h.b16 %v2235
    %v2375 = vunpack.c.l.b16 %v2236
    %v2376 = vunpack.c.h.b16 %v2236
    %v2377 = vunpack.c.l.b16 %v2237
    %v2378 = vunpack.c.h.b16 %v2237
    %v2379 = vunpack.c.l.b16 %v2238
    %v2380 = vunpack.c.h.b16 %v2238
    %v2381 = vunpack.c.l.b16 %v2239
    %v2382 = vunpack.c.h.b16 %v2239
    %v2383 = vunpack.c.l.b16 %v2240
    %v2384 = vunpack.c.h.b16 %v2240
    %v2385 = vpack.c.b16 %v2291, %v2289
    %v2386 = vpack.c.b16 %v2292, %v2290
    %v2387 = vpack.c.b16 %v2295, %v2293
    %v2388 = vpack.c.b16 %v2296, %v2294
    %v2389 = vpack.c.b16 %v2299, %v2297
    %v2390 = vpack.c.b16 %v2300, %v2298
    %v2391 = vpack.c.b16 %v2303, %v2301
    %v2392 = vpack.c.b16 %v2304, %v2302
    %v2393 = vpack.c.b16 %v2307, %v2305
    %v2394 = vpack.c.b16 %v2308, %v2306
    %v2395 = vpack.c.b16 %v2311, %v2309
    %v2396 = vpack.c.b16 %v2312, %v2310
    %v2397 = vpack.c.b16 %v2315, %v2313
    %v2398 = vpack.c.b16 %v2316, %v2314
    %v2399 = vpack.c.b16 %v2319, %v2317
    %v2400 = vpack.c.b16 %v2320, %v2318
    %v2401 = vpack.c.b16 %v2323, %v2321
    %v2402 = vpack.c.b16 %v2324, %v2322
    %v2403 = vpack.c.b16 %v2327, %v2325
    %v2404 = vpack.c.b16 %v2328, %v2326
    %v2405 = vpack.c.b16 %v2331, %v2329
    %v2406 = vpack.c.b16 %v2332, %v2330
    %v2407 = vpack.c.b16 %v2335, %v2333
    %v2408 = vpack.c.b16 %v2336, %v2334
    %v2409 = vpack.c.b16 %v2339, %v2337
    %v2410 = vpack.c.b16 %v2340, %v2338
    %v2411 = vpack.c.b16 %v2343, %v2341
    %v2412 = vpack.c.b16 %v2344, %v2342
    %v2413 = vpack.c.b16 %v2347, %v2345
    %v2414 = vpack.c.b16 %v2348, %v2346
    %v2415 = vpack.c.b16 %v2351, %v2349
    %v2416 = vpack.c.b16 %v2352, %v2350
    %v2417 = vpack.c.b16 %v2355, %v2353
    %v2418 = vpack.c.b16 %v2356, %v2354
    %v2419 = vpack.c.b16 %v2359, %v2357
    %v2420 = vpack.c.b16 %v2360, %v2358
    %v2421 = vpack.c.b16 %v2363, %v2361
    %v2422 = vpack.c.b16 %v2364, %v2362
    %v2423 = vpack.c.b16 %v2367, %v2365
    %v2424 = vpack.c.b16 %v2368, %v2366
    %v2425 = vpack.c.b16 %v2371, %v2369
    %v2426 = vpack.c.b16 %v2372, %v2370
    %v2427 = vpack.c.b16 %v2375, %v2373
    %v2428 = vpack.c.b16 %v2376, %v2374
    %v2429 = vpack.c.b16 %v2379, %v2377
    %v2430 = vpack.c.b16 %v2380, %v2378
    %v2431 = vpack.c.b16 %v2383, %v2381
    %v2432 = vpack.c.b16 %v2384, %v2382
    %2481 = vmatprep.subr.bf16.mxu0 %v2386
    %2482 = vmatpush1.bf16.msra.mxu0 %v2385
    %2483 = vmatprep.subr.bf16.mxu0 %v2388
    %2484 = vmatpush1.bf16.msra.mxu0 %v2387
    %2485 = vmatprep.subr.bf16.mxu0 %v2390
    %2486 = vmatpush1.bf16.msra.mxu0 %v2389
    %2487 = vmatprep.subr.bf16.mxu0 %v2392
    %2488 = vmatpush1.bf16.msra.mxu0 %v2391
    %2489 = vmatprep.subr.bf16.mxu0 %v2394
    %2490 = vmatpush1.bf16.msra.mxu0 %v2393
    %2491 = vmatprep.subr.bf16.mxu0 %v2396
    %2492 = vmatpush1.bf16.msra.mxu0 %v2395
    %2493 = vmatprep.subr.bf16.mxu0 %v2398
    %2494 = vmatpush1.bf16.msra.mxu0 %v2397
    %2495 = vmatprep.subr.bf16.mxu0 %v2400
    %2496 = vmatpush1.bf16.msra.mxu0 %v2399
    %2497 = vmatprep.subr.bf16.mxu0 %v2402
    %2498 = vmatpush1.bf16.msra.mxu0 %v2401
    %2499 = vmatprep.subr.bf16.mxu0 %v2404
    %2500 = vmatpush1.bf16.msra.mxu0 %v2403
    %2501 = vmatprep.subr.bf16.mxu0 %v2406
    %2502 = vmatpush1.bf16.msra.mxu0 %v2405
    %2503 = vmatprep.subr.bf16.mxu0 %v2408
    %2504 = vmatpush1.bf16.msra.mxu0 %v2407
    %2505 = vmatprep.subr.bf16.mxu0 %v2410
    %2506 = vmatpush1.bf16.msra.mxu0 %v2409
    %2507 = vmatprep.subr.bf16.mxu0 %v2412
    %2508 = vmatpush1.bf16.msra.mxu0 %v2411
    %2509 = vmatprep.subr.bf16.mxu0 %v2414
    %2510 = vmatpush1.bf16.msra.mxu0 %v2413
    %2511 = vmatprep.subr.bf16.mxu0 %v2416
    %2512 = vmatpush1.bf16.msra.mxu0 %v2415
    %2513 = vmatprep.mubr.bf16.mxu0 %v2181
    %2514 = vmatmul.mubr.bf16.gmra.mrb[0].mxu0 %v2180
    %v2515 = vpop.f32.mrb[0].mxu0
    %v2516 = vadd.f32 0.0, %v2515
    %v2517 = vpop.f32.mrb[0].mxu0
    %v2518 = vadd.f32 0.0, %v2517
    %v2519 = vpop.f32.mrb[0].mxu0
    %v2520 = vadd.f32 0.0, %v2519
    %v2521 = vpop.f32.mrb[0].mxu0
    %v2522 = vadd.f32 0.0, %v2521
    %2523 = vmatprep.mubr.bf16.mxu0 %v2184
    %2524 = vmatmul.mubr.bf16.gmra.mrb[0].mxu0 %v2183
    %v2525 = vpop.f32.mrb[0].mxu0
    %v2526 = vadd.f32 0.0, %v2525
    %v2527 = vpop.f32.mrb[0].mxu0
    %v2528 = vadd.f32 0.0, %v2527
    %v2529 = vpop.f32.mrb[0].mxu0
    %v2530 = vadd.f32 0.0, %v2529
    %v2531 = vpop.f32.mrb[0].mxu0
    %v2532 = vadd.f32 0.0, %v2531
    %2533 = vmatprep.mubr.bf16.mxu0 %v2187
    %2534 = vmatmul.mubr.bf16.gmra.mrb[0].mxu0 %v2186
    %v2535 = vpop.f32.mrb[0].mxu0
    %v2536 = vadd.f32 0.0, %v2535
    %v2537 = vpop.f32.mrb[0].mxu0
    %v2538 = vadd.f32 0.0, %v2537
    %v2539 = vpop.f32.mrb[0].mxu0
    %v2540 = vadd.f32 0.0, %v2539
    %v2541 = vpop.f32.mrb[0].mxu0
    %v2542 = vadd.f32 0.0, %v2541
    %2543 = vmatprep.mubr.bf16.mxu0 %v2190
    %2544 = vmatmul.mubr.bf16.gmra.mrb[0].mxu0 %v2189
    %v2545 = vpop.f32.mrb[0].mxu0
    %v2546 = vadd.f32 0.0, %v2545
    %v2547 = vpop.f32.mrb[0].mxu0
    %v2548 = vadd.f32 0.0, %v2547
    %v2549 = vpop.f32.mrb[0].mxu0
    %v2550 = vadd.f32 0.0, %v2549
    %v2551 = vpop.f32.mrb[0].mxu0
    %v2552 = vadd.f32 0.0, %v2551
    %2553 = vdwg.mxu0
    %2554 = vmatprep.subr.bf16.mxu0 %v2418
    %2555 = vmatpush1.bf16.msra.mxu0 %v2417
    %2556 = vmatprep.subr.bf16.mxu0 %v2420
    %2557 = vmatpush1.bf16.msra.mxu0 %v2419
    %2558 = vmatprep.subr.bf16.mxu0 %v2422
    %2559 = vmatpush1.bf16.msra.mxu0 %v2421
    %2560 = vmatprep.subr.bf16.mxu0 %v2424
    %2561 = vmatpush1.bf16.msra.mxu0 %v2423
    %2562 = vmatprep.subr.bf16.mxu0 %v2426
    %2563 = vmatpush1.bf16.msra.mxu0 %v2425
    %2564 = vmatprep.subr.bf16.mxu0 %v2428
    %2565 = vmatpush1.bf16.msra.mxu0 %v2427
    %2566 = vmatprep.subr.bf16.mxu0 %v2430
    %2567 = vmatpush1.bf16.msra.mxu0 %v2429
    %2568 = vmatprep.subr.bf16.mxu0 %v2432
    %2569 = vmatpush1.bf16.msra.mxu0 %v2431
    %2570 = vmatprep.subr.bf16.mxu0 0
    %2571 = vmatpush1.bf16.msra.mxu0 0
    %2572 = vmatprep.subr.bf16.mxu0 0
    %2573 = vmatpush1.bf16.msra.mxu0 0
    %2574 = vmatprep.subr.bf16.mxu0 0
    %2575 = vmatpush1.bf16.msra.mxu0 0
    %2576 = vmatprep.subr.bf16.mxu0 0
    %2577 = vmatpush1.bf16.msra.mxu0 0
    %2578 = vmatprep.subr.bf16.mxu0 0
    %2579 = vmatpush1.bf16.msra.mxu0 0
    %2580 = vmatprep.subr.bf16.mxu0 0
    %2581 = vmatpush1.bf16.msra.mxu0 0
    %2582 = vmatprep.subr.bf16.mxu0 0
    %2583 = vmatpush1.bf16.msra.mxu0 0
    %2584 = vmatprep.subr.bf16.mxu0 0
    %2585 = vmatpush1.bf16.msra.mxu0 0
    %2586 = vmatprep.mubr.bf16.mxu0 0
    %2587 = vmatmul.mubr.bf16.gmra.mrb[0].mxu0 %v2182
    %v2588 = vpop.f32.mrb[0].mxu0
    %v2589 = vadd.f32 %v2516, %v2588
    %v2590 = vpop.f32.mrb[0].mxu0
    %v2591 = vadd.f32 %v2518, %v2590
    %v2592 = vpop.f32.mrb[0].mxu0
    %v2593 = vadd.f32 %v2520, %v2592
    %v2594 = vpop.f32.mrb[0].mxu0
    %v2595 = vadd.f32 %v2522, %v2594
    %2596 = vmatprep.mubr.bf16.mxu0 0
    %2597 = vmatmul.mubr.bf16.gmra.mrb[0].mxu0 %v2185
    %v2598 = vpop.f32.mrb[0].mxu0
    %v2599 = vadd.f32 %v2526, %v2598
    %v2600 = vpop.f32.mrb[0].mxu0
    %v2601 = vadd.f32 %v2528, %v2600
    %v2602 = vpop.f32.mrb[0].mxu0
    %v2603 = vadd.f32 %v2530, %v2602
    %v2604 = vpop.f32.mrb[0].mxu0
    %v2605 = vadd.f32 %v2532, %v2604
    %2606 = vmatprep.mubr.bf16.mxu0 0
    %2607 = vmatmul.mubr.bf16.gmra.mrb[0].mxu0 %v2188
    %v2608 = vpop.f32.mrb[0].mxu0
    %v2609 = vadd.f32 %v2536, %v2608
    %v2610 = vpop.f32.mrb[0].mxu0
    %v2611 = vadd.f32 %v2538, %v2610
    %v2612 = vpop.f32.mrb[0].mxu0
    %v2613 = vadd.f32 %v2540, %v2612
    %v2614 = vpop.f32.mrb[0].mxu0
    %v2615 = vadd.f32 %v2542, %v2614
    %2616 = vmatprep.mubr.bf16.mxu0 0
    %2617 = vmatmul.mubr.bf16.gmra.mrb[0].mxu0 %v2191
    %v2618 = vpop.f32.mrb[0].mxu0
    %v2619 = vadd.f32 %v2546, %v2618
    %v2620 = vpop.f32.mrb[0].mxu0
    %v2621 = vadd.f32 %v2548, %v2620
    %v2622 = vpop.f32.mrb[0].mxu0
    %v2623 = vadd.f32 %v2550, %v2622
    %v2624 = vpop.f32.mrb[0].mxu0
    %v2625 = vadd.f32 %v2552, %v2624
    %2626 = vdwg.mxu0
    %v2627 = vadd.f32 %v1971, %v2589
    %v2628 = vadd.f32 %v1973, %v2591
    %v2629 = vadd.f32 %v1975, %v2593
    %v2630 = vadd.f32 %v1977, %v2595
    %v2631 = vadd.f32 %v1981, %v2599
    %v2632 = vadd.f32 %v1983, %v2601
    %v2633 = vadd.f32 %v1985, %v2603
    %v2634 = vadd.f32 %v1987, %v2605
    %v2635 = vadd.f32 %v1991, %v2609
    %v2636 = vadd.f32 %v1993, %v2611
    %v2637 = vadd.f32 %v1995, %v2613
    %v2638 = vadd.f32 %v1997, %v2615
    %v2639 = vadd.f32 %v2001, %v2619
    %v2640 = vadd.f32 %v2003, %v2621
    %v2641 = vadd.f32 %v2005, %v2623
    %v2642 = vadd.f32 %v2007, %v2625
    %s2643 = scalar_lea.vmem %s2, 96
    %v2644 = vld [vmem:[%s2643] sm:$0xf]
    %v2645 = vld [vmem:[%s2643 + $0x4] sm:$0xf]
    %v2646 = vld [vmem:[%s2643 + $0x8] sm:$0xf]
    %v2647 = vld [vmem:[%s2643 + $0xc] sm:$0xf]
    %v2648 = vld [vmem:[%s2643 + $0x10] sm:$0xf]
    %v2649 = vld [vmem:[%s2643 + $0x14] sm:$0xf]
    %v2650 = vld [vmem:[%s2643 + $0x18] sm:$0xf]
    %v2651 = vld [vmem:[%s2643 + $0x1c] sm:$0xf]
    %v2660 = vunpack.c.l.b16 %v2644
    %v2661 = vunpack.c.l.b16 %v2645
    %v2662 = vunpack.c.l.b16 %v2646
    %v2663 = vunpack.c.l.b16 %v2647
    %v2664 = vunpack.c.l.b16 %v2648
    %v2665 = vunpack.c.l.b16 %v2649
    %v2666 = vunpack.c.l.b16 %v2650
    %v2667 = vunpack.c.l.b16 %v2651
    %v2668 = vpack.c.b16 %v2661, %v2660
    %v2669 = vpack.c.b16 %v2663, %v2662
    %v2670 = vpack.c.b16 %v2665, %v2664
    %v2671 = vpack.c.b16 %v2667, %v2666
    %2676 = vmatprep.subr.bf16.mxu0 %v752
    %2677 = vmatpush1.bf16.msra.mxu0 %v751
    %2678 = vmatprep.subr.bf16.mxu0 %v755
    %2679 = vmatpush1.bf16.msra.mxu0 %v754
    %2680 = vmatprep.subr.bf16.mxu0 %v758
    %2681 = vmatpush1.bf16.msra.mxu0 %v757
    %2682 = vmatprep.subr.bf16.mxu0 %v761
    %2683 = vmatpush1.bf16.msra.mxu0 %v760
    %2684 = vmatprep.subr.bf16.mxu0 %v764
    %2685 = vmatpush1.bf16.msra.mxu0 %v763
    %2686 = vmatprep.subr.bf16.mxu0 %v767
    %2687 = vmatpush1.bf16.msra.mxu0 %v766
    %2688 = vmatprep.subr.bf16.mxu0 %v770
    %2689 = vmatpush1.bf16.msra.mxu0 %v769
    %2690 = vmatprep.subr.bf16.mxu0 %v773
    %2691 = vmatpush1.bf16.msra.mxu0 %v772
    %2692 = vmatprep.subr.bf16.mxu0 0
    %2693 = vmatpush1.bf16.msra.mxu0 0
    %2694 = vmatprep.subr.bf16.mxu0 0
    %2695 = vmatpush1.bf16.msra.mxu0 0
    %2696 = vmatprep.subr.bf16.mxu0 0
    %2697 = vmatpush1.bf16.msra.mxu0 0
    %2698 = vmatprep.subr.bf16.mxu0 0
    %2699 = vmatpush1.bf16.msra.mxu0 0
    %2700 = vmatprep.subr.bf16.mxu0 0
    %2701 = vmatpush1.bf16.msra.mxu0 0
    %2702 = vmatprep.subr.bf16.mxu0 0
    %2703 = vmatpush1.bf16.msra.mxu0 0
    %2704 = vmatprep.subr.bf16.mxu0 0
    %2705 = vmatpush1.bf16.msra.mxu0 0
    %2706 = vmatprep.subr.bf16.mxu0 0
    %2707 = vmatpush1.bf16.msra.mxu0 0
    %2708 = vmatprep.mubr.bf16.mxu0 0
    %2709 = vmatmul.mubr.bf16.gmra.mrb[0].mxu0 %v2668
    %v2710 = vpop.f32.mrb[0].mxu0
    %v2711 = vadd.f32 0.0, %v2710
    %v2712 = vpop.f32.mrb[0].mxu0
    %v2713 = vadd.f32 0.0, %v2712
    %v2714 = vpop.f32.mrb[0].mxu0
    %v2715 = vadd.f32 0.0, %v2714
    %v2716 = vpop.f32.mrb[0].mxu0
    %v2717 = vadd.f32 0.0, %v2716
    %2718 = vmatprep.mubr.bf16.mxu0 0
    %2719 = vmatmul.mubr.bf16.gmra.mrb[0].mxu0 %v2669
    %v2720 = vpop.f32.mrb[0].mxu0
    %v2721 = vadd.f32 0.0, %v2720
    %v2722 = vpop.f32.mrb[0].mxu0
    %v2723 = vadd.f32 0.0, %v2722
    %v2724 = vpop.f32.mrb[0].mxu0
    %v2725 = vadd.f32 0.0, %v2724
    %v2726 = vpop.f32.mrb[0].mxu0
    %v2727 = vadd.f32 0.0, %v2726
    %2728 = vmatprep.mubr.bf16.mxu0 0
    %2729 = vmatmul.mubr.bf16.gmra.mrb[0].mxu0 %v2670
    %v2730 = vpop.f32.mrb[0].mxu0
    %v2731 = vadd.f32 0.0, %v2730
    %v2732 = vpop.f32.mrb[0].mxu0
    %v2733 = vadd.f32 0.0, %v2732
    %v2734 = vpop.f32.mrb[0].mxu0
    %v2735 = vadd.f32 0.0, %v2734
    %v2736 = vpop.f32.mrb[0].mxu0
    %v2737 = vadd.f32 0.0, %v2736
    %2738 = vmatprep.mubr.bf16.mxu0 0
    %2739 = vmatmul.mubr.bf16.gmra.mrb[0].mxu0 %v2671
    %v2740 = vpop.f32.mrb[0].mxu0
    %v2741 = vadd.f32 0.0, %v2740
    %v2742 = vpop.f32.mrb[0].mxu0
    %v2743 = vadd.f32 0.0, %v2742
    %v2744 = vpop.f32.mrb[0].mxu0
    %v2745 = vadd.f32 0.0, %v2744
    %v2746 = vpop.f32.mrb[0].mxu0
    %v2747 = vadd.f32 0.0, %v2746
    %2748 = vdwg.mxu0
    %2749 = vmatprep.subr.bf16.mxu0 0
    %2750 = vmatpush1.bf16.msra.mxu0 %v753
    %2751 = vmatprep.subr.bf16.mxu0 0
    %2752 = vmatpush1.bf16.msra.mxu0 %v756
    %2753 = vmatprep.subr.bf16.mxu0 0
    %2754 = vmatpush1.bf16.msra.mxu0 %v759
    %2755 = vmatprep.subr.bf16.mxu0 0
    %2756 = vmatpush1.bf16.msra.mxu0 %v762
    %2757 = vmatprep.subr.bf16.mxu0 0
    %2758 = vmatpush1.bf16.msra.mxu0 %v765
    %2759 = vmatprep.subr.bf16.mxu0 0
    %2760 = vmatpush1.bf16.msra.mxu0 %v768
    %2761 = vmatprep.subr.bf16.mxu0 0
    %2762 = vmatpush1.bf16.msra.mxu0 %v771
    %2763 = vmatprep.subr.bf16.mxu0 0
    %2764 = vmatpush1.bf16.msra.mxu0 %v774
    %2765 = vmatprep.subr.bf16.mxu0 0
    %2766 = vmatpush1.bf16.msra.mxu0 0
    %2767 = vmatprep.subr.bf16.mxu0 0
    %2768 = vmatpush1.bf16.msra.mxu0 0
    %2769 = vmatprep.subr.bf16.mxu0 0
    %2770 = vmatpush1.bf16.msra.mxu0 0
    %2771 = vmatprep.subr.bf16.mxu0 0
    %2772 = vmatpush1.bf16.msra.mxu0 0
    %2773 = vmatprep.subr.bf16.mxu0 0
    %2774 = vmatpush1.bf16.msra.mxu0 0
    %2775 = vmatprep.subr.bf16.mxu0 0
    %2776 = vmatpush1.bf16.msra.mxu0 0
    %2777 = vmatprep.subr.bf16.mxu0 0
    %2778 = vmatpush1.bf16.msra.mxu0 0
    %2779 = vmatprep.subr.bf16.mxu0 0
    %2780 = vmatpush1.bf16.msra.mxu0 0
    %2781 = vmatprep.mubr.bf16.mxu0 0
    %2782 = vmatmul.mubr.bf16.gmra.mrb[0].mxu0 %v2668
    %v2783 = vpop.f32.mrb[0].mxu0
    %v2784 = vadd.f32 0.0, %v2783
    %v2785 = vpop.f32.mrb[0].mxu0
    %v2786 = vpop.f32.mrb[0].mxu0
    %v2787 = vadd.f32 0.0, %v2786
    %v2788 = vpop.f32.mrb[0].mxu0
    %2789 = vmatprep.mubr.bf16.mxu0 0
    %2790 = vmatmul.mubr.bf16.gmra.mrb[0].mxu0 %v2669
    %v2791 = vpop.f32.mrb[0].mxu0
    %v2792 = vadd.f32 0.0, %v2791
    %v2793 = vpop.f32.mrb[0].mxu0
    %v2794 = vpop.f32.mrb[0].mxu0
    %v2795 = vadd.f32 0.0, %v2794
    %v2796 = vpop.f32.mrb[0].mxu0
    %2797 = vmatprep.mubr.bf16.mxu0 0
    %2798 = vmatmul.mubr.bf16.gmra.mrb[0].mxu0 %v2670
    %v2799 = vpop.f32.mrb[0].mxu0
    %v2800 = vadd.f32 0.0, %v2799
    %v2801 = vpop.f32.mrb[0].mxu0
    %v2802 = vpop.f32.mrb[0].mxu0
    %v2803 = vadd.f32 0.0, %v2802
    %v2804 = vpop.f32.mrb[0].mxu0
    %2805 = vmatprep.mubr.bf16.mxu0 0
    %2806 = vmatmul.mubr.bf16.gmra.mrb[0].mxu0 %v2671
    %v2807 = vpop.f32.mrb[0].mxu0
    %v2808 = vadd.f32 0.0, %v2807
    %v2809 = vpop.f32.mrb[0].mxu0
    %v2810 = vpop.f32.mrb[0].mxu0
    %v2811 = vadd.f32 0.0, %v2810
    %v2812 = vpop.f32.mrb[0].mxu0
    %2813 = vdwg.mxu0
    %v2814 = vpack.c.bf16 %v2715, %v2711
    %v2815 = vpack.c.bf16 %v2717, %v2713
    %v2816 = vpack.c.bf16 %v2787, %v2784
    %v2817 = vpack.c.bf16 %v2725, %v2721
    %v2818 = vpack.c.bf16 %v2727, %v2723
    %v2819 = vpack.c.bf16 %v2795, %v2792
    %v2820 = vpack.c.bf16 %v2735, %v2731
    %v2821 = vpack.c.bf16 %v2737, %v2733
    %v2822 = vpack.c.bf16 %v2803, %v2800
    %v2823 = vpack.c.bf16 %v2745, %v2741
    %v2824 = vpack.c.bf16 %v2747, %v2743
    %v2825 = vpack.c.bf16 %v2811, %v2808
    %s2826 = scalar_lea.vmem [#allocation5], 1152
    %v2827 = vld [vmem:[%s2826] sm:$0xff]
    %v2828 = vld [vmem:[%s2826 + $0x8] sm:$0xff]
    %v2829 = vld [vmem:[%s2826 + $0x10] sm:$0xff]
    %v2830 = vld [vmem:[%s2826 + $0x18] sm:$0xff]
    %v2831 = vld [vmem:[%s2826 + $0x20] sm:$0xff]
    %v2832 = vld [vmem:[%s2826 + $0x28] sm:$0xff]
    %v2833 = vld [vmem:[%s2826 + $0x30] sm:$0xff]
    %v2834 = vld [vmem:[%s2826 + $0x38] sm:$0xff]
    %v2835 = vld [vmem:[%s2826 + $0x40] sm:$0xff]
    %v2836 = vld [vmem:[%s2826 + $0x48] sm:$0xff]
    %v2837 = vld [vmem:[%s2826 + $0x50] sm:$0xff]
    %v2838 = vld [vmem:[%s2826 + $0x58] sm:$0xff]
    %v2839 = vld [vmem:[%s2826 + $0x60] sm:$0xff]
    %v2840 = vld [vmem:[%s2826 + $0x68] sm:$0xff]
    %v2841 = vld [vmem:[%s2826 + $0x70] sm:$0xff]
    %v2842 = vld [vmem:[%s2826 + $0x78] sm:$0xff]
    %v2843 = vld [vmem:[%s2826 + $0x80] sm:$0xff]
    %v2844 = vld [vmem:[%s2826 + $0x88] sm:$0xff]
    %v2845 = vld [vmem:[%s2826 + $0x90] sm:$0xff]
    %v2846 = vld [vmem:[%s2826 + $0x98] sm:$0xff]
    %v2847 = vld [vmem:[%s2826 + $0xa0] sm:$0xff]
    %v2848 = vld [vmem:[%s2826 + $0xa8] sm:$0xff]
    %v2849 = vld [vmem:[%s2826 + $0xb0] sm:$0xff]
    %v2850 = vld [vmem:[%s2826 + $0xb8] sm:$0xff]
    %v2851 = vld [vmem:[%s2826 + $0xc0] sm:$0xff]
    %v2852 = vld [vmem:[%s2826 + $0xc8] sm:$0xff]
    %v2853 = vld [vmem:[%s2826 + $0xd0] sm:$0xff]
    %v2854 = vld [vmem:[%s2826 + $0xd8] sm:$0xff]
    %v2855 = vld [vmem:[%s2826 + $0xe0] sm:$0xff]
    %v2856 = vld [vmem:[%s2826 + $0xe8] sm:$0xff]
    %v2857 = vld [vmem:[%s2826 + $0xf0] sm:$0xff]
    %v2858 = vld [vmem:[%s2826 + $0xf8] sm:$0xff]
    %v2859 = vld [vmem:[%s2826 + $0x100] sm:$0xff]
    %v2860 = vld [vmem:[%s2826 + $0x108] sm:$0xff]
    %v2861 = vld [vmem:[%s2826 + $0x110] sm:$0xff]
    %v2862 = vld [vmem:[%s2826 + $0x118] sm:$0xff]
    %v2863 = vld [vmem:[%s2826 + $0x120] sm:$0xff]
    %v2864 = vld [vmem:[%s2826 + $0x128] sm:$0xff]
    %v2865 = vld [vmem:[%s2826 + $0x130] sm:$0xff]
    %v2866 = vld [vmem:[%s2826 + $0x138] sm:$0xff]
    %v2867 = vld [vmem:[%s2826 + $0x140] sm:$0xff]
    %v2868 = vld [vmem:[%s2826 + $0x148] sm:$0xff]
    %v2869 = vld [vmem:[%s2826 + $0x150] sm:$0xff]
    %v2870 = vld [vmem:[%s2826 + $0x158] sm:$0xff]
    %v2871 = vld [vmem:[%s2826 + $0x160] sm:$0xff]
    %v2872 = vld [vmem:[%s2826 + $0x168] sm:$0xff]
    %v2873 = vld [vmem:[%s2826 + $0x170] sm:$0xff]
    %v2874 = vld [vmem:[%s2826 + $0x178] sm:$0xff]
    %v2923 = vunpack.c.l.b16 %v2827
    %v2924 = vunpack.c.h.b16 %v2827
    %v2925 = vunpack.c.l.b16 %v2828
    %v2926 = vunpack.c.h.b16 %v2828
    %v2927 = vunpack.c.l.b16 %v2829
    %v2928 = vunpack.c.h.b16 %v2829
    %v2929 = vunpack.c.l.b16 %v2830
    %v2930 = vunpack.c.h.b16 %v2830
    %v2931 = vunpack.c.l.b16 %v2831
    %v2932 = vunpack.c.h.b16 %v2831
    %v2933 = vunpack.c.l.b16 %v2832
    %v2934 = vunpack.c.h.b16 %v2832
    %v2935 = vunpack.c.l.b16 %v2833
    %v2936 = vunpack.c.h.b16 %v2833
    %v2937 = vunpack.c.l.b16 %v2834
    %v2938 = vunpack.c.h.b16 %v2834
    %v2939 = vunpack.c.l.b16 %v2835
    %v2940 = vunpack.c.h.b16 %v2835
    %v2941 = vunpack.c.l.b16 %v2836
    %v2942 = vunpack.c.h.b16 %v2836
    %v2943 = vunpack.c.l.b16 %v2837
    %v2944 = vunpack.c.h.b16 %v2837
    %v2945 = vunpack.c.l.b16 %v2838
    %v2946 = vunpack.c.h.b16 %v2838
    %v2947 = vunpack.c.l.b16 %v2839
    %v2948 = vunpack.c.h.b16 %v2839
    %v2949 = vunpack.c.l.b16 %v2840
    %v2950 = vunpack.c.h.b16 %v2840
    %v2951 = vunpack.c.l.b16 %v2841
    %v2952 = vunpack.c.h.b16 %v2841
    %v2953 = vunpack.c.l.b16 %v2842
    %v2954 = vunpack.c.h.b16 %v2842
    %v2955 = vunpack.c.l.b16 %v2843
    %v2956 = vunpack.c.h.b16 %v2843
    %v2957 = vunpack.c.l.b16 %v2844
    %v2958 = vunpack.c.h.b16 %v2844
    %v2959 = vunpack.c.l.b16 %v2845
    %v2960 = vunpack.c.h.b16 %v2845
    %v2961 = vunpack.c.l.b16 %v2846
    %v2962 = vunpack.c.h.b16 %v2846
    %v2963 = vunpack.c.l.b16 %v2847
    %v2964 = vunpack.c.h.b16 %v2847
    %v2965 = vunpack.c.l.b16 %v2848
    %v2966 = vunpack.c.h.b16 %v2848
    %v2967 = vunpack.c.l.b16 %v2849
    %v2968 = vunpack.c.h.b16 %v2849
    %v2969 = vunpack.c.l.b16 %v2850
    %v2970 = vunpack.c.h.b16 %v2850
    %v2971 = vunpack.c.l.b16 %v2851
    %v2972 = vunpack.c.h.b16 %v2851
    %v2973 = vunpack.c.l.b16 %v2852
    %v2974 = vunpack.c.h.b16 %v2852
    %v2975 = vunpack.c.l.b16 %v2853
    %v2976 = vunpack.c.h.b16 %v2853
    %v2977 = vunpack.c.l.b16 %v2854
    %v2978 = vunpack.c.h.b16 %v2854
    %v2979 = vunpack.c.l.b16 %v2855
    %v2980 = vunpack.c.h.b16 %v2855
    %v2981 = vunpack.c.l.b16 %v2856
    %v2982 = vunpack.c.h.b16 %v2856
    %v2983 = vunpack.c.l.b16 %v2857
    %v2984 = vunpack.c.h.b16 %v2857
    %v2985 = vunpack.c.l.b16 %v2858
    %v2986 = vunpack.c.h.b16 %v2858
    %v2987 = vunpack.c.l.b16 %v2859
    %v2988 = vunpack.c.h.b16 %v2859
    %v2989 = vunpack.c.l.b16 %v2860
    %v2990 = vunpack.c.h.b16 %v2860
    %v2991 = vunpack.c.l.b16 %v2861
    %v2992 = vunpack.c.h.b16 %v2861
    %v2993 = vunpack.c.l.b16 %v2862
    %v2994 = vunpack.c.h.b16 %v2862
    %v2995 = vunpack.c.l.b16 %v2863
    %v2996 = vunpack.c.h.b16 %v2863
    %v2997 = vunpack.c.l.b16 %v2864
    %v2998 = vunpack.c.h.b16 %v2864
    %v2999 = vunpack.c.l.b16 %v2865
    %v3000 = vunpack.c.h.b16 %v2865
    %v3001 = vunpack.c.l.b16 %v2866
    %v3002 = vunpack.c.h.b16 %v2866
    %v3003 = vunpack.c.l.b16 %v2867
    %v3004 = vunpack.c.h.b16 %v2867
    %v3005 = vunpack.c.l.b16 %v2868
    %v3006 = vunpack.c.h.b16 %v2868
    %v3007 = vunpack.c.l.b16 %v2869
    %v3008 = vunpack.c.h.b16 %v2869
    %v3009 = vunpack.c.l.b16 %v2870
    %v3010 = vunpack.c.h.b16 %v2870
    %v3011 = vunpack.c.l.b16 %v2871
    %v3012 = vunpack.c.h.b16 %v2871
    %v3013 = vunpack.c.l.b16 %v2872
    %v3014 = vunpack.c.h.b16 %v2872
    %v3015 = vunpack.c.l.b16 %v2873
    %v3016 = vunpack.c.h.b16 %v2873
    %v3017 = vunpack.c.l.b16 %v2874
    %v3018 = vunpack.c.h.b16 %v2874
    %v3019 = vpack.c.b16 %v2925, %v2923
    %v3020 = vpack.c.b16 %v2926, %v2924
    %v3021 = vpack.c.b16 %v2929, %v2927
    %v3022 = vpack.c.b16 %v2930, %v2928
    %v3023 = vpack.c.b16 %v2933, %v2931
    %v3024 = vpack.c.b16 %v2934, %v2932
    %v3025 = vpack.c.b16 %v2937, %v2935
    %v3026 = vpack.c.b16 %v2938, %v2936
    %v3027 = vpack.c.b16 %v2941, %v2939
    %v3028 = vpack.c.b16 %v2942, %v2940
    %v3029 = vpack.c.b16 %v2945, %v2943
    %v3030 = vpack.c.b16 %v2946, %v2944
    %v3031 = vpack.c.b16 %v2949, %v2947
    %v3032 = vpack.c.b16 %v2950, %v2948
    %v3033 = vpack.c.b16 %v2953, %v2951
    %v3034 = vpack.c.b16 %v2954, %v2952
    %v3035 = vpack.c.b16 %v2957, %v2955
    %v3036 = vpack.c.b16 %v2958, %v2956
    %v3037 = vpack.c.b16 %v2961, %v2959
    %v3038 = vpack.c.b16 %v2962, %v2960
    %v3039 = vpack.c.b16 %v2965, %v2963
    %v3040 = vpack.c.b16 %v2966, %v2964
    %v3041 = vpack.c.b16 %v2969, %v2967
    %v3042 = vpack.c.b16 %v2970, %v2968
    %v3043 = vpack.c.b16 %v2973, %v2971
    %v3044 = vpack.c.b16 %v2974, %v2972
    %v3045 = vpack.c.b16 %v2977, %v2975
    %v3046 = vpack.c.b16 %v2978, %v2976
    %v3047 = vpack.c.b16 %v2981, %v2979
    %v3048 = vpack.c.b16 %v2982, %v2980
    %v3049 = vpack.c.b16 %v2985, %v2983
    %v3050 = vpack.c.b16 %v2986, %v2984
    %v3051 = vpack.c.b16 %v2989, %v2987
    %v3052 = vpack.c.b16 %v2990, %v2988
    %v3053 = vpack.c.b16 %v2993, %v2991
    %v3054 = vpack.c.b16 %v2994, %v2992
    %v3055 = vpack.c.b16 %v2997, %v2995
    %v3056 = vpack.c.b16 %v2998, %v2996
    %v3057 = vpack.c.b16 %v3001, %v2999
    %v3058 = vpack.c.b16 %v3002, %v3000
    %v3059 = vpack.c.b16 %v3005, %v3003
    %v3060 = vpack.c.b16 %v3006, %v3004
    %v3061 = vpack.c.b16 %v3009, %v3007
    %v3062 = vpack.c.b16 %v3010, %v3008
    %v3063 = vpack.c.b16 %v3013, %v3011
    %v3064 = vpack.c.b16 %v3014, %v3012
    %v3065 = vpack.c.b16 %v3017, %v3015
    %v3066 = vpack.c.b16 %v3018, %v3016
    %3115 = vmatprep.subr.bf16.mxu0 %v3020
    %3116 = vmatpush1.bf16.msra.mxu0 %v3019
    %3117 = vmatprep.subr.bf16.mxu0 %v3022
    %3118 = vmatpush1.bf16.msra.mxu0 %v3021
    %3119 = vmatprep.subr.bf16.mxu0 %v3024
    %3120 = vmatpush1.bf16.msra.mxu0 %v3023
    %3121 = vmatprep.subr.bf16.mxu0 %v3026
    %3122 = vmatpush1.bf16.msra.mxu0 %v3025
    %3123 = vmatprep.subr.bf16.mxu0 %v3028
    %3124 = vmatpush1.bf16.msra.mxu0 %v3027
    %3125 = vmatprep.subr.bf16.mxu0 %v3030
    %3126 = vmatpush1.bf16.msra.mxu0 %v3029
    %3127 = vmatprep.subr.bf16.mxu0 %v3032
    %3128 = vmatpush1.bf16.msra.mxu0 %v3031
    %3129 = vmatprep.subr.bf16.mxu0 %v3034
    %3130 = vmatpush1.bf16.msra.mxu0 %v3033
    %3131 = vmatprep.subr.bf16.mxu0 %v3036
    %3132 = vmatpush1.bf16.msra.mxu0 %v3035
    %3133 = vmatprep.subr.bf16.mxu0 %v3038
    %3134 = vmatpush1.bf16.msra.mxu0 %v3037
    %3135 = vmatprep.subr.bf16.mxu0 %v3040
    %3136 = vmatpush1.bf16.msra.mxu0 %v3039
    %3137 = vmatprep.subr.bf16.mxu0 %v3042
    %3138 = vmatpush1.bf16.msra.mxu0 %v3041
    %3139 = vmatprep.subr.bf16.mxu0 %v3044
    %3140 = vmatpush1.bf16.msra.mxu0 %v3043
    %3141 = vmatprep.subr.bf16.mxu0 %v3046
    %3142 = vmatpush1.bf16.msra.mxu0 %v3045
    %3143 = vmatprep.subr.bf16.mxu0 %v3048
    %3144 = vmatpush1.bf16.msra.mxu0 %v3047
    %3145 = vmatprep.subr.bf16.mxu0 %v3050
    %3146 = vmatpush1.bf16.msra.mxu0 %v3049
    %3147 = vmatprep.mubr.bf16.mxu0 %v2815
    %3148 = vmatmul.mubr.bf16.gmra.mrb[0].mxu0 %v2814
    %v3149 = vpop.f32.mrb[0].mxu0
    %v3150 = vadd.f32 0.0, %v3149
    %v3151 = vpop.f32.mrb[0].mxu0
    %v3152 = vadd.f32 0.0, %v3151
    %v3153 = vpop.f32.mrb[0].mxu0
    %v3154 = vadd.f32 0.0, %v3153
    %v3155 = vpop.f32.mrb[0].mxu0
    %v3156 = vadd.f32 0.0, %v3155
    %3157 = vmatprep.mubr.bf16.mxu0 %v2818
    %3158 = vmatmul.mubr.bf16.gmra.mrb[0].mxu0 %v2817
    %v3159 = vpop.f32.mrb[0].mxu0
    %v3160 = vadd.f32 0.0, %v3159
    %v3161 = vpop.f32.mrb[0].mxu0
    %v3162 = vadd.f32 0.0, %v3161
    %v3163 = vpop.f32.mrb[0].mxu0
    %v3164 = vadd.f32 0.0, %v3163
    %v3165 = vpop.f32.mrb[0].mxu0
    %v3166 = vadd.f32 0.0, %v3165
    %3167 = vmatprep.mubr.bf16.mxu0 %v2821
    %3168 = vmatmul.mubr.bf16.gmra.mrb[0].mxu0 %v2820
    %v3169 = vpop.f32.mrb[0].mxu0
    %v3170 = vadd.f32 0.0, %v3169
    %v3171 = vpop.f32.mrb[0].mxu0
    %v3172 = vadd.f32 0.0, %v3171
    %v3173 = vpop.f32.mrb[0].mxu0
    %v3174 = vadd.f32 0.0, %v3173
    %v3175 = vpop.f32.mrb[0].mxu0
    %v3176 = vadd.f32 0.0, %v3175
    %3177 = vmatprep.mubr.bf16.mxu0 %v2824
    %3178 = vmatmul.mubr.bf16.gmra.mrb[0].mxu0 %v2823
    %v3179 = vpop.f32.mrb[0].mxu0
    %v3180 = vadd.f32 0.0, %v3179
    %v3181 = vpop.f32.mrb[0].mxu0
    %v3182 = vadd.f32 0.0, %v3181
    %v3183 = vpop.f32.mrb[0].mxu0
    %v3184 = vadd.f32 0.0, %v3183
    %v3185 = vpop.f32.mrb[0].mxu0
    %v3186 = vadd.f32 0.0, %v3185
    %3187 = vdwg.mxu0
    %3188 = vmatprep.subr.bf16.mxu0 %v3052
    %3189 = vmatpush1.bf16.msra.mxu0 %v3051
    %3190 = vmatprep.subr.bf16.mxu0 %v3054
    %3191 = vmatpush1.bf16.msra.mxu0 %v3053
    %3192 = vmatprep.subr.bf16.mxu0 %v3056
    %3193 = vmatpush1.bf16.msra.mxu0 %v3055
    %3194 = vmatprep.subr.bf16.mxu0 %v3058
    %3195 = vmatpush1.bf16.msra.mxu0 %v3057
    %3196 = vmatprep.subr.bf16.mxu0 %v3060
    %3197 = vmatpush1.bf16.msra.mxu0 %v3059
    %3198 = vmatprep.subr.bf16.mxu0 %v3062
    %3199 = vmatpush1.bf16.msra.mxu0 %v3061
    %3200 = vmatprep.subr.bf16.mxu0 %v3064
    %3201 = vmatpush1.bf16.msra.mxu0 %v3063
    %3202 = vmatprep.subr.bf16.mxu0 %v3066
    %3203 = vmatpush1.bf16.msra.mxu0 %v3065
    %3204 = vmatprep.subr.bf16.mxu0 0
    %3205 = vmatpush1.bf16.msra.mxu0 0
    %3206 = vmatprep.subr.bf16.mxu0 0
    %3207 = vmatpush1.bf16.msra.mxu0 0
    %3208 = vmatprep.subr.bf16.mxu0 0
    %3209 = vmatpush1.bf16.msra.mxu0 0
    %3210 = vmatprep.subr.bf16.mxu0 0
    %3211 = vmatpush1.bf16.msra.mxu0 0
    %3212 = vmatprep.subr.bf16.mxu0 0
    %3213 = vmatpush1.bf16.msra.mxu0 0
    %3214 = vmatprep.subr.bf16.mxu0 0
    %3215 = vmatpush1.bf16.msra.mxu0 0
    %3216 = vmatprep.subr.bf16.mxu0 0
    %3217 = vmatpush1.bf16.msra.mxu0 0
    %3218 = vmatprep.subr.bf16.mxu0 0
    %3219 = vmatpush1.bf16.msra.mxu0 0
    %3220 = vmatprep.mubr.bf16.mxu0 0
    %3221 = vmatmul.mubr.bf16.gmra.mrb[0].mxu0 %v2816
    %v3222 = vpop.f32.mrb[0].mxu0
    %v3223 = vadd.f32 %v3150, %v3222
    %v3224 = vpop.f32.mrb[0].mxu0
    %v3225 = vadd.f32 %v3152, %v3224
    %v3226 = vpop.f32.mrb[0].mxu0
    %v3227 = vadd.f32 %v3154, %v3226
    %v3228 = vpop.f32.mrb[0].mxu0
    %v3229 = vadd.f32 %v3156, %v3228
    %3230 = vmatprep.mubr.bf16.mxu0 0
    %3231 = vmatmul.mubr.bf16.gmra.mrb[0].mxu0 %v2819
    %v3232 = vpop.f32.mrb[0].mxu0
    %v3233 = vadd.f32 %v3160, %v3232
    %v3234 = vpop.f32.mrb[0].mxu0
    %v3235 = vadd.f32 %v3162, %v3234
    %v3236 = vpop.f32.mrb[0].mxu0
    %v3237 = vadd.f32 %v3164, %v3236
    %v3238 = vpop.f32.mrb[0].mxu0
    %v3239 = vadd.f32 %v3166, %v3238
    %3240 = vmatprep.mubr.bf16.mxu0 0
    %3241 = vmatmul.mubr.bf16.gmra.mrb[0].mxu0 %v2822
    %v3242 = vpop.f32.mrb[0].mxu0
    %v3243 = vadd.f32 %v3170, %v3242
    %v3244 = vpop.f32.mrb[0].mxu0
    %v3245 = vadd.f32 %v3172, %v3244
    %v3246 = vpop.f32.mrb[0].mxu0
    %v3247 = vadd.f32 %v3174, %v3246
    %v3248 = vpop.f32.mrb[0].mxu0
    %v3249 = vadd.f32 %v3176, %v3248
    %3250 = vmatprep.mubr.bf16.mxu0 0
    %3251 = vmatmul.mubr.bf16.gmra.mrb[0].mxu0 %v2825
    %v3252 = vpop.f32.mrb[0].mxu0
    %v3253 = vadd.f32 %v3180, %v3252
    %v3254 = vpop.f32.mrb[0].mxu0
    %v3255 = vadd.f32 %v3182, %v3254
    %v3256 = vpop.f32.mrb[0].mxu0
    %v3257 = vadd.f32 %v3184, %v3256
    %v3258 = vpop.f32.mrb[0].mxu0
    %v3259 = vadd.f32 %v3186, %v3258
    %3260 = vdwg.mxu0
    %v3261 = vadd.f32 %v2627, %v3223
    %v3262 = vadd.f32 %v2628, %v3225
    %v3263 = vadd.f32 %v2629, %v3227
    %v3264 = vadd.f32 %v2630, %v3229
    %v3265 = vadd.f32 %v2631, %v3233
    %v3266 = vadd.f32 %v2632, %v3235
    %v3267 = vadd.f32 %v2633, %v3237
    %v3268 = vadd.f32 %v2634, %v3239
    %v3269 = vadd.f32 %v2635, %v3243
    %v3270 = vadd.f32 %v2636, %v3245
    %v3271 = vadd.f32 %v2637, %v3247
    %v3272 = vadd.f32 %v2638, %v3249
    %v3273 = vadd.f32 %v2639, %v3253
    %v3274 = vadd.f32 %v2640, %v3255
    %v3275 = vadd.f32 %v2641, %v3257
    %v3276 = vadd.f32 %v2642, %v3259
    %v3277 = vld [vmem:[#allocation7] sm:$0x3]
    %v3279 = vlaneseq
    %v3280 = vshrl.u32 %v3279, 7
    %v3281 = vsub.s32 0, %v3280
    %v3282 = vrot.slane %v3277, %v3281
    %v3283 = vlaneseq
    %v3284 = vshrl.u32 %v3283, 7
    %v3285 = vsub.s32 1, %v3284
    %v3286 = vrot.slane %v3277, %v3285
    %v3289 = vadd.f32 %v3261, %v3282
    %v3290 = vadd.f32 %v3262, %v3286
    %v3291 = vadd.f32 %v3263, %v3282
    %v3292 = vadd.f32 %v3264, %v3286
    %v3293 = vadd.f32 %v3265, %v3282
    %v3294 = vadd.f32 %v3266, %v3286
    %v3295 = vadd.f32 %v3267, %v3282
    %v3296 = vadd.f32 %v3268, %v3286
    %v3297 = vadd.f32 %v3269, %v3282
    %v3298 = vadd.f32 %v3270, %v3286
    %v3299 = vadd.f32 %v3271, %v3282
    %v3300 = vadd.f32 %v3272, %v3286
    %v3301 = vadd.f32 %v3273, %v3282
    %v3302 = vadd.f32 %v3274, %v3286
    %v3303 = vadd.f32 %v3275, %v3282
    %v3304 = vadd.f32 %v3276, %v3286
    %vm3305 = vcmp.gt.f32.partialorder %v3289, 0.0
    %vm3306 = vcmp.gt.f32.partialorder %v3290, 0.0
    %vm3307 = vcmp.gt.f32.partialorder %v3291, 0.0
    %vm3308 = vcmp.gt.f32.partialorder %v3292, 0.0
    %vm3309 = vcmp.gt.f32.partialorder %v3293, 0.0
    %vm3310 = vcmp.gt.f32.partialorder %v3294, 0.0
    %vm3311 = vcmp.gt.f32.partialorder %v3295, 0.0
    %vm3312 = vcmp.gt.f32.partialorder %v3296, 0.0
    %vm3313 = vcmp.gt.f32.partialorder %v3297, 0.0
    %vm3314 = vcmp.gt.f32.partialorder %v3298, 0.0
    %vm3315 = vcmp.gt.f32.partialorder %v3299, 0.0
    %vm3316 = vcmp.gt.f32.partialorder %v3300, 0.0
    %vm3317 = vcmp.gt.f32.partialorder %v3301, 0.0
    %vm3318 = vcmp.gt.f32.partialorder %v3302, 0.0
    %vm3319 = vcmp.gt.f32.partialorder %v3303, 0.0
    %vm3320 = vcmp.gt.f32.partialorder %v3304, 0.0
    %v3321 = vmul.f32 %v3289, 0.2
    %v3322 = vmul.f32 %v3290, 0.2
    %v3323 = vmul.f32 %v3291, 0.2
    %v3324 = vmul.f32 %v3292, 0.2
    %v3325 = vmul.f32 %v3293, 0.2
    %v3326 = vmul.f32 %v3294, 0.2
    %v3327 = vmul.f32 %v3295, 0.2
    %v3328 = vmul.f32 %v3296, 0.2
    %v3329 = vmul.f32 %v3297, 0.2
    %v3330 = vmul.f32 %v3298, 0.2
    %v3331 = vmul.f32 %v3299, 0.2
    %v3332 = vmul.f32 %v3300, 0.2
    %v3333 = vmul.f32 %v3301, 0.2
    %v3334 = vmul.f32 %v3302, 0.2
    %v3335 = vmul.f32 %v3303, 0.2
    %v3336 = vmul.f32 %v3304, 0.2
    %v3337 = vsel %vm3305, %v3289, %v3321
    %v3338 = vsel %vm3306, %v3290, %v3322
    %v3339 = vsel %vm3307, %v3291, %v3323
    %v3340 = vsel %vm3308, %v3292, %v3324
    %v3341 = vsel %vm3309, %v3293, %v3325
    %v3342 = vsel %vm3310, %v3294, %v3326
    %v3343 = vsel %vm3311, %v3295, %v3327
    %v3344 = vsel %vm3312, %v3296, %v3328
    %v3345 = vsel %vm3313, %v3297, %v3329
    %v3346 = vsel %vm3314, %v3298, %v3330
    %v3347 = vsel %vm3315, %v3299, %v3331
    %v3348 = vsel %vm3316, %v3300, %v3332
    %v3349 = vsel %vm3317, %v3301, %v3333
    %v3350 = vsel %vm3318, %v3302, %v3334
    %v3351 = vsel %vm3319, %v3303, %v3335
    %v3352 = vsel %vm3320, %v3304, %v3336
    %v3353 = vpack.c.bf16 %v3339, %v3337
    %v3354 = vpack.c.bf16 %v3340, %v3338
    %v3355 = vpack.c.bf16 %v3343, %v3341
    %v3356 = vpack.c.bf16 %v3344, %v3342
    %v3357 = vpack.c.bf16 %v3347, %v3345
    %v3358 = vpack.c.bf16 %v3348, %v3346
    %v3359 = vpack.c.bf16 %v3351, %v3349
    %v3360 = vpack.c.bf16 %v3352, %v3350
    %v3361 = vld [vmem:[#allocation8] sm:$0xff]
    %v3362 = vld [vmem:[#allocation8 + $0x8] sm:$0xff]
    %v3363 = vld [vmem:[#allocation8 + $0x10] sm:$0xff]
    %v3364 = vld [vmem:[#allocation8 + $0x18] sm:$0xff]
    %v3365 = vld [vmem:[#allocation8 + $0x20] sm:$0xff]
    %v3366 = vld [vmem:[#allocation8 + $0x28] sm:$0xff]
    %v3367 = vld [vmem:[#allocation8 + $0x30] sm:$0xff]
    %v3368 = vld [vmem:[#allocation8 + $0x38] sm:$0xff]
    %v3369 = vld [vmem:[#allocation8 + $0x40] sm:$0xff]
    %v3370 = vld [vmem:[#allocation8 + $0x48] sm:$0xff]
    %v3371 = vld [vmem:[#allocation8 + $0x50] sm:$0xff]
    %v3372 = vld [vmem:[#allocation8 + $0x58] sm:$0xff]
    %v3373 = vld [vmem:[#allocation8 + $0x60] sm:$0xff]
    %v3374 = vld [vmem:[#allocation8 + $0x68] sm:$0xff]
    %v3375 = vld [vmem:[#allocation8 + $0x70] sm:$0xff]
    %v3376 = vld [vmem:[#allocation8 + $0x78] sm:$0xff]
    %v3377 = vld [vmem:[#allocation8 + $0x80] sm:$0xff]
    %v3378 = vld [vmem:[#allocation8 + $0x88] sm:$0xff]
    %v3379 = vld [vmem:[#allocation8 + $0x90] sm:$0xff]
    %v3380 = vld [vmem:[#allocation8 + $0x98] sm:$0xff]
    %v3381 = vld [vmem:[#allocation8 + $0xa0] sm:$0xff]
    %v3382 = vld [vmem:[#allocation8 + $0xa8] sm:$0xff]
    %v3383 = vld [vmem:[#allocation8 + $0xb0] sm:$0xff]
    %v3384 = vld [vmem:[#allocation8 + $0xb8] sm:$0xff]
    %v3385 = vld [vmem:[#allocation8 + $0xc0] sm:$0xff]
    %v3386 = vld [vmem:[#allocation8 + $0xc8] sm:$0xff]
    %v3387 = vld [vmem:[#allocation8 + $0xd0] sm:$0xff]
    %v3388 = vld [vmem:[#allocation8 + $0xd8] sm:$0xff]
    %v3389 = vld [vmem:[#allocation8 + $0xe0] sm:$0xff]
    %v3390 = vld [vmem:[#allocation8 + $0xe8] sm:$0xff]
    %v3391 = vld [vmem:[#allocation8 + $0xf0] sm:$0xff]
    %v3392 = vld [vmem:[#allocation8 + $0xf8] sm:$0xff]
    %v3393 = vld [vmem:[#allocation8 + $0x100] sm:$0xff]
    %v3394 = vld [vmem:[#allocation8 + $0x108] sm:$0xff]
    %v3395 = vld [vmem:[#allocation8 + $0x110] sm:$0xff]
    %v3396 = vld [vmem:[#allocation8 + $0x118] sm:$0xff]
    %v3397 = vld [vmem:[#allocation8 + $0x120] sm:$0xff]
    %v3398 = vld [vmem:[#allocation8 + $0x128] sm:$0xff]
    %v3399 = vld [vmem:[#allocation8 + $0x130] sm:$0xff]
    %v3400 = vld [vmem:[#allocation8 + $0x138] sm:$0xff]
    %v3401 = vld [vmem:[#allocation8 + $0x140] sm:$0xff]
    %v3402 = vld [vmem:[#allocation8 + $0x148] sm:$0xff]
    %v3403 = vld [vmem:[#allocation8 + $0x150] sm:$0xff]
    %v3404 = vld [vmem:[#allocation8 + $0x158] sm:$0xff]
    %v3405 = vld [vmem:[#allocation8 + $0x160] sm:$0xff]
    %v3406 = vld [vmem:[#allocation8 + $0x168] sm:$0xff]
    %v3407 = vld [vmem:[#allocation8 + $0x170] sm:$0xff]
    %v3408 = vld [vmem:[#allocation8 + $0x178] sm:$0xff]
    %v3409 = vld [vmem:[#allocation8 + $0x180] sm:$0xff]
    %v3410 = vld [vmem:[#allocation8 + $0x188] sm:$0xff]
    %v3411 = vld [vmem:[#allocation8 + $0x190] sm:$0xff]
    %v3412 = vld [vmem:[#allocation8 + $0x198] sm:$0xff]
    %v3413 = vld [vmem:[#allocation8 + $0x1a0] sm:$0xff]
    %v3414 = vld [vmem:[#allocation8 + $0x1a8] sm:$0xff]
    %v3415 = vld [vmem:[#allocation8 + $0x1b0] sm:$0xff]
    %v3416 = vld [vmem:[#allocation8 + $0x1b8] sm:$0xff]
    %v3417 = vld [vmem:[#allocation8 + $0x1c0] sm:$0xff]
    %v3418 = vld [vmem:[#allocation8 + $0x1c8] sm:$0xff]
    %v3419 = vld [vmem:[#allocation8 + $0x1d0] sm:$0xff]
    %v3420 = vld [vmem:[#allocation8 + $0x1d8] sm:$0xff]
    %v3421 = vld [vmem:[#allocation8 + $0x1e0] sm:$0xff]
    %v3422 = vld [vmem:[#allocation8 + $0x1e8] sm:$0xff]
    %v3423 = vld [vmem:[#allocation8 + $0x1f0] sm:$0xff]
    %v3424 = vld [vmem:[#allocation8 + $0x1f8] sm:$0xff]
    %v3489 = vunpack.c.l.b16 %v3361
    %v3490 = vunpack.c.h.b16 %v3361
    %v3491 = vunpack.c.l.b16 %v3362
    %v3492 = vunpack.c.h.b16 %v3362
    %v3493 = vunpack.c.l.b16 %v3363
    %v3494 = vunpack.c.h.b16 %v3363
    %v3495 = vunpack.c.l.b16 %v3364
    %v3496 = vunpack.c.h.b16 %v3364
    %v3497 = vunpack.c.l.b16 %v3365
    %v3498 = vunpack.c.h.b16 %v3365
    %v3499 = vunpack.c.l.b16 %v3366
    %v3500 = vunpack.c.h.b16 %v3366
    %v3501 = vunpack.c.l.b16 %v3367
    %v3502 = vunpack.c.h.b16 %v3367
    %v3503 = vunpack.c.l.b16 %v3368
    %v3504 = vunpack.c.h.b16 %v3368
    %v3505 = vunpack.c.l.b16 %v3369
    %v3506 = vunpack.c.h.b16 %v3369
    %v3507 = vunpack.c.l.b16 %v3370
    %v3508 = vunpack.c.h.b16 %v3370
    %v3509 = vunpack.c.l.b16 %v3371
    %v3510 = vunpack.c.h.b16 %v3371
    %v3511 = vunpack.c.l.b16 %v3372
    %v3512 = vunpack.c.h.b16 %v3372
    %v3513 = vunpack.c.l.b16 %v3373
    %v3514 = vunpack.c.h.b16 %v3373
    %v3515 = vunpack.c.l.b16 %v3374
    %v3516 = vunpack.c.h.b16 %v3374
    %v3517 = vunpack.c.l.b16 %v3375
    %v3518 = vunpack.c.h.b16 %v3375
    %v3519 = vunpack.c.l.b16 %v3376
    %v3520 = vunpack.c.h.b16 %v3376
    %v3521 = vunpack.c.l.b16 %v3377
    %v3522 = vunpack.c.h.b16 %v3377
    %v3523 = vunpack.c.l.b16 %v3378
    %v3524 = vunpack.c.h.b16 %v3378
    %v3525 = vunpack.c.l.b16 %v3379
    %v3526 = vunpack.c.h.b16 %v3379
    %v3527 = vunpack.c.l.b16 %v3380
    %v3528 = vunpack.c.h.b16 %v3380
    %v3529 = vunpack.c.l.b16 %v3381
    %v3530 = vunpack.c.h.b16 %v3381
    %v3531 = vunpack.c.l.b16 %v3382
    %v3532 = vunpack.c.h.b16 %v3382
    %v3533 = vunpack.c.l.b16 %v3383
    %v3534 = vunpack.c.h.b16 %v3383
    %v3535 = vunpack.c.l.b16 %v3384
    %v3536 = vunpack.c.h.b16 %v3384
    %v3537 = vunpack.c.l.b16 %v3385
    %v3538 = vunpack.c.h.b16 %v3385
    %v3539 = vunpack.c.l.b16 %v3386
    %v3540 = vunpack.c.h.b16 %v3386
    %v3541 = vunpack.c.l.b16 %v3387
    %v3542 = vunpack.c.h.b16 %v3387
    %v3543 = vunpack.c.l.b16 %v3388
    %v3544 = vunpack.c.h.b16 %v3388
    %v3545 = vunpack.c.l.b16 %v3389
    %v3546 = vunpack.c.h.b16 %v3389
    %v3547 = vunpack.c.l.b16 %v3390
    %v3548 = vunpack.c.h.b16 %v3390
    %v3549 = vunpack.c.l.b16 %v3391
    %v3550 = vunpack.c.h.b16 %v3391
    %v3551 = vunpack.c.l.b16 %v3392
    %v3552 = vunpack.c.h.b16 %v3392
    %v3553 = vunpack.c.l.b16 %v3393
    %v3554 = vunpack.c.h.b16 %v3393
    %v3555 = vunpack.c.l.b16 %v3394
    %v3556 = vunpack.c.h.b16 %v3394
    %v3557 = vunpack.c.l.b16 %v3395
    %v3558 = vunpack.c.h.b16 %v3395
    %v3559 = vunpack.c.l.b16 %v3396
    %v3560 = vunpack.c.h.b16 %v3396
    %v3561 = vunpack.c.l.b16 %v3397
    %v3562 = vunpack.c.h.b16 %v3397
    %v3563 = vunpack.c.l.b16 %v3398
    %v3564 = vunpack.c.h.b16 %v3398
    %v3565 = vunpack.c.l.b16 %v3399
    %v3566 = vunpack.c.h.b16 %v3399
    %v3567 = vunpack.c.l.b16 %v3400
    %v3568 = vunpack.c.h.b16 %v3400
    %v3569 = vunpack.c.l.b16 %v3401
    %v3570 = vunpack.c.h.b16 %v3401
    %v3571 = vunpack.c.l.b16 %v3402
    %v3572 = vunpack.c.h.b16 %v3402
    %v3573 = vunpack.c.l.b16 %v3403
    %v3574 = vunpack.c.h.b16 %v3403
    %v3575 = vunpack.c.l.b16 %v3404
    %v3576 = vunpack.c.h.b16 %v3404
    %v3577 = vunpack.c.l.b16 %v3405
    %v3578 = vunpack.c.h.b16 %v3405
    %v3579 = vunpack.c.l.b16 %v3406
    %v3580 = vunpack.c.h.b16 %v3406
    %v3581 = vunpack.c.l.b16 %v3407
    %v3582 = vunpack.c.h.b16 %v3407
    %v3583 = vunpack.c.l.b16 %v3408
    %v3584 = vunpack.c.h.b16 %v3408
    %v3585 = vunpack.c.l.b16 %v3409
    %v3586 = vunpack.c.h.b16 %v3409
    %v3587 = vunpack.c.l.b16 %v3410
    %v3588 = vunpack.c.h.b16 %v3410
    %v3589 = vunpack.c.l.b16 %v3411
    %v3590 = vunpack.c.h.b16 %v3411
    %v3591 = vunpack.c.l.b16 %v3412
    %v3592 = vunpack.c.h.b16 %v3412
    %v3593 = vunpack.c.l.b16 %v3413
    %v3594 = vunpack.c.h.b16 %v3413
    %v3595 = vunpack.c.l.b16 %v3414
    %v3596 = vunpack.c.h.b16 %v3414
    %v3597 = vunpack.c.l.b16 %v3415
    %v3598 = vunpack.c.h.b16 %v3415
    %v3599 = vunpack.c.l.b16 %v3416
    %v3600 = vunpack.c.h.b16 %v3416
    %v3601 = vunpack.c.l.b16 %v3417
    %v3602 = vunpack.c.h.b16 %v3417
    %v3603 = vunpack.c.l.b16 %v3418
    %v3604 = vunpack.c.h.b16 %v3418
    %v3605 = vunpack.c.l.b16 %v3419
    %v3606 = vunpack.c.h.b16 %v3419
    %v3607 = vunpack.c.l.b16 %v3420
    %v3608 = vunpack.c.h.b16 %v3420
    %v3609 = vunpack.c.l.b16 %v3421
    %v3610 = vunpack.c.h.b16 %v3421
    %v3611 = vunpack.c.l.b16 %v3422
    %v3612 = vunpack.c.h.b16 %v3422
    %v3613 = vunpack.c.l.b16 %v3423
    %v3614 = vunpack.c.h.b16 %v3423
    %v3615 = vunpack.c.l.b16 %v3424
    %v3616 = vunpack.c.h.b16 %v3424
    %v3617 = vpack.c.b16 %v3493, %v3489
    %v3618 = vpack.c.b16 %v3494, %v3490
    %v3619 = vpack.c.b16 %v3495, %v3491
    %v3620 = vpack.c.b16 %v3496, %v3492
    %v3621 = vpack.c.b16 %v3501, %v3497
    %v3622 = vpack.c.b16 %v3502, %v3498
    %v3623 = vpack.c.b16 %v3503, %v3499
    %v3624 = vpack.c.b16 %v3504, %v3500
    %v3625 = vpack.c.b16 %v3509, %v3505
    %v3626 = vpack.c.b16 %v3510, %v3506
    %v3627 = vpack.c.b16 %v3511, %v3507
    %v3628 = vpack.c.b16 %v3512, %v3508
    %v3629 = vpack.c.b16 %v3517, %v3513
    %v3630 = vpack.c.b16 %v3518, %v3514
    %v3631 = vpack.c.b16 %v3519, %v3515
    %v3632 = vpack.c.b16 %v3520, %v3516
    %v3633 = vpack.c.b16 %v3525, %v3521
    %v3634 = vpack.c.b16 %v3526, %v3522
    %v3635 = vpack.c.b16 %v3527, %v3523
    %v3636 = vpack.c.b16 %v3528, %v3524
    %v3637 = vpack.c.b16 %v3533, %v3529
    %v3638 = vpack.c.b16 %v3534, %v3530
    %v3639 = vpack.c.b16 %v3535, %v3531
    %v3640 = vpack.c.b16 %v3536, %v3532
    %v3641 = vpack.c.b16 %v3541, %v3537
    %v3642 = vpack.c.b16 %v3542, %v3538
    %v3643 = vpack.c.b16 %v3543, %v3539
    %v3644 = vpack.c.b16 %v3544, %v3540
    %v3645 = vpack.c.b16 %v3549, %v3545
    %v3646 = vpack.c.b16 %v3550, %v3546
    %v3647 = vpack.c.b16 %v3551, %v3547
    %v3648 = vpack.c.b16 %v3552, %v3548
    %v3649 = vpack.c.b16 %v3557, %v3553
    %v3650 = vpack.c.b16 %v3558, %v3554
    %v3651 = vpack.c.b16 %v3559, %v3555
    %v3652 = vpack.c.b16 %v3560, %v3556
    %v3653 = vpack.c.b16 %v3565, %v3561
    %v3654 = vpack.c.b16 %v3566, %v3562
    %v3655 = vpack.c.b16 %v3567, %v3563
    %v3656 = vpack.c.b16 %v3568, %v3564
    %v3657 = vpack.c.b16 %v3573, %v3569
    %v3658 = vpack.c.b16 %v3574, %v3570
    %v3659 = vpack.c.b16 %v3575, %v3571
    %v3660 = vpack.c.b16 %v3576, %v3572
    %v3661 = vpack.c.b16 %v3581, %v3577
    %v3662 = vpack.c.b16 %v3582, %v3578
    %v3663 = vpack.c.b16 %v3583, %v3579
    %v3664 = vpack.c.b16 %v3584, %v3580
    %v3665 = vpack.c.b16 %v3589, %v3585
    %v3666 = vpack.c.b16 %v3590, %v3586
    %v3667 = vpack.c.b16 %v3591, %v3587
    %v3668 = vpack.c.b16 %v3592, %v3588
    %v3669 = vpack.c.b16 %v3597, %v3593
    %v3670 = vpack.c.b16 %v3598, %v3594
    %v3671 = vpack.c.b16 %v3599, %v3595
    %v3672 = vpack.c.b16 %v3600, %v3596
    %v3673 = vpack.c.b16 %v3605, %v3601
    %v3674 = vpack.c.b16 %v3606, %v3602
    %v3675 = vpack.c.b16 %v3607, %v3603
    %v3676 = vpack.c.b16 %v3608, %v3604
    %v3677 = vpack.c.b16 %v3613, %v3609
    %v3678 = vpack.c.b16 %v3614, %v3610
    %v3679 = vpack.c.b16 %v3615, %v3611
    %v3680 = vpack.c.b16 %v3616, %v3612
    %3745 = vmatprep.subr.bf16.mxu0 %v3618
    %3746 = vmatpush1.bf16.msra.mxu0 %v3617
    %3747 = vmatprep.subr.bf16.mxu0 %v3622
    %3748 = vmatpush1.bf16.msra.mxu0 %v3621
    %3749 = vmatprep.subr.bf16.mxu0 %v3626
    %3750 = vmatpush1.bf16.msra.mxu0 %v3625
    %3751 = vmatprep.subr.bf16.mxu0 %v3630
    %3752 = vmatpush1.bf16.msra.mxu0 %v3629
    %3753 = vmatprep.subr.bf16.mxu0 %v3634
    %3754 = vmatpush1.bf16.msra.mxu0 %v3633
    %3755 = vmatprep.subr.bf16.mxu0 %v3638
    %3756 = vmatpush1.bf16.msra.mxu0 %v3637
    %3757 = vmatprep.subr.bf16.mxu0 %v3642
    %3758 = vmatpush1.bf16.msra.mxu0 %v3641
    %3759 = vmatprep.subr.bf16.mxu0 %v3646
    %3760 = vmatpush1.bf16.msra.mxu0 %v3645
    %3761 = vmatprep.subr.bf16.mxu0 %v3650
    %3762 = vmatpush1.bf16.msra.mxu0 %v3649
    %3763 = vmatprep.subr.bf16.mxu0 %v3654
    %3764 = vmatpush1.bf16.msra.mxu0 %v3653
    %3765 = vmatprep.subr.bf16.mxu0 %v3658
    %3766 = vmatpush1.bf16.msra.mxu0 %v3657
    %3767 = vmatprep.subr.bf16.mxu0 %v3662
    %3768 = vmatpush1.bf16.msra.mxu0 %v3661
    %3769 = vmatprep.subr.bf16.mxu0 %v3666
    %3770 = vmatpush1.bf16.msra.mxu0 %v3665
    %3771 = vmatprep.subr.bf16.mxu0 %v3670
    %3772 = vmatpush1.bf16.msra.mxu0 %v3669
    %3773 = vmatprep.subr.bf16.mxu0 %v3674
    %3774 = vmatpush1.bf16.msra.mxu0 %v3673
    %3775 = vmatprep.subr.bf16.mxu0 %v3678
    %3776 = vmatpush1.bf16.msra.mxu0 %v3677
    %3777 = vmatprep.mubr.bf16.mxu0 %v3354
    %3778 = vmatmul.mubr.bf16.gmra.mrb[0].mxu0 %v3353
    %v3779 = vpop.f32.mrb[0].mxu0
    %v3780 = vadd.f32 0.0, %v3779
    %v3781 = vpop.f32.mrb[0].mxu0
    %v3782 = vadd.f32 0.0, %v3781
    %v3783 = vpop.f32.mrb[0].mxu0
    %v3784 = vadd.f32 0.0, %v3783
    %v3785 = vpop.f32.mrb[0].mxu0
    %v3786 = vadd.f32 0.0, %v3785
    %3787 = vmatprep.mubr.bf16.mxu0 %v3356
    %3788 = vmatmul.mubr.bf16.gmra.mrb[0].mxu0 %v3355
    %v3789 = vpop.f32.mrb[0].mxu0
    %v3790 = vadd.f32 0.0, %v3789
    %v3791 = vpop.f32.mrb[0].mxu0
    %v3792 = vadd.f32 0.0, %v3791
    %v3793 = vpop.f32.mrb[0].mxu0
    %v3794 = vadd.f32 0.0, %v3793
    %v3795 = vpop.f32.mrb[0].mxu0
    %v3796 = vadd.f32 0.0, %v3795
    %3797 = vmatprep.mubr.bf16.mxu0 %v3358
    %3798 = vmatmul.mubr.bf16.gmra.mrb[0].mxu0 %v3357
    %v3799 = vpop.f32.mrb[0].mxu0
    %v3800 = vadd.f32 0.0, %v3799
    %v3801 = vpop.f32.mrb[0].mxu0
    %v3802 = vadd.f32 0.0, %v3801
    %v3803 = vpop.f32.mrb[0].mxu0
    %v3804 = vadd.f32 0.0, %v3803
    %v3805 = vpop.f32.mrb[0].mxu0
    %v3806 = vadd.f32 0.0, %v3805
    %3807 = vmatprep.mubr.bf16.mxu0 %v3360
    %3808 = vmatmul.mubr.bf16.gmra.mrb[0].mxu0 %v3359
    %v3809 = vpop.f32.mrb[0].mxu0
    %v3810 = vadd.f32 0.0, %v3809
    %v3811 = vpop.f32.mrb[0].mxu0
    %v3812 = vadd.f32 0.0, %v3811
    %v3813 = vpop.f32.mrb[0].mxu0
    %v3814 = vadd.f32 0.0, %v3813
    %v3815 = vpop.f32.mrb[0].mxu0
    %v3816 = vadd.f32 0.0, %v3815
    %3817 = vdwg.mxu0
    %3818 = vmatprep.subr.bf16.mxu0 %v3620
    %3819 = vmatpush1.bf16.msra.mxu0 %v3619
    %3820 = vmatprep.subr.bf16.mxu0 %v3624
    %3821 = vmatpush1.bf16.msra.mxu0 %v3623
    %3822 = vmatprep.subr.bf16.mxu0 %v3628
    %3823 = vmatpush1.bf16.msra.mxu0 %v3627
    %3824 = vmatprep.subr.bf16.mxu0 %v3632
    %3825 = vmatpush1.bf16.msra.mxu0 %v3631
    %3826 = vmatprep.subr.bf16.mxu0 %v3636
    %3827 = vmatpush1.bf16.msra.mxu0 %v3635
    %3828 = vmatprep.subr.bf16.mxu0 %v3640
    %3829 = vmatpush1.bf16.msra.mxu0 %v3639
    %3830 = vmatprep.subr.bf16.mxu0 %v3644
    %3831 = vmatpush1.bf16.msra.mxu0 %v3643
    %3832 = vmatprep.subr.bf16.mxu0 %v3648
    %3833 = vmatpush1.bf16.msra.mxu0 %v3647
    %3834 = vmatprep.subr.bf16.mxu0 %v3652
    %3835 = vmatpush1.bf16.msra.mxu0 %v3651
    %3836 = vmatprep.subr.bf16.mxu0 %v3656
    %3837 = vmatpush1.bf16.msra.mxu0 %v3655
    %3838 = vmatprep.subr.bf16.mxu0 %v3660
    %3839 = vmatpush1.bf16.msra.mxu0 %v3659
    %3840 = vmatprep.subr.bf16.mxu0 %v3664
    %3841 = vmatpush1.bf16.msra.mxu0 %v3663
    %3842 = vmatprep.subr.bf16.mxu0 %v3668
    %3843 = vmatpush1.bf16.msra.mxu0 %v3667
    %3844 = vmatprep.subr.bf16.mxu0 %v3672
    %3845 = vmatpush1.bf16.msra.mxu0 %v3671
    %3846 = vmatprep.subr.bf16.mxu0 %v3676
    %3847 = vmatpush1.bf16.msra.mxu0 %v3675
    %3848 = vmatprep.subr.bf16.mxu0 %v3680
    %3849 = vmatpush1.bf16.msra.mxu0 %v3679
    %3850 = vmatprep.mubr.bf16.mxu0 %v3354
    %3851 = vmatmul.mubr.bf16.gmra.mrb[0].mxu0 %v3353
    %v3852 = vpop.f32.mrb[0].mxu0
    %v3853 = vadd.f32 0.0, %v3852
    %v3854 = vpop.f32.mrb[0].mxu0
    %v3855 = vadd.f32 0.0, %v3854
    %v3856 = vpop.f32.mrb[0].mxu0
    %v3857 = vadd.f32 0.0, %v3856
    %v3858 = vpop.f32.mrb[0].mxu0
    %v3859 = vadd.f32 0.0, %v3858
    %3860 = vmatprep.mubr.bf16.mxu0 %v3356
    %3861 = vmatmul.mubr.bf16.gmra.mrb[0].mxu0 %v3355
    %v3862 = vpop.f32.mrb[0].mxu0
    %v3863 = vadd.f32 0.0, %v3862
    %v3864 = vpop.f32.mrb[0].mxu0
    %v3865 = vadd.f32 0.0, %v3864
    %v3866 = vpop.f32.mrb[0].mxu0
    %v3867 = vadd.f32 0.0, %v3866
    %v3868 = vpop.f32.mrb[0].mxu0
    %v3869 = vadd.f32 0.0, %v3868
    %3870 = vmatprep.mubr.bf16.mxu0 %v3358
    %3871 = vmatmul.mubr.bf16.gmra.mrb[0].mxu0 %v3357
    %v3872 = vpop.f32.mrb[0].mxu0
    %v3873 = vadd.f32 0.0, %v3872
    %v3874 = vpop.f32.mrb[0].mxu0
    %v3875 = vadd.f32 0.0, %v3874
    %v3876 = vpop.f32.mrb[0].mxu0
    %v3877 = vadd.f32 0.0, %v3876
    %v3878 = vpop.f32.mrb[0].mxu0
    %v3879 = vadd.f32 0.0, %v3878
    %3880 = vmatprep.mubr.bf16.mxu0 %v3360
    %3881 = vmatmul.mubr.bf16.gmra.mrb[0].mxu0 %v3359
    %v3882 = vpop.f32.mrb[0].mxu0
    %v3883 = vadd.f32 0.0, %v3882
    %v3884 = vpop.f32.mrb[0].mxu0
    %v3885 = vadd.f32 0.0, %v3884
    %v3886 = vpop.f32.mrb[0].mxu0
    %v3887 = vadd.f32 0.0, %v3886
    %v3888 = vpop.f32.mrb[0].mxu0
    %v3889 = vadd.f32 0.0, %v3888
    %3890 = vdwg.mxu0
    %v3891 = vpack.c.bf16 %v3784, %v3780
    %v3892 = vpack.c.bf16 %v3786, %v3782
    %v3893 = vpack.c.bf16 %v3857, %v3853
    %v3894 = vpack.c.bf16 %v3859, %v3855
    %v3895 = vpack.c.bf16 %v3794, %v3790
    %v3896 = vpack.c.bf16 %v3796, %v3792
    %v3897 = vpack.c.bf16 %v3867, %v3863
    %v3898 = vpack.c.bf16 %v3869, %v3865
    %v3899 = vpack.c.bf16 %v3804, %v3800
    %v3900 = vpack.c.bf16 %v3806, %v3802
    %v3901 = vpack.c.bf16 %v3877, %v3873
    %v3902 = vpack.c.bf16 %v3879, %v3875
    %v3903 = vpack.c.bf16 %v3814, %v3810
    %v3904 = vpack.c.bf16 %v3816, %v3812
    %v3905 = vpack.c.bf16 %v3887, %v3883
    %v3906 = vpack.c.bf16 %v3889, %v3885
    %v3907 = vld [vmem:[#allocation10] sm:$0xf]
    %v3908 = vld [vmem:[#allocation10 + $0x4] sm:$0xf]
    %v3909 = vld [vmem:[#allocation10 + $0x8] sm:$0xf]
    %v3910 = vld [vmem:[#allocation10 + $0xc] sm:$0xf]
    %v3915 = vunpack.c.l.b16 %v3907
    %v3916 = vunpack.c.l.b16 %v3908
    %v3917 = vunpack.c.l.b16 %v3909
    %v3918 = vunpack.c.l.b16 %v3910
    %v3919 = vpack.c.b16 %v3916, %v3915
    %v3920 = vpack.c.b16 %v3918, %v3917
    %v3922 = vsel %vm516, %v3919, 0
    %v3925 = vsel %vm516, %v3920, 0
    %3927 = vmatprep.subr.bf16.mxu0 %v3892
    %3928 = vmatpush1.bf16.msra.mxu0 %v3891
    %3929 = vmatprep.subr.bf16.mxu0 %v3896
    %3930 = vmatpush1.bf16.msra.mxu0 %v3895
    %3931 = vmatprep.subr.bf16.mxu0 %v3900
    %3932 = vmatpush1.bf16.msra.mxu0 %v3899
    %3933 = vmatprep.subr.bf16.mxu0 %v3904
    %3934 = vmatpush1.bf16.msra.mxu0 %v3903
    %3935 = vmatprep.subr.bf16.mxu0 0
    %3936 = vmatpush1.bf16.msra.mxu0 0
    %3937 = vmatprep.subr.bf16.mxu0 0
    %3938 = vmatpush1.bf16.msra.mxu0 0
    %3939 = vmatprep.subr.bf16.mxu0 0
    %3940 = vmatpush1.bf16.msra.mxu0 0
    %3941 = vmatprep.subr.bf16.mxu0 0
    %3942 = vmatpush1.bf16.msra.mxu0 0
    %3943 = vmatprep.subr.bf16.mxu0 0
    %3944 = vmatpush1.bf16.msra.mxu0 0
    %3945 = vmatprep.subr.bf16.mxu0 0
    %3946 = vmatpush1.bf16.msra.mxu0 0
    %3947 = vmatprep.subr.bf16.mxu0 0
    %3948 = vmatpush1.bf16.msra.mxu0 0
    %3949 = vmatprep.subr.bf16.mxu0 0
    %3950 = vmatpush1.bf16.msra.mxu0 0
    %3951 = vmatprep.subr.bf16.mxu0 0
    %3952 = vmatpush1.bf16.msra.mxu0 0
    %3953 = vmatprep.subr.bf16.mxu0 0
    %3954 = vmatpush1.bf16.msra.mxu0 0
    %3955 = vmatprep.subr.bf16.mxu0 0
    %3956 = vmatpush1.bf16.msra.mxu0 0
    %3957 = vmatprep.subr.bf16.mxu0 0
    %3958 = vmatpush1.bf16.msra.mxu0 0
    %3959 = vmatprep.mubr.bf16.mxu0 0
    %3960 = vmatmul.mubr.bf16.gmra.mrb[0].mxu0 %v3922
    %v3961 = vpop.f32.mrb[0].mxu0
    %v3962 = vadd.f32 0.0, %v3961
    %v3963 = vpop.f32.mrb[0].mxu0
    %v3964 = vadd.f32 0.0, %v3963
    %v3965 = vpop.f32.mrb[0].mxu0
    %v3966 = vadd.f32 0.0, %v3965
    %v3967 = vpop.f32.mrb[0].mxu0
    %v3968 = vadd.f32 0.0, %v3967
    %3969 = vmatprep.mubr.bf16.mxu0 0
    %3970 = vmatmul.mubr.bf16.gmra.mrb[0].mxu0 %v3925
    %v3971 = vpop.f32.mrb[0].mxu0
    %v3972 = vadd.f32 0.0, %v3971
    %v3973 = vpop.f32.mrb[0].mxu0
    %v3974 = vadd.f32 0.0, %v3973
    %v3975 = vpop.f32.mrb[0].mxu0
    %v3976 = vadd.f32 0.0, %v3975
    %v3977 = vpop.f32.mrb[0].mxu0
    %v3978 = vadd.f32 0.0, %v3977
    %3979 = vdwg.mxu0
    %3980 = vmatprep.subr.bf16.mxu0 %v3894
    %3981 = vmatpush1.bf16.msra.mxu0 %v3893
    %3982 = vmatprep.subr.bf16.mxu0 %v3898
    %3983 = vmatpush1.bf16.msra.mxu0 %v3897
    %3984 = vmatprep.subr.bf16.mxu0 %v3902
    %3985 = vmatpush1.bf16.msra.mxu0 %v3901
    %3986 = vmatprep.subr.bf16.mxu0 %v3906
    %3987 = vmatpush1.bf16.msra.mxu0 %v3905
    %3988 = vmatprep.subr.bf16.mxu0 0
    %3989 = vmatpush1.bf16.msra.mxu0 0
    %3990 = vmatprep.subr.bf16.mxu0 0
    %3991 = vmatpush1.bf16.msra.mxu0 0
    %3992 = vmatprep.subr.bf16.mxu0 0
    %3993 = vmatpush1.bf16.msra.mxu0 0
    %3994 = vmatprep.subr.bf16.mxu0 0
    %3995 = vmatpush1.bf16.msra.mxu0 0
    %3996 = vmatprep.subr.bf16.mxu0 0
    %3997 = vmatpush1.bf16.msra.mxu0 0
    %3998 = vmatprep.subr.bf16.mxu0 0
    %3999 = vmatpush1.bf16.msra.mxu0 0
    %4000 = vmatprep.subr.bf16.mxu0 0
    %4001 = vmatpush1.bf16.msra.mxu0 0
    %4002 = vmatprep.subr.bf16.mxu0 0
    %4003 = vmatpush1.bf16.msra.mxu0 0
    %4004 = vmatprep.subr.bf16.mxu0 0
    %4005 = vmatpush1.bf16.msra.mxu0 0
    %4006 = vmatprep.subr.bf16.mxu0 0
    %4007 = vmatpush1.bf16.msra.mxu0 0
    %4008 = vmatprep.subr.bf16.mxu0 0
    %4009 = vmatpush1.bf16.msra.mxu0 0
    %4010 = vmatprep.subr.bf16.mxu0 0
    %4011 = vmatpush1.bf16.msra.mxu0 0
    %4012 = vmatprep.mubr.bf16.mxu0 0
    %4013 = vmatmul.mubr.bf16.gmra.mrb[0].mxu0 %v3922
    %v4014 = vpop.f32.mrb[0].mxu0
    %v4015 = vadd.f32 0.0, %v4014
    %v4016 = vpop.f32.mrb[0].mxu0
    %v4017 = vadd.f32 0.0, %v4016
    %v4018 = vpop.f32.mrb[0].mxu0
    %v4019 = vadd.f32 0.0, %v4018
    %v4020 = vpop.f32.mrb[0].mxu0
    %v4021 = vadd.f32 0.0, %v4020
    %4022 = vmatprep.mubr.bf16.mxu0 0
    %4023 = vmatmul.mubr.bf16.gmra.mrb[0].mxu0 %v3925
    %v4024 = vpop.f32.mrb[0].mxu0
    %v4025 = vadd.f32 0.0, %v4024
    %v4026 = vpop.f32.mrb[0].mxu0
    %v4027 = vadd.f32 0.0, %v4026
    %v4028 = vpop.f32.mrb[0].mxu0
    %v4029 = vadd.f32 0.0, %v4028
    %v4030 = vpop.f32.mrb[0].mxu0
    %v4031 = vadd.f32 0.0, %v4030
    %4032 = vdwg.mxu0
    %v4033 = vpack.c.bf16 %v3966, %v3962
    %v4034 = vpack.c.bf16 %v3968, %v3964
    %v4035 = vpack.c.bf16 %v4019, %v4015
    %v4036 = vpack.c.bf16 %v4021, %v4017
    %v4037 = vpack.c.bf16 %v3976, %v3972
    %v4038 = vpack.c.bf16 %v3978, %v3974
    %v4039 = vpack.c.bf16 %v4029, %v4025
    %v4040 = vpack.c.bf16 %v4031, %v4027
    %v4041 = vld [vmem:[%s7] sm:$0xff]
    %v4042 = vld [vmem:[%s7 + $0x8] sm:$0xff]
    %v4043 = vld [vmem:[%s7 + $0x10] sm:$0xff]
    %v4044 = vld [vmem:[%s7 + $0x18] sm:$0xff]
    %v4045 = vld [vmem:[%s7 + $0x20] sm:$0xff]
    %v4046 = vld [vmem:[%s7 + $0x28] sm:$0xff]
    %v4047 = vld [vmem:[%s7 + $0x30] sm:$0xff]
    %v4048 = vld [vmem:[%s7 + $0x38] sm:$0xff]
    %v4049 = vld [vmem:[%s7 + $0x40] sm:$0xff]
    %v4050 = vld [vmem:[%s7 + $0x48] sm:$0xff]
    %v4051 = vld [vmem:[%s7 + $0x50] sm:$0xff]
    %v4052 = vld [vmem:[%s7 + $0x58] sm:$0xff]
    %v4053 = vld [vmem:[%s7 + $0x60] sm:$0xff]
    %v4054 = vld [vmem:[%s7 + $0x68] sm:$0xff]
    %v4055 = vld [vmem:[%s7 + $0x70] sm:$0xff]
    %v4056 = vld [vmem:[%s7 + $0x78] sm:$0xff]
    %v4057 = vld [vmem:[%s7 + $0x80] sm:$0xff]
    %v4058 = vld [vmem:[%s7 + $0x88] sm:$0xff]
    %v4059 = vld [vmem:[%s7 + $0x90] sm:$0xff]
    %v4060 = vld [vmem:[%s7 + $0x98] sm:$0xff]
    %v4061 = vld [vmem:[%s7 + $0xa0] sm:$0xff]
    %v4062 = vld [vmem:[%s7 + $0xa8] sm:$0xff]
    %v4063 = vld [vmem:[%s7 + $0xb0] sm:$0xff]
    %v4064 = vld [vmem:[%s7 + $0xb8] sm:$0xff]
    %v4065 = vld [vmem:[%s7 + $0xc0] sm:$0xff]
    %v4066 = vld [vmem:[%s7 + $0xc8] sm:$0xff]
    %v4067 = vld [vmem:[%s7 + $0xd0] sm:$0xff]
    %v4068 = vld [vmem:[%s7 + $0xd8] sm:$0xff]
    %v4069 = vld [vmem:[%s7 + $0xe0] sm:$0xff]
    %v4070 = vld [vmem:[%s7 + $0xe8] sm:$0xff]
    %v4071 = vld [vmem:[%s7 + $0xf0] sm:$0xff]
    %v4072 = vld [vmem:[%s7 + $0xf8] sm:$0xff]
    %v4073 = vld [vmem:[%s7 + $0x100] sm:$0xff]
    %v4074 = vld [vmem:[%s7 + $0x108] sm:$0xff]
    %v4075 = vld [vmem:[%s7 + $0x110] sm:$0xff]
    %v4076 = vld [vmem:[%s7 + $0x118] sm:$0xff]
    %v4077 = vld [vmem:[%s7 + $0x120] sm:$0xff]
    %v4078 = vld [vmem:[%s7 + $0x128] sm:$0xff]
    %v4079 = vld [vmem:[%s7 + $0x130] sm:$0xff]
    %v4080 = vld [vmem:[%s7 + $0x138] sm:$0xff]
    %v4081 = vld [vmem:[%s7 + $0x140] sm:$0xff]
    %v4082 = vld [vmem:[%s7 + $0x148] sm:$0xff]
    %v4083 = vld [vmem:[%s7 + $0x150] sm:$0xff]
    %v4084 = vld [vmem:[%s7 + $0x158] sm:$0xff]
    %v4085 = vld [vmem:[%s7 + $0x160] sm:$0xff]
    %v4086 = vld [vmem:[%s7 + $0x168] sm:$0xff]
    %v4087 = vld [vmem:[%s7 + $0x170] sm:$0xff]
    %v4088 = vld [vmem:[%s7 + $0x178] sm:$0xff]
    %v4089 = vld [vmem:[%s7 + $0x180] sm:$0xff]
    %v4090 = vld [vmem:[%s7 + $0x188] sm:$0xff]
    %v4091 = vld [vmem:[%s7 + $0x190] sm:$0xff]
    %v4092 = vld [vmem:[%s7 + $0x198] sm:$0xff]
    %v4093 = vld [vmem:[%s7 + $0x1a0] sm:$0xff]
    %v4094 = vld [vmem:[%s7 + $0x1a8] sm:$0xff]
    %v4095 = vld [vmem:[%s7 + $0x1b0] sm:$0xff]
    %v4096 = vld [vmem:[%s7 + $0x1b8] sm:$0xff]
    %v4097 = vld [vmem:[%s7 + $0x1c0] sm:$0xff]
    %v4098 = vld [vmem:[%s7 + $0x1c8] sm:$0xff]
    %v4099 = vld [vmem:[%s7 + $0x1d0] sm:$0xff]
    %v4100 = vld [vmem:[%s7 + $0x1d8] sm:$0xff]
    %v4101 = vld [vmem:[%s7 + $0x1e0] sm:$0xff]
    %v4102 = vld [vmem:[%s7 + $0x1e8] sm:$0xff]
    %v4103 = vld [vmem:[%s7 + $0x1f0] sm:$0xff]
    %v4104 = vld [vmem:[%s7 + $0x1f8] sm:$0xff]
    %s4105 = scalar_lea.vmem [#allocation10], 16
    %v4106 = vld [vmem:[%s4105] sm:$0xf]
    %v4107 = vld [vmem:[%s4105 + $0x4] sm:$0xf]
    %v4108 = vld [vmem:[%s4105 + $0x8] sm:$0xf]
    %v4109 = vld [vmem:[%s4105 + $0xc] sm:$0xf]
    %v4114 = vunpack.c.l.b16 %v4106
    %v4115 = vunpack.c.l.b16 %v4107
    %v4116 = vunpack.c.l.b16 %v4108
    %v4117 = vunpack.c.l.b16 %v4109
    %v4118 = vpack.c.b16 %v4115, %v4114
    %v4119 = vpack.c.b16 %v4117, %v4116
    %v4121 = vsel %vm516, %v4118, 0
    %v4124 = vsel %vm516, %v4119, 0
    %4126 = vmatprep.subr.bf16.mxu0 %v3892
    %4127 = vmatpush1.bf16.msra.mxu0 %v3891
    %4128 = vmatprep.subr.bf16.mxu0 %v3896
    %4129 = vmatpush1.bf16.msra.mxu0 %v3895
    %4130 = vmatprep.subr.bf16.mxu0 %v3900
    %4131 = vmatpush1.bf16.msra.mxu0 %v3899
    %4132 = vmatprep.subr.bf16.mxu0 %v3904
    %4133 = vmatpush1.bf16.msra.mxu0 %v3903
    %4134 = vmatprep.subr.bf16.mxu0 0
    %4135 = vmatpush1.bf16.msra.mxu0 0
    %4136 = vmatprep.subr.bf16.mxu0 0
    %4137 = vmatpush1.bf16.msra.mxu0 0
    %4138 = vmatprep.subr.bf16.mxu0 0
    %4139 = vmatpush1.bf16.msra.mxu0 0
    %4140 = vmatprep.subr.bf16.mxu0 0
    %4141 = vmatpush1.bf16.msra.mxu0 0
    %4142 = vmatprep.subr.bf16.mxu0 0
    %4143 = vmatpush1.bf16.msra.mxu0 0
    %4144 = vmatprep.subr.bf16.mxu0 0
    %4145 = vmatpush1.bf16.msra.mxu0 0
    %4146 = vmatprep.subr.bf16.mxu0 0
    %4147 = vmatpush1.bf16.msra.mxu0 0
    %4148 = vmatprep.subr.bf16.mxu0 0
    %4149 = vmatpush1.bf16.msra.mxu0 0
    %4150 = vmatprep.subr.bf16.mxu0 0
    %4151 = vmatpush1.bf16.msra.mxu0 0
    %4152 = vmatprep.subr.bf16.mxu0 0
    %4153 = vmatpush1.bf16.msra.mxu0 0
    %4154 = vmatprep.subr.bf16.mxu0 0
    %4155 = vmatpush1.bf16.msra.mxu0 0
    %4156 = vmatprep.subr.bf16.mxu0 0
    %4157 = vmatpush1.bf16.msra.mxu0 0
    %4158 = vmatprep.mubr.bf16.mxu0 0
    %4159 = vmatmul.mubr.bf16.gmra.mrb[0].mxu0 %v4121
    %v4160 = vpop.f32.mrb[0].mxu0
    %v4161 = vadd.f32 0.0, %v4160
    %v4162 = vpop.f32.mrb[0].mxu0
    %v4163 = vadd.f32 0.0, %v4162
    %v4164 = vpop.f32.mrb[0].mxu0
    %v4165 = vadd.f32 0.0, %v4164
    %v4166 = vpop.f32.mrb[0].mxu0
    %v4167 = vadd.f32 0.0, %v4166
    %4168 = vmatprep.mubr.bf16.mxu0 0
    %4169 = vmatmul.mubr.bf16.gmra.mrb[0].mxu0 %v4124
    %v4170 = vpop.f32.mrb[0].mxu0
    %v4171 = vadd.f32 0.0, %v4170
    %v4172 = vpop.f32.mrb[0].mxu0
    %v4173 = vadd.f32 0.0, %v4172
    %v4174 = vpop.f32.mrb[0].mxu0
    %v4175 = vadd.f32 0.0, %v4174
    %v4176 = vpop.f32.mrb[0].mxu0
    %v4177 = vadd.f32 0.0, %v4176
    %4178 = vdwg.mxu0
    %4179 = vmatprep.subr.bf16.mxu0 %v3894
    %4180 = vmatpush1.bf16.msra.mxu0 %v3893
    %4181 = vmatprep.subr.bf16.mxu0 %v3898
    %4182 = vmatpush1.bf16.msra.mxu0 %v3897
    %4183 = vmatprep.subr.bf16.mxu0 %v3902
    %4184 = vmatpush1.bf16.msra.mxu0 %v3901
    %4185 = vmatprep.subr.bf16.mxu0 %v3906
    %4186 = vmatpush1.bf16.msra.mxu0 %v3905
    %4187 = vmatprep.subr.bf16.mxu0 0
    %4188 = vmatpush1.bf16.msra.mxu0 0
    %4189 = vmatprep.subr.bf16.mxu0 0
    %4190 = vmatpush1.bf16.msra.mxu0 0
    %4191 = vmatprep.subr.bf16.mxu0 0
    %4192 = vmatpush1.bf16.msra.mxu0 0
    %4193 = vmatprep.subr.bf16.mxu0 0
    %4194 = vmatpush1.bf16.msra.mxu0 0
    %4195 = vmatprep.subr.bf16.mxu0 0
    %4196 = vmatpush1.bf16.msra.mxu0 0
    %4197 = vmatprep.subr.bf16.mxu0 0
    %4198 = vmatpush1.bf16.msra.mxu0 0
    %4199 = vmatprep.subr.bf16.mxu0 0
    %4200 = vmatpush1.bf16.msra.mxu0 0
    %4201 = vmatprep.subr.bf16.mxu0 0
    %4202 = vmatpush1.bf16.msra.mxu0 0
    %4203 = vmatprep.subr.bf16.mxu0 0
    %4204 = vmatpush1.bf16.msra.mxu0 0
    %4205 = vmatprep.subr.bf16.mxu0 0
    %4206 = vmatpush1.bf16.msra.mxu0 0
    %4207 = vmatprep.subr.bf16.mxu0 0
    %4208 = vmatpush1.bf16.msra.mxu0 0
    %4209 = vmatprep.subr.bf16.mxu0 0
    %4210 = vmatpush1.bf16.msra.mxu0 0
    %4211 = vmatprep.mubr.bf16.mxu0 0
    %4212 = vmatmul.mubr.bf16.gmra.mrb[0].mxu0 %v4121
    %v4213 = vpop.f32.mrb[0].mxu0
    %v4214 = vadd.f32 0.0, %v4213
    %v4215 = vpop.f32.mrb[0].mxu0
    %v4216 = vadd.f32 0.0, %v4215
    %v4217 = vpop.f32.mrb[0].mxu0
    %v4218 = vadd.f32 0.0, %v4217
    %v4219 = vpop.f32.mrb[0].mxu0
    %v4220 = vadd.f32 0.0, %v4219
    %4221 = vmatprep.mubr.bf16.mxu0 0
    %4222 = vmatmul.mubr.bf16.gmra.mrb[0].mxu0 %v4124
    %v4223 = vpop.f32.mrb[0].mxu0
    %v4224 = vadd.f32 0.0, %v4223
    %v4225 = vpop.f32.mrb[0].mxu0
    %v4226 = vadd.f32 0.0, %v4225
    %v4227 = vpop.f32.mrb[0].mxu0
    %v4228 = vadd.f32 0.0, %v4227
    %v4229 = vpop.f32.mrb[0].mxu0
    %v4230 = vadd.f32 0.0, %v4229
    %4231 = vdwg.mxu0
    %v4232 = vpack.c.bf16 %v4165, %v4161
    %v4233 = vpack.c.bf16 %v4167, %v4163
    %v4234 = vpack.c.bf16 %v4218, %v4214
    %v4235 = vpack.c.bf16 %v4220, %v4216
    %v4236 = vpack.c.bf16 %v4175, %v4171
    %v4237 = vpack.c.bf16 %v4177, %v4173
    %v4238 = vpack.c.bf16 %v4228, %v4224
    %v4239 = vpack.c.bf16 %v4230, %v4226
    %s4240 = scalar_lea.vmem %s7, 512
    %v4241 = vld [vmem:[%s4240] sm:$0xff]
    %v4242 = vld [vmem:[%s4240 + $0x8] sm:$0xff]
    %v4243 = vld [vmem:[%s4240 + $0x10] sm:$0xff]
    %v4244 = vld [vmem:[%s4240 + $0x18] sm:$0xff]
    %v4245 = vld [vmem:[%s4240 + $0x20] sm:$0xff]
    %v4246 = vld [vmem:[%s4240 + $0x28] sm:$0xff]
    %v4247 = vld [vmem:[%s4240 + $0x30] sm:$0xff]
    %v4248 = vld [vmem:[%s4240 + $0x38] sm:$0xff]
    %v4249 = vld [vmem:[%s4240 + $0x40] sm:$0xff]
    %v4250 = vld [vmem:[%s4240 + $0x48] sm:$0xff]
    %v4251 = vld [vmem:[%s4240 + $0x50] sm:$0xff]
    %v4252 = vld [vmem:[%s4240 + $0x58] sm:$0xff]
    %v4253 = vld [vmem:[%s4240 + $0x60] sm:$0xff]
    %v4254 = vld [vmem:[%s4240 + $0x68] sm:$0xff]
    %v4255 = vld [vmem:[%s4240 + $0x70] sm:$0xff]
    %v4256 = vld [vmem:[%s4240 + $0x78] sm:$0xff]
    %v4257 = vld [vmem:[%s4240 + $0x80] sm:$0xff]
    %v4258 = vld [vmem:[%s4240 + $0x88] sm:$0xff]
    %v4259 = vld [vmem:[%s4240 + $0x90] sm:$0xff]
    %v4260 = vld [vmem:[%s4240 + $0x98] sm:$0xff]
    %v4261 = vld [vmem:[%s4240 + $0xa0] sm:$0xff]
    %v4262 = vld [vmem:[%s4240 + $0xa8] sm:$0xff]
    %v4263 = vld [vmem:[%s4240 + $0xb0] sm:$0xff]
    %v4264 = vld [vmem:[%s4240 + $0xb8] sm:$0xff]
    %v4265 = vld [vmem:[%s4240 + $0xc0] sm:$0xff]
    %v4266 = vld [vmem:[%s4240 + $0xc8] sm:$0xff]
    %v4267 = vld [vmem:[%s4240 + $0xd0] sm:$0xff]
    %v4268 = vld [vmem:[%s4240 + $0xd8] sm:$0xff]
    %v4269 = vld [vmem:[%s4240 + $0xe0] sm:$0xff]
    %v4270 = vld [vmem:[%s4240 + $0xe8] sm:$0xff]
    %v4271 = vld [vmem:[%s4240 + $0xf0] sm:$0xff]
    %v4272 = vld [vmem:[%s4240 + $0xf8] sm:$0xff]
    %v4273 = vld [vmem:[%s4240 + $0x100] sm:$0xff]
    %v4274 = vld [vmem:[%s4240 + $0x108] sm:$0xff]
    %v4275 = vld [vmem:[%s4240 + $0x110] sm:$0xff]
    %v4276 = vld [vmem:[%s4240 + $0x118] sm:$0xff]
    %v4277 = vld [vmem:[%s4240 + $0x120] sm:$0xff]
    %v4278 = vld [vmem:[%s4240 + $0x128] sm:$0xff]
    %v4279 = vld [vmem:[%s4240 + $0x130] sm:$0xff]
    %v4280 = vld [vmem:[%s4240 + $0x138] sm:$0xff]
    %v4281 = vld [vmem:[%s4240 + $0x140] sm:$0xff]
    %v4282 = vld [vmem:[%s4240 + $0x148] sm:$0xff]
    %v4283 = vld [vmem:[%s4240 + $0x150] sm:$0xff]
    %v4284 = vld [vmem:[%s4240 + $0x158] sm:$0xff]
    %v4285 = vld [vmem:[%s4240 + $0x160] sm:$0xff]
    %v4286 = vld [vmem:[%s4240 + $0x168] sm:$0xff]
    %v4287 = vld [vmem:[%s4240 + $0x170] sm:$0xff]
    %v4288 = vld [vmem:[%s4240 + $0x178] sm:$0xff]
    %v4289 = vld [vmem:[%s4240 + $0x180] sm:$0xff]
    %v4290 = vld [vmem:[%s4240 + $0x188] sm:$0xff]
    %v4291 = vld [vmem:[%s4240 + $0x190] sm:$0xff]
    %v4292 = vld [vmem:[%s4240 + $0x198] sm:$0xff]
    %v4293 = vld [vmem:[%s4240 + $0x1a0] sm:$0xff]
    %v4294 = vld [vmem:[%s4240 + $0x1a8] sm:$0xff]
    %v4295 = vld [vmem:[%s4240 + $0x1b0] sm:$0xff]
    %v4296 = vld [vmem:[%s4240 + $0x1b8] sm:$0xff]
    %v4297 = vld [vmem:[%s4240 + $0x1c0] sm:$0xff]
    %v4298 = vld [vmem:[%s4240 + $0x1c8] sm:$0xff]
    %v4299 = vld [vmem:[%s4240 + $0x1d0] sm:$0xff]
    %v4300 = vld [vmem:[%s4240 + $0x1d8] sm:$0xff]
    %v4301 = vld [vmem:[%s4240 + $0x1e0] sm:$0xff]
    %v4302 = vld [vmem:[%s4240 + $0x1e8] sm:$0xff]
    %v4303 = vld [vmem:[%s4240 + $0x1f0] sm:$0xff]
    %v4304 = vld [vmem:[%s4240 + $0x1f8] sm:$0xff]
    %v4369 = vunpack.c.l.b16 %v4241
    %v4370 = vunpack.c.h.b16 %v4241
    %v4371 = vunpack.c.l.b16 %v4242
    %v4372 = vunpack.c.h.b16 %v4242
    %v4373 = vunpack.c.l.b16 %v4243
    %v4374 = vunpack.c.h.b16 %v4243
    %v4375 = vunpack.c.l.b16 %v4244
    %v4376 = vunpack.c.h.b16 %v4244
    %v4377 = vunpack.c.l.b16 %v4245
    %v4378 = vunpack.c.h.b16 %v4245
    %v4379 = vunpack.c.l.b16 %v4246
    %v4380 = vunpack.c.h.b16 %v4246
    %v4381 = vunpack.c.l.b16 %v4247
    %v4382 = vunpack.c.h.b16 %v4247
    %v4383 = vunpack.c.l.b16 %v4248
    %v4384 = vunpack.c.h.b16 %v4248
    %v4385 = vunpack.c.l.b16 %v4249
    %v4386 = vunpack.c.h.b16 %v4249
    %v4387 = vunpack.c.l.b16 %v4250
    %v4388 = vunpack.c.h.b16 %v4250
    %v4389 = vunpack.c.l.b16 %v4251
    %v4390 = vunpack.c.h.b16 %v4251
    %v4391 = vunpack.c.l.b16 %v4252
    %v4392 = vunpack.c.h.b16 %v4252
    %v4393 = vunpack.c.l.b16 %v4253
    %v4394 = vunpack.c.h.b16 %v4253
    %v4395 = vunpack.c.l.b16 %v4254
    %v4396 = vunpack.c.h.b16 %v4254
    %v4397 = vunpack.c.l.b16 %v4255
    %v4398 = vunpack.c.h.b16 %v4255
    %v4399 = vunpack.c.l.b16 %v4256
    %v4400 = vunpack.c.h.b16 %v4256
    %v4401 = vunpack.c.l.b16 %v4257
    %v4402 = vunpack.c.h.b16 %v4257
    %v4403 = vunpack.c.l.b16 %v4258
    %v4404 = vunpack.c.h.b16 %v4258
    %v4405 = vunpack.c.l.b16 %v4259
    %v4406 = vunpack.c.h.b16 %v4259
    %v4407 = vunpack.c.l.b16 %v4260
    %v4408 = vunpack.c.h.b16 %v4260
    %v4409 = vunpack.c.l.b16 %v4261
    %v4410 = vunpack.c.h.b16 %v4261
    %v4411 = vunpack.c.l.b16 %v4262
    %v4412 = vunpack.c.h.b16 %v4262
    %v4413 = vunpack.c.l.b16 %v4263
    %v4414 = vunpack.c.h.b16 %v4263
    %v4415 = vunpack.c.l.b16 %v4264
    %v4416 = vunpack.c.h.b16 %v4264
    %v4417 = vunpack.c.l.b16 %v4265
    %v4418 = vunpack.c.h.b16 %v4265
    %v4419 = vunpack.c.l.b16 %v4266
    %v4420 = vunpack.c.h.b16 %v4266
    %v4421 = vunpack.c.l.b16 %v4267
    %v4422 = vunpack.c.h.b16 %v4267
    %v4423 = vunpack.c.l.b16 %v4268
    %v4424 = vunpack.c.h.b16 %v4268
    %v4425 = vunpack.c.l.b16 %v4269
    %v4426 = vunpack.c.h.b16 %v4269
    %v4427 = vunpack.c.l.b16 %v4270
    %v4428 = vunpack.c.h.b16 %v4270
    %v4429 = vunpack.c.l.b16 %v4271
    %v4430 = vunpack.c.h.b16 %v4271
    %v4431 = vunpack.c.l.b16 %v4272
    %v4432 = vunpack.c.h.b16 %v4272
    %v4433 = vunpack.c.l.b16 %v4273
    %v4434 = vunpack.c.h.b16 %v4273
    %v4435 = vunpack.c.l.b16 %v4274
    %v4436 = vunpack.c.h.b16 %v4274
    %v4437 = vunpack.c.l.b16 %v4275
    %v4438 = vunpack.c.h.b16 %v4275
    %v4439 = vunpack.c.l.b16 %v4276
    %v4440 = vunpack.c.h.b16 %v4276
    %v4441 = vunpack.c.l.b16 %v4277
    %v4442 = vunpack.c.h.b16 %v4277
    %v4443 = vunpack.c.l.b16 %v4278
    %v4444 = vunpack.c.h.b16 %v4278
    %v4445 = vunpack.c.l.b16 %v4279
    %v4446 = vunpack.c.h.b16 %v4279
    %v4447 = vunpack.c.l.b16 %v4280
    %v4448 = vunpack.c.h.b16 %v4280
    %v4449 = vunpack.c.l.b16 %v4281
    %v4450 = vunpack.c.h.b16 %v4281
    %v4451 = vunpack.c.l.b16 %v4282
    %v4452 = vunpack.c.h.b16 %v4282
    %v4453 = vunpack.c.l.b16 %v4283
    %v4454 = vunpack.c.h.b16 %v4283
    %v4455 = vunpack.c.l.b16 %v4284
    %v4456 = vunpack.c.h.b16 %v4284
    %v4457 = vunpack.c.l.b16 %v4285
    %v4458 = vunpack.c.h.b16 %v4285
    %v4459 = vunpack.c.l.b16 %v4286
    %v4460 = vunpack.c.h.b16 %v4286
    %v4461 = vunpack.c.l.b16 %v4287
    %v4462 = vunpack.c.h.b16 %v4287
    %v4463 = vunpack.c.l.b16 %v4288
    %v4464 = vunpack.c.h.b16 %v4288
    %v4465 = vunpack.c.l.b16 %v4289
    %v4466 = vunpack.c.h.b16 %v4289
    %v4467 = vunpack.c.l.b16 %v4290
    %v4468 = vunpack.c.h.b16 %v4290
    %v4469 = vunpack.c.l.b16 %v4291
    %v4470 = vunpack.c.h.b16 %v4291
    %v4471 = vunpack.c.l.b16 %v4292
    %v4472 = vunpack.c.h.b16 %v4292
    %v4473 = vunpack.c.l.b16 %v4293
    %v4474 = vunpack.c.h.b16 %v4293
    %v4475 = vunpack.c.l.b16 %v4294
    %v4476 = vunpack.c.h.b16 %v4294
    %v4477 = vunpack.c.l.b16 %v4295
    %v4478 = vunpack.c.h.b16 %v4295
    %v4479 = vunpack.c.l.b16 %v4296
    %v4480 = vunpack.c.h.b16 %v4296
    %v4481 = vunpack.c.l.b16 %v4297
    %v4482 = vunpack.c.h.b16 %v4297
    %v4483 = vunpack.c.l.b16 %v4298
    %v4484 = vunpack.c.h.b16 %v4298
    %v4485 = vunpack.c.l.b16 %v4299
    %v4486 = vunpack.c.h.b16 %v4299
    %v4487 = vunpack.c.l.b16 %v4300
    %v4488 = vunpack.c.h.b16 %v4300
    %v4489 = vunpack.c.l.b16 %v4301
    %v4490 = vunpack.c.h.b16 %v4301
    %v4491 = vunpack.c.l.b16 %v4302
    %v4492 = vunpack.c.h.b16 %v4302
    %v4493 = vunpack.c.l.b16 %v4303
    %v4494 = vunpack.c.h.b16 %v4303
    %v4495 = vunpack.c.l.b16 %v4304
    %v4496 = vunpack.c.h.b16 %v4304
    %v4497 = vpack.c.b16 %v4371, %v4369
    %v4498 = vpack.c.b16 %v4372, %v4370
    %v4499 = vpack.c.b16 %v4375, %v4373
    %v4500 = vpack.c.b16 %v4376, %v4374
    %v4501 = vpack.c.b16 %v4379, %v4377
    %v4502 = vpack.c.b16 %v4380, %v4378
    %v4503 = vpack.c.b16 %v4383, %v4381
    %v4504 = vpack.c.b16 %v4384, %v4382
    %v4505 = vpack.c.b16 %v4387, %v4385
    %v4506 = vpack.c.b16 %v4388, %v4386
    %v4507 = vpack.c.b16 %v4391, %v4389
    %v4508 = vpack.c.b16 %v4392, %v4390
    %v4509 = vpack.c.b16 %v4395, %v4393
    %v4510 = vpack.c.b16 %v4396, %v4394
    %v4511 = vpack.c.b16 %v4399, %v4397
    %v4512 = vpack.c.b16 %v4400, %v4398
    %v4513 = vpack.c.b16 %v4403, %v4401
    %v4514 = vpack.c.b16 %v4404, %v4402
    %v4515 = vpack.c.b16 %v4407, %v4405
    %v4516 = vpack.c.b16 %v4408, %v4406
    %v4517 = vpack.c.b16 %v4411, %v4409
    %v4518 = vpack.c.b16 %v4412, %v4410
    %v4519 = vpack.c.b16 %v4415, %v4413
    %v4520 = vpack.c.b16 %v4416, %v4414
    %v4521 = vpack.c.b16 %v4419, %v4417
    %v4522 = vpack.c.b16 %v4420, %v4418
    %v4523 = vpack.c.b16 %v4423, %v4421
    %v4524 = vpack.c.b16 %v4424, %v4422
    %v4525 = vpack.c.b16 %v4427, %v4425
    %v4526 = vpack.c.b16 %v4428, %v4426
    %v4527 = vpack.c.b16 %v4431, %v4429
    %v4528 = vpack.c.b16 %v4432, %v4430
    %v4529 = vpack.c.b16 %v4435, %v4433
    %v4530 = vpack.c.b16 %v4436, %v4434
    %v4531 = vpack.c.b16 %v4439, %v4437
    %v4532 = vpack.c.b16 %v4440, %v4438
    %v4533 = vpack.c.b16 %v4443, %v4441
    %v4534 = vpack.c.b16 %v4444, %v4442
    %v4535 = vpack.c.b16 %v4447, %v4445
    %v4536 = vpack.c.b16 %v4448, %v4446
    %v4537 = vpack.c.b16 %v4451, %v4449
    %v4538 = vpack.c.b16 %v4452, %v4450
    %v4539 = vpack.c.b16 %v4455, %v4453
    %v4540 = vpack.c.b16 %v4456, %v4454
    %v4541 = vpack.c.b16 %v4459, %v4457
    %v4542 = vpack.c.b16 %v4460, %v4458
    %v4543 = vpack.c.b16 %v4463, %v4461
    %v4544 = vpack.c.b16 %v4464, %v4462
    %v4545 = vpack.c.b16 %v4467, %v4465
    %v4546 = vpack.c.b16 %v4468, %v4466
    %v4547 = vpack.c.b16 %v4471, %v4469
    %v4548 = vpack.c.b16 %v4472, %v4470
    %v4549 = vpack.c.b16 %v4475, %v4473
    %v4550 = vpack.c.b16 %v4476, %v4474
    %v4551 = vpack.c.b16 %v4479, %v4477
    %v4552 = vpack.c.b16 %v4480, %v4478
    %v4553 = vpack.c.b16 %v4483, %v4481
    %v4554 = vpack.c.b16 %v4484, %v4482
    %v4555 = vpack.c.b16 %v4487, %v4485
    %v4556 = vpack.c.b16 %v4488, %v4486
    %v4557 = vpack.c.b16 %v4491, %v4489
    %v4558 = vpack.c.b16 %v4492, %v4490
    %v4559 = vpack.c.b16 %v4495, %v4493
    %v4560 = vpack.c.b16 %v4496, %v4494
    %4625 = vmatprep.subr.bf16.mxu0 %v4498
    %4626 = vmatpush1.bf16.msra.mxu0 %v4497
    %4627 = vmatprep.subr.bf16.mxu0 %v4500
    %4628 = vmatpush1.bf16.msra.mxu0 %v4499
    %4629 = vmatprep.subr.bf16.mxu0 %v4502
    %4630 = vmatpush1.bf16.msra.mxu0 %v4501
    %4631 = vmatprep.subr.bf16.mxu0 %v4504
    %4632 = vmatpush1.bf16.msra.mxu0 %v4503
    %4633 = vmatprep.subr.bf16.mxu0 %v4506
    %4634 = vmatpush1.bf16.msra.mxu0 %v4505
    %4635 = vmatprep.subr.bf16.mxu0 %v4508
    %4636 = vmatpush1.bf16.msra.mxu0 %v4507
    %4637 = vmatprep.subr.bf16.mxu0 %v4510
    %4638 = vmatpush1.bf16.msra.mxu0 %v4509
    %4639 = vmatprep.subr.bf16.mxu0 %v4512
    %4640 = vmatpush1.bf16.msra.mxu0 %v4511
    %4641 = vmatprep.subr.bf16.mxu0 %v4514
    %4642 = vmatpush1.bf16.msra.mxu0 %v4513
    %4643 = vmatprep.subr.bf16.mxu0 %v4516
    %4644 = vmatpush1.bf16.msra.mxu0 %v4515
    %4645 = vmatprep.subr.bf16.mxu0 %v4518
    %4646 = vmatpush1.bf16.msra.mxu0 %v4517
    %4647 = vmatprep.subr.bf16.mxu0 %v4520
    %4648 = vmatpush1.bf16.msra.mxu0 %v4519
    %4649 = vmatprep.subr.bf16.mxu0 %v4522
    %4650 = vmatpush1.bf16.msra.mxu0 %v4521
    %4651 = vmatprep.subr.bf16.mxu0 %v4524
    %4652 = vmatpush1.bf16.msra.mxu0 %v4523
    %4653 = vmatprep.subr.bf16.mxu0 %v4526
    %4654 = vmatpush1.bf16.msra.mxu0 %v4525
    %4655 = vmatprep.subr.bf16.mxu0 %v4528
    %4656 = vmatpush1.bf16.msra.mxu0 %v4527
    %4657 = vmatprep.mubr.bf16.mxu0 %v4233
    %4658 = vmatmul.mubr.bf16.gmra.mrb[0].mxu0 %v4232
    %v4659 = vpop.f32.mrb[0].mxu0
    %v4660 = vadd.f32 0.0, %v4659
    %v4661 = vpop.f32.mrb[0].mxu0
    %v4662 = vadd.f32 0.0, %v4661
    %v4663 = vpop.f32.mrb[0].mxu0
    %v4664 = vadd.f32 0.0, %v4663
    %v4665 = vpop.f32.mrb[0].mxu0
    %v4666 = vadd.f32 0.0, %v4665
    %4667 = vmatprep.mubr.bf16.mxu0 %v4237
    %4668 = vmatmul.mubr.bf16.gmra.mrb[0].mxu0 %v4236
    %v4669 = vpop.f32.mrb[0].mxu0
    %v4670 = vadd.f32 0.0, %v4669
    %v4671 = vpop.f32.mrb[0].mxu0
    %v4672 = vadd.f32 0.0, %v4671
    %v4673 = vpop.f32.mrb[0].mxu0
    %v4674 = vadd.f32 0.0, %v4673
    %v4675 = vpop.f32.mrb[0].mxu0
    %v4676 = vadd.f32 0.0, %v4675
    %4677 = vdwg.mxu0
    %4678 = vmatprep.subr.bf16.mxu0 %v4530
    %4679 = vmatpush1.bf16.msra.mxu0 %v4529
    %4680 = vmatprep.subr.bf16.mxu0 %v4532
    %4681 = vmatpush1.bf16.msra.mxu0 %v4531
    %4682 = vmatprep.subr.bf16.mxu0 %v4534
    %4683 = vmatpush1.bf16.msra.mxu0 %v4533
    %4684 = vmatprep.subr.bf16.mxu0 %v4536
    %4685 = vmatpush1.bf16.msra.mxu0 %v4535
    %4686 = vmatprep.subr.bf16.mxu0 %v4538
    %4687 = vmatpush1.bf16.msra.mxu0 %v4537
    %4688 = vmatprep.subr.bf16.mxu0 %v4540
    %4689 = vmatpush1.bf16.msra.mxu0 %v4539
    %4690 = vmatprep.subr.bf16.mxu0 %v4542
    %4691 = vmatpush1.bf16.msra.mxu0 %v4541
    %4692 = vmatprep.subr.bf16.mxu0 %v4544
    %4693 = vmatpush1.bf16.msra.mxu0 %v4543
    %4694 = vmatprep.subr.bf16.mxu0 %v4546
    %4695 = vmatpush1.bf16.msra.mxu0 %v4545
    %4696 = vmatprep.subr.bf16.mxu0 %v4548
    %4697 = vmatpush1.bf16.msra.mxu0 %v4547
    %4698 = vmatprep.subr.bf16.mxu0 %v4550
    %4699 = vmatpush1.bf16.msra.mxu0 %v4549
    %4700 = vmatprep.subr.bf16.mxu0 %v4552
    %4701 = vmatpush1.bf16.msra.mxu0 %v4551
    %4702 = vmatprep.subr.bf16.mxu0 %v4554
    %4703 = vmatpush1.bf16.msra.mxu0 %v4553
    %4704 = vmatprep.subr.bf16.mxu0 %v4556
    %4705 = vmatpush1.bf16.msra.mxu0 %v4555
    %4706 = vmatprep.subr.bf16.mxu0 %v4558
    %4707 = vmatpush1.bf16.msra.mxu0 %v4557
    %4708 = vmatprep.subr.bf16.mxu0 %v4560
    %4709 = vmatpush1.bf16.msra.mxu0 %v4559
    %4710 = vmatprep.mubr.bf16.mxu0 %v4235
    %4711 = vmatmul.mubr.bf16.gmra.mrb[0].mxu0 %v4234
    %v4712 = vpop.f32.mrb[0].mxu0
    %v4713 = vadd.f32 %v4660, %v4712
    %v4714 = vpop.f32.mrb[0].mxu0
    %v4715 = vadd.f32 %v4662, %v4714
    %v4716 = vpop.f32.mrb[0].mxu0
    %v4717 = vadd.f32 %v4664, %v4716
    %v4718 = vpop.f32.mrb[0].mxu0
    %v4719 = vadd.f32 %v4666, %v4718
    %4720 = vmatprep.mubr.bf16.mxu0 %v4239
    %4721 = vmatmul.mubr.bf16.gmra.mrb[0].mxu0 %v4238
    %v4722 = vpop.f32.mrb[0].mxu0
    %v4723 = vadd.f32 %v4670, %v4722
    %v4724 = vpop.f32.mrb[0].mxu0
    %v4725 = vadd.f32 %v4672, %v4724
    %v4726 = vpop.f32.mrb[0].mxu0
    %v4727 = vadd.f32 %v4674, %v4726
    %v4728 = vpop.f32.mrb[0].mxu0
    %v4729 = vadd.f32 %v4676, %v4728
    %4730 = vdwg.mxu0
    %v4795 = vunpack.c.l.b16 %v4041
    %v4796 = vunpack.c.h.b16 %v4041
    %v4797 = vunpack.c.l.b16 %v4042
    %v4798 = vunpack.c.h.b16 %v4042
    %v4799 = vunpack.c.l.b16 %v4043
    %v4800 = vunpack.c.h.b16 %v4043
    %v4801 = vunpack.c.l.b16 %v4044
    %v4802 = vunpack.c.h.b16 %v4044
    %v4803 = vunpack.c.l.b16 %v4045
    %v4804 = vunpack.c.h.b16 %v4045
    %v4805 = vunpack.c.l.b16 %v4046
    %v4806 = vunpack.c.h.b16 %v4046
    %v4807 = vunpack.c.l.b16 %v4047
    %v4808 = vunpack.c.h.b16 %v4047
    %v4809 = vunpack.c.l.b16 %v4048
    %v4810 = vunpack.c.h.b16 %v4048
    %v4811 = vunpack.c.l.b16 %v4049
    %v4812 = vunpack.c.h.b16 %v4049
    %v4813 = vunpack.c.l.b16 %v4050
    %v4814 = vunpack.c.h.b16 %v4050
    %v4815 = vunpack.c.l.b16 %v4051
    %v4816 = vunpack.c.h.b16 %v4051
    %v4817 = vunpack.c.l.b16 %v4052
    %v4818 = vunpack.c.h.b16 %v4052
    %v4819 = vunpack.c.l.b16 %v4053
    %v4820 = vunpack.c.h.b16 %v4053
    %v4821 = vunpack.c.l.b16 %v4054
    %v4822 = vunpack.c.h.b16 %v4054
    %v4823 = vunpack.c.l.b16 %v4055
    %v4824 = vunpack.c.h.b16 %v4055
    %v4825 = vunpack.c.l.b16 %v4056
    %v4826 = vunpack.c.h.b16 %v4056
    %v4827 = vunpack.c.l.b16 %v4057
    %v4828 = vunpack.c.h.b16 %v4057
    %v4829 = vunpack.c.l.b16 %v4058
    %v4830 = vunpack.c.h.b16 %v4058
    %v4831 = vunpack.c.l.b16 %v4059
    %v4832 = vunpack.c.h.b16 %v4059
    %v4833 = vunpack.c.l.b16 %v4060
    %v4834 = vunpack.c.h.b16 %v4060
    %v4835 = vunpack.c.l.b16 %v4061
    %v4836 = vunpack.c.h.b16 %v4061
    %v4837 = vunpack.c.l.b16 %v4062
    %v4838 = vunpack.c.h.b16 %v4062
    %v4839 = vunpack.c.l.b16 %v4063
    %v4840 = vunpack.c.h.b16 %v4063
    %v4841 = vunpack.c.l.b16 %v4064
    %v4842 = vunpack.c.h.b16 %v4064
    %v4843 = vunpack.c.l.b16 %v4065
    %v4844 = vunpack.c.h.b16 %v4065
    %v4845 = vunpack.c.l.b16 %v4066
    %v4846 = vunpack.c.h.b16 %v4066
    %v4847 = vunpack.c.l.b16 %v4067
    %v4848 = vunpack.c.h.b16 %v4067
    %v4849 = vunpack.c.l.b16 %v4068
    %v4850 = vunpack.c.h.b16 %v4068
    %v4851 = vunpack.c.l.b16 %v4069
    %v4852 = vunpack.c.h.b16 %v4069
    %v4853 = vunpack.c.l.b16 %v4070
    %v4854 = vunpack.c.h.b16 %v4070
    %v4855 = vunpack.c.l.b16 %v4071
    %v4856 = vunpack.c.h.b16 %v4071
    %v4857 = vunpack.c.l.b16 %v4072
    %v4858 = vunpack.c.h.b16 %v4072
    %v4859 = vunpack.c.l.b16 %v4073
    %v4860 = vunpack.c.h.b16 %v4073
    %v4861 = vunpack.c.l.b16 %v4074
    %v4862 = vunpack.c.h.b16 %v4074
    %v4863 = vunpack.c.l.b16 %v4075
    %v4864 = vunpack.c.h.b16 %v4075
    %v4865 = vunpack.c.l.b16 %v4076
    %v4866 = vunpack.c.h.b16 %v4076
    %v4867 = vunpack.c.l.b16 %v4077
    %v4868 = vunpack.c.h.b16 %v4077
    %v4869 = vunpack.c.l.b16 %v4078
    %v4870 = vunpack.c.h.b16 %v4078
    %v4871 = vunpack.c.l.b16 %v4079
    %v4872 = vunpack.c.h.b16 %v4079
    %v4873 = vunpack.c.l.b16 %v4080
    %v4874 = vunpack.c.h.b16 %v4080
    %v4875 = vunpack.c.l.b16 %v4081
    %v4876 = vunpack.c.h.b16 %v4081
    %v4877 = vunpack.c.l.b16 %v4082
    %v4878 = vunpack.c.h.b16 %v4082
    %v4879 = vunpack.c.l.b16 %v4083
    %v4880 = vunpack.c.h.b16 %v4083
    %v4881 = vunpack.c.l.b16 %v4084
    %v4882 = vunpack.c.h.b16 %v4084
    %v4883 = vunpack.c.l.b16 %v4085
    %v4884 = vunpack.c.h.b16 %v4085
    %v4885 = vunpack.c.l.b16 %v4086
    %v4886 = vunpack.c.h.b16 %v4086
    %v4887 = vunpack.c.l.b16 %v4087
    %v4888 = vunpack.c.h.b16 %v4087
    %v4889 = vunpack.c.l.b16 %v4088
    %v4890 = vunpack.c.h.b16 %v4088
    %v4891 = vunpack.c.l.b16 %v4089
    %v4892 = vunpack.c.h.b16 %v4089
    %v4893 = vunpack.c.l.b16 %v4090
    %v4894 = vunpack.c.h.b16 %v4090
    %v4895 = vunpack.c.l.b16 %v4091
    %v4896 = vunpack.c.h.b16 %v4091
    %v4897 = vunpack.c.l.b16 %v4092
    %v4898 = vunpack.c.h.b16 %v4092
    %v4899 = vunpack.c.l.b16 %v4093
    %v4900 = vunpack.c.h.b16 %v4093
    %v4901 = vunpack.c.l.b16 %v4094
    %v4902 = vunpack.c.h.b16 %v4094
    %v4903 = vunpack.c.l.b16 %v4095
    %v4904 = vunpack.c.h.b16 %v4095
    %v4905 = vunpack.c.l.b16 %v4096
    %v4906 = vunpack.c.h.b16 %v4096
    %v4907 = vunpack.c.l.b16 %v4097
    %v4908 = vunpack.c.h.b16 %v4097
    %v4909 = vunpack.c.l.b16 %v4098
    %v4910 = vunpack.c.h.b16 %v4098
    %v4911 = vunpack.c.l.b16 %v4099
    %v4912 = vunpack.c.h.b16 %v4099
    %v4913 = vunpack.c.l.b16 %v4100
    %v4914 = vunpack.c.h.b16 %v4100
    %v4915 = vunpack.c.l.b16 %v4101
    %v4916 = vunpack.c.h.b16 %v4101
    %v4917 = vunpack.c.l.b16 %v4102
    %v4918 = vunpack.c.h.b16 %v4102
    %v4919 = vunpack.c.l.b16 %v4103
    %v4920 = vunpack.c.h.b16 %v4103
    %v4921 = vunpack.c.l.b16 %v4104
    %v4922 = vunpack.c.h.b16 %v4104
    %v4923 = vpack.c.b16 %v4797, %v4795
    %v4924 = vpack.c.b16 %v4798, %v4796
    %v4925 = vpack.c.b16 %v4801, %v4799
    %v4926 = vpack.c.b16 %v4802, %v4800
    %v4927 = vpack.c.b16 %v4805, %v4803
    %v4928 = vpack.c.b16 %v4806, %v4804
    %v4929 = vpack.c.b16 %v4809, %v4807
    %v4930 = vpack.c.b16 %v4810, %v4808
    %v4931 = vpack.c.b16 %v4813, %v4811
    %v4932 = vpack.c.b16 %v4814, %v4812
    %v4933 = vpack.c.b16 %v4817, %v4815
    %v4934 = vpack.c.b16 %v4818, %v4816
    %v4935 = vpack.c.b16 %v4821, %v4819
    %v4936 = vpack.c.b16 %v4822, %v4820
    %v4937 = vpack.c.b16 %v4825, %v4823
    %v4938 = vpack.c.b16 %v4826, %v4824
    %v4939 = vpack.c.b16 %v4829, %v4827
    %v4940 = vpack.c.b16 %v4830, %v4828
    %v4941 = vpack.c.b16 %v4833, %v4831
    %v4942 = vpack.c.b16 %v4834, %v4832
    %v4943 = vpack.c.b16 %v4837, %v4835
    %v4944 = vpack.c.b16 %v4838, %v4836
    %v4945 = vpack.c.b16 %v4841, %v4839
    %v4946 = vpack.c.b16 %v4842, %v4840
    %v4947 = vpack.c.b16 %v4845, %v4843
    %v4948 = vpack.c.b16 %v4846, %v4844
    %v4949 = vpack.c.b16 %v4849, %v4847
    %v4950 = vpack.c.b16 %v4850, %v4848
    %v4951 = vpack.c.b16 %v4853, %v4851
    %v4952 = vpack.c.b16 %v4854, %v4852
    %v4953 = vpack.c.b16 %v4857, %v4855
    %v4954 = vpack.c.b16 %v4858, %v4856
    %v4955 = vpack.c.b16 %v4861, %v4859
    %v4956 = vpack.c.b16 %v4862, %v4860
    %v4957 = vpack.c.b16 %v4865, %v4863
    %v4958 = vpack.c.b16 %v4866, %v4864
    %v4959 = vpack.c.b16 %v4869, %v4867
    %v4960 = vpack.c.b16 %v4870, %v4868
    %v4961 = vpack.c.b16 %v4873, %v4871
    %v4962 = vpack.c.b16 %v4874, %v4872
    %v4963 = vpack.c.b16 %v4877, %v4875
    %v4964 = vpack.c.b16 %v4878, %v4876
    %v4965 = vpack.c.b16 %v4881, %v4879
    %v4966 = vpack.c.b16 %v4882, %v4880
    %v4967 = vpack.c.b16 %v4885, %v4883
    %v4968 = vpack.c.b16 %v4886, %v4884
    %v4969 = vpack.c.b16 %v4889, %v4887
    %v4970 = vpack.c.b16 %v4890, %v4888
    %v4971 = vpack.c.b16 %v4893, %v4891
    %v4972 = vpack.c.b16 %v4894, %v4892
    %v4973 = vpack.c.b16 %v4897, %v4895
    %v4974 = vpack.c.b16 %v4898, %v4896
    %v4975 = vpack.c.b16 %v4901, %v4899
    %v4976 = vpack.c.b16 %v4902, %v4900
    %v4977 = vpack.c.b16 %v4905, %v4903
    %v4978 = vpack.c.b16 %v4906, %v4904
    %v4979 = vpack.c.b16 %v4909, %v4907
    %v4980 = vpack.c.b16 %v4910, %v4908
    %v4981 = vpack.c.b16 %v4913, %v4911
    %v4982 = vpack.c.b16 %v4914, %v4912
    %v4983 = vpack.c.b16 %v4917, %v4915
    %v4984 = vpack.c.b16 %v4918, %v4916
    %v4985 = vpack.c.b16 %v4921, %v4919
    %v4986 = vpack.c.b16 %v4922, %v4920
    %5051 = vmatprep.subr.bf16.mxu0 %v4924
    %5052 = vmatpush1.bf16.msra.mxu0 %v4923
    %5053 = vmatprep.subr.bf16.mxu0 %v4926
    %5054 = vmatpush1.bf16.msra.mxu0 %v4925
    %5055 = vmatprep.subr.bf16.mxu0 %v4928
    %5056 = vmatpush1.bf16.msra.mxu0 %v4927
    %5057 = vmatprep.subr.bf16.mxu0 %v4930
    %5058 = vmatpush1.bf16.msra.mxu0 %v4929
    %5059 = vmatprep.subr.bf16.mxu0 %v4932
    %5060 = vmatpush1.bf16.msra.mxu0 %v4931
    %5061 = vmatprep.subr.bf16.mxu0 %v4934
    %5062 = vmatpush1.bf16.msra.mxu0 %v4933
    %5063 = vmatprep.subr.bf16.mxu0 %v4936
    %5064 = vmatpush1.bf16.msra.mxu0 %v4935
    %5065 = vmatprep.subr.bf16.mxu0 %v4938
    %5066 = vmatpush1.bf16.msra.mxu0 %v4937
    %5067 = vmatprep.subr.bf16.mxu0 %v4940
    %5068 = vmatpush1.bf16.msra.mxu0 %v4939
    %5069 = vmatprep.subr.bf16.mxu0 %v4942
    %5070 = vmatpush1.bf16.msra.mxu0 %v4941
    %5071 = vmatprep.subr.bf16.mxu0 %v4944
    %5072 = vmatpush1.bf16.msra.mxu0 %v4943
    %5073 = vmatprep.subr.bf16.mxu0 %v4946
    %5074 = vmatpush1.bf16.msra.mxu0 %v4945
    %5075 = vmatprep.subr.bf16.mxu0 %v4948
    %5076 = vmatpush1.bf16.msra.mxu0 %v4947
    %5077 = vmatprep.subr.bf16.mxu0 %v4950
    %5078 = vmatpush1.bf16.msra.mxu0 %v4949
    %5079 = vmatprep.subr.bf16.mxu0 %v4952
    %5080 = vmatpush1.bf16.msra.mxu0 %v4951
    %5081 = vmatprep.subr.bf16.mxu0 %v4954
    %5082 = vmatpush1.bf16.msra.mxu0 %v4953
    %5083 = vmatprep.mubr.bf16.mxu0 %v4034
    %5084 = vmatmul.mubr.bf16.gmra.mrb[0].mxu0 %v4033
    %v5085 = vpop.f32.mrb[0].mxu0
    %v5086 = vadd.f32 %v4713, %v5085
    %v5087 = vpop.f32.mrb[0].mxu0
    %v5088 = vadd.f32 %v4715, %v5087
    %v5089 = vpop.f32.mrb[0].mxu0
    %v5090 = vadd.f32 %v4717, %v5089
    %v5091 = vpop.f32.mrb[0].mxu0
    %v5092 = vadd.f32 %v4719, %v5091
    %5093 = vmatprep.mubr.bf16.mxu0 %v4038
    %5094 = vmatmul.mubr.bf16.gmra.mrb[0].mxu0 %v4037
    %v5095 = vpop.f32.mrb[0].mxu0
    %v5096 = vadd.f32 %v4723, %v5095
    %v5097 = vpop.f32.mrb[0].mxu0
    %v5098 = vadd.f32 %v4725, %v5097
    %v5099 = vpop.f32.mrb[0].mxu0
    %v5100 = vadd.f32 %v4727, %v5099
    %v5101 = vpop.f32.mrb[0].mxu0
    %v5102 = vadd.f32 %v4729, %v5101
    %5103 = vdwg.mxu0
    %5104 = vmatprep.subr.bf16.mxu0 %v4956
    %5105 = vmatpush1.bf16.msra.mxu0 %v4955
    %5106 = vmatprep.subr.bf16.mxu0 %v4958
    %5107 = vmatpush1.bf16.msra.mxu0 %v4957
    %5108 = vmatprep.subr.bf16.mxu0 %v4960
    %5109 = vmatpush1.bf16.msra.mxu0 %v4959
    %5110 = vmatprep.subr.bf16.mxu0 %v4962
    %5111 = vmatpush1.bf16.msra.mxu0 %v4961
    %5112 = vmatprep.subr.bf16.mxu0 %v4964
    %5113 = vmatpush1.bf16.msra.mxu0 %v4963
    %5114 = vmatprep.subr.bf16.mxu0 %v4966
    %5115 = vmatpush1.bf16.msra.mxu0 %v4965
    %5116 = vmatprep.subr.bf16.mxu0 %v4968
    %5117 = vmatpush1.bf16.msra.mxu0 %v4967
    %5118 = vmatprep.subr.bf16.mxu0 %v4970
    %5119 = vmatpush1.bf16.msra.mxu0 %v4969
    %5120 = vmatprep.subr.bf16.mxu0 %v4972
    %5121 = vmatpush1.bf16.msra.mxu0 %v4971
    %5122 = vmatprep.subr.bf16.mxu0 %v4974
    %5123 = vmatpush1.bf16.msra.mxu0 %v4973
    %5124 = vmatprep.subr.bf16.mxu0 %v4976
    %5125 = vmatpush1.bf16.msra.mxu0 %v4975
    %5126 = vmatprep.subr.bf16.mxu0 %v4978
    %5127 = vmatpush1.bf16.msra.mxu0 %v4977
    %5128 = vmatprep.subr.bf16.mxu0 %v4980
    %5129 = vmatpush1.bf16.msra.mxu0 %v4979
    %5130 = vmatprep.subr.bf16.mxu0 %v4982
    %5131 = vmatpush1.bf16.msra.mxu0 %v4981
    %5132 = vmatprep.subr.bf16.mxu0 %v4984
    %5133 = vmatpush1.bf16.msra.mxu0 %v4983
    %5134 = vmatprep.subr.bf16.mxu0 %v4986
    %5135 = vmatpush1.bf16.msra.mxu0 %v4985
    %5136 = vmatprep.mubr.bf16.mxu0 %v4036
    %5137 = vmatmul.mubr.bf16.gmra.mrb[0].mxu0 %v4035
    %v5138 = vpop.f32.mrb[0].mxu0
    %v5139 = vadd.f32 %v5086, %v5138
    %v5140 = vpop.f32.mrb[0].mxu0
    %v5141 = vadd.f32 %v5088, %v5140
    %v5142 = vpop.f32.mrb[0].mxu0
    %v5143 = vadd.f32 %v5090, %v5142
    %v5144 = vpop.f32.mrb[0].mxu0
    %v5145 = vadd.f32 %v5092, %v5144
    %5146 = vmatprep.mubr.bf16.mxu0 %v4040
    %5147 = vmatmul.mubr.bf16.gmra.mrb[0].mxu0 %v4039
    %v5148 = vpop.f32.mrb[0].mxu0
    %v5149 = vadd.f32 %v5096, %v5148
    %v5150 = vpop.f32.mrb[0].mxu0
    %v5151 = vadd.f32 %v5098, %v5150
    %v5152 = vpop.f32.mrb[0].mxu0
    %v5153 = vadd.f32 %v5100, %v5152
    %v5154 = vpop.f32.mrb[0].mxu0
    %v5155 = vadd.f32 %v5102, %v5154
    %5156 = vdwg.mxu0
    %s5157 = scalar_lea.vmem [#allocation10], 32
    %v5158 = vld [vmem:[%s5157] sm:$0xf]
    %v5159 = vld [vmem:[%s5157 + $0x4] sm:$0xf]
    %v5160 = vld [vmem:[%s5157 + $0x8] sm:$0xf]
    %v5161 = vld [vmem:[%s5157 + $0xc] sm:$0xf]
    %v5166 = vunpack.c.l.b16 %v5158
    %v5167 = vunpack.c.l.b16 %v5159
    %v5168 = vunpack.c.l.b16 %v5160
    %v5169 = vunpack.c.l.b16 %v5161
    %v5170 = vpack.c.b16 %v5167, %v5166
    %v5171 = vpack.c.b16 %v5169, %v5168
    %v5173 = vsel %vm516, %v5170, 0
    %v5176 = vsel %vm516, %v5171, 0
    %5178 = vmatprep.subr.bf16.mxu0 %v3892
    %5179 = vmatpush1.bf16.msra.mxu0 %v3891
    %5180 = vmatprep.subr.bf16.mxu0 %v3896
    %5181 = vmatpush1.bf16.msra.mxu0 %v3895
    %5182 = vmatprep.subr.bf16.mxu0 %v3900
    %5183 = vmatpush1.bf16.msra.mxu0 %v3899
    %5184 = vmatprep.subr.bf16.mxu0 %v3904
    %5185 = vmatpush1.bf16.msra.mxu0 %v3903
    %5186 = vmatprep.subr.bf16.mxu0 0
    %5187 = vmatpush1.bf16.msra.mxu0 0
    %5188 = vmatprep.subr.bf16.mxu0 0
    %5189 = vmatpush1.bf16.msra.mxu0 0
    %5190 = vmatprep.subr.bf16.mxu0 0
    %5191 = vmatpush1.bf16.msra.mxu0 0
    %5192 = vmatprep.subr.bf16.mxu0 0
    %5193 = vmatpush1.bf16.msra.mxu0 0
    %5194 = vmatprep.subr.bf16.mxu0 0
    %5195 = vmatpush1.bf16.msra.mxu0 0
    %5196 = vmatprep.subr.bf16.mxu0 0
    %5197 = vmatpush1.bf16.msra.mxu0 0
    %5198 = vmatprep.subr.bf16.mxu0 0
    %5199 = vmatpush1.bf16.msra.mxu0 0
    %5200 = vmatprep.subr.bf16.mxu0 0
    %5201 = vmatpush1.bf16.msra.mxu0 0
    %5202 = vmatprep.subr.bf16.mxu0 0
    %5203 = vmatpush1.bf16.msra.mxu0 0
    %5204 = vmatprep.subr.bf16.mxu0 0
    %5205 = vmatpush1.bf16.msra.mxu0 0
    %5206 = vmatprep.subr.bf16.mxu0 0
    %5207 = vmatpush1.bf16.msra.mxu0 0
    %5208 = vmatprep.subr.bf16.mxu0 0
    %5209 = vmatpush1.bf16.msra.mxu0 0
    %5210 = vmatprep.mubr.bf16.mxu0 0
    %5211 = vmatmul.mubr.bf16.gmra.mrb[0].mxu0 %v5173
    %v5212 = vpop.f32.mrb[0].mxu0
    %v5213 = vadd.f32 0.0, %v5212
    %v5214 = vpop.f32.mrb[0].mxu0
    %v5215 = vadd.f32 0.0, %v5214
    %v5216 = vpop.f32.mrb[0].mxu0
    %v5217 = vadd.f32 0.0, %v5216
    %v5218 = vpop.f32.mrb[0].mxu0
    %v5219 = vadd.f32 0.0, %v5218
    %5220 = vmatprep.mubr.bf16.mxu0 0
    %5221 = vmatmul.mubr.bf16.gmra.mrb[0].mxu0 %v5176
    %v5222 = vpop.f32.mrb[0].mxu0
    %v5223 = vadd.f32 0.0, %v5222
    %v5224 = vpop.f32.mrb[0].mxu0
    %v5225 = vadd.f32 0.0, %v5224
    %v5226 = vpop.f32.mrb[0].mxu0
    %v5227 = vadd.f32 0.0, %v5226
    %v5228 = vpop.f32.mrb[0].mxu0
    %v5229 = vadd.f32 0.0, %v5228
    %5230 = vdwg.mxu0
    %5231 = vmatprep.subr.bf16.mxu0 %v3894
    %5232 = vmatpush1.bf16.msra.mxu0 %v3893
    %5233 = vmatprep.subr.bf16.mxu0 %v3898
    %5234 = vmatpush1.bf16.msra.mxu0 %v3897
    %5235 = vmatprep.subr.bf16.mxu0 %v3902
    %5236 = vmatpush1.bf16.msra.mxu0 %v3901
    %5237 = vmatprep.subr.bf16.mxu0 %v3906
    %5238 = vmatpush1.bf16.msra.mxu0 %v3905
    %5239 = vmatprep.subr.bf16.mxu0 0
    %5240 = vmatpush1.bf16.msra.mxu0 0
    %5241 = vmatprep.subr.bf16.mxu0 0
    %5242 = vmatpush1.bf16.msra.mxu0 0
    %5243 = vmatprep.subr.bf16.mxu0 0
    %5244 = vmatpush1.bf16.msra.mxu0 0
    %5245 = vmatprep.subr.bf16.mxu0 0
    %5246 = vmatpush1.bf16.msra.mxu0 0
    %5247 = vmatprep.subr.bf16.mxu0 0
    %5248 = vmatpush1.bf16.msra.mxu0 0
    %5249 = vmatprep.subr.bf16.mxu0 0
    %5250 = vmatpush1.bf16.msra.mxu0 0
    %5251 = vmatprep.subr.bf16.mxu0 0
    %5252 = vmatpush1.bf16.msra.mxu0 0
    %5253 = vmatprep.subr.bf16.mxu0 0
    %5254 = vmatpush1.bf16.msra.mxu0 0
    %5255 = vmatprep.subr.bf16.mxu0 0
    %5256 = vmatpush1.bf16.msra.mxu0 0
    %5257 = vmatprep.subr.bf16.mxu0 0
    %5258 = vmatpush1.bf16.msra.mxu0 0
    %5259 = vmatprep.subr.bf16.mxu0 0
    %5260 = vmatpush1.bf16.msra.mxu0 0
    %5261 = vmatprep.subr.bf16.mxu0 0
    %5262 = vmatpush1.bf16.msra.mxu0 0
    %5263 = vmatprep.mubr.bf16.mxu0 0
    %5264 = vmatmul.mubr.bf16.gmra.mrb[0].mxu0 %v5173
    %v5265 = vpop.f32.mrb[0].mxu0
    %v5266 = vadd.f32 0.0, %v5265
    %v5267 = vpop.f32.mrb[0].mxu0
    %v5268 = vadd.f32 0.0, %v5267
    %v5269 = vpop.f32.mrb[0].mxu0
    %v5270 = vadd.f32 0.0, %v5269
    %v5271 = vpop.f32.mrb[0].mxu0
    %v5272 = vadd.f32 0.0, %v5271
    %5273 = vmatprep.mubr.bf16.mxu0 0
    %5274 = vmatmul.mubr.bf16.gmra.mrb[0].mxu0 %v5176
    %v5275 = vpop.f32.mrb[0].mxu0
    %v5276 = vadd.f32 0.0, %v5275
    %v5277 = vpop.f32.mrb[0].mxu0
    %v5278 = vadd.f32 0.0, %v5277
    %v5279 = vpop.f32.mrb[0].mxu0
    %v5280 = vadd.f32 0.0, %v5279
    %v5281 = vpop.f32.mrb[0].mxu0
    %v5282 = vadd.f32 0.0, %v5281
    %5283 = vdwg.mxu0
    %v5284 = vpack.c.bf16 %v5217, %v5213
    %v5285 = vpack.c.bf16 %v5219, %v5215
    %v5286 = vpack.c.bf16 %v5270, %v5266
    %v5287 = vpack.c.bf16 %v5272, %v5268
    %v5288 = vpack.c.bf16 %v5227, %v5223
    %v5289 = vpack.c.bf16 %v5229, %v5225
    %v5290 = vpack.c.bf16 %v5280, %v5276
    %v5291 = vpack.c.bf16 %v5282, %v5278
    %s5292 = scalar_lea.vmem %s7, 1024
    %v5293 = vld [vmem:[%s5292] sm:$0xff]
    %v5294 = vld [vmem:[%s5292 + $0x8] sm:$0xff]
    %v5295 = vld [vmem:[%s5292 + $0x10] sm:$0xff]
    %v5296 = vld [vmem:[%s5292 + $0x18] sm:$0xff]
    %v5297 = vld [vmem:[%s5292 + $0x20] sm:$0xff]
    %v5298 = vld [vmem:[%s5292 + $0x28] sm:$0xff]
    %v5299 = vld [vmem:[%s5292 + $0x30] sm:$0xff]
    %v5300 = vld [vmem:[%s5292 + $0x38] sm:$0xff]
    %v5301 = vld [vmem:[%s5292 + $0x40] sm:$0xff]
    %v5302 = vld [vmem:[%s5292 + $0x48] sm:$0xff]
    %v5303 = vld [vmem:[%s5292 + $0x50] sm:$0xff]
    %v5304 = vld [vmem:[%s5292 + $0x58] sm:$0xff]
    %v5305 = vld [vmem:[%s5292 + $0x60] sm:$0xff]
    %v5306 = vld [vmem:[%s5292 + $0x68] sm:$0xff]
    %v5307 = vld [vmem:[%s5292 + $0x70] sm:$0xff]
    %v5308 = vld [vmem:[%s5292 + $0x78] sm:$0xff]
    %v5309 = vld [vmem:[%s5292 + $0x80] sm:$0xff]
    %v5310 = vld [vmem:[%s5292 + $0x88] sm:$0xff]
    %v5311 = vld [vmem:[%s5292 + $0x90] sm:$0xff]
    %v5312 = vld [vmem:[%s5292 + $0x98] sm:$0xff]
    %v5313 = vld [vmem:[%s5292 + $0xa0] sm:$0xff]
    %v5314 = vld [vmem:[%s5292 + $0xa8] sm:$0xff]
    %v5315 = vld [vmem:[%s5292 + $0xb0] sm:$0xff]
    %v5316 = vld [vmem:[%s5292 + $0xb8] sm:$0xff]
    %v5317 = vld [vmem:[%s5292 + $0xc0] sm:$0xff]
    %v5318 = vld [vmem:[%s5292 + $0xc8] sm:$0xff]
    %v5319 = vld [vmem:[%s5292 + $0xd0] sm:$0xff]
    %v5320 = vld [vmem:[%s5292 + $0xd8] sm:$0xff]
    %v5321 = vld [vmem:[%s5292 + $0xe0] sm:$0xff]
    %v5322 = vld [vmem:[%s5292 + $0xe8] sm:$0xff]
    %v5323 = vld [vmem:[%s5292 + $0xf0] sm:$0xff]
    %v5324 = vld [vmem:[%s5292 + $0xf8] sm:$0xff]
    %v5325 = vld [vmem:[%s5292 + $0x100] sm:$0xff]
    %v5326 = vld [vmem:[%s5292 + $0x108] sm:$0xff]
    %v5327 = vld [vmem:[%s5292 + $0x110] sm:$0xff]
    %v5328 = vld [vmem:[%s5292 + $0x118] sm:$0xff]
    %v5329 = vld [vmem:[%s5292 + $0x120] sm:$0xff]
    %v5330 = vld [vmem:[%s5292 + $0x128] sm:$0xff]
    %v5331 = vld [vmem:[%s5292 + $0x130] sm:$0xff]
    %v5332 = vld [vmem:[%s5292 + $0x138] sm:$0xff]
    %v5333 = vld [vmem:[%s5292 + $0x140] sm:$0xff]
    %v5334 = vld [vmem:[%s5292 + $0x148] sm:$0xff]
    %v5335 = vld [vmem:[%s5292 + $0x150] sm:$0xff]
    %v5336 = vld [vmem:[%s5292 + $0x158] sm:$0xff]
    %v5337 = vld [vmem:[%s5292 + $0x160] sm:$0xff]
    %v5338 = vld [vmem:[%s5292 + $0x168] sm:$0xff]
    %v5339 = vld [vmem:[%s5292 + $0x170] sm:$0xff]
    %v5340 = vld [vmem:[%s5292 + $0x178] sm:$0xff]
    %v5341 = vld [vmem:[%s5292 + $0x180] sm:$0xff]
    %v5342 = vld [vmem:[%s5292 + $0x188] sm:$0xff]
    %v5343 = vld [vmem:[%s5292 + $0x190] sm:$0xff]
    %v5344 = vld [vmem:[%s5292 + $0x198] sm:$0xff]
    %v5345 = vld [vmem:[%s5292 + $0x1a0] sm:$0xff]
    %v5346 = vld [vmem:[%s5292 + $0x1a8] sm:$0xff]
    %v5347 = vld [vmem:[%s5292 + $0x1b0] sm:$0xff]
    %v5348 = vld [vmem:[%s5292 + $0x1b8] sm:$0xff]
    %v5349 = vld [vmem:[%s5292 + $0x1c0] sm:$0xff]
    %v5350 = vld [vmem:[%s5292 + $0x1c8] sm:$0xff]
    %v5351 = vld [vmem:[%s5292 + $0x1d0] sm:$0xff]
    %v5352 = vld [vmem:[%s5292 + $0x1d8] sm:$0xff]
    %v5353 = vld [vmem:[%s5292 + $0x1e0] sm:$0xff]
    %v5354 = vld [vmem:[%s5292 + $0x1e8] sm:$0xff]
    %v5355 = vld [vmem:[%s5292 + $0x1f0] sm:$0xff]
    %v5356 = vld [vmem:[%s5292 + $0x1f8] sm:$0xff]
    %v5421 = vunpack.c.l.b16 %v5293
    %v5422 = vunpack.c.h.b16 %v5293
    %v5423 = vunpack.c.l.b16 %v5294
    %v5424 = vunpack.c.h.b16 %v5294
    %v5425 = vunpack.c.l.b16 %v5295
    %v5426 = vunpack.c.h.b16 %v5295
    %v5427 = vunpack.c.l.b16 %v5296
    %v5428 = vunpack.c.h.b16 %v5296
    %v5429 = vunpack.c.l.b16 %v5297
    %v5430 = vunpack.c.h.b16 %v5297
    %v5431 = vunpack.c.l.b16 %v5298
    %v5432 = vunpack.c.h.b16 %v5298
    %v5433 = vunpack.c.l.b16 %v5299
    %v5434 = vunpack.c.h.b16 %v5299
    %v5435 = vunpack.c.l.b16 %v5300
    %v5436 = vunpack.c.h.b16 %v5300
    %v5437 = vunpack.c.l.b16 %v5301
    %v5438 = vunpack.c.h.b16 %v5301
    %v5439 = vunpack.c.l.b16 %v5302
    %v5440 = vunpack.c.h.b16 %v5302
    %v5441 = vunpack.c.l.b16 %v5303
    %v5442 = vunpack.c.h.b16 %v5303
    %v5443 = vunpack.c.l.b16 %v5304
    %v5444 = vunpack.c.h.b16 %v5304
    %v5445 = vunpack.c.l.b16 %v5305
    %v5446 = vunpack.c.h.b16 %v5305
    %v5447 = vunpack.c.l.b16 %v5306
    %v5448 = vunpack.c.h.b16 %v5306
    %v5449 = vunpack.c.l.b16 %v5307
    %v5450 = vunpack.c.h.b16 %v5307
    %v5451 = vunpack.c.l.b16 %v5308
    %v5452 = vunpack.c.h.b16 %v5308
    %v5453 = vunpack.c.l.b16 %v5309
    %v5454 = vunpack.c.h.b16 %v5309
    %v5455 = vunpack.c.l.b16 %v5310
    %v5456 = vunpack.c.h.b16 %v5310
    %v5457 = vunpack.c.l.b16 %v5311
    %v5458 = vunpack.c.h.b16 %v5311
    %v5459 = vunpack.c.l.b16 %v5312
    %v5460 = vunpack.c.h.b16 %v5312
    %v5461 = vunpack.c.l.b16 %v5313
    %v5462 = vunpack.c.h.b16 %v5313
    %v5463 = vunpack.c.l.b16 %v5314
    %v5464 = vunpack.c.h.b16 %v5314
    %v5465 = vunpack.c.l.b16 %v5315
    %v5466 = vunpack.c.h.b16 %v5315
    %v5467 = vunpack.c.l.b16 %v5316
    %v5468 = vunpack.c.h.b16 %v5316
    %v5469 = vunpack.c.l.b16 %v5317
    %v5470 = vunpack.c.h.b16 %v5317
    %v5471 = vunpack.c.l.b16 %v5318
    %v5472 = vunpack.c.h.b16 %v5318
    %v5473 = vunpack.c.l.b16 %v5319
    %v5474 = vunpack.c.h.b16 %v5319
    %v5475 = vunpack.c.l.b16 %v5320
    %v5476 = vunpack.c.h.b16 %v5320
    %v5477 = vunpack.c.l.b16 %v5321
    %v5478 = vunpack.c.h.b16 %v5321
    %v5479 = vunpack.c.l.b16 %v5322
    %v5480 = vunpack.c.h.b16 %v5322
    %v5481 = vunpack.c.l.b16 %v5323
    %v5482 = vunpack.c.h.b16 %v5323
    %v5483 = vunpack.c.l.b16 %v5324
    %v5484 = vunpack.c.h.b16 %v5324
    %v5485 = vunpack.c.l.b16 %v5325
    %v5486 = vunpack.c.h.b16 %v5325
    %v5487 = vunpack.c.l.b16 %v5326
    %v5488 = vunpack.c.h.b16 %v5326
    %v5489 = vunpack.c.l.b16 %v5327
    %v5490 = vunpack.c.h.b16 %v5327
    %v5491 = vunpack.c.l.b16 %v5328
    %v5492 = vunpack.c.h.b16 %v5328
    %v5493 = vunpack.c.l.b16 %v5329
    %v5494 = vunpack.c.h.b16 %v5329
    %v5495 = vunpack.c.l.b16 %v5330
    %v5496 = vunpack.c.h.b16 %v5330
    %v5497 = vunpack.c.l.b16 %v5331
    %v5498 = vunpack.c.h.b16 %v5331
    %v5499 = vunpack.c.l.b16 %v5332
    %v5500 = vunpack.c.h.b16 %v5332
    %v5501 = vunpack.c.l.b16 %v5333
    %v5502 = vunpack.c.h.b16 %v5333
    %v5503 = vunpack.c.l.b16 %v5334
    %v5504 = vunpack.c.h.b16 %v5334
    %v5505 = vunpack.c.l.b16 %v5335
    %v5506 = vunpack.c.h.b16 %v5335
    %v5507 = vunpack.c.l.b16 %v5336
    %v5508 = vunpack.c.h.b16 %v5336
    %v5509 = vunpack.c.l.b16 %v5337
    %v5510 = vunpack.c.h.b16 %v5337
    %v5511 = vunpack.c.l.b16 %v5338
    %v5512 = vunpack.c.h.b16 %v5338
    %v5513 = vunpack.c.l.b16 %v5339
    %v5514 = vunpack.c.h.b16 %v5339
    %v5515 = vunpack.c.l.b16 %v5340
    %v5516 = vunpack.c.h.b16 %v5340
    %v5517 = vunpack.c.l.b16 %v5341
    %v5518 = vunpack.c.h.b16 %v5341
    %v5519 = vunpack.c.l.b16 %v5342
    %v5520 = vunpack.c.h.b16 %v5342
    %v5521 = vunpack.c.l.b16 %v5343
    %v5522 = vunpack.c.h.b16 %v5343
    %v5523 = vunpack.c.l.b16 %v5344
    %v5524 = vunpack.c.h.b16 %v5344
    %v5525 = vunpack.c.l.b16 %v5345
    %v5526 = vunpack.c.h.b16 %v5345
    %v5527 = vunpack.c.l.b16 %v5346
    %v5528 = vunpack.c.h.b16 %v5346
    %v5529 = vunpack.c.l.b16 %v5347
    %v5530 = vunpack.c.h.b16 %v5347
    %v5531 = vunpack.c.l.b16 %v5348
    %v5532 = vunpack.c.h.b16 %v5348
    %v5533 = vunpack.c.l.b16 %v5349
    %v5534 = vunpack.c.h.b16 %v5349
    %v5535 = vunpack.c.l.b16 %v5350
    %v5536 = vunpack.c.h.b16 %v5350
    %v5537 = vunpack.c.l.b16 %v5351
    %v5538 = vunpack.c.h.b16 %v5351
    %v5539 = vunpack.c.l.b16 %v5352
    %v5540 = vunpack.c.h.b16 %v5352
    %v5541 = vunpack.c.l.b16 %v5353
    %v5542 = vunpack.c.h.b16 %v5353
    %v5543 = vunpack.c.l.b16 %v5354
    %v5544 = vunpack.c.h.b16 %v5354
    %v5545 = vunpack.c.l.b16 %v5355
    %v5546 = vunpack.c.h.b16 %v5355
    %v5547 = vunpack.c.l.b16 %v5356
    %v5548 = vunpack.c.h.b16 %v5356
    %v5549 = vpack.c.b16 %v5423, %v5421
    %v5550 = vpack.c.b16 %v5424, %v5422
    %v5551 = vpack.c.b16 %v5427, %v5425
    %v5552 = vpack.c.b16 %v5428, %v5426
    %v5553 = vpack.c.b16 %v5431, %v5429
    %v5554 = vpack.c.b16 %v5432, %v5430
    %v5555 = vpack.c.b16 %v5435, %v5433
    %v5556 = vpack.c.b16 %v5436, %v5434
    %v5557 = vpack.c.b16 %v5439, %v5437
    %v5558 = vpack.c.b16 %v5440, %v5438
    %v5559 = vpack.c.b16 %v5443, %v5441
    %v5560 = vpack.c.b16 %v5444, %v5442
    %v5561 = vpack.c.b16 %v5447, %v5445
    %v5562 = vpack.c.b16 %v5448, %v5446
    %v5563 = vpack.c.b16 %v5451, %v5449
    %v5564 = vpack.c.b16 %v5452, %v5450
    %v5565 = vpack.c.b16 %v5455, %v5453
    %v5566 = vpack.c.b16 %v5456, %v5454
    %v5567 = vpack.c.b16 %v5459, %v5457
    %v5568 = vpack.c.b16 %v5460, %v5458
    %v5569 = vpack.c.b16 %v5463, %v5461
    %v5570 = vpack.c.b16 %v5464, %v5462
    %v5571 = vpack.c.b16 %v5467, %v5465
    %v5572 = vpack.c.b16 %v5468, %v5466
    %v5573 = vpack.c.b16 %v5471, %v5469
    %v5574 = vpack.c.b16 %v5472, %v5470
    %v5575 = vpack.c.b16 %v5475, %v5473
    %v5576 = vpack.c.b16 %v5476, %v5474
    %v5577 = vpack.c.b16 %v5479, %v5477
    %v5578 = vpack.c.b16 %v5480, %v5478
    %v5579 = vpack.c.b16 %v5483, %v5481
    %v5580 = vpack.c.b16 %v5484, %v5482
    %v5581 = vpack.c.b16 %v5487, %v5485
    %v5582 = vpack.c.b16 %v5488, %v5486
    %v5583 = vpack.c.b16 %v5491, %v5489
    %v5584 = vpack.c.b16 %v5492, %v5490
    %v5585 = vpack.c.b16 %v5495, %v5493
    %v5586 = vpack.c.b16 %v5496, %v5494
    %v5587 = vpack.c.b16 %v5499, %v5497
    %v5588 = vpack.c.b16 %v5500, %v5498
    %v5589 = vpack.c.b16 %v5503, %v5501
    %v5590 = vpack.c.b16 %v5504, %v5502
    %v5591 = vpack.c.b16 %v5507, %v5505
    %v5592 = vpack.c.b16 %v5508, %v5506
    %v5593 = vpack.c.b16 %v5511, %v5509
    %v5594 = vpack.c.b16 %v5512, %v5510
    %v5595 = vpack.c.b16 %v5515, %v5513
    %v5596 = vpack.c.b16 %v5516, %v5514
    %v5597 = vpack.c.b16 %v5519, %v5517
    %v5598 = vpack.c.b16 %v5520, %v5518
    %v5599 = vpack.c.b16 %v5523, %v5521
    %v5600 = vpack.c.b16 %v5524, %v5522
    %v5601 = vpack.c.b16 %v5527, %v5525
    %v5602 = vpack.c.b16 %v5528, %v5526
    %v5603 = vpack.c.b16 %v5531, %v5529
    %v5604 = vpack.c.b16 %v5532, %v5530
    %v5605 = vpack.c.b16 %v5535, %v5533
    %v5606 = vpack.c.b16 %v5536, %v5534
    %v5607 = vpack.c.b16 %v5539, %v5537
    %v5608 = vpack.c.b16 %v5540, %v5538
    %v5609 = vpack.c.b16 %v5543, %v5541
    %v5610 = vpack.c.b16 %v5544, %v5542
    %v5611 = vpack.c.b16 %v5547, %v5545
    %v5612 = vpack.c.b16 %v5548, %v5546
    %5677 = vmatprep.subr.bf16.mxu0 %v5550
    %5678 = vmatpush1.bf16.msra.mxu0 %v5549
    %5679 = vmatprep.subr.bf16.mxu0 %v5552
    %5680 = vmatpush1.bf16.msra.mxu0 %v5551
    %5681 = vmatprep.subr.bf16.mxu0 %v5554
    %5682 = vmatpush1.bf16.msra.mxu0 %v5553
    %5683 = vmatprep.subr.bf16.mxu0 %v5556
    %5684 = vmatpush1.bf16.msra.mxu0 %v5555
    %5685 = vmatprep.subr.bf16.mxu0 %v5558
    %5686 = vmatpush1.bf16.msra.mxu0 %v5557
    %5687 = vmatprep.subr.bf16.mxu0 %v5560
    %5688 = vmatpush1.bf16.msra.mxu0 %v5559
    %5689 = vmatprep.subr.bf16.mxu0 %v5562
    %5690 = vmatpush1.bf16.msra.mxu0 %v5561
    %5691 = vmatprep.subr.bf16.mxu0 %v5564
    %5692 = vmatpush1.bf16.msra.mxu0 %v5563
    %5693 = vmatprep.subr.bf16.mxu0 %v5566
    %5694 = vmatpush1.bf16.msra.mxu0 %v5565
    %5695 = vmatprep.subr.bf16.mxu0 %v5568
    %5696 = vmatpush1.bf16.msra.mxu0 %v5567
    %5697 = vmatprep.subr.bf16.mxu0 %v5570
    %5698 = vmatpush1.bf16.msra.mxu0 %v5569
    %5699 = vmatprep.subr.bf16.mxu0 %v5572
    %5700 = vmatpush1.bf16.msra.mxu0 %v5571
    %5701 = vmatprep.subr.bf16.mxu0 %v5574
    %5702 = vmatpush1.bf16.msra.mxu0 %v5573
    %5703 = vmatprep.subr.bf16.mxu0 %v5576
    %5704 = vmatpush1.bf16.msra.mxu0 %v5575
    %5705 = vmatprep.subr.bf16.mxu0 %v5578
    %5706 = vmatpush1.bf16.msra.mxu0 %v5577
    %5707 = vmatprep.subr.bf16.mxu0 %v5580
    %5708 = vmatpush1.bf16.msra.mxu0 %v5579
    %5709 = vmatprep.mubr.bf16.mxu0 %v5285
    %5710 = vmatmul.mubr.bf16.gmra.mrb[0].mxu0 %v5284
    %v5711 = vpop.f32.mrb[0].mxu0
    %v5712 = vadd.f32 0.0, %v5711
    %v5713 = vpop.f32.mrb[0].mxu0
    %v5714 = vadd.f32 0.0, %v5713
    %v5715 = vpop.f32.mrb[0].mxu0
    %v5716 = vadd.f32 0.0, %v5715
    %v5717 = vpop.f32.mrb[0].mxu0
    %v5718 = vadd.f32 0.0, %v5717
    %5719 = vmatprep.mubr.bf16.mxu0 %v5289
    %5720 = vmatmul.mubr.bf16.gmra.mrb[0].mxu0 %v5288
    %v5721 = vpop.f32.mrb[0].mxu0
    %v5722 = vadd.f32 0.0, %v5721
    %v5723 = vpop.f32.mrb[0].mxu0
    %v5724 = vadd.f32 0.0, %v5723
    %v5725 = vpop.f32.mrb[0].mxu0
    %v5726 = vadd.f32 0.0, %v5725
    %v5727 = vpop.f32.mrb[0].mxu0
    %v5728 = vadd.f32 0.0, %v5727
    %5729 = vdwg.mxu0
    %5730 = vmatprep.subr.bf16.mxu0 %v5582
    %5731 = vmatpush1.bf16.msra.mxu0 %v5581
    %5732 = vmatprep.subr.bf16.mxu0 %v5584
    %5733 = vmatpush1.bf16.msra.mxu0 %v5583
    %5734 = vmatprep.subr.bf16.mxu0 %v5586
    %5735 = vmatpush1.bf16.msra.mxu0 %v5585
    %5736 = vmatprep.subr.bf16.mxu0 %v5588
    %5737 = vmatpush1.bf16.msra.mxu0 %v5587
    %5738 = vmatprep.subr.bf16.mxu0 %v5590
    %5739 = vmatpush1.bf16.msra.mxu0 %v5589
    %5740 = vmatprep.subr.bf16.mxu0 %v5592
    %5741 = vmatpush1.bf16.msra.mxu0 %v5591
    %5742 = vmatprep.subr.bf16.mxu0 %v5594
    %5743 = vmatpush1.bf16.msra.mxu0 %v5593
    %5744 = vmatprep.subr.bf16.mxu0 %v5596
    %5745 = vmatpush1.bf16.msra.mxu0 %v5595
    %5746 = vmatprep.subr.bf16.mxu0 %v5598
    %5747 = vmatpush1.bf16.msra.mxu0 %v5597
    %5748 = vmatprep.subr.bf16.mxu0 %v5600
    %5749 = vmatpush1.bf16.msra.mxu0 %v5599
    %5750 = vmatprep.subr.bf16.mxu0 %v5602
    %5751 = vmatpush1.bf16.msra.mxu0 %v5601
    %5752 = vmatprep.subr.bf16.mxu0 %v5604
    %5753 = vmatpush1.bf16.msra.mxu0 %v5603
    %5754 = vmatprep.subr.bf16.mxu0 %v5606
    %5755 = vmatpush1.bf16.msra.mxu0 %v5605
    %5756 = vmatprep.subr.bf16.mxu0 %v5608
    %5757 = vmatpush1.bf16.msra.mxu0 %v5607
    %5758 = vmatprep.subr.bf16.mxu0 %v5610
    %5759 = vmatpush1.bf16.msra.mxu0 %v5609
    %5760 = vmatprep.subr.bf16.mxu0 %v5612
    %5761 = vmatpush1.bf16.msra.mxu0 %v5611
    %5762 = vmatprep.mubr.bf16.mxu0 %v5287
    %5763 = vmatmul.mubr.bf16.gmra.mrb[0].mxu0 %v5286
    %v5764 = vpop.f32.mrb[0].mxu0
    %v5765 = vadd.f32 %v5712, %v5764
    %v5766 = vpop.f32.mrb[0].mxu0
    %v5767 = vadd.f32 %v5714, %v5766
    %v5768 = vpop.f32.mrb[0].mxu0
    %v5769 = vadd.f32 %v5716, %v5768
    %v5770 = vpop.f32.mrb[0].mxu0
    %v5771 = vadd.f32 %v5718, %v5770
    %5772 = vmatprep.mubr.bf16.mxu0 %v5291
    %5773 = vmatmul.mubr.bf16.gmra.mrb[0].mxu0 %v5290
    %v5774 = vpop.f32.mrb[0].mxu0
    %v5775 = vadd.f32 %v5722, %v5774
    %v5776 = vpop.f32.mrb[0].mxu0
    %v5777 = vadd.f32 %v5724, %v5776
    %v5778 = vpop.f32.mrb[0].mxu0
    %v5779 = vadd.f32 %v5726, %v5778
    %v5780 = vpop.f32.mrb[0].mxu0
    %v5781 = vadd.f32 %v5728, %v5780
    %5782 = vdwg.mxu0
    %v5783 = vadd.f32 %v5139, %v5765
    %v5784 = vadd.f32 %v5141, %v5767
    %v5785 = vadd.f32 %v5143, %v5769
    %v5786 = vadd.f32 %v5145, %v5771
    %v5787 = vadd.f32 %v5149, %v5775
    %v5788 = vadd.f32 %v5151, %v5777
    %v5789 = vadd.f32 %v5153, %v5779
    %v5790 = vadd.f32 %v5155, %v5781
    %s5791 = scalar_lea.vmem [#allocation10], 48
    %v5792 = vld [vmem:[%s5791] sm:$0xf]
    %v5793 = vld [vmem:[%s5791 + $0x4] sm:$0xf]
    %v5794 = vld [vmem:[%s5791 + $0x8] sm:$0xf]
    %v5795 = vld [vmem:[%s5791 + $0xc] sm:$0xf]
    %v5800 = vunpack.c.l.b16 %v5792
    %v5801 = vunpack.c.l.b16 %v5793
    %v5802 = vunpack.c.l.b16 %v5794
    %v5803 = vunpack.c.l.b16 %v5795
    %v5804 = vpack.c.b16 %v5801, %v5800
    %v5805 = vpack.c.b16 %v5803, %v5802
    %v5807 = vsel %vm516, %v5804, 0
    %v5810 = vsel %vm516, %v5805, 0
    %5812 = vmatprep.subr.bf16.mxu0 %v3892
    %5813 = vmatpush1.bf16.msra.mxu0 %v3891
    %5814 = vmatprep.subr.bf16.mxu0 %v3896
    %5815 = vmatpush1.bf16.msra.mxu0 %v3895
    %5816 = vmatprep.subr.bf16.mxu0 %v3900
    %5817 = vmatpush1.bf16.msra.mxu0 %v3899
    %5818 = vmatprep.subr.bf16.mxu0 %v3904
    %5819 = vmatpush1.bf16.msra.mxu0 %v3903
    %5820 = vmatprep.subr.bf16.mxu0 0
    %5821 = vmatpush1.bf16.msra.mxu0 0
    %5822 = vmatprep.subr.bf16.mxu0 0
    %5823 = vmatpush1.bf16.msra.mxu0 0
    %5824 = vmatprep.subr.bf16.mxu0 0
    %5825 = vmatpush1.bf16.msra.mxu0 0
    %5826 = vmatprep.subr.bf16.mxu0 0
    %5827 = vmatpush1.bf16.msra.mxu0 0
    %5828 = vmatprep.subr.bf16.mxu0 0
    %5829 = vmatpush1.bf16.msra.mxu0 0
    %5830 = vmatprep.subr.bf16.mxu0 0
    %5831 = vmatpush1.bf16.msra.mxu0 0
    %5832 = vmatprep.subr.bf16.mxu0 0
    %5833 = vmatpush1.bf16.msra.mxu0 0
    %5834 = vmatprep.subr.bf16.mxu0 0
    %5835 = vmatpush1.bf16.msra.mxu0 0
    %5836 = vmatprep.subr.bf16.mxu0 0
    %5837 = vmatpush1.bf16.msra.mxu0 0
    %5838 = vmatprep.subr.bf16.mxu0 0
    %5839 = vmatpush1.bf16.msra.mxu0 0
    %5840 = vmatprep.subr.bf16.mxu0 0
    %5841 = vmatpush1.bf16.msra.mxu0 0
    %5842 = vmatprep.subr.bf16.mxu0 0
    %5843 = vmatpush1.bf16.msra.mxu0 0
    %5844 = vmatprep.mubr.bf16.mxu0 0
    %5845 = vmatmul.mubr.bf16.gmra.mrb[0].mxu0 %v5807
    %v5846 = vpop.f32.mrb[0].mxu0
    %v5847 = vadd.f32 0.0, %v5846
    %v5848 = vpop.f32.mrb[0].mxu0
    %v5849 = vadd.f32 0.0, %v5848
    %v5850 = vpop.f32.mrb[0].mxu0
    %v5851 = vadd.f32 0.0, %v5850
    %v5852 = vpop.f32.mrb[0].mxu0
    %v5853 = vadd.f32 0.0, %v5852
    %5854 = vmatprep.mubr.bf16.mxu0 0
    %5855 = vmatmul.mubr.bf16.gmra.mrb[0].mxu0 %v5810
    %v5856 = vpop.f32.mrb[0].mxu0
    %v5857 = vadd.f32 0.0, %v5856
    %v5858 = vpop.f32.mrb[0].mxu0
    %v5859 = vadd.f32 0.0, %v5858
    %v5860 = vpop.f32.mrb[0].mxu0
    %v5861 = vadd.f32 0.0, %v5860
    %v5862 = vpop.f32.mrb[0].mxu0
    %v5863 = vadd.f32 0.0, %v5862
    %5864 = vdwg.mxu0
    %5865 = vmatprep.subr.bf16.mxu0 %v3894
    %5866 = vmatpush1.bf16.msra.mxu0 %v3893
    %5867 = vmatprep.subr.bf16.mxu0 %v3898
    %5868 = vmatpush1.bf16.msra.mxu0 %v3897
    %5869 = vmatprep.subr.bf16.mxu0 %v3902
    %5870 = vmatpush1.bf16.msra.mxu0 %v3901
    %5871 = vmatprep.subr.bf16.mxu0 %v3906
    %5872 = vmatpush1.bf16.msra.mxu0 %v3905
    %5873 = vmatprep.subr.bf16.mxu0 0
    %5874 = vmatpush1.bf16.msra.mxu0 0
    %5875 = vmatprep.subr.bf16.mxu0 0
    %5876 = vmatpush1.bf16.msra.mxu0 0
    %5877 = vmatprep.subr.bf16.mxu0 0
    %5878 = vmatpush1.bf16.msra.mxu0 0
    %5879 = vmatprep.subr.bf16.mxu0 0
    %5880 = vmatpush1.bf16.msra.mxu0 0
    %5881 = vmatprep.subr.bf16.mxu0 0
    %5882 = vmatpush1.bf16.msra.mxu0 0
    %5883 = vmatprep.subr.bf16.mxu0 0
    %5884 = vmatpush1.bf16.msra.mxu0 0
    %5885 = vmatprep.subr.bf16.mxu0 0
    %5886 = vmatpush1.bf16.msra.mxu0 0
    %5887 = vmatprep.subr.bf16.mxu0 0
    %5888 = vmatpush1.bf16.msra.mxu0 0
    %5889 = vmatprep.subr.bf16.mxu0 0
    %5890 = vmatpush1.bf16.msra.mxu0 0
    %5891 = vmatprep.subr.bf16.mxu0 0
    %5892 = vmatpush1.bf16.msra.mxu0 0
    %5893 = vmatprep.subr.bf16.mxu0 0
    %5894 = vmatpush1.bf16.msra.mxu0 0
    %5895 = vmatprep.subr.bf16.mxu0 0
    %5896 = vmatpush1.bf16.msra.mxu0 0
    %5897 = vmatprep.mubr.bf16.mxu0 0
    %5898 = vmatmul.mubr.bf16.gmra.mrb[0].mxu0 %v5807
    %v5899 = vpop.f32.mrb[0].mxu0
    %v5900 = vadd.f32 0.0, %v5899
    %v5901 = vpop.f32.mrb[0].mxu0
    %v5902 = vadd.f32 0.0, %v5901
    %v5903 = vpop.f32.mrb[0].mxu0
    %v5904 = vadd.f32 0.0, %v5903
    %v5905 = vpop.f32.mrb[0].mxu0
    %v5906 = vadd.f32 0.0, %v5905
    %5907 = vmatprep.mubr.bf16.mxu0 0
    %5908 = vmatmul.mubr.bf16.gmra.mrb[0].mxu0 %v5810
    %v5909 = vpop.f32.mrb[0].mxu0
    %v5910 = vadd.f32 0.0, %v5909
    %v5911 = vpop.f32.mrb[0].mxu0
    %v5912 = vadd.f32 0.0, %v5911
    %v5913 = vpop.f32.mrb[0].mxu0
    %v5914 = vadd.f32 0.0, %v5913
    %v5915 = vpop.f32.mrb[0].mxu0
    %v5916 = vadd.f32 0.0, %v5915
    %5917 = vdwg.mxu0
    %v5918 = vpack.c.bf16 %v5851, %v5847
    %v5919 = vpack.c.bf16 %v5853, %v5849
    %v5920 = vpack.c.bf16 %v5904, %v5900
    %v5921 = vpack.c.bf16 %v5906, %v5902
    %v5922 = vpack.c.bf16 %v5861, %v5857
    %v5923 = vpack.c.bf16 %v5863, %v5859
    %v5924 = vpack.c.bf16 %v5914, %v5910
    %v5925 = vpack.c.bf16 %v5916, %v5912
    %s5926 = scalar_lea.vmem %s7, 1536
    %v5927 = vld [vmem:[%s5926] sm:$0xff]
    %v5928 = vld [vmem:[%s5926 + $0x8] sm:$0xff]
    %v5929 = vld [vmem:[%s5926 + $0x10] sm:$0xff]
    %v5930 = vld [vmem:[%s5926 + $0x18] sm:$0xff]
    %v5931 = vld [vmem:[%s5926 + $0x20] sm:$0xff]
    %v5932 = vld [vmem:[%s5926 + $0x28] sm:$0xff]
    %v5933 = vld [vmem:[%s5926 + $0x30] sm:$0xff]
    %v5934 = vld [vmem:[%s5926 + $0x38] sm:$0xff]
    %v5935 = vld [vmem:[%s5926 + $0x40] sm:$0xff]
    %v5936 = vld [vmem:[%s5926 + $0x48] sm:$0xff]
    %v5937 = vld [vmem:[%s5926 + $0x50] sm:$0xff]
    %v5938 = vld [vmem:[%s5926 + $0x58] sm:$0xff]
    %v5939 = vld [vmem:[%s5926 + $0x60] sm:$0xff]
    %v5940 = vld [vmem:[%s5926 + $0x68] sm:$0xff]
    %v5941 = vld [vmem:[%s5926 + $0x70] sm:$0xff]
    %v5942 = vld [vmem:[%s5926 + $0x78] sm:$0xff]
    %v5943 = vld [vmem:[%s5926 + $0x80] sm:$0xff]
    %v5944 = vld [vmem:[%s5926 + $0x88] sm:$0xff]
    %v5945 = vld [vmem:[%s5926 + $0x90] sm:$0xff]
    %v5946 = vld [vmem:[%s5926 + $0x98] sm:$0xff]
    %v5947 = vld [vmem:[%s5926 + $0xa0] sm:$0xff]
    %v5948 = vld [vmem:[%s5926 + $0xa8] sm:$0xff]
    %v5949 = vld [vmem:[%s5926 + $0xb0] sm:$0xff]
    %v5950 = vld [vmem:[%s5926 + $0xb8] sm:$0xff]
    %v5951 = vld [vmem:[%s5926 + $0xc0] sm:$0xff]
    %v5952 = vld [vmem:[%s5926 + $0xc8] sm:$0xff]
    %v5953 = vld [vmem:[%s5926 + $0xd0] sm:$0xff]
    %v5954 = vld [vmem:[%s5926 + $0xd8] sm:$0xff]
    %v5955 = vld [vmem:[%s5926 + $0xe0] sm:$0xff]
    %v5956 = vld [vmem:[%s5926 + $0xe8] sm:$0xff]
    %v5957 = vld [vmem:[%s5926 + $0xf0] sm:$0xff]
    %v5958 = vld [vmem:[%s5926 + $0xf8] sm:$0xff]
    %v5959 = vld [vmem:[%s5926 + $0x100] sm:$0xff]
    %v5960 = vld [vmem:[%s5926 + $0x108] sm:$0xff]
    %v5961 = vld [vmem:[%s5926 + $0x110] sm:$0xff]
    %v5962 = vld [vmem:[%s5926 + $0x118] sm:$0xff]
    %v5963 = vld [vmem:[%s5926 + $0x120] sm:$0xff]
    %v5964 = vld [vmem:[%s5926 + $0x128] sm:$0xff]
    %v5965 = vld [vmem:[%s5926 + $0x130] sm:$0xff]
    %v5966 = vld [vmem:[%s5926 + $0x138] sm:$0xff]
    %v5967 = vld [vmem:[%s5926 + $0x140] sm:$0xff]
    %v5968 = vld [vmem:[%s5926 + $0x148] sm:$0xff]
    %v5969 = vld [vmem:[%s5926 + $0x150] sm:$0xff]
    %v5970 = vld [vmem:[%s5926 + $0x158] sm:$0xff]
    %v5971 = vld [vmem:[%s5926 + $0x160] sm:$0xff]
    %v5972 = vld [vmem:[%s5926 + $0x168] sm:$0xff]
    %v5973 = vld [vmem:[%s5926 + $0x170] sm:$0xff]
    %v5974 = vld [vmem:[%s5926 + $0x178] sm:$0xff]
    %v5975 = vld [vmem:[%s5926 + $0x180] sm:$0xff]
    %v5976 = vld [vmem:[%s5926 + $0x188] sm:$0xff]
    %v5977 = vld [vmem:[%s5926 + $0x190] sm:$0xff]
    %v5978 = vld [vmem:[%s5926 + $0x198] sm:$0xff]
    %v5979 = vld [vmem:[%s5926 + $0x1a0] sm:$0xff]
    %v5980 = vld [vmem:[%s5926 + $0x1a8] sm:$0xff]
    %v5981 = vld [vmem:[%s5926 + $0x1b0] sm:$0xff]
    %v5982 = vld [vmem:[%s5926 + $0x1b8] sm:$0xff]
    %v5983 = vld [vmem:[%s5926 + $0x1c0] sm:$0xff]
    %v5984 = vld [vmem:[%s5926 + $0x1c8] sm:$0xff]
    %v5985 = vld [vmem:[%s5926 + $0x1d0] sm:$0xff]
    %v5986 = vld [vmem:[%s5926 + $0x1d8] sm:$0xff]
    %v5987 = vld [vmem:[%s5926 + $0x1e0] sm:$0xff]
    %v5988 = vld [vmem:[%s5926 + $0x1e8] sm:$0xff]
    %v5989 = vld [vmem:[%s5926 + $0x1f0] sm:$0xff]
    %v5990 = vld [vmem:[%s5926 + $0x1f8] sm:$0xff]
    %v6055 = vunpack.c.l.b16 %v5927
    %v6056 = vunpack.c.h.b16 %v5927
    %v6057 = vunpack.c.l.b16 %v5928
    %v6058 = vunpack.c.h.b16 %v5928
    %v6059 = vunpack.c.l.b16 %v5929
    %v6060 = vunpack.c.h.b16 %v5929
    %v6061 = vunpack.c.l.b16 %v5930
    %v6062 = vunpack.c.h.b16 %v5930
    %v6063 = vunpack.c.l.b16 %v5931
    %v6064 = vunpack.c.h.b16 %v5931
    %v6065 = vunpack.c.l.b16 %v5932
    %v6066 = vunpack.c.h.b16 %v5932
    %v6067 = vunpack.c.l.b16 %v5933
    %v6068 = vunpack.c.h.b16 %v5933
    %v6069 = vunpack.c.l.b16 %v5934
    %v6070 = vunpack.c.h.b16 %v5934
    %v6071 = vunpack.c.l.b16 %v5935
    %v6072 = vunpack.c.h.b16 %v5935
    %v6073 = vunpack.c.l.b16 %v5936
    %v6074 = vunpack.c.h.b16 %v5936
    %v6075 = vunpack.c.l.b16 %v5937
    %v6076 = vunpack.c.h.b16 %v5937
    %v6077 = vunpack.c.l.b16 %v5938
    %v6078 = vunpack.c.h.b16 %v5938
    %v6079 = vunpack.c.l.b16 %v5939
    %v6080 = vunpack.c.h.b16 %v5939
    %v6081 = vunpack.c.l.b16 %v5940
    %v6082 = vunpack.c.h.b16 %v5940
    %v6083 = vunpack.c.l.b16 %v5941
    %v6084 = vunpack.c.h.b16 %v5941
    %v6085 = vunpack.c.l.b16 %v5942
    %v6086 = vunpack.c.h.b16 %v5942
    %v6087 = vunpack.c.l.b16 %v5943
    %v6088 = vunpack.c.h.b16 %v5943
    %v6089 = vunpack.c.l.b16 %v5944
    %v6090 = vunpack.c.h.b16 %v5944
    %v6091 = vunpack.c.l.b16 %v5945
    %v6092 = vunpack.c.h.b16 %v5945
    %v6093 = vunpack.c.l.b16 %v5946
    %v6094 = vunpack.c.h.b16 %v5946
    %v6095 = vunpack.c.l.b16 %v5947
    %v6096 = vunpack.c.h.b16 %v5947
    %v6097 = vunpack.c.l.b16 %v5948
    %v6098 = vunpack.c.h.b16 %v5948
    %v6099 = vunpack.c.l.b16 %v5949
    %v6100 = vunpack.c.h.b16 %v5949
    %v6101 = vunpack.c.l.b16 %v5950
    %v6102 = vunpack.c.h.b16 %v5950
    %v6103 = vunpack.c.l.b16 %v5951
    %v6104 = vunpack.c.h.b16 %v5951
    %v6105 = vunpack.c.l.b16 %v5952
    %v6106 = vunpack.c.h.b16 %v5952
    %v6107 = vunpack.c.l.b16 %v5953
    %v6108 = vunpack.c.h.b16 %v5953
    %v6109 = vunpack.c.l.b16 %v5954
    %v6110 = vunpack.c.h.b16 %v5954
    %v6111 = vunpack.c.l.b16 %v5955
    %v6112 = vunpack.c.h.b16 %v5955
    %v6113 = vunpack.c.l.b16 %v5956
    %v6114 = vunpack.c.h.b16 %v5956
    %v6115 = vunpack.c.l.b16 %v5957
    %v6116 = vunpack.c.h.b16 %v5957
    %v6117 = vunpack.c.l.b16 %v5958
    %v6118 = vunpack.c.h.b16 %v5958
    %v6119 = vunpack.c.l.b16 %v5959
    %v6120 = vunpack.c.h.b16 %v5959
    %v6121 = vunpack.c.l.b16 %v5960
    %v6122 = vunpack.c.h.b16 %v5960
    %v6123 = vunpack.c.l.b16 %v5961
    %v6124 = vunpack.c.h.b16 %v5961
    %v6125 = vunpack.c.l.b16 %v5962
    %v6126 = vunpack.c.h.b16 %v5962
    %v6127 = vunpack.c.l.b16 %v5963
    %v6128 = vunpack.c.h.b16 %v5963
    %v6129 = vunpack.c.l.b16 %v5964
    %v6130 = vunpack.c.h.b16 %v5964
    %v6131 = vunpack.c.l.b16 %v5965
    %v6132 = vunpack.c.h.b16 %v5965
    %v6133 = vunpack.c.l.b16 %v5966
    %v6134 = vunpack.c.h.b16 %v5966
    %v6135 = vunpack.c.l.b16 %v5967
    %v6136 = vunpack.c.h.b16 %v5967
    %v6137 = vunpack.c.l.b16 %v5968
    %v6138 = vunpack.c.h.b16 %v5968
    %v6139 = vunpack.c.l.b16 %v5969
    %v6140 = vunpack.c.h.b16 %v5969
    %v6141 = vunpack.c.l.b16 %v5970
    %v6142 = vunpack.c.h.b16 %v5970
    %v6143 = vunpack.c.l.b16 %v5971
    %v6144 = vunpack.c.h.b16 %v5971
    %v6145 = vunpack.c.l.b16 %v5972
    %v6146 = vunpack.c.h.b16 %v5972
    %v6147 = vunpack.c.l.b16 %v5973
    %v6148 = vunpack.c.h.b16 %v5973
    %v6149 = vunpack.c.l.b16 %v5974
    %v6150 = vunpack.c.h.b16 %v5974
    %v6151 = vunpack.c.l.b16 %v5975
    %v6152 = vunpack.c.h.b16 %v5975
    %v6153 = vunpack.c.l.b16 %v5976
    %v6154 = vunpack.c.h.b16 %v5976
    %v6155 = vunpack.c.l.b16 %v5977
    %v6156 = vunpack.c.h.b16 %v5977
    %v6157 = vunpack.c.l.b16 %v5978
    %v6158 = vunpack.c.h.b16 %v5978
    %v6159 = vunpack.c.l.b16 %v5979
    %v6160 = vunpack.c.h.b16 %v5979
    %v6161 = vunpack.c.l.b16 %v5980
    %v6162 = vunpack.c.h.b16 %v5980
    %v6163 = vunpack.c.l.b16 %v5981
    %v6164 = vunpack.c.h.b16 %v5981
    %v6165 = vunpack.c.l.b16 %v5982
    %v6166 = vunpack.c.h.b16 %v5982
    %v6167 = vunpack.c.l.b16 %v5983
    %v6168 = vunpack.c.h.b16 %v5983
    %v6169 = vunpack.c.l.b16 %v5984
    %v6170 = vunpack.c.h.b16 %v5984
    %v6171 = vunpack.c.l.b16 %v5985
    %v6172 = vunpack.c.h.b16 %v5985
    %v6173 = vunpack.c.l.b16 %v5986
    %v6174 = vunpack.c.h.b16 %v5986
    %v6175 = vunpack.c.l.b16 %v5987
    %v6176 = vunpack.c.h.b16 %v5987
    %v6177 = vunpack.c.l.b16 %v5988
    %v6178 = vunpack.c.h.b16 %v5988
    %v6179 = vunpack.c.l.b16 %v5989
    %v6180 = vunpack.c.h.b16 %v5989
    %v6181 = vunpack.c.l.b16 %v5990
    %v6182 = vunpack.c.h.b16 %v5990
    %v6183 = vpack.c.b16 %v6057, %v6055
    %v6184 = vpack.c.b16 %v6058, %v6056
    %v6185 = vpack.c.b16 %v6061, %v6059
    %v6186 = vpack.c.b16 %v6062, %v6060
    %v6187 = vpack.c.b16 %v6065, %v6063
    %v6188 = vpack.c.b16 %v6066, %v6064
    %v6189 = vpack.c.b16 %v6069, %v6067
    %v6190 = vpack.c.b16 %v6070, %v6068
    %v6191 = vpack.c.b16 %v6073, %v6071
    %v6192 = vpack.c.b16 %v6074, %v6072
    %v6193 = vpack.c.b16 %v6077, %v6075
    %v6194 = vpack.c.b16 %v6078, %v6076
    %v6195 = vpack.c.b16 %v6081, %v6079
    %v6196 = vpack.c.b16 %v6082, %v6080
    %v6197 = vpack.c.b16 %v6085, %v6083
    %v6198 = vpack.c.b16 %v6086, %v6084
    %v6199 = vpack.c.b16 %v6089, %v6087
    %v6200 = vpack.c.b16 %v6090, %v6088
    %v6201 = vpack.c.b16 %v6093, %v6091
    %v6202 = vpack.c.b16 %v6094, %v6092
    %v6203 = vpack.c.b16 %v6097, %v6095
    %v6204 = vpack.c.b16 %v6098, %v6096
    %v6205 = vpack.c.b16 %v6101, %v6099
    %v6206 = vpack.c.b16 %v6102, %v6100
    %v6207 = vpack.c.b16 %v6105, %v6103
    %v6208 = vpack.c.b16 %v6106, %v6104
    %v6209 = vpack.c.b16 %v6109, %v6107
    %v6210 = vpack.c.b16 %v6110, %v6108
    %v6211 = vpack.c.b16 %v6113, %v6111
    %v6212 = vpack.c.b16 %v6114, %v6112
    %v6213 = vpack.c.b16 %v6117, %v6115
    %v6214 = vpack.c.b16 %v6118, %v6116
    %v6215 = vpack.c.b16 %v6121, %v6119
    %v6216 = vpack.c.b16 %v6122, %v6120
    %v6217 = vpack.c.b16 %v6125, %v6123
    %v6218 = vpack.c.b16 %v6126, %v6124
    %v6219 = vpack.c.b16 %v6129, %v6127
    %v6220 = vpack.c.b16 %v6130, %v6128
    %v6221 = vpack.c.b16 %v6133, %v6131
    %v6222 = vpack.c.b16 %v6134, %v6132
    %v6223 = vpack.c.b16 %v6137, %v6135
    %v6224 = vpack.c.b16 %v6138, %v6136
    %v6225 = vpack.c.b16 %v6141, %v6139
    %v6226 = vpack.c.b16 %v6142, %v6140
    %v6227 = vpack.c.b16 %v6145, %v6143
    %v6228 = vpack.c.b16 %v6146, %v6144
    %v6229 = vpack.c.b16 %v6149, %v6147
    %v6230 = vpack.c.b16 %v6150, %v6148
    %v6231 = vpack.c.b16 %v6153, %v6151
    %v6232 = vpack.c.b16 %v6154, %v6152
    %v6233 = vpack.c.b16 %v6157, %v6155
    %v6234 = vpack.c.b16 %v6158, %v6156
    %v6235 = vpack.c.b16 %v6161, %v6159
    %v6236 = vpack.c.b16 %v6162, %v6160
    %v6237 = vpack.c.b16 %v6165, %v6163
    %v6238 = vpack.c.b16 %v6166, %v6164
    %v6239 = vpack.c.b16 %v6169, %v6167
    %v6240 = vpack.c.b16 %v6170, %v6168
    %v6241 = vpack.c.b16 %v6173, %v6171
    %v6242 = vpack.c.b16 %v6174, %v6172
    %v6243 = vpack.c.b16 %v6177, %v6175
    %v6244 = vpack.c.b16 %v6178, %v6176
    %v6245 = vpack.c.b16 %v6181, %v6179
    %v6246 = vpack.c.b16 %v6182, %v6180
    %6311 = vmatprep.subr.bf16.mxu0 %v6184
    %6312 = vmatpush1.bf16.msra.mxu0 %v6183
    %6313 = vmatprep.subr.bf16.mxu0 %v6186
    %6314 = vmatpush1.bf16.msra.mxu0 %v6185
    %6315 = vmatprep.subr.bf16.mxu0 %v6188
    %6316 = vmatpush1.bf16.msra.mxu0 %v6187
    %6317 = vmatprep.subr.bf16.mxu0 %v6190
    %6318 = vmatpush1.bf16.msra.mxu0 %v6189
    %6319 = vmatprep.subr.bf16.mxu0 %v6192
    %6320 = vmatpush1.bf16.msra.mxu0 %v6191
    %6321 = vmatprep.subr.bf16.mxu0 %v6194
    %6322 = vmatpush1.bf16.msra.mxu0 %v6193
    %6323 = vmatprep.subr.bf16.mxu0 %v6196
    %6324 = vmatpush1.bf16.msra.mxu0 %v6195
    %6325 = vmatprep.subr.bf16.mxu0 %v6198
    %6326 = vmatpush1.bf16.msra.mxu0 %v6197
    %6327 = vmatprep.subr.bf16.mxu0 %v6200
    %6328 = vmatpush1.bf16.msra.mxu0 %v6199
    %6329 = vmatprep.subr.bf16.mxu0 %v6202
    %6330 = vmatpush1.bf16.msra.mxu0 %v6201
    %6331 = vmatprep.subr.bf16.mxu0 %v6204
    %6332 = vmatpush1.bf16.msra.mxu0 %v6203
    %6333 = vmatprep.subr.bf16.mxu0 %v6206
    %6334 = vmatpush1.bf16.msra.mxu0 %v6205
    %6335 = vmatprep.subr.bf16.mxu0 %v6208
    %6336 = vmatpush1.bf16.msra.mxu0 %v6207
    %6337 = vmatprep.subr.bf16.mxu0 %v6210
    %6338 = vmatpush1.bf16.msra.mxu0 %v6209
    %6339 = vmatprep.subr.bf16.mxu0 %v6212
    %6340 = vmatpush1.bf16.msra.mxu0 %v6211
    %6341 = vmatprep.subr.bf16.mxu0 %v6214
    %6342 = vmatpush1.bf16.msra.mxu0 %v6213
    %6343 = vmatprep.mubr.bf16.mxu0 %v5919
    %6344 = vmatmul.mubr.bf16.gmra.mrb[0].mxu0 %v5918
    %v6345 = vpop.f32.mrb[0].mxu0
    %v6346 = vadd.f32 0.0, %v6345
    %v6347 = vpop.f32.mrb[0].mxu0
    %v6348 = vadd.f32 0.0, %v6347
    %v6349 = vpop.f32.mrb[0].mxu0
    %v6350 = vadd.f32 0.0, %v6349
    %v6351 = vpop.f32.mrb[0].mxu0
    %v6352 = vadd.f32 0.0, %v6351
    %6353 = vmatprep.mubr.bf16.mxu0 %v5923
    %6354 = vmatmul.mubr.bf16.gmra.mrb[0].mxu0 %v5922
    %v6355 = vpop.f32.mrb[0].mxu0
    %v6356 = vadd.f32 0.0, %v6355
    %v6357 = vpop.f32.mrb[0].mxu0
    %v6358 = vadd.f32 0.0, %v6357
    %v6359 = vpop.f32.mrb[0].mxu0
    %v6360 = vadd.f32 0.0, %v6359
    %v6361 = vpop.f32.mrb[0].mxu0
    %v6362 = vadd.f32 0.0, %v6361
    %6363 = vdwg.mxu0
    %6364 = vmatprep.subr.bf16.mxu0 %v6216
    %6365 = vmatpush1.bf16.msra.mxu0 %v6215
    %6366 = vmatprep.subr.bf16.mxu0 %v6218
    %6367 = vmatpush1.bf16.msra.mxu0 %v6217
    %6368 = vmatprep.subr.bf16.mxu0 %v6220
    %6369 = vmatpush1.bf16.msra.mxu0 %v6219
    %6370 = vmatprep.subr.bf16.mxu0 %v6222
    %6371 = vmatpush1.bf16.msra.mxu0 %v6221
    %6372 = vmatprep.subr.bf16.mxu0 %v6224
    %6373 = vmatpush1.bf16.msra.mxu0 %v6223
    %6374 = vmatprep.subr.bf16.mxu0 %v6226
    %6375 = vmatpush1.bf16.msra.mxu0 %v6225
    %6376 = vmatprep.subr.bf16.mxu0 %v6228
    %6377 = vmatpush1.bf16.msra.mxu0 %v6227
    %6378 = vmatprep.subr.bf16.mxu0 %v6230
    %6379 = vmatpush1.bf16.msra.mxu0 %v6229
    %6380 = vmatprep.subr.bf16.mxu0 %v6232
    %6381 = vmatpush1.bf16.msra.mxu0 %v6231
    %6382 = vmatprep.subr.bf16.mxu0 %v6234
    %6383 = vmatpush1.bf16.msra.mxu0 %v6233
    %6384 = vmatprep.subr.bf16.mxu0 %v6236
    %6385 = vmatpush1.bf16.msra.mxu0 %v6235
    %6386 = vmatprep.subr.bf16.mxu0 %v6238
    %6387 = vmatpush1.bf16.msra.mxu0 %v6237
    %6388 = vmatprep.subr.bf16.mxu0 %v6240
    %6389 = vmatpush1.bf16.msra.mxu0 %v6239
    %6390 = vmatprep.subr.bf16.mxu0 %v6242
    %6391 = vmatpush1.bf16.msra.mxu0 %v6241
    %6392 = vmatprep.subr.bf16.mxu0 %v6244
    %6393 = vmatpush1.bf16.msra.mxu0 %v6243
    %6394 = vmatprep.subr.bf16.mxu0 %v6246
    %6395 = vmatpush1.bf16.msra.mxu0 %v6245
    %6396 = vmatprep.mubr.bf16.mxu0 %v5921
    %6397 = vmatmul.mubr.bf16.gmra.mrb[0].mxu0 %v5920
    %v6398 = vpop.f32.mrb[0].mxu0
    %v6399 = vadd.f32 %v6346, %v6398
    %v6400 = vpop.f32.mrb[0].mxu0
    %v6401 = vadd.f32 %v6348, %v6400
    %v6402 = vpop.f32.mrb[0].mxu0
    %v6403 = vadd.f32 %v6350, %v6402
    %v6404 = vpop.f32.mrb[0].mxu0
    %v6405 = vadd.f32 %v6352, %v6404
    %6406 = vmatprep.mubr.bf16.mxu0 %v5925
    %6407 = vmatmul.mubr.bf16.gmra.mrb[0].mxu0 %v5924
    %v6408 = vpop.f32.mrb[0].mxu0
    %v6409 = vadd.f32 %v6356, %v6408
    %v6410 = vpop.f32.mrb[0].mxu0
    %v6411 = vadd.f32 %v6358, %v6410
    %v6412 = vpop.f32.mrb[0].mxu0
    %v6413 = vadd.f32 %v6360, %v6412
    %v6414 = vpop.f32.mrb[0].mxu0
    %v6415 = vadd.f32 %v6362, %v6414
    %6416 = vdwg.mxu0
    %v6417 = vadd.f32 %v5783, %v6399
    %v6418 = vadd.f32 %v5784, %v6401
    %v6419 = vadd.f32 %v5785, %v6403
    %v6420 = vadd.f32 %v5786, %v6405
    %v6421 = vadd.f32 %v5787, %v6409
    %v6422 = vadd.f32 %v5788, %v6411
    %v6423 = vadd.f32 %v5789, %v6413
    %v6424 = vadd.f32 %v5790, %v6415
    %v6425 = vld [vmem:[#allocation11] sm:$0x3]
    %v6427 = vlaneseq
    %v6428 = vshrl.u32 %v6427, 7
    %v6429 = vsub.s32 0, %v6428
    %v6430 = vrot.slane %v6425, %v6429
    %v6431 = vlaneseq
    %v6432 = vshrl.u32 %v6431, 7
    %v6433 = vsub.s32 1, %v6432
    %v6434 = vrot.slane %v6425, %v6433
    %v6437 = vadd.f32 %v6417, %v6430
    %v6438 = vadd.f32 %v6418, %v6434
    %v6439 = vadd.f32 %v6419, %v6430
    %v6440 = vadd.f32 %v6420, %v6434
    %v6441 = vadd.f32 %v6421, %v6430
    %v6442 = vadd.f32 %v6422, %v6434
    %v6443 = vadd.f32 %v6423, %v6430
    %v6444 = vadd.f32 %v6424, %v6434
    %vm6445 = vcmp.gt.f32.partialorder %v6437, 0.0
    %vm6446 = vcmp.gt.f32.partialorder %v6438, 0.0
    %vm6447 = vcmp.gt.f32.partialorder %v6439, 0.0
    %vm6448 = vcmp.gt.f32.partialorder %v6440, 0.0
    %vm6449 = vcmp.gt.f32.partialorder %v6441, 0.0
    %vm6450 = vcmp.gt.f32.partialorder %v6442, 0.0
    %vm6451 = vcmp.gt.f32.partialorder %v6443, 0.0
    %vm6452 = vcmp.gt.f32.partialorder %v6444, 0.0
    %v6453 = vmul.f32 %v6437, 0.2
    %v6454 = vmul.f32 %v6438, 0.2
    %v6455 = vmul.f32 %v6439, 0.2
    %v6456 = vmul.f32 %v6440, 0.2
    %v6457 = vmul.f32 %v6441, 0.2
    %v6458 = vmul.f32 %v6442, 0.2
    %v6459 = vmul.f32 %v6443, 0.2
    %v6460 = vmul.f32 %v6444, 0.2
    %v6461 = vsel %vm6445, %v6437, %v6453
    %v6462 = vsel %vm6446, %v6438, %v6454
    %v6463 = vsel %vm6447, %v6439, %v6455
    %v6464 = vsel %vm6448, %v6440, %v6456
    %v6465 = vsel %vm6449, %v6441, %v6457
    %v6466 = vsel %vm6450, %v6442, %v6458
    %v6467 = vsel %vm6451, %v6443, %v6459
    %v6468 = vsel %vm6452, %v6444, %v6460
    %v6469 = vpack.c.bf16 %v6463, %v6461
    %v6470 = vpack.c.bf16 %v6464, %v6462
    %v6471 = vpack.c.bf16 %v6467, %v6465
    %v6472 = vpack.c.bf16 %v6468, %v6466
    %v6473 = vld [vmem:[#allocation13] sm:$0xff]
    %v6474 = vld [vmem:[#allocation13 + $0x8] sm:$0xff]
    %v6475 = vld [vmem:[#allocation13 + $0x10] sm:$0xff]
    %v6476 = vld [vmem:[#allocation13 + $0x18] sm:$0xff]
    %v6477 = vld [vmem:[#allocation13 + $0x20] sm:$0xff]
    %v6478 = vld [vmem:[#allocation13 + $0x28] sm:$0xff]
    %v6479 = vld [vmem:[#allocation13 + $0x30] sm:$0xff]
    %v6480 = vld [vmem:[#allocation13 + $0x38] sm:$0xff]
    %v6481 = vld [vmem:[#allocation13 + $0x40] sm:$0xff]
    %v6482 = vld [vmem:[#allocation13 + $0x48] sm:$0xff]
    %v6483 = vld [vmem:[#allocation13 + $0x50] sm:$0xff]
    %v6484 = vld [vmem:[#allocation13 + $0x58] sm:$0xff]
    %v6485 = vld [vmem:[#allocation13 + $0x60] sm:$0xff]
    %v6486 = vld [vmem:[#allocation13 + $0x68] sm:$0xff]
    %v6487 = vld [vmem:[#allocation13 + $0x70] sm:$0xff]
    %v6488 = vld [vmem:[#allocation13 + $0x78] sm:$0xff]
    %v6489 = vld [vmem:[#allocation13 + $0x80] sm:$0xff]
    %v6490 = vld [vmem:[#allocation13 + $0x88] sm:$0xff]
    %v6491 = vld [vmem:[#allocation13 + $0x90] sm:$0xff]
    %v6492 = vld [vmem:[#allocation13 + $0x98] sm:$0xff]
    %v6493 = vld [vmem:[#allocation13 + $0xa0] sm:$0xff]
    %v6494 = vld [vmem:[#allocation13 + $0xa8] sm:$0xff]
    %v6495 = vld [vmem:[#allocation13 + $0xb0] sm:$0xff]
    %v6496 = vld [vmem:[#allocation13 + $0xb8] sm:$0xff]
    %v6497 = vld [vmem:[#allocation13 + $0xc0] sm:$0xff]
    %v6498 = vld [vmem:[#allocation13 + $0xc8] sm:$0xff]
    %v6499 = vld [vmem:[#allocation13 + $0xd0] sm:$0xff]
    %v6500 = vld [vmem:[#allocation13 + $0xd8] sm:$0xff]
    %v6501 = vld [vmem:[#allocation13 + $0xe0] sm:$0xff]
    %v6502 = vld [vmem:[#allocation13 + $0xe8] sm:$0xff]
    %v6503 = vld [vmem:[#allocation13 + $0xf0] sm:$0xff]
    %v6504 = vld [vmem:[#allocation13 + $0xf8] sm:$0xff]
    %v6505 = vld [vmem:[#allocation13 + $0x100] sm:$0xff]
    %v6506 = vld [vmem:[#allocation13 + $0x108] sm:$0xff]
    %v6507 = vld [vmem:[#allocation13 + $0x110] sm:$0xff]
    %v6508 = vld [vmem:[#allocation13 + $0x118] sm:$0xff]
    %v6509 = vld [vmem:[#allocation13 + $0x120] sm:$0xff]
    %v6510 = vld [vmem:[#allocation13 + $0x128] sm:$0xff]
    %v6511 = vld [vmem:[#allocation13 + $0x130] sm:$0xff]
    %v6512 = vld [vmem:[#allocation13 + $0x138] sm:$0xff]
    %v6513 = vld [vmem:[#allocation13 + $0x140] sm:$0xff]
    %v6514 = vld [vmem:[#allocation13 + $0x148] sm:$0xff]
    %v6515 = vld [vmem:[#allocation13 + $0x150] sm:$0xff]
    %v6516 = vld [vmem:[#allocation13 + $0x158] sm:$0xff]
    %v6517 = vld [vmem:[#allocation13 + $0x160] sm:$0xff]
    %v6518 = vld [vmem:[#allocation13 + $0x168] sm:$0xff]
    %v6519 = vld [vmem:[#allocation13 + $0x170] sm:$0xff]
    %v6520 = vld [vmem:[#allocation13 + $0x178] sm:$0xff]
    %v6521 = vld [vmem:[#allocation13 + $0x180] sm:$0xff]
    %v6522 = vld [vmem:[#allocation13 + $0x188] sm:$0xff]
    %v6523 = vld [vmem:[#allocation13 + $0x190] sm:$0xff]
    %v6524 = vld [vmem:[#allocation13 + $0x198] sm:$0xff]
    %v6525 = vld [vmem:[#allocation13 + $0x1a0] sm:$0xff]
    %v6526 = vld [vmem:[#allocation13 + $0x1a8] sm:$0xff]
    %v6527 = vld [vmem:[#allocation13 + $0x1b0] sm:$0xff]
    %v6528 = vld [vmem:[#allocation13 + $0x1b8] sm:$0xff]
    %v6529 = vld [vmem:[#allocation13 + $0x1c0] sm:$0xff]
    %v6530 = vld [vmem:[#allocation13 + $0x1c8] sm:$0xff]
    %v6531 = vld [vmem:[#allocation13 + $0x1d0] sm:$0xff]
    %v6532 = vld [vmem:[#allocation13 + $0x1d8] sm:$0xff]
    %v6533 = vld [vmem:[#allocation13 + $0x1e0] sm:$0xff]
    %v6534 = vld [vmem:[#allocation13 + $0x1e8] sm:$0xff]
    %v6535 = vld [vmem:[#allocation13 + $0x1f0] sm:$0xff]
    %v6536 = vld [vmem:[#allocation13 + $0x1f8] sm:$0xff]
    %v6601 = vunpack.c.l.b16 %v6473
    %v6602 = vunpack.c.h.b16 %v6473
    %v6603 = vunpack.c.l.b16 %v6474
    %v6604 = vunpack.c.h.b16 %v6474
    %v6605 = vunpack.c.l.b16 %v6475
    %v6606 = vunpack.c.h.b16 %v6475
    %v6607 = vunpack.c.l.b16 %v6476
    %v6608 = vunpack.c.h.b16 %v6476
    %v6609 = vunpack.c.l.b16 %v6477
    %v6610 = vunpack.c.h.b16 %v6477
    %v6611 = vunpack.c.l.b16 %v6478
    %v6612 = vunpack.c.h.b16 %v6478
    %v6613 = vunpack.c.l.b16 %v6479
    %v6614 = vunpack.c.h.b16 %v6479
    %v6615 = vunpack.c.l.b16 %v6480
    %v6616 = vunpack.c.h.b16 %v6480
    %v6617 = vunpack.c.l.b16 %v6481
    %v6618 = vunpack.c.h.b16 %v6481
    %v6619 = vunpack.c.l.b16 %v6482
    %v6620 = vunpack.c.h.b16 %v6482
    %v6621 = vunpack.c.l.b16 %v6483
    %v6622 = vunpack.c.h.b16 %v6483
    %v6623 = vunpack.c.l.b16 %v6484
    %v6624 = vunpack.c.h.b16 %v6484
    %v6625 = vunpack.c.l.b16 %v6485
    %v6626 = vunpack.c.h.b16 %v6485
    %v6627 = vunpack.c.l.b16 %v6486
    %v6628 = vunpack.c.h.b16 %v6486
    %v6629 = vunpack.c.l.b16 %v6487
    %v6630 = vunpack.c.h.b16 %v6487
    %v6631 = vunpack.c.l.b16 %v6488
    %v6632 = vunpack.c.h.b16 %v6488
    %v6633 = vunpack.c.l.b16 %v6489
    %v6634 = vunpack.c.h.b16 %v6489
    %v6635 = vunpack.c.l.b16 %v6490
    %v6636 = vunpack.c.h.b16 %v6490
    %v6637 = vunpack.c.l.b16 %v6491
    %v6638 = vunpack.c.h.b16 %v6491
    %v6639 = vunpack.c.l.b16 %v6492
    %v6640 = vunpack.c.h.b16 %v6492
    %v6641 = vunpack.c.l.b16 %v6493
    %v6642 = vunpack.c.h.b16 %v6493
    %v6643 = vunpack.c.l.b16 %v6494
    %v6644 = vunpack.c.h.b16 %v6494
    %v6645 = vunpack.c.l.b16 %v6495
    %v6646 = vunpack.c.h.b16 %v6495
    %v6647 = vunpack.c.l.b16 %v6496
    %v6648 = vunpack.c.h.b16 %v6496
    %v6649 = vunpack.c.l.b16 %v6497
    %v6650 = vunpack.c.h.b16 %v6497
    %v6651 = vunpack.c.l.b16 %v6498
    %v6652 = vunpack.c.h.b16 %v6498
    %v6653 = vunpack.c.l.b16 %v6499
    %v6654 = vunpack.c.h.b16 %v6499
    %v6655 = vunpack.c.l.b16 %v6500
    %v6656 = vunpack.c.h.b16 %v6500
    %v6657 = vunpack.c.l.b16 %v6501
    %v6658 = vunpack.c.h.b16 %v6501
    %v6659 = vunpack.c.l.b16 %v6502
    %v6660 = vunpack.c.h.b16 %v6502
    %v6661 = vunpack.c.l.b16 %v6503
    %v6662 = vunpack.c.h.b16 %v6503
    %v6663 = vunpack.c.l.b16 %v6504
    %v6664 = vunpack.c.h.b16 %v6504
    %v6665 = vunpack.c.l.b16 %v6505
    %v6666 = vunpack.c.h.b16 %v6505
    %v6667 = vunpack.c.l.b16 %v6506
    %v6668 = vunpack.c.h.b16 %v6506
    %v6669 = vunpack.c.l.b16 %v6507
    %v6670 = vunpack.c.h.b16 %v6507
    %v6671 = vunpack.c.l.b16 %v6508
    %v6672 = vunpack.c.h.b16 %v6508
    %v6673 = vunpack.c.l.b16 %v6509
    %v6674 = vunpack.c.h.b16 %v6509
    %v6675 = vunpack.c.l.b16 %v6510
    %v6676 = vunpack.c.h.b16 %v6510
    %v6677 = vunpack.c.l.b16 %v6511
    %v6678 = vunpack.c.h.b16 %v6511
    %v6679 = vunpack.c.l.b16 %v6512
    %v6680 = vunpack.c.h.b16 %v6512
    %v6681 = vunpack.c.l.b16 %v6513
    %v6682 = vunpack.c.h.b16 %v6513
    %v6683 = vunpack.c.l.b16 %v6514
    %v6684 = vunpack.c.h.b16 %v6514
    %v6685 = vunpack.c.l.b16 %v6515
    %v6686 = vunpack.c.h.b16 %v6515
    %v6687 = vunpack.c.l.b16 %v6516
    %v6688 = vunpack.c.h.b16 %v6516
    %v6689 = vunpack.c.l.b16 %v6517
    %v6690 = vunpack.c.h.b16 %v6517
    %v6691 = vunpack.c.l.b16 %v6518
    %v6692 = vunpack.c.h.b16 %v6518
    %v6693 = vunpack.c.l.b16 %v6519
    %v6694 = vunpack.c.h.b16 %v6519
    %v6695 = vunpack.c.l.b16 %v6520
    %v6696 = vunpack.c.h.b16 %v6520
    %v6697 = vunpack.c.l.b16 %v6521
    %v6698 = vunpack.c.h.b16 %v6521
    %v6699 = vunpack.c.l.b16 %v6522
    %v6700 = vunpack.c.h.b16 %v6522
    %v6701 = vunpack.c.l.b16 %v6523
    %v6702 = vunpack.c.h.b16 %v6523
    %v6703 = vunpack.c.l.b16 %v6524
    %v6704 = vunpack.c.h.b16 %v6524
    %v6705 = vunpack.c.l.b16 %v6525
    %v6706 = vunpack.c.h.b16 %v6525
    %v6707 = vunpack.c.l.b16 %v6526
    %v6708 = vunpack.c.h.b16 %v6526
    %v6709 = vunpack.c.l.b16 %v6527
    %v6710 = vunpack.c.h.b16 %v6527
    %v6711 = vunpack.c.l.b16 %v6528
    %v6712 = vunpack.c.h.b16 %v6528
    %v6713 = vunpack.c.l.b16 %v6529
    %v6714 = vunpack.c.h.b16 %v6529
    %v6715 = vunpack.c.l.b16 %v6530
    %v6716 = vunpack.c.h.b16 %v6530
    %v6717 = vunpack.c.l.b16 %v6531
    %v6718 = vunpack.c.h.b16 %v6531
    %v6719 = vunpack.c.l.b16 %v6532
    %v6720 = vunpack.c.h.b16 %v6532
    %v6721 = vunpack.c.l.b16 %v6533
    %v6722 = vunpack.c.h.b16 %v6533
    %v6723 = vunpack.c.l.b16 %v6534
    %v6724 = vunpack.c.h.b16 %v6534
    %v6725 = vunpack.c.l.b16 %v6535
    %v6726 = vunpack.c.h.b16 %v6535
    %v6727 = vunpack.c.l.b16 %v6536
    %v6728 = vunpack.c.h.b16 %v6536
    %v6729 = vpack.c.b16 %v6605, %v6601
    %v6730 = vpack.c.b16 %v6606, %v6602
    %v6731 = vpack.c.b16 %v6607, %v6603
    %v6732 = vpack.c.b16 %v6608, %v6604
    %v6733 = vpack.c.b16 %v6613, %v6609
    %v6734 = vpack.c.b16 %v6614, %v6610
    %v6735 = vpack.c.b16 %v6615, %v6611
    %v6736 = vpack.c.b16 %v6616, %v6612
    %v6737 = vpack.c.b16 %v6621, %v6617
    %v6738 = vpack.c.b16 %v6622, %v6618
    %v6739 = vpack.c.b16 %v6623, %v6619
    %v6740 = vpack.c.b16 %v6624, %v6620
    %v6741 = vpack.c.b16 %v6629, %v6625
    %v6742 = vpack.c.b16 %v6630, %v6626
    %v6743 = vpack.c.b16 %v6631, %v6627
    %v6744 = vpack.c.b16 %v6632, %v6628
    %v6745 = vpack.c.b16 %v6637, %v6633
    %v6746 = vpack.c.b16 %v6638, %v6634
    %v6747 = vpack.c.b16 %v6639, %v6635
    %v6748 = vpack.c.b16 %v6640, %v6636
    %v6749 = vpack.c.b16 %v6645, %v6641
    %v6750 = vpack.c.b16 %v6646, %v6642
    %v6751 = vpack.c.b16 %v6647, %v6643
    %v6752 = vpack.c.b16 %v6648, %v6644
    %v6753 = vpack.c.b16 %v6653, %v6649
    %v6754 = vpack.c.b16 %v6654, %v6650
    %v6755 = vpack.c.b16 %v6655, %v6651
    %v6756 = vpack.c.b16 %v6656, %v6652
    %v6757 = vpack.c.b16 %v6661, %v6657
    %v6758 = vpack.c.b16 %v6662, %v6658
    %v6759 = vpack.c.b16 %v6663, %v6659
    %v6760 = vpack.c.b16 %v6664, %v6660
    %v6761 = vpack.c.b16 %v6669, %v6665
    %v6762 = vpack.c.b16 %v6670, %v6666
    %v6763 = vpack.c.b16 %v6671, %v6667
    %v6764 = vpack.c.b16 %v6672, %v6668
    %v6765 = vpack.c.b16 %v6677, %v6673
    %v6766 = vpack.c.b16 %v6678, %v6674
    %v6767 = vpack.c.b16 %v6679, %v6675
    %v6768 = vpack.c.b16 %v6680, %v6676
    %v6769 = vpack.c.b16 %v6685, %v6681
    %v6770 = vpack.c.b16 %v6686, %v6682
    %v6771 = vpack.c.b16 %v6687, %v6683
    %v6772 = vpack.c.b16 %v6688, %v6684
    %v6773 = vpack.c.b16 %v6693, %v6689
    %v6774 = vpack.c.b16 %v6694, %v6690
    %v6775 = vpack.c.b16 %v6695, %v6691
    %v6776 = vpack.c.b16 %v6696, %v6692
    %v6777 = vpack.c.b16 %v6701, %v6697
    %v6778 = vpack.c.b16 %v6702, %v6698
    %v6779 = vpack.c.b16 %v6703, %v6699
    %v6780 = vpack.c.b16 %v6704, %v6700
    %v6781 = vpack.c.b16 %v6709, %v6705
    %v6782 = vpack.c.b16 %v6710, %v6706
    %v6783 = vpack.c.b16 %v6711, %v6707
    %v6784 = vpack.c.b16 %v6712, %v6708
    %v6785 = vpack.c.b16 %v6717, %v6713
    %v6786 = vpack.c.b16 %v6718, %v6714
    %v6787 = vpack.c.b16 %v6719, %v6715
    %v6788 = vpack.c.b16 %v6720, %v6716
    %v6789 = vpack.c.b16 %v6725, %v6721
    %v6790 = vpack.c.b16 %v6726, %v6722
    %v6791 = vpack.c.b16 %v6727, %v6723
    %v6792 = vpack.c.b16 %v6728, %v6724
    %6857 = vmatprep.subr.bf16.mxu0 %v6730
    %6858 = vmatpush1.bf16.msra.mxu0 %v6729
    %6859 = vmatprep.subr.bf16.mxu0 %v6734
    %6860 = vmatpush1.bf16.msra.mxu0 %v6733
    %6861 = vmatprep.subr.bf16.mxu0 %v6738
    %6862 = vmatpush1.bf16.msra.mxu0 %v6737
    %6863 = vmatprep.subr.bf16.mxu0 %v6742
    %6864 = vmatpush1.bf16.msra.mxu0 %v6741
    %6865 = vmatprep.subr.bf16.mxu0 %v6746
    %6866 = vmatpush1.bf16.msra.mxu0 %v6745
    %6867 = vmatprep.subr.bf16.mxu0 %v6750
    %6868 = vmatpush1.bf16.msra.mxu0 %v6749
    %6869 = vmatprep.subr.bf16.mxu0 %v6754
    %6870 = vmatpush1.bf16.msra.mxu0 %v6753
    %6871 = vmatprep.subr.bf16.mxu0 %v6758
    %6872 = vmatpush1.bf16.msra.mxu0 %v6757
    %6873 = vmatprep.subr.bf16.mxu0 %v6762
    %6874 = vmatpush1.bf16.msra.mxu0 %v6761
    %6875 = vmatprep.subr.bf16.mxu0 %v6766
    %6876 = vmatpush1.bf16.msra.mxu0 %v6765
    %6877 = vmatprep.subr.bf16.mxu0 %v6770
    %6878 = vmatpush1.bf16.msra.mxu0 %v6769
    %6879 = vmatprep.subr.bf16.mxu0 %v6774
    %6880 = vmatpush1.bf16.msra.mxu0 %v6773
    %6881 = vmatprep.subr.bf16.mxu0 %v6778
    %6882 = vmatpush1.bf16.msra.mxu0 %v6777
    %6883 = vmatprep.subr.bf16.mxu0 %v6782
    %6884 = vmatpush1.bf16.msra.mxu0 %v6781
    %6885 = vmatprep.subr.bf16.mxu0 %v6786
    %6886 = vmatpush1.bf16.msra.mxu0 %v6785
    %6887 = vmatprep.subr.bf16.mxu0 %v6790
    %6888 = vmatpush1.bf16.msra.mxu0 %v6789
    %6889 = vmatprep.mubr.bf16.mxu0 %v6470
    %6890 = vmatmul.mubr.bf16.gmra.mrb[0].mxu0 %v6469
    %v6891 = vpop.f32.mrb[0].mxu0
    %v6892 = vadd.f32 0.0, %v6891
    %v6893 = vpop.f32.mrb[0].mxu0
    %v6894 = vadd.f32 0.0, %v6893
    %v6895 = vpop.f32.mrb[0].mxu0
    %v6896 = vadd.f32 0.0, %v6895
    %v6897 = vpop.f32.mrb[0].mxu0
    %v6898 = vadd.f32 0.0, %v6897
    %6899 = vmatprep.mubr.bf16.mxu0 %v6472
    %6900 = vmatmul.mubr.bf16.gmra.mrb[0].mxu0 %v6471
    %v6901 = vpop.f32.mrb[0].mxu0
    %v6902 = vadd.f32 0.0, %v6901
    %v6903 = vpop.f32.mrb[0].mxu0
    %v6904 = vadd.f32 0.0, %v6903
    %v6905 = vpop.f32.mrb[0].mxu0
    %v6906 = vadd.f32 0.0, %v6905
    %v6907 = vpop.f32.mrb[0].mxu0
    %v6908 = vadd.f32 0.0, %v6907
    %6909 = vdwg.mxu0
    %6910 = vmatprep.subr.bf16.mxu0 %v6732
    %6911 = vmatpush1.bf16.msra.mxu0 %v6731
    %6912 = vmatprep.subr.bf16.mxu0 %v6736
    %6913 = vmatpush1.bf16.msra.mxu0 %v6735
    %6914 = vmatprep.subr.bf16.mxu0 %v6740
    %6915 = vmatpush1.bf16.msra.mxu0 %v6739
    %6916 = vmatprep.subr.bf16.mxu0 %v6744
    %6917 = vmatpush1.bf16.msra.mxu0 %v6743
    %6918 = vmatprep.subr.bf16.mxu0 %v6748
    %6919 = vmatpush1.bf16.msra.mxu0 %v6747
    %6920 = vmatprep.subr.bf16.mxu0 %v6752
    %6921 = vmatpush1.bf16.msra.mxu0 %v6751
    %6922 = vmatprep.subr.bf16.mxu0 %v6756
    %6923 = vmatpush1.bf16.msra.mxu0 %v6755
    %6924 = vmatprep.subr.bf16.mxu0 %v6760
    %6925 = vmatpush1.bf16.msra.mxu0 %v6759
    %6926 = vmatprep.subr.bf16.mxu0 %v6764
    %6927 = vmatpush1.bf16.msra.mxu0 %v6763
    %6928 = vmatprep.subr.bf16.mxu0 %v6768
    %6929 = vmatpush1.bf16.msra.mxu0 %v6767
    %6930 = vmatprep.subr.bf16.mxu0 %v6772
    %6931 = vmatpush1.bf16.msra.mxu0 %v6771
    %6932 = vmatprep.subr.bf16.mxu0 %v6776
    %6933 = vmatpush1.bf16.msra.mxu0 %v6775
    %6934 = vmatprep.subr.bf16.mxu0 %v6780
    %6935 = vmatpush1.bf16.msra.mxu0 %v6779
    %6936 = vmatprep.subr.bf16.mxu0 %v6784
    %6937 = vmatpush1.bf16.msra.mxu0 %v6783
    %6938 = vmatprep.subr.bf16.mxu0 %v6788
    %6939 = vmatpush1.bf16.msra.mxu0 %v6787
    %6940 = vmatprep.subr.bf16.mxu0 %v6792
    %6941 = vmatpush1.bf16.msra.mxu0 %v6791
    %6942 = vmatprep.mubr.bf16.mxu0 %v6470
    %6943 = vmatmul.mubr.bf16.gmra.mrb[0].mxu0 %v6469
    %v6944 = vpop.f32.mrb[0].mxu0
    %v6945 = vadd.f32 0.0, %v6944
    %v6946 = vpop.f32.mrb[0].mxu0
    %v6947 = vadd.f32 0.0, %v6946
    %v6948 = vpop.f32.mrb[0].mxu0
    %v6949 = vadd.f32 0.0, %v6948
    %v6950 = vpop.f32.mrb[0].mxu0
    %v6951 = vadd.f32 0.0, %v6950
    %6952 = vmatprep.mubr.bf16.mxu0 %v6472
    %6953 = vmatmul.mubr.bf16.gmra.mrb[0].mxu0 %v6471
    %v6954 = vpop.f32.mrb[0].mxu0
    %v6955 = vadd.f32 0.0, %v6954
    %v6956 = vpop.f32.mrb[0].mxu0
    %v6957 = vadd.f32 0.0, %v6956
    %v6958 = vpop.f32.mrb[0].mxu0
    %v6959 = vadd.f32 0.0, %v6958
    %v6960 = vpop.f32.mrb[0].mxu0
    %v6961 = vadd.f32 0.0, %v6960
    %6962 = vdwg.mxu0
    %v6963 = vpack.c.bf16 %v6896, %v6892
    %v6964 = vpack.c.bf16 %v6898, %v6894
    %v6965 = vpack.c.bf16 %v6949, %v6945
    %v6966 = vpack.c.bf16 %v6951, %v6947
    %v6967 = vpack.c.bf16 %v6906, %v6902
    %v6968 = vpack.c.bf16 %v6908, %v6904
    %v6969 = vpack.c.bf16 %v6959, %v6955
    %v6970 = vpack.c.bf16 %v6961, %v6957
    %v6971 = vld [vmem:[%s10] sm:$0xf]
    %v6972 = vld [vmem:[%s10 + $0x4] sm:$0xf]
    %v6975 = vunpack.c.l.b16 %v6971
    %v6976 = vunpack.c.l.b16 %v6972
    %v6977 = vpack.c.b16 %v6976, %v6975
    %vm6978 = vcmask 261120
    %v6980 = vsel %vm6978, %v6977, 0
    %6982 = vmatprep.subr.bf16.mxu0 %v6964
    %6983 = vmatpush1.bf16.msra.mxu0 %v6963
    %6984 = vmatprep.subr.bf16.mxu0 %v6968
    %6985 = vmatpush1.bf16.msra.mxu0 %v6967
    %6986 = vmatprep.subr.bf16.mxu0 0
    %6987 = vmatpush1.bf16.msra.mxu0 0
    %6988 = vmatprep.subr.bf16.mxu0 0
    %6989 = vmatpush1.bf16.msra.mxu0 0
    %6990 = vmatprep.subr.bf16.mxu0 0
    %6991 = vmatpush1.bf16.msra.mxu0 0
    %6992 = vmatprep.subr.bf16.mxu0 0
    %6993 = vmatpush1.bf16.msra.mxu0 0
    %6994 = vmatprep.subr.bf16.mxu0 0
    %6995 = vmatpush1.bf16.msra.mxu0 0
    %6996 = vmatprep.subr.bf16.mxu0 0
    %6997 = vmatpush1.bf16.msra.mxu0 0
    %6998 = vmatprep.subr.bf16.mxu0 0
    %6999 = vmatpush1.bf16.msra.mxu0 0
    %7000 = vmatprep.subr.bf16.mxu0 0
    %7001 = vmatpush1.bf16.msra.mxu0 0
    %7002 = vmatprep.subr.bf16.mxu0 0
    %7003 = vmatpush1.bf16.msra.mxu0 0
    %7004 = vmatprep.subr.bf16.mxu0 0
    %7005 = vmatpush1.bf16.msra.mxu0 0
    %7006 = vmatprep.subr.bf16.mxu0 0
    %7007 = vmatpush1.bf16.msra.mxu0 0
    %7008 = vmatprep.subr.bf16.mxu0 0
    %7009 = vmatpush1.bf16.msra.mxu0 0
    %7010 = vmatprep.subr.bf16.mxu0 0
    %7011 = vmatpush1.bf16.msra.mxu0 0
    %7012 = vmatprep.subr.bf16.mxu0 0
    %7013 = vmatpush1.bf16.msra.mxu0 0
    %7014 = vmatprep.mubr.bf16.mxu0 0
    %7015 = vmatmul.mubr.bf16.gmra.mrb[0].mxu0 %v6980
    %v7016 = vpop.f32.mrb[0].mxu0
    %v7017 = vadd.f32 0.0, %v7016
    %v7018 = vpop.f32.mrb[0].mxu0
    %v7019 = vadd.f32 0.0, %v7018
    %v7020 = vpop.f32.mrb[0].mxu0
    %v7021 = vadd.f32 0.0, %v7020
    %v7022 = vpop.f32.mrb[0].mxu0
    %v7023 = vadd.f32 0.0, %v7022
    %7024 = vdwg.mxu0
    %7025 = vmatprep.subr.bf16.mxu0 %v6966
    %7026 = vmatpush1.bf16.msra.mxu0 %v6965
    %7027 = vmatprep.subr.bf16.mxu0 %v6970
    %7028 = vmatpush1.bf16.msra.mxu0 %v6969
    %7029 = vmatprep.subr.bf16.mxu0 0
    %7030 = vmatpush1.bf16.msra.mxu0 0
    %7031 = vmatprep.subr.bf16.mxu0 0
    %7032 = vmatpush1.bf16.msra.mxu0 0
    %7033 = vmatprep.subr.bf16.mxu0 0
    %7034 = vmatpush1.bf16.msra.mxu0 0
    %7035 = vmatprep.subr.bf16.mxu0 0
    %7036 = vmatpush1.bf16.msra.mxu0 0
    %7037 = vmatprep.subr.bf16.mxu0 0
    %7038 = vmatpush1.bf16.msra.mxu0 0
    %7039 = vmatprep.subr.bf16.mxu0 0
    %7040 = vmatpush1.bf16.msra.mxu0 0
    %7041 = vmatprep.subr.bf16.mxu0 0
    %7042 = vmatpush1.bf16.msra.mxu0 0
    %7043 = vmatprep.subr.bf16.mxu0 0
    %7044 = vmatpush1.bf16.msra.mxu0 0
    %7045 = vmatprep.subr.bf16.mxu0 0
    %7046 = vmatpush1.bf16.msra.mxu0 0
    %7047 = vmatprep.subr.bf16.mxu0 0
    %7048 = vmatpush1.bf16.msra.mxu0 0
    %7049 = vmatprep.subr.bf16.mxu0 0
    %7050 = vmatpush1.bf16.msra.mxu0 0
    %7051 = vmatprep.subr.bf16.mxu0 0
    %7052 = vmatpush1.bf16.msra.mxu0 0
    %7053 = vmatprep.subr.bf16.mxu0 0
    %7054 = vmatpush1.bf16.msra.mxu0 0
    %7055 = vmatprep.subr.bf16.mxu0 0
    %7056 = vmatpush1.bf16.msra.mxu0 0
    %7057 = vmatprep.mubr.bf16.mxu0 0
    %7058 = vmatmul.mubr.bf16.gmra.mrb[0].mxu0 %v6980
    %v7059 = vpop.f32.mrb[0].mxu0
    %v7060 = vadd.f32 0.0, %v7059
    %v7061 = vpop.f32.mrb[0].mxu0
    %v7062 = vadd.f32 0.0, %v7061
    %v7063 = vpop.f32.mrb[0].mxu0
    %v7064 = vadd.f32 0.0, %v7063
    %v7065 = vpop.f32.mrb[0].mxu0
    %v7066 = vadd.f32 0.0, %v7065
    %7067 = vdwg.mxu0
    %v7068 = vpack.c.bf16 %v7021, %v7017
    %v7069 = vpack.c.bf16 %v7023, %v7019
    %v7070 = vpack.c.bf16 %v7064, %v7060
    %v7071 = vpack.c.bf16 %v7066, %v7062
    %v7072 = vld [vmem:[#allocation14] sm:$0xff]
    %v7073 = vld [vmem:[#allocation14 + $0x8] sm:$0xff]
    %v7074 = vld [vmem:[#allocation14 + $0x10] sm:$0xff]
    %v7075 = vld [vmem:[#allocation14 + $0x18] sm:$0xff]
    %v7076 = vld [vmem:[#allocation14 + $0x20] sm:$0xff]
    %v7077 = vld [vmem:[#allocation14 + $0x28] sm:$0xff]
    %v7078 = vld [vmem:[#allocation14 + $0x30] sm:$0xff]
    %v7079 = vld [vmem:[#allocation14 + $0x38] sm:$0xff]
    %v7080 = vld [vmem:[#allocation14 + $0x40] sm:$0xff]
    %v7081 = vld [vmem:[#allocation14 + $0x48] sm:$0xff]
    %v7082 = vld [vmem:[#allocation14 + $0x50] sm:$0xff]
    %v7083 = vld [vmem:[#allocation14 + $0x58] sm:$0xff]
    %v7084 = vld [vmem:[#allocation14 + $0x60] sm:$0xff]
    %v7085 = vld [vmem:[#allocation14 + $0x68] sm:$0xff]
    %v7086 = vld [vmem:[#allocation14 + $0x70] sm:$0xff]
    %v7087 = vld [vmem:[#allocation14 + $0x78] sm:$0xff]
    %v7088 = vld [vmem:[#allocation14 + $0x80] sm:$0xff]
    %v7089 = vld [vmem:[#allocation14 + $0x88] sm:$0xff]
    %v7090 = vld [vmem:[#allocation14 + $0x90] sm:$0xff]
    %v7091 = vld [vmem:[#allocation14 + $0x98] sm:$0xff]
    %v7092 = vld [vmem:[#allocation14 + $0xa0] sm:$0xff]
    %v7093 = vld [vmem:[#allocation14 + $0xa8] sm:$0xff]
    %v7094 = vld [vmem:[#allocation14 + $0xb0] sm:$0xff]
    %v7095 = vld [vmem:[#allocation14 + $0xb8] sm:$0xff]
    %v7096 = vld [vmem:[#allocation14 + $0xc0] sm:$0xff]
    %v7097 = vld [vmem:[#allocation14 + $0xc8] sm:$0xff]
    %v7098 = vld [vmem:[#allocation14 + $0xd0] sm:$0xff]
    %v7099 = vld [vmem:[#allocation14 + $0xd8] sm:$0xff]
    %v7100 = vld [vmem:[#allocation14 + $0xe0] sm:$0xff]
    %v7101 = vld [vmem:[#allocation14 + $0xe8] sm:$0xff]
    %v7102 = vld [vmem:[#allocation14 + $0xf0] sm:$0xff]
    %v7103 = vld [vmem:[#allocation14 + $0xf8] sm:$0xff]
    %v7104 = vld [vmem:[#allocation14 + $0x100] sm:$0xff]
    %v7105 = vld [vmem:[#allocation14 + $0x108] sm:$0xff]
    %v7106 = vld [vmem:[#allocation14 + $0x110] sm:$0xff]
    %v7107 = vld [vmem:[#allocation14 + $0x118] sm:$0xff]
    %v7108 = vld [vmem:[#allocation14 + $0x120] sm:$0xff]
    %v7109 = vld [vmem:[#allocation14 + $0x128] sm:$0xff]
    %v7110 = vld [vmem:[#allocation14 + $0x130] sm:$0xff]
    %v7111 = vld [vmem:[#allocation14 + $0x138] sm:$0xff]
    %v7112 = vld [vmem:[#allocation14 + $0x140] sm:$0xff]
    %v7113 = vld [vmem:[#allocation14 + $0x148] sm:$0xff]
    %v7114 = vld [vmem:[#allocation14 + $0x150] sm:$0xff]
    %v7115 = vld [vmem:[#allocation14 + $0x158] sm:$0xff]
    %v7116 = vld [vmem:[#allocation14 + $0x160] sm:$0xff]
    %v7117 = vld [vmem:[#allocation14 + $0x168] sm:$0xff]
    %v7118 = vld [vmem:[#allocation14 + $0x170] sm:$0xff]
    %v7119 = vld [vmem:[#allocation14 + $0x178] sm:$0xff]
    %v7120 = vld [vmem:[#allocation14 + $0x180] sm:$0xff]
    %v7121 = vld [vmem:[#allocation14 + $0x188] sm:$0xff]
    %v7122 = vld [vmem:[#allocation14 + $0x190] sm:$0xff]
    %v7123 = vld [vmem:[#allocation14 + $0x198] sm:$0xff]
    %v7124 = vld [vmem:[#allocation14 + $0x1a0] sm:$0xff]
    %v7125 = vld [vmem:[#allocation14 + $0x1a8] sm:$0xff]
    %v7126 = vld [vmem:[#allocation14 + $0x1b0] sm:$0xff]
    %v7127 = vld [vmem:[#allocation14 + $0x1b8] sm:$0xff]
    %v7128 = vld [vmem:[#allocation14 + $0x1c0] sm:$0xff]
    %v7129 = vld [vmem:[#allocation14 + $0x1c8] sm:$0xff]
    %v7130 = vld [vmem:[#allocation14 + $0x1d0] sm:$0xff]
    %v7131 = vld [vmem:[#allocation14 + $0x1d8] sm:$0xff]
    %v7132 = vld [vmem:[#allocation14 + $0x1e0] sm:$0xff]
    %v7133 = vld [vmem:[#allocation14 + $0x1e8] sm:$0xff]
    %v7134 = vld [vmem:[#allocation14 + $0x1f0] sm:$0xff]
    %v7135 = vld [vmem:[#allocation14 + $0x1f8] sm:$0xff]
    %s7136 = scalar_lea.vmem %s10, 8
    %v7137 = vld [vmem:[%s7136] sm:$0xf]
    %v7138 = vld [vmem:[%s7136 + $0x4] sm:$0xf]
    %v7141 = vunpack.c.l.b16 %v7137
    %v7142 = vunpack.c.l.b16 %v7138
    %v7143 = vpack.c.b16 %v7142, %v7141
    %v7145 = vsel %vm6978, %v7143, 0
    %7147 = vmatprep.subr.bf16.mxu0 %v6964
    %7148 = vmatpush1.bf16.msra.mxu0 %v6963
    %7149 = vmatprep.subr.bf16.mxu0 %v6968
    %7150 = vmatpush1.bf16.msra.mxu0 %v6967
    %7151 = vmatprep.subr.bf16.mxu0 0
    %7152 = vmatpush1.bf16.msra.mxu0 0
    %7153 = vmatprep.subr.bf16.mxu0 0
    %7154 = vmatpush1.bf16.msra.mxu0 0
    %7155 = vmatprep.subr.bf16.mxu0 0
    %7156 = vmatpush1.bf16.msra.mxu0 0
    %7157 = vmatprep.subr.bf16.mxu0 0
    %7158 = vmatpush1.bf16.msra.mxu0 0
    %7159 = vmatprep.subr.bf16.mxu0 0
    %7160 = vmatpush1.bf16.msra.mxu0 0
    %7161 = vmatprep.subr.bf16.mxu0 0
    %7162 = vmatpush1.bf16.msra.mxu0 0
    %7163 = vmatprep.subr.bf16.mxu0 0
    %7164 = vmatpush1.bf16.msra.mxu0 0
    %7165 = vmatprep.subr.bf16.mxu0 0
    %7166 = vmatpush1.bf16.msra.mxu0 0
    %7167 = vmatprep.subr.bf16.mxu0 0
    %7168 = vmatpush1.bf16.msra.mxu0 0
    %7169 = vmatprep.subr.bf16.mxu0 0
    %7170 = vmatpush1.bf16.msra.mxu0 0
    %7171 = vmatprep.subr.bf16.mxu0 0
    %7172 = vmatpush1.bf16.msra.mxu0 0
    %7173 = vmatprep.subr.bf16.mxu0 0
    %7174 = vmatpush1.bf16.msra.mxu0 0
    %7175 = vmatprep.subr.bf16.mxu0 0
    %7176 = vmatpush1.bf16.msra.mxu0 0
    %7177 = vmatprep.subr.bf16.mxu0 0
    %7178 = vmatpush1.bf16.msra.mxu0 0
    %7179 = vmatprep.mubr.bf16.mxu0 0
    %7180 = vmatmul.mubr.bf16.gmra.mrb[0].mxu0 %v7145
    %v7181 = vpop.f32.mrb[0].mxu0
    %v7182 = vadd.f32 0.0, %v7181
    %v7183 = vpop.f32.mrb[0].mxu0
    %v7184 = vadd.f32 0.0, %v7183
    %v7185 = vpop.f32.mrb[0].mxu0
    %v7186 = vadd.f32 0.0, %v7185
    %v7187 = vpop.f32.mrb[0].mxu0
    %v7188 = vadd.f32 0.0, %v7187
    %7189 = vdwg.mxu0
    %7190 = vmatprep.subr.bf16.mxu0 %v6966
    %7191 = vmatpush1.bf16.msra.mxu0 %v6965
    %7192 = vmatprep.subr.bf16.mxu0 %v6970
    %7193 = vmatpush1.bf16.msra.mxu0 %v6969
    %7194 = vmatprep.subr.bf16.mxu0 0
    %7195 = vmatpush1.bf16.msra.mxu0 0
    %7196 = vmatprep.subr.bf16.mxu0 0
    %7197 = vmatpush1.bf16.msra.mxu0 0
    %7198 = vmatprep.subr.bf16.mxu0 0
    %7199 = vmatpush1.bf16.msra.mxu0 0
    %7200 = vmatprep.subr.bf16.mxu0 0
    %7201 = vmatpush1.bf16.msra.mxu0 0
    %7202 = vmatprep.subr.bf16.mxu0 0
    %7203 = vmatpush1.bf16.msra.mxu0 0
    %7204 = vmatprep.subr.bf16.mxu0 0
    %7205 = vmatpush1.bf16.msra.mxu0 0
    %7206 = vmatprep.subr.bf16.mxu0 0
    %7207 = vmatpush1.bf16.msra.mxu0 0
    %7208 = vmatprep.subr.bf16.mxu0 0
    %7209 = vmatpush1.bf16.msra.mxu0 0
    %7210 = vmatprep.subr.bf16.mxu0 0
    %7211 = vmatpush1.bf16.msra.mxu0 0
    %7212 = vmatprep.subr.bf16.mxu0 0
    %7213 = vmatpush1.bf16.msra.mxu0 0
    %7214 = vmatprep.subr.bf16.mxu0 0
    %7215 = vmatpush1.bf16.msra.mxu0 0
    %7216 = vmatprep.subr.bf16.mxu0 0
    %7217 = vmatpush1.bf16.msra.mxu0 0
    %7218 = vmatprep.subr.bf16.mxu0 0
    %7219 = vmatpush1.bf16.msra.mxu0 0
    %7220 = vmatprep.subr.bf16.mxu0 0
    %7221 = vmatpush1.bf16.msra.mxu0 0
    %7222 = vmatprep.mubr.bf16.mxu0 0
    %7223 = vmatmul.mubr.bf16.gmra.mrb[0].mxu0 %v7145
    %v7224 = vpop.f32.mrb[0].mxu0
    %v7225 = vadd.f32 0.0, %v7224
    %v7226 = vpop.f32.mrb[0].mxu0
    %v7227 = vadd.f32 0.0, %v7226
    %v7228 = vpop.f32.mrb[0].mxu0
    %v7229 = vadd.f32 0.0, %v7228
    %v7230 = vpop.f32.mrb[0].mxu0
    %v7231 = vadd.f32 0.0, %v7230
    %7232 = vdwg.mxu0
    %v7233 = vpack.c.bf16 %v7186, %v7182
    %v7234 = vpack.c.bf16 %v7188, %v7184
    %v7235 = vpack.c.bf16 %v7229, %v7225
    %v7236 = vpack.c.bf16 %v7231, %v7227
    %s7237 = scalar_lea.vmem [#allocation14], 512
    %v7238 = vld [vmem:[%s7237] sm:$0xff]
    %v7239 = vld [vmem:[%s7237 + $0x8] sm:$0xff]
    %v7240 = vld [vmem:[%s7237 + $0x10] sm:$0xff]
    %v7241 = vld [vmem:[%s7237 + $0x18] sm:$0xff]
    %v7242 = vld [vmem:[%s7237 + $0x20] sm:$0xff]
    %v7243 = vld [vmem:[%s7237 + $0x28] sm:$0xff]
    %v7244 = vld [vmem:[%s7237 + $0x30] sm:$0xff]
    %v7245 = vld [vmem:[%s7237 + $0x38] sm:$0xff]
    %v7246 = vld [vmem:[%s7237 + $0x40] sm:$0xff]
    %v7247 = vld [vmem:[%s7237 + $0x48] sm:$0xff]
    %v7248 = vld [vmem:[%s7237 + $0x50] sm:$0xff]
    %v7249 = vld [vmem:[%s7237 + $0x58] sm:$0xff]
    %v7250 = vld [vmem:[%s7237 + $0x60] sm:$0xff]
    %v7251 = vld [vmem:[%s7237 + $0x68] sm:$0xff]
    %v7252 = vld [vmem:[%s7237 + $0x70] sm:$0xff]
    %v7253 = vld [vmem:[%s7237 + $0x78] sm:$0xff]
    %v7254 = vld [vmem:[%s7237 + $0x80] sm:$0xff]
    %v7255 = vld [vmem:[%s7237 + $0x88] sm:$0xff]
    %v7256 = vld [vmem:[%s7237 + $0x90] sm:$0xff]
    %v7257 = vld [vmem:[%s7237 + $0x98] sm:$0xff]
    %v7258 = vld [vmem:[%s7237 + $0xa0] sm:$0xff]
    %v7259 = vld [vmem:[%s7237 + $0xa8] sm:$0xff]
    %v7260 = vld [vmem:[%s7237 + $0xb0] sm:$0xff]
    %v7261 = vld [vmem:[%s7237 + $0xb8] sm:$0xff]
    %v7262 = vld [vmem:[%s7237 + $0xc0] sm:$0xff]
    %v7263 = vld [vmem:[%s7237 + $0xc8] sm:$0xff]
    %v7264 = vld [vmem:[%s7237 + $0xd0] sm:$0xff]
    %v7265 = vld [vmem:[%s7237 + $0xd8] sm:$0xff]
    %v7266 = vld [vmem:[%s7237 + $0xe0] sm:$0xff]
    %v7267 = vld [vmem:[%s7237 + $0xe8] sm:$0xff]
    %v7268 = vld [vmem:[%s7237 + $0xf0] sm:$0xff]
    %v7269 = vld [vmem:[%s7237 + $0xf8] sm:$0xff]
    %v7270 = vld [vmem:[%s7237 + $0x100] sm:$0xff]
    %v7271 = vld [vmem:[%s7237 + $0x108] sm:$0xff]
    %v7272 = vld [vmem:[%s7237 + $0x110] sm:$0xff]
    %v7273 = vld [vmem:[%s7237 + $0x118] sm:$0xff]
    %v7274 = vld [vmem:[%s7237 + $0x120] sm:$0xff]
    %v7275 = vld [vmem:[%s7237 + $0x128] sm:$0xff]
    %v7276 = vld [vmem:[%s7237 + $0x130] sm:$0xff]
    %v7277 = vld [vmem:[%s7237 + $0x138] sm:$0xff]
    %v7278 = vld [vmem:[%s7237 + $0x140] sm:$0xff]
    %v7279 = vld [vmem:[%s7237 + $0x148] sm:$0xff]
    %v7280 = vld [vmem:[%s7237 + $0x150] sm:$0xff]
    %v7281 = vld [vmem:[%s7237 + $0x158] sm:$0xff]
    %v7282 = vld [vmem:[%s7237 + $0x160] sm:$0xff]
    %v7283 = vld [vmem:[%s7237 + $0x168] sm:$0xff]
    %v7284 = vld [vmem:[%s7237 + $0x170] sm:$0xff]
    %v7285 = vld [vmem:[%s7237 + $0x178] sm:$0xff]
    %v7286 = vld [vmem:[%s7237 + $0x180] sm:$0xff]
    %v7287 = vld [vmem:[%s7237 + $0x188] sm:$0xff]
    %v7288 = vld [vmem:[%s7237 + $0x190] sm:$0xff]
    %v7289 = vld [vmem:[%s7237 + $0x198] sm:$0xff]
    %v7290 = vld [vmem:[%s7237 + $0x1a0] sm:$0xff]
    %v7291 = vld [vmem:[%s7237 + $0x1a8] sm:$0xff]
    %v7292 = vld [vmem:[%s7237 + $0x1b0] sm:$0xff]
    %v7293 = vld [vmem:[%s7237 + $0x1b8] sm:$0xff]
    %v7294 = vld [vmem:[%s7237 + $0x1c0] sm:$0xff]
    %v7295 = vld [vmem:[%s7237 + $0x1c8] sm:$0xff]
    %v7296 = vld [vmem:[%s7237 + $0x1d0] sm:$0xff]
    %v7297 = vld [vmem:[%s7237 + $0x1d8] sm:$0xff]
    %v7298 = vld [vmem:[%s7237 + $0x1e0] sm:$0xff]
    %v7299 = vld [vmem:[%s7237 + $0x1e8] sm:$0xff]
    %v7300 = vld [vmem:[%s7237 + $0x1f0] sm:$0xff]
    %v7301 = vld [vmem:[%s7237 + $0x1f8] sm:$0xff]
    %v7366 = vunpack.c.l.b16 %v7238
    %v7367 = vunpack.c.h.b16 %v7238
    %v7368 = vunpack.c.l.b16 %v7239
    %v7369 = vunpack.c.h.b16 %v7239
    %v7370 = vunpack.c.l.b16 %v7240
    %v7371 = vunpack.c.h.b16 %v7240
    %v7372 = vunpack.c.l.b16 %v7241
    %v7373 = vunpack.c.h.b16 %v7241
    %v7374 = vunpack.c.l.b16 %v7242
    %v7375 = vunpack.c.h.b16 %v7242
    %v7376 = vunpack.c.l.b16 %v7243
    %v7377 = vunpack.c.h.b16 %v7243
    %v7378 = vunpack.c.l.b16 %v7244
    %v7379 = vunpack.c.h.b16 %v7244
    %v7380 = vunpack.c.l.b16 %v7245
    %v7381 = vunpack.c.h.b16 %v7245
    %v7382 = vunpack.c.l.b16 %v7246
    %v7383 = vunpack.c.h.b16 %v7246
    %v7384 = vunpack.c.l.b16 %v7247
    %v7385 = vunpack.c.h.b16 %v7247
    %v7386 = vunpack.c.l.b16 %v7248
    %v7387 = vunpack.c.h.b16 %v7248
    %v7388 = vunpack.c.l.b16 %v7249
    %v7389 = vunpack.c.h.b16 %v7249
    %v7390 = vunpack.c.l.b16 %v7250
    %v7391 = vunpack.c.h.b16 %v7250
    %v7392 = vunpack.c.l.b16 %v7251
    %v7393 = vunpack.c.h.b16 %v7251
    %v7394 = vunpack.c.l.b16 %v7252
    %v7395 = vunpack.c.h.b16 %v7252
    %v7396 = vunpack.c.l.b16 %v7253
    %v7397 = vunpack.c.h.b16 %v7253
    %v7398 = vunpack.c.l.b16 %v7254
    %v7399 = vunpack.c.h.b16 %v7254
    %v7400 = vunpack.c.l.b16 %v7255
    %v7401 = vunpack.c.h.b16 %v7255
    %v7402 = vunpack.c.l.b16 %v7256
    %v7403 = vunpack.c.h.b16 %v7256
    %v7404 = vunpack.c.l.b16 %v7257
    %v7405 = vunpack.c.h.b16 %v7257
    %v7406 = vunpack.c.l.b16 %v7258
    %v7407 = vunpack.c.h.b16 %v7258
    %v7408 = vunpack.c.l.b16 %v7259
    %v7409 = vunpack.c.h.b16 %v7259
    %v7410 = vunpack.c.l.b16 %v7260
    %v7411 = vunpack.c.h.b16 %v7260
    %v7412 = vunpack.c.l.b16 %v7261
    %v7413 = vunpack.c.h.b16 %v7261
    %v7414 = vunpack.c.l.b16 %v7262
    %v7415 = vunpack.c.h.b16 %v7262
    %v7416 = vunpack.c.l.b16 %v7263
    %v7417 = vunpack.c.h.b16 %v7263
    %v7418 = vunpack.c.l.b16 %v7264
    %v7419 = vunpack.c.h.b16 %v7264
    %v7420 = vunpack.c.l.b16 %v7265
    %v7421 = vunpack.c.h.b16 %v7265
    %v7422 = vunpack.c.l.b16 %v7266
    %v7423 = vunpack.c.h.b16 %v7266
    %v7424 = vunpack.c.l.b16 %v7267
    %v7425 = vunpack.c.h.b16 %v7267
    %v7426 = vunpack.c.l.b16 %v7268
    %v7427 = vunpack.c.h.b16 %v7268
    %v7428 = vunpack.c.l.b16 %v7269
    %v7429 = vunpack.c.h.b16 %v7269
    %v7430 = vunpack.c.l.b16 %v7270
    %v7431 = vunpack.c.h.b16 %v7270
    %v7432 = vunpack.c.l.b16 %v7271
    %v7433 = vunpack.c.h.b16 %v7271
    %v7434 = vunpack.c.l.b16 %v7272
    %v7435 = vunpack.c.h.b16 %v7272
    %v7436 = vunpack.c.l.b16 %v7273
    %v7437 = vunpack.c.h.b16 %v7273
    %v7438 = vunpack.c.l.b16 %v7274
    %v7439 = vunpack.c.h.b16 %v7274
    %v7440 = vunpack.c.l.b16 %v7275
    %v7441 = vunpack.c.h.b16 %v7275
    %v7442 = vunpack.c.l.b16 %v7276
    %v7443 = vunpack.c.h.b16 %v7276
    %v7444 = vunpack.c.l.b16 %v7277
    %v7445 = vunpack.c.h.b16 %v7277
    %v7446 = vunpack.c.l.b16 %v7278
    %v7447 = vunpack.c.h.b16 %v7278
    %v7448 = vunpack.c.l.b16 %v7279
    %v7449 = vunpack.c.h.b16 %v7279
    %v7450 = vunpack.c.l.b16 %v7280
    %v7451 = vunpack.c.h.b16 %v7280
    %v7452 = vunpack.c.l.b16 %v7281
    %v7453 = vunpack.c.h.b16 %v7281
    %v7454 = vunpack.c.l.b16 %v7282
    %v7455 = vunpack.c.h.b16 %v7282
    %v7456 = vunpack.c.l.b16 %v7283
    %v7457 = vunpack.c.h.b16 %v7283
    %v7458 = vunpack.c.l.b16 %v7284
    %v7459 = vunpack.c.h.b16 %v7284
    %v7460 = vunpack.c.l.b16 %v7285
    %v7461 = vunpack.c.h.b16 %v7285
    %v7462 = vunpack.c.l.b16 %v7286
    %v7463 = vunpack.c.h.b16 %v7286
    %v7464 = vunpack.c.l.b16 %v7287
    %v7465 = vunpack.c.h.b16 %v7287
    %v7466 = vunpack.c.l.b16 %v7288
    %v7467 = vunpack.c.h.b16 %v7288
    %v7468 = vunpack.c.l.b16 %v7289
    %v7469 = vunpack.c.h.b16 %v7289
    %v7470 = vunpack.c.l.b16 %v7290
    %v7471 = vunpack.c.h.b16 %v7290
    %v7472 = vunpack.c.l.b16 %v7291
    %v7473 = vunpack.c.h.b16 %v7291
    %v7474 = vunpack.c.l.b16 %v7292
    %v7475 = vunpack.c.h.b16 %v7292
    %v7476 = vunpack.c.l.b16 %v7293
    %v7477 = vunpack.c.h.b16 %v7293
    %v7478 = vunpack.c.l.b16 %v7294
    %v7479 = vunpack.c.h.b16 %v7294
    %v7480 = vunpack.c.l.b16 %v7295
    %v7481 = vunpack.c.h.b16 %v7295
    %v7482 = vunpack.c.l.b16 %v7296
    %v7483 = vunpack.c.h.b16 %v7296
    %v7484 = vunpack.c.l.b16 %v7297
    %v7485 = vunpack.c.h.b16 %v7297
    %v7486 = vunpack.c.l.b16 %v7298
    %v7487 = vunpack.c.h.b16 %v7298
    %v7488 = vunpack.c.l.b16 %v7299
    %v7489 = vunpack.c.h.b16 %v7299
    %v7490 = vunpack.c.l.b16 %v7300
    %v7491 = vunpack.c.h.b16 %v7300
    %v7492 = vunpack.c.l.b16 %v7301
    %v7493 = vunpack.c.h.b16 %v7301
    %v7494 = vpack.c.b16 %v7368, %v7366
    %v7495 = vpack.c.b16 %v7369, %v7367
    %v7496 = vpack.c.b16 %v7372, %v7370
    %v7497 = vpack.c.b16 %v7373, %v7371
    %v7498 = vpack.c.b16 %v7376, %v7374
    %v7499 = vpack.c.b16 %v7377, %v7375
    %v7500 = vpack.c.b16 %v7380, %v7378
    %v7501 = vpack.c.b16 %v7381, %v7379
    %v7502 = vpack.c.b16 %v7384, %v7382
    %v7503 = vpack.c.b16 %v7385, %v7383
    %v7504 = vpack.c.b16 %v7388, %v7386
    %v7505 = vpack.c.b16 %v7389, %v7387
    %v7506 = vpack.c.b16 %v7392, %v7390
    %v7507 = vpack.c.b16 %v7393, %v7391
    %v7508 = vpack.c.b16 %v7396, %v7394
    %v7509 = vpack.c.b16 %v7397, %v7395
    %v7510 = vpack.c.b16 %v7400, %v7398
    %v7511 = vpack.c.b16 %v7401, %v7399
    %v7512 = vpack.c.b16 %v7404, %v7402
    %v7513 = vpack.c.b16 %v7405, %v7403
    %v7514 = vpack.c.b16 %v7408, %v7406
    %v7515 = vpack.c.b16 %v7409, %v7407
    %v7516 = vpack.c.b16 %v7412, %v7410
    %v7517 = vpack.c.b16 %v7413, %v7411
    %v7518 = vpack.c.b16 %v7416, %v7414
    %v7519 = vpack.c.b16 %v7417, %v7415
    %v7520 = vpack.c.b16 %v7420, %v7418
    %v7521 = vpack.c.b16 %v7421, %v7419
    %v7522 = vpack.c.b16 %v7424, %v7422
    %v7523 = vpack.c.b16 %v7425, %v7423
    %v7524 = vpack.c.b16 %v7428, %v7426
    %v7525 = vpack.c.b16 %v7429, %v7427
    %v7526 = vpack.c.b16 %v7432, %v7430
    %v7527 = vpack.c.b16 %v7433, %v7431
    %v7528 = vpack.c.b16 %v7436, %v7434
    %v7529 = vpack.c.b16 %v7437, %v7435
    %v7530 = vpack.c.b16 %v7440, %v7438
    %v7531 = vpack.c.b16 %v7441, %v7439
    %v7532 = vpack.c.b16 %v7444, %v7442
    %v7533 = vpack.c.b16 %v7445, %v7443
    %v7534 = vpack.c.b16 %v7448, %v7446
    %v7535 = vpack.c.b16 %v7449, %v7447
    %v7536 = vpack.c.b16 %v7452, %v7450
    %v7537 = vpack.c.b16 %v7453, %v7451
    %v7538 = vpack.c.b16 %v7456, %v7454
    %v7539 = vpack.c.b16 %v7457, %v7455
    %v7540 = vpack.c.b16 %v7460, %v7458
    %v7541 = vpack.c.b16 %v7461, %v7459
    %v7542 = vpack.c.b16 %v7464, %v7462
    %v7543 = vpack.c.b16 %v7465, %v7463
    %v7544 = vpack.c.b16 %v7468, %v7466
    %v7545 = vpack.c.b16 %v7469, %v7467
    %v7546 = vpack.c.b16 %v7472, %v7470
    %v7547 = vpack.c.b16 %v7473, %v7471
    %v7548 = vpack.c.b16 %v7476, %v7474
    %v7549 = vpack.c.b16 %v7477, %v7475
    %v7550 = vpack.c.b16 %v7480, %v7478
    %v7551 = vpack.c.b16 %v7481, %v7479
    %v7552 = vpack.c.b16 %v7484, %v7482
    %v7553 = vpack.c.b16 %v7485, %v7483
    %v7554 = vpack.c.b16 %v7488, %v7486
    %v7555 = vpack.c.b16 %v7489, %v7487
    %v7556 = vpack.c.b16 %v7492, %v7490
    %v7557 = vpack.c.b16 %v7493, %v7491
    %7622 = vmatprep.subr.bf16.mxu0 %v7495
    %7623 = vmatpush1.bf16.msra.mxu0 %v7494
    %7624 = vmatprep.subr.bf16.mxu0 %v7497
    %7625 = vmatpush1.bf16.msra.mxu0 %v7496
    %7626 = vmatprep.subr.bf16.mxu0 %v7499
    %7627 = vmatpush1.bf16.msra.mxu0 %v7498
    %7628 = vmatprep.subr.bf16.mxu0 %v7501
    %7629 = vmatpush1.bf16.msra.mxu0 %v7500
    %7630 = vmatprep.subr.bf16.mxu0 %v7503
    %7631 = vmatpush1.bf16.msra.mxu0 %v7502
    %7632 = vmatprep.subr.bf16.mxu0 %v7505
    %7633 = vmatpush1.bf16.msra.mxu0 %v7504
    %7634 = vmatprep.subr.bf16.mxu0 %v7507
    %7635 = vmatpush1.bf16.msra.mxu0 %v7506
    %7636 = vmatprep.subr.bf16.mxu0 %v7509
    %7637 = vmatpush1.bf16.msra.mxu0 %v7508
    %7638 = vmatprep.subr.bf16.mxu0 %v7511
    %7639 = vmatpush1.bf16.msra.mxu0 %v7510
    %7640 = vmatprep.subr.bf16.mxu0 %v7513
    %7641 = vmatpush1.bf16.msra.mxu0 %v7512
    %7642 = vmatprep.subr.bf16.mxu0 %v7515
    %7643 = vmatpush1.bf16.msra.mxu0 %v7514
    %7644 = vmatprep.subr.bf16.mxu0 %v7517
    %7645 = vmatpush1.bf16.msra.mxu0 %v7516
    %7646 = vmatprep.subr.bf16.mxu0 %v7519
    %7647 = vmatpush1.bf16.msra.mxu0 %v7518
    %7648 = vmatprep.subr.bf16.mxu0 %v7521
    %7649 = vmatpush1.bf16.msra.mxu0 %v7520
    %7650 = vmatprep.subr.bf16.mxu0 %v7523
    %7651 = vmatpush1.bf16.msra.mxu0 %v7522
    %7652 = vmatprep.subr.bf16.mxu0 %v7525
    %7653 = vmatpush1.bf16.msra.mxu0 %v7524
    %7654 = vmatprep.mubr.bf16.mxu0 %v7234
    %7655 = vmatmul.mubr.bf16.gmra.mrb[0].mxu0 %v7233
    %v7656 = vpop.f32.mrb[0].mxu0
    %v7657 = vadd.f32 0.0, %v7656
    %v7658 = vpop.f32.mrb[0].mxu0
    %v7659 = vadd.f32 0.0, %v7658
    %v7660 = vpop.f32.mrb[0].mxu0
    %v7661 = vadd.f32 0.0, %v7660
    %v7662 = vpop.f32.mrb[0].mxu0
    %v7663 = vadd.f32 0.0, %v7662
    %7664 = vdwg.mxu0
    %7665 = vmatprep.subr.bf16.mxu0 %v7527
    %7666 = vmatpush1.bf16.msra.mxu0 %v7526
    %7667 = vmatprep.subr.bf16.mxu0 %v7529
    %7668 = vmatpush1.bf16.msra.mxu0 %v7528
    %7669 = vmatprep.subr.bf16.mxu0 %v7531
    %7670 = vmatpush1.bf16.msra.mxu0 %v7530
    %7671 = vmatprep.subr.bf16.mxu0 %v7533
    %7672 = vmatpush1.bf16.msra.mxu0 %v7532
    %7673 = vmatprep.subr.bf16.mxu0 %v7535
    %7674 = vmatpush1.bf16.msra.mxu0 %v7534
    %7675 = vmatprep.subr.bf16.mxu0 %v7537
    %7676 = vmatpush1.bf16.msra.mxu0 %v7536
    %7677 = vmatprep.subr.bf16.mxu0 %v7539
    %7678 = vmatpush1.bf16.msra.mxu0 %v7538
    %7679 = vmatprep.subr.bf16.mxu0 %v7541
    %7680 = vmatpush1.bf16.msra.mxu0 %v7540
    %7681 = vmatprep.subr.bf16.mxu0 %v7543
    %7682 = vmatpush1.bf16.msra.mxu0 %v7542
    %7683 = vmatprep.subr.bf16.mxu0 %v7545
    %7684 = vmatpush1.bf16.msra.mxu0 %v7544
    %7685 = vmatprep.subr.bf16.mxu0 %v7547
    %7686 = vmatpush1.bf16.msra.mxu0 %v7546
    %7687 = vmatprep.subr.bf16.mxu0 %v7549
    %7688 = vmatpush1.bf16.msra.mxu0 %v7548
    %7689 = vmatprep.subr.bf16.mxu0 %v7551
    %7690 = vmatpush1.bf16.msra.mxu0 %v7550
    %7691 = vmatprep.subr.bf16.mxu0 %v7553
    %7692 = vmatpush1.bf16.msra.mxu0 %v7552
    %7693 = vmatprep.subr.bf16.mxu0 %v7555
    %7694 = vmatpush1.bf16.msra.mxu0 %v7554
    %7695 = vmatprep.subr.bf16.mxu0 %v7557
    %7696 = vmatpush1.bf16.msra.mxu0 %v7556
    %7697 = vmatprep.mubr.bf16.mxu0 %v7236
    %7698 = vmatmul.mubr.bf16.gmra.mrb[0].mxu0 %v7235
    %v7699 = vpop.f32.mrb[0].mxu0
    %v7700 = vadd.f32 %v7657, %v7699
    %v7701 = vpop.f32.mrb[0].mxu0
    %v7702 = vadd.f32 %v7659, %v7701
    %v7703 = vpop.f32.mrb[0].mxu0
    %v7704 = vadd.f32 %v7661, %v7703
    %v7705 = vpop.f32.mrb[0].mxu0
    %v7706 = vadd.f32 %v7663, %v7705
    %7707 = vdwg.mxu0
    %v7772 = vunpack.c.l.b16 %v7072
    %v7773 = vunpack.c.h.b16 %v7072
    %v7774 = vunpack.c.l.b16 %v7073
    %v7775 = vunpack.c.h.b16 %v7073
    %v7776 = vunpack.c.l.b16 %v7074
    %v7777 = vunpack.c.h.b16 %v7074
    %v7778 = vunpack.c.l.b16 %v7075
    %v7779 = vunpack.c.h.b16 %v7075
    %v7780 = vunpack.c.l.b16 %v7076
    %v7781 = vunpack.c.h.b16 %v7076
    %v7782 = vunpack.c.l.b16 %v7077
    %v7783 = vunpack.c.h.b16 %v7077
    %v7784 = vunpack.c.l.b16 %v7078
    %v7785 = vunpack.c.h.b16 %v7078
    %v7786 = vunpack.c.l.b16 %v7079
    %v7787 = vunpack.c.h.b16 %v7079
    %v7788 = vunpack.c.l.b16 %v7080
    %v7789 = vunpack.c.h.b16 %v7080
    %v7790 = vunpack.c.l.b16 %v7081
    %v7791 = vunpack.c.h.b16 %v7081
    %v7792 = vunpack.c.l.b16 %v7082
    %v7793 = vunpack.c.h.b16 %v7082
    %v7794 = vunpack.c.l.b16 %v7083
    %v7795 = vunpack.c.h.b16 %v7083
    %v7796 = vunpack.c.l.b16 %v7084
    %v7797 = vunpack.c.h.b16 %v7084
    %v7798 = vunpack.c.l.b16 %v7085
    %v7799 = vunpack.c.h.b16 %v7085
    %v7800 = vunpack.c.l.b16 %v7086
    %v7801 = vunpack.c.h.b16 %v7086
    %v7802 = vunpack.c.l.b16 %v7087
    %v7803 = vunpack.c.h.b16 %v7087
    %v7804 = vunpack.c.l.b16 %v7088
    %v7805 = vunpack.c.h.b16 %v7088
    %v7806 = vunpack.c.l.b16 %v7089
    %v7807 = vunpack.c.h.b16 %v7089
    %v7808 = vunpack.c.l.b16 %v7090
    %v7809 = vunpack.c.h.b16 %v7090
    %v7810 = vunpack.c.l.b16 %v7091
    %v7811 = vunpack.c.h.b16 %v7091
    %v7812 = vunpack.c.l.b16 %v7092
    %v7813 = vunpack.c.h.b16 %v7092
    %v7814 = vunpack.c.l.b16 %v7093
    %v7815 = vunpack.c.h.b16 %v7093
    %v7816 = vunpack.c.l.b16 %v7094
    %v7817 = vunpack.c.h.b16 %v7094
    %v7818 = vunpack.c.l.b16 %v7095
    %v7819 = vunpack.c.h.b16 %v7095
    %v7820 = vunpack.c.l.b16 %v7096
    %v7821 = vunpack.c.h.b16 %v7096
    %v7822 = vunpack.c.l.b16 %v7097
    %v7823 = vunpack.c.h.b16 %v7097
    %v7824 = vunpack.c.l.b16 %v7098
    %v7825 = vunpack.c.h.b16 %v7098
    %v7826 = vunpack.c.l.b16 %v7099
    %v7827 = vunpack.c.h.b16 %v7099
    %v7828 = vunpack.c.l.b16 %v7100
    %v7829 = vunpack.c.h.b16 %v7100
    %v7830 = vunpack.c.l.b16 %v7101
    %v7831 = vunpack.c.h.b16 %v7101
    %v7832 = vunpack.c.l.b16 %v7102
    %v7833 = vunpack.c.h.b16 %v7102
    %v7834 = vunpack.c.l.b16 %v7103
    %v7835 = vunpack.c.h.b16 %v7103
    %v7836 = vunpack.c.l.b16 %v7104
    %v7837 = vunpack.c.h.b16 %v7104
    %v7838 = vunpack.c.l.b16 %v7105
    %v7839 = vunpack.c.h.b16 %v7105
    %v7840 = vunpack.c.l.b16 %v7106
    %v7841 = vunpack.c.h.b16 %v7106
    %v7842 = vunpack.c.l.b16 %v7107
    %v7843 = vunpack.c.h.b16 %v7107
    %v7844 = vunpack.c.l.b16 %v7108
    %v7845 = vunpack.c.h.b16 %v7108
    %v7846 = vunpack.c.l.b16 %v7109
    %v7847 = vunpack.c.h.b16 %v7109
    %v7848 = vunpack.c.l.b16 %v7110
    %v7849 = vunpack.c.h.b16 %v7110
    %v7850 = vunpack.c.l.b16 %v7111
    %v7851 = vunpack.c.h.b16 %v7111
    %v7852 = vunpack.c.l.b16 %v7112
    %v7853 = vunpack.c.h.b16 %v7112
    %v7854 = vunpack.c.l.b16 %v7113
    %v7855 = vunpack.c.h.b16 %v7113
    %v7856 = vunpack.c.l.b16 %v7114
    %v7857 = vunpack.c.h.b16 %v7114
    %v7858 = vunpack.c.l.b16 %v7115
    %v7859 = vunpack.c.h.b16 %v7115
    %v7860 = vunpack.c.l.b16 %v7116
    %v7861 = vunpack.c.h.b16 %v7116
    %v7862 = vunpack.c.l.b16 %v7117
    %v7863 = vunpack.c.h.b16 %v7117
    %v7864 = vunpack.c.l.b16 %v7118
    %v7865 = vunpack.c.h.b16 %v7118
    %v7866 = vunpack.c.l.b16 %v7119
    %v7867 = vunpack.c.h.b16 %v7119
    %v7868 = vunpack.c.l.b16 %v7120
    %v7869 = vunpack.c.h.b16 %v7120
    %v7870 = vunpack.c.l.b16 %v7121
    %v7871 = vunpack.c.h.b16 %v7121
    %v7872 = vunpack.c.l.b16 %v7122
    %v7873 = vunpack.c.h.b16 %v7122
    %v7874 = vunpack.c.l.b16 %v7123
    %v7875 = vunpack.c.h.b16 %v7123
    %v7876 = vunpack.c.l.b16 %v7124
    %v7877 = vunpack.c.h.b16 %v7124
    %v7878 = vunpack.c.l.b16 %v7125
    %v7879 = vunpack.c.h.b16 %v7125
    %v7880 = vunpack.c.l.b16 %v7126
    %v7881 = vunpack.c.h.b16 %v7126
    %v7882 = vunpack.c.l.b16 %v7127
    %v7883 = vunpack.c.h.b16 %v7127
    %v7884 = vunpack.c.l.b16 %v7128
    %v7885 = vunpack.c.h.b16 %v7128
    %v7886 = vunpack.c.l.b16 %v7129
    %v7887 = vunpack.c.h.b16 %v7129
    %v7888 = vunpack.c.l.b16 %v7130
    %v7889 = vunpack.c.h.b16 %v7130
    %v7890 = vunpack.c.l.b16 %v7131
    %v7891 = vunpack.c.h.b16 %v7131
    %v7892 = vunpack.c.l.b16 %v7132
    %v7893 = vunpack.c.h.b16 %v7132
    %v7894 = vunpack.c.l.b16 %v7133
    %v7895 = vunpack.c.h.b16 %v7133
    %v7896 = vunpack.c.l.b16 %v7134
    %v7897 = vunpack.c.h.b16 %v7134
    %v7898 = vunpack.c.l.b16 %v7135
    %v7899 = vunpack.c.h.b16 %v7135
    %v7900 = vpack.c.b16 %v7774, %v7772
    %v7901 = vpack.c.b16 %v7775, %v7773
    %v7902 = vpack.c.b16 %v7778, %v7776
    %v7903 = vpack.c.b16 %v7779, %v7777
    %v7904 = vpack.c.b16 %v7782, %v7780
    %v7905 = vpack.c.b16 %v7783, %v7781
    %v7906 = vpack.c.b16 %v7786, %v7784
    %v7907 = vpack.c.b16 %v7787, %v7785
    %v7908 = vpack.c.b16 %v7790, %v7788
    %v7909 = vpack.c.b16 %v7791, %v7789
    %v7910 = vpack.c.b16 %v7794, %v7792
    %v7911 = vpack.c.b16 %v7795, %v7793
    %v7912 = vpack.c.b16 %v7798, %v7796
    %v7913 = vpack.c.b16 %v7799, %v7797
    %v7914 = vpack.c.b16 %v7802, %v7800
    %v7915 = vpack.c.b16 %v7803, %v7801
    %v7916 = vpack.c.b16 %v7806, %v7804
    %v7917 = vpack.c.b16 %v7807, %v7805
    %v7918 = vpack.c.b16 %v7810, %v7808
    %v7919 = vpack.c.b16 %v7811, %v7809
    %v7920 = vpack.c.b16 %v7814, %v7812
    %v7921 = vpack.c.b16 %v7815, %v7813
    %v7922 = vpack.c.b16 %v7818, %v7816
    %v7923 = vpack.c.b16 %v7819, %v7817
    %v7924 = vpack.c.b16 %v7822, %v7820
    %v7925 = vpack.c.b16 %v7823, %v7821
    %v7926 = vpack.c.b16 %v7826, %v7824
    %v7927 = vpack.c.b16 %v7827, %v7825
    %v7928 = vpack.c.b16 %v7830, %v7828
    %v7929 = vpack.c.b16 %v7831, %v7829
    %v7930 = vpack.c.b16 %v7834, %v7832
    %v7931 = vpack.c.b16 %v7835, %v7833
    %v7932 = vpack.c.b16 %v7838, %v7836
    %v7933 = vpack.c.b16 %v7839, %v7837
    %v7934 = vpack.c.b16 %v7842, %v7840
    %v7935 = vpack.c.b16 %v7843, %v7841
    %v7936 = vpack.c.b16 %v7846, %v7844
    %v7937 = vpack.c.b16 %v7847, %v7845
    %v7938 = vpack.c.b16 %v7850, %v7848
    %v7939 = vpack.c.b16 %v7851, %v7849
    %v7940 = vpack.c.b16 %v7854, %v7852
    %v7941 = vpack.c.b16 %v7855, %v7853
    %v7942 = vpack.c.b16 %v7858, %v7856
    %v7943 = vpack.c.b16 %v7859, %v7857
    %v7944 = vpack.c.b16 %v7862, %v7860
    %v7945 = vpack.c.b16 %v7863, %v7861
    %v7946 = vpack.c.b16 %v7866, %v7864
    %v7947 = vpack.c.b16 %v7867, %v7865
    %v7948 = vpack.c.b16 %v7870, %v7868
    %v7949 = vpack.c.b16 %v7871, %v7869
    %v7950 = vpack.c.b16 %v7874, %v7872
    %v7951 = vpack.c.b16 %v7875, %v7873
    %v7952 = vpack.c.b16 %v7878, %v7876
    %v7953 = vpack.c.b16 %v7879, %v7877
    %v7954 = vpack.c.b16 %v7882, %v7880
    %v7955 = vpack.c.b16 %v7883, %v7881
    %v7956 = vpack.c.b16 %v7886, %v7884
    %v7957 = vpack.c.b16 %v7887, %v7885
    %v7958 = vpack.c.b16 %v7890, %v7888
    %v7959 = vpack.c.b16 %v7891, %v7889
    %v7960 = vpack.c.b16 %v7894, %v7892
    %v7961 = vpack.c.b16 %v7895, %v7893
    %v7962 = vpack.c.b16 %v7898, %v7896
    %v7963 = vpack.c.b16 %v7899, %v7897
    %8028 = vmatprep.subr.bf16.mxu0 %v7901
    %8029 = vmatpush1.bf16.msra.mxu0 %v7900
    %8030 = vmatprep.subr.bf16.mxu0 %v7903
    %8031 = vmatpush1.bf16.msra.mxu0 %v7902
    %8032 = vmatprep.subr.bf16.mxu0 %v7905
    %8033 = vmatpush1.bf16.msra.mxu0 %v7904
    %8034 = vmatprep.subr.bf16.mxu0 %v7907
    %8035 = vmatpush1.bf16.msra.mxu0 %v7906
    %8036 = vmatprep.subr.bf16.mxu0 %v7909
    %8037 = vmatpush1.bf16.msra.mxu0 %v7908
    %8038 = vmatprep.subr.bf16.mxu0 %v7911
    %8039 = vmatpush1.bf16.msra.mxu0 %v7910
    %8040 = vmatprep.subr.bf16.mxu0 %v7913
    %8041 = vmatpush1.bf16.msra.mxu0 %v7912
    %8042 = vmatprep.subr.bf16.mxu0 %v7915
    %8043 = vmatpush1.bf16.msra.mxu0 %v7914
    %8044 = vmatprep.subr.bf16.mxu0 %v7917
    %8045 = vmatpush1.bf16.msra.mxu0 %v7916
    %8046 = vmatprep.subr.bf16.mxu0 %v7919
    %8047 = vmatpush1.bf16.msra.mxu0 %v7918
    %8048 = vmatprep.subr.bf16.mxu0 %v7921
    %8049 = vmatpush1.bf16.msra.mxu0 %v7920
    %8050 = vmatprep.subr.bf16.mxu0 %v7923
    %8051 = vmatpush1.bf16.msra.mxu0 %v7922
    %8052 = vmatprep.subr.bf16.mxu0 %v7925
    %8053 = vmatpush1.bf16.msra.mxu0 %v7924
    %8054 = vmatprep.subr.bf16.mxu0 %v7927
    %8055 = vmatpush1.bf16.msra.mxu0 %v7926
    %8056 = vmatprep.subr.bf16.mxu0 %v7929
    %8057 = vmatpush1.bf16.msra.mxu0 %v7928
    %8058 = vmatprep.subr.bf16.mxu0 %v7931
    %8059 = vmatpush1.bf16.msra.mxu0 %v7930
    %8060 = vmatprep.mubr.bf16.mxu0 %v7069
    %8061 = vmatmul.mubr.bf16.gmra.mrb[0].mxu0 %v7068
    %v8062 = vpop.f32.mrb[0].mxu0
    %v8063 = vadd.f32 %v7700, %v8062
    %v8064 = vpop.f32.mrb[0].mxu0
    %v8065 = vadd.f32 %v7702, %v8064
    %v8066 = vpop.f32.mrb[0].mxu0
    %v8067 = vadd.f32 %v7704, %v8066
    %v8068 = vpop.f32.mrb[0].mxu0
    %v8069 = vadd.f32 %v7706, %v8068
    %8070 = vdwg.mxu0
    %8071 = vmatprep.subr.bf16.mxu0 %v7933
    %8072 = vmatpush1.bf16.msra.mxu0 %v7932
    %8073 = vmatprep.subr.bf16.mxu0 %v7935
    %8074 = vmatpush1.bf16.msra.mxu0 %v7934
    %8075 = vmatprep.subr.bf16.mxu0 %v7937
    %8076 = vmatpush1.bf16.msra.mxu0 %v7936
    %8077 = vmatprep.subr.bf16.mxu0 %v7939
    %8078 = vmatpush1.bf16.msra.mxu0 %v7938
    %8079 = vmatprep.subr.bf16.mxu0 %v7941
    %8080 = vmatpush1.bf16.msra.mxu0 %v7940
    %8081 = vmatprep.subr.bf16.mxu0 %v7943
    %8082 = vmatpush1.bf16.msra.mxu0 %v7942
    %8083 = vmatprep.subr.bf16.mxu0 %v7945
    %8084 = vmatpush1.bf16.msra.mxu0 %v7944
    %8085 = vmatprep.subr.bf16.mxu0 %v7947
    %8086 = vmatpush1.bf16.msra.mxu0 %v7946
    %8087 = vmatprep.subr.bf16.mxu0 %v7949
    %8088 = vmatpush1.bf16.msra.mxu0 %v7948
    %8089 = vmatprep.subr.bf16.mxu0 %v7951
    %8090 = vmatpush1.bf16.msra.mxu0 %v7950
    %8091 = vmatprep.subr.bf16.mxu0 %v7953
    %8092 = vmatpush1.bf16.msra.mxu0 %v7952
    %8093 = vmatprep.subr.bf16.mxu0 %v7955
    %8094 = vmatpush1.bf16.msra.mxu0 %v7954
    %8095 = vmatprep.subr.bf16.mxu0 %v7957
    %8096 = vmatpush1.bf16.msra.mxu0 %v7956
    %8097 = vmatprep.subr.bf16.mxu0 %v7959
    %8098 = vmatpush1.bf16.msra.mxu0 %v7958
    %8099 = vmatprep.subr.bf16.mxu0 %v7961
    %8100 = vmatpush1.bf16.msra.mxu0 %v7960
    %8101 = vmatprep.subr.bf16.mxu0 %v7963
    %8102 = vmatpush1.bf16.msra.mxu0 %v7962
    %8103 = vmatprep.mubr.bf16.mxu0 %v7071
    %8104 = vmatmul.mubr.bf16.gmra.mrb[0].mxu0 %v7070
    %v8105 = vpop.f32.mrb[0].mxu0
    %v8106 = vadd.f32 %v8063, %v8105
    %v8107 = vpop.f32.mrb[0].mxu0
    %v8108 = vadd.f32 %v8065, %v8107
    %v8109 = vpop.f32.mrb[0].mxu0
    %v8110 = vadd.f32 %v8067, %v8109
    %v8111 = vpop.f32.mrb[0].mxu0
    %v8112 = vadd.f32 %v8069, %v8111
    %8113 = vdwg.mxu0
    %s8114 = scalar_lea.vmem %s10, 16
    %v8115 = vld [vmem:[%s8114] sm:$0xf]
    %v8116 = vld [vmem:[%s8114 + $0x4] sm:$0xf]
    %v8119 = vunpack.c.l.b16 %v8115
    %v8120 = vunpack.c.l.b16 %v8116
    %v8121 = vpack.c.b16 %v8120, %v8119
    %v8123 = vsel %vm6978, %v8121, 0
    %8125 = vmatprep.subr.bf16.mxu0 %v6964
    %8126 = vmatpush1.bf16.msra.mxu0 %v6963
    %8127 = vmatprep.subr.bf16.mxu0 %v6968
    %8128 = vmatpush1.bf16.msra.mxu0 %v6967
    %8129 = vmatprep.subr.bf16.mxu0 0
    %8130 = vmatpush1.bf16.msra.mxu0 0
    %8131 = vmatprep.subr.bf16.mxu0 0
    %8132 = vmatpush1.bf16.msra.mxu0 0
    %8133 = vmatprep.subr.bf16.mxu0 0
    %8134 = vmatpush1.bf16.msra.mxu0 0
    %8135 = vmatprep.subr.bf16.mxu0 0
    %8136 = vmatpush1.bf16.msra.mxu0 0
    %8137 = vmatprep.subr.bf16.mxu0 0
    %8138 = vmatpush1.bf16.msra.mxu0 0
    %8139 = vmatprep.subr.bf16.mxu0 0
    %8140 = vmatpush1.bf16.msra.mxu0 0
    %8141 = vmatprep.subr.bf16.mxu0 0
    %8142 = vmatpush1.bf16.msra.mxu0 0
    %8143 = vmatprep.subr.bf16.mxu0 0
    %8144 = vmatpush1.bf16.msra.mxu0 0
    %8145 = vmatprep.subr.bf16.mxu0 0
    %8146 = vmatpush1.bf16.msra.mxu0 0
    %8147 = vmatprep.subr.bf16.mxu0 0
    %8148 = vmatpush1.bf16.msra.mxu0 0
    %8149 = vmatprep.subr.bf16.mxu0 0
    %8150 = vmatpush1.bf16.msra.mxu0 0
    %8151 = vmatprep.subr.bf16.mxu0 0
    %8152 = vmatpush1.bf16.msra.mxu0 0
    %8153 = vmatprep.subr.bf16.mxu0 0
    %8154 = vmatpush1.bf16.msra.mxu0 0
    %8155 = vmatprep.subr.bf16.mxu0 0
    %8156 = vmatpush1.bf16.msra.mxu0 0
    %8157 = vmatprep.mubr.bf16.mxu0 0
    %8158 = vmatmul.mubr.bf16.gmra.mrb[0].mxu0 %v8123
    %v8159 = vpop.f32.mrb[0].mxu0
    %v8160 = vadd.f32 0.0, %v8159
    %v8161 = vpop.f32.mrb[0].mxu0
    %v8162 = vadd.f32 0.0, %v8161
    %v8163 = vpop.f32.mrb[0].mxu0
    %v8164 = vadd.f32 0.0, %v8163
    %v8165 = vpop.f32.mrb[0].mxu0
    %v8166 = vadd.f32 0.0, %v8165
    %8167 = vdwg.mxu0
    %8168 = vmatprep.subr.bf16.mxu0 %v6966
    %8169 = vmatpush1.bf16.msra.mxu0 %v6965
    %8170 = vmatprep.subr.bf16.mxu0 %v6970
    %8171 = vmatpush1.bf16.msra.mxu0 %v6969
    %8172 = vmatprep.subr.bf16.mxu0 0
    %8173 = vmatpush1.bf16.msra.mxu0 0
    %8174 = vmatprep.subr.bf16.mxu0 0
    %8175 = vmatpush1.bf16.msra.mxu0 0
    %8176 = vmatprep.subr.bf16.mxu0 0
    %8177 = vmatpush1.bf16.msra.mxu0 0
    %8178 = vmatprep.subr.bf16.mxu0 0
    %8179 = vmatpush1.bf16.msra.mxu0 0
    %8180 = vmatprep.subr.bf16.mxu0 0
    %8181 = vmatpush1.bf16.msra.mxu0 0
    %8182 = vmatprep.subr.bf16.mxu0 0
    %8183 = vmatpush1.bf16.msra.mxu0 0
    %8184 = vmatprep.subr.bf16.mxu0 0
    %8185 = vmatpush1.bf16.msra.mxu0 0
    %8186 = vmatprep.subr.bf16.mxu0 0
    %8187 = vmatpush1.bf16.msra.mxu0 0
    %8188 = vmatprep.subr.bf16.mxu0 0
    %8189 = vmatpush1.bf16.msra.mxu0 0
    %8190 = vmatprep.subr.bf16.mxu0 0
    %8191 = vmatpush1.bf16.msra.mxu0 0
    %8192 = vmatprep.subr.bf16.mxu0 0
    %8193 = vmatpush1.bf16.msra.mxu0 0
    %8194 = vmatprep.subr.bf16.mxu0 0
    %8195 = vmatpush1.bf16.msra.mxu0 0
    %8196 = vmatprep.subr.bf16.mxu0 0
    %8197 = vmatpush1.bf16.msra.mxu0 0
    %8198 = vmatprep.subr.bf16.mxu0 0
    %8199 = vmatpush1.bf16.msra.mxu0 0
    %8200 = vmatprep.mubr.bf16.mxu0 0
    %8201 = vmatmul.mubr.bf16.gmra.mrb[0].mxu0 %v8123
    %v8202 = vpop.f32.mrb[0].mxu0
    %v8203 = vadd.f32 0.0, %v8202
    %v8204 = vpop.f32.mrb[0].mxu0
    %v8205 = vadd.f32 0.0, %v8204
    %v8206 = vpop.f32.mrb[0].mxu0
    %v8207 = vadd.f32 0.0, %v8206
    %v8208 = vpop.f32.mrb[0].mxu0
    %v8209 = vadd.f32 0.0, %v8208
    %8210 = vdwg.mxu0
    %v8211 = vpack.c.bf16 %v8164, %v8160
    %v8212 = vpack.c.bf16 %v8166, %v8162
    %v8213 = vpack.c.bf16 %v8207, %v8203
    %v8214 = vpack.c.bf16 %v8209, %v8205
    %s8215 = scalar_lea.vmem [#allocation14], 1024
    %v8216 = vld [vmem:[%s8215] sm:$0xff]
    %v8217 = vld [vmem:[%s8215 + $0x8] sm:$0xff]
    %v8218 = vld [vmem:[%s8215 + $0x10] sm:$0xff]
    %v8219 = vld [vmem:[%s8215 + $0x18] sm:$0xff]
    %v8220 = vld [vmem:[%s8215 + $0x20] sm:$0xff]
    %v8221 = vld [vmem:[%s8215 + $0x28] sm:$0xff]
    %v8222 = vld [vmem:[%s8215 + $0x30] sm:$0xff]
    %v8223 = vld [vmem:[%s8215 + $0x38] sm:$0xff]
    %v8224 = vld [vmem:[%s8215 + $0x40] sm:$0xff]
    %v8225 = vld [vmem:[%s8215 + $0x48] sm:$0xff]
    %v8226 = vld [vmem:[%s8215 + $0x50] sm:$0xff]
    %v8227 = vld [vmem:[%s8215 + $0x58] sm:$0xff]
    %v8228 = vld [vmem:[%s8215 + $0x60] sm:$0xff]
    %v8229 = vld [vmem:[%s8215 + $0x68] sm:$0xff]
    %v8230 = vld [vmem:[%s8215 + $0x70] sm:$0xff]
    %v8231 = vld [vmem:[%s8215 + $0x78] sm:$0xff]
    %v8232 = vld [vmem:[%s8215 + $0x80] sm:$0xff]
    %v8233 = vld [vmem:[%s8215 + $0x88] sm:$0xff]
    %v8234 = vld [vmem:[%s8215 + $0x90] sm:$0xff]
    %v8235 = vld [vmem:[%s8215 + $0x98] sm:$0xff]
    %v8236 = vld [vmem:[%s8215 + $0xa0] sm:$0xff]
    %v8237 = vld [vmem:[%s8215 + $0xa8] sm:$0xff]
    %v8238 = vld [vmem:[%s8215 + $0xb0] sm:$0xff]
    %v8239 = vld [vmem:[%s8215 + $0xb8] sm:$0xff]
    %v8240 = vld [vmem:[%s8215 + $0xc0] sm:$0xff]
    %v8241 = vld [vmem:[%s8215 + $0xc8] sm:$0xff]
    %v8242 = vld [vmem:[%s8215 + $0xd0] sm:$0xff]
    %v8243 = vld [vmem:[%s8215 + $0xd8] sm:$0xff]
    %v8244 = vld [vmem:[%s8215 + $0xe0] sm:$0xff]
    %v8245 = vld [vmem:[%s8215 + $0xe8] sm:$0xff]
    %v8246 = vld [vmem:[%s8215 + $0xf0] sm:$0xff]
    %v8247 = vld [vmem:[%s8215 + $0xf8] sm:$0xff]
    %v8248 = vld [vmem:[%s8215 + $0x100] sm:$0xff]
    %v8249 = vld [vmem:[%s8215 + $0x108] sm:$0xff]
    %v8250 = vld [vmem:[%s8215 + $0x110] sm:$0xff]
    %v8251 = vld [vmem:[%s8215 + $0x118] sm:$0xff]
    %v8252 = vld [vmem:[%s8215 + $0x120] sm:$0xff]
    %v8253 = vld [vmem:[%s8215 + $0x128] sm:$0xff]
    %v8254 = vld [vmem:[%s8215 + $0x130] sm:$0xff]
    %v8255 = vld [vmem:[%s8215 + $0x138] sm:$0xff]
    %v8256 = vld [vmem:[%s8215 + $0x140] sm:$0xff]
    %v8257 = vld [vmem:[%s8215 + $0x148] sm:$0xff]
    %v8258 = vld [vmem:[%s8215 + $0x150] sm:$0xff]
    %v8259 = vld [vmem:[%s8215 + $0x158] sm:$0xff]
    %v8260 = vld [vmem:[%s8215 + $0x160] sm:$0xff]
    %v8261 = vld [vmem:[%s8215 + $0x168] sm:$0xff]
    %v8262 = vld [vmem:[%s8215 + $0x170] sm:$0xff]
    %v8263 = vld [vmem:[%s8215 + $0x178] sm:$0xff]
    %v8264 = vld [vmem:[%s8215 + $0x180] sm:$0xff]
    %v8265 = vld [vmem:[%s8215 + $0x188] sm:$0xff]
    %v8266 = vld [vmem:[%s8215 + $0x190] sm:$0xff]
    %v8267 = vld [vmem:[%s8215 + $0x198] sm:$0xff]
    %v8268 = vld [vmem:[%s8215 + $0x1a0] sm:$0xff]
    %v8269 = vld [vmem:[%s8215 + $0x1a8] sm:$0xff]
    %v8270 = vld [vmem:[%s8215 + $0x1b0] sm:$0xff]
    %v8271 = vld [vmem:[%s8215 + $0x1b8] sm:$0xff]
    %v8272 = vld [vmem:[%s8215 + $0x1c0] sm:$0xff]
    %v8273 = vld [vmem:[%s8215 + $0x1c8] sm:$0xff]
    %v8274 = vld [vmem:[%s8215 + $0x1d0] sm:$0xff]
    %v8275 = vld [vmem:[%s8215 + $0x1d8] sm:$0xff]
    %v8276 = vld [vmem:[%s8215 + $0x1e0] sm:$0xff]
    %v8277 = vld [vmem:[%s8215 + $0x1e8] sm:$0xff]
    %v8278 = vld [vmem:[%s8215 + $0x1f0] sm:$0xff]
    %v8279 = vld [vmem:[%s8215 + $0x1f8] sm:$0xff]
    %v8344 = vunpack.c.l.b16 %v8216
    %v8345 = vunpack.c.h.b16 %v8216
    %v8346 = vunpack.c.l.b16 %v8217
    %v8347 = vunpack.c.h.b16 %v8217
    %v8348 = vunpack.c.l.b16 %v8218
    %v8349 = vunpack.c.h.b16 %v8218
    %v8350 = vunpack.c.l.b16 %v8219
    %v8351 = vunpack.c.h.b16 %v8219
    %v8352 = vunpack.c.l.b16 %v8220
    %v8353 = vunpack.c.h.b16 %v8220
    %v8354 = vunpack.c.l.b16 %v8221
    %v8355 = vunpack.c.h.b16 %v8221
    %v8356 = vunpack.c.l.b16 %v8222
    %v8357 = vunpack.c.h.b16 %v8222
    %v8358 = vunpack.c.l.b16 %v8223
    %v8359 = vunpack.c.h.b16 %v8223
    %v8360 = vunpack.c.l.b16 %v8224
    %v8361 = vunpack.c.h.b16 %v8224
    %v8362 = vunpack.c.l.b16 %v8225
    %v8363 = vunpack.c.h.b16 %v8225
    %v8364 = vunpack.c.l.b16 %v8226
    %v8365 = vunpack.c.h.b16 %v8226
    %v8366 = vunpack.c.l.b16 %v8227
    %v8367 = vunpack.c.h.b16 %v8227
    %v8368 = vunpack.c.l.b16 %v8228
    %v8369 = vunpack.c.h.b16 %v8228
    %v8370 = vunpack.c.l.b16 %v8229
    %v8371 = vunpack.c.h.b16 %v8229
    %v8372 = vunpack.c.l.b16 %v8230
    %v8373 = vunpack.c.h.b16 %v8230
    %v8374 = vunpack.c.l.b16 %v8231
    %v8375 = vunpack.c.h.b16 %v8231
    %v8376 = vunpack.c.l.b16 %v8232
    %v8377 = vunpack.c.h.b16 %v8232
    %v8378 = vunpack.c.l.b16 %v8233
    %v8379 = vunpack.c.h.b16 %v8233
    %v8380 = vunpack.c.l.b16 %v8234
    %v8381 = vunpack.c.h.b16 %v8234
    %v8382 = vunpack.c.l.b16 %v8235
    %v8383 = vunpack.c.h.b16 %v8235
    %v8384 = vunpack.c.l.b16 %v8236
    %v8385 = vunpack.c.h.b16 %v8236
    %v8386 = vunpack.c.l.b16 %v8237
    %v8387 = vunpack.c.h.b16 %v8237
    %v8388 = vunpack.c.l.b16 %v8238
    %v8389 = vunpack.c.h.b16 %v8238
    %v8390 = vunpack.c.l.b16 %v8239
    %v8391 = vunpack.c.h.b16 %v8239
    %v8392 = vunpack.c.l.b16 %v8240
    %v8393 = vunpack.c.h.b16 %v8240
    %v8394 = vunpack.c.l.b16 %v8241
    %v8395 = vunpack.c.h.b16 %v8241
    %v8396 = vunpack.c.l.b16 %v8242
    %v8397 = vunpack.c.h.b16 %v8242
    %v8398 = vunpack.c.l.b16 %v8243
    %v8399 = vunpack.c.h.b16 %v8243
    %v8400 = vunpack.c.l.b16 %v8244
    %v8401 = vunpack.c.h.b16 %v8244
    %v8402 = vunpack.c.l.b16 %v8245
    %v8403 = vunpack.c.h.b16 %v8245
    %v8404 = vunpack.c.l.b16 %v8246
    %v8405 = vunpack.c.h.b16 %v8246
    %v8406 = vunpack.c.l.b16 %v8247
    %v8407 = vunpack.c.h.b16 %v8247
    %v8408 = vunpack.c.l.b16 %v8248
    %v8409 = vunpack.c.h.b16 %v8248
    %v8410 = vunpack.c.l.b16 %v8249
    %v8411 = vunpack.c.h.b16 %v8249
    %v8412 = vunpack.c.l.b16 %v8250
    %v8413 = vunpack.c.h.b16 %v8250
    %v8414 = vunpack.c.l.b16 %v8251
    %v8415 = vunpack.c.h.b16 %v8251
    %v8416 = vunpack.c.l.b16 %v8252
    %v8417 = vunpack.c.h.b16 %v8252
    %v8418 = vunpack.c.l.b16 %v8253
    %v8419 = vunpack.c.h.b16 %v8253
    %v8420 = vunpack.c.l.b16 %v8254
    %v8421 = vunpack.c.h.b16 %v8254
    %v8422 = vunpack.c.l.b16 %v8255
    %v8423 = vunpack.c.h.b16 %v8255
    %v8424 = vunpack.c.l.b16 %v8256
    %v8425 = vunpack.c.h.b16 %v8256
    %v8426 = vunpack.c.l.b16 %v8257
    %v8427 = vunpack.c.h.b16 %v8257
    %v8428 = vunpack.c.l.b16 %v8258
    %v8429 = vunpack.c.h.b16 %v8258
    %v8430 = vunpack.c.l.b16 %v8259
    %v8431 = vunpack.c.h.b16 %v8259
    %v8432 = vunpack.c.l.b16 %v8260
    %v8433 = vunpack.c.h.b16 %v8260
    %v8434 = vunpack.c.l.b16 %v8261
    %v8435 = vunpack.c.h.b16 %v8261
    %v8436 = vunpack.c.l.b16 %v8262
    %v8437 = vunpack.c.h.b16 %v8262
    %v8438 = vunpack.c.l.b16 %v8263
    %v8439 = vunpack.c.h.b16 %v8263
    %v8440 = vunpack.c.l.b16 %v8264
    %v8441 = vunpack.c.h.b16 %v8264
    %v8442 = vunpack.c.l.b16 %v8265
    %v8443 = vunpack.c.h.b16 %v8265
    %v8444 = vunpack.c.l.b16 %v8266
    %v8445 = vunpack.c.h.b16 %v8266
    %v8446 = vunpack.c.l.b16 %v8267
    %v8447 = vunpack.c.h.b16 %v8267
    %v8448 = vunpack.c.l.b16 %v8268
    %v8449 = vunpack.c.h.b16 %v8268
    %v8450 = vunpack.c.l.b16 %v8269
    %v8451 = vunpack.c.h.b16 %v8269
    %v8452 = vunpack.c.l.b16 %v8270
    %v8453 = vunpack.c.h.b16 %v8270
    %v8454 = vunpack.c.l.b16 %v8271
    %v8455 = vunpack.c.h.b16 %v8271
    %v8456 = vunpack.c.l.b16 %v8272
    %v8457 = vunpack.c.h.b16 %v8272
    %v8458 = vunpack.c.l.b16 %v8273
    %v8459 = vunpack.c.h.b16 %v8273
    %v8460 = vunpack.c.l.b16 %v8274
    %v8461 = vunpack.c.h.b16 %v8274
    %v8462 = vunpack.c.l.b16 %v8275
    %v8463 = vunpack.c.h.b16 %v8275
    %v8464 = vunpack.c.l.b16 %v8276
    %v8465 = vunpack.c.h.b16 %v8276
    %v8466 = vunpack.c.l.b16 %v8277
    %v8467 = vunpack.c.h.b16 %v8277
    %v8468 = vunpack.c.l.b16 %v8278
    %v8469 = vunpack.c.h.b16 %v8278
    %v8470 = vunpack.c.l.b16 %v8279
    %v8471 = vunpack.c.h.b16 %v8279
    %v8472 = vpack.c.b16 %v8346, %v8344
    %v8473 = vpack.c.b16 %v8347, %v8345
    %v8474 = vpack.c.b16 %v8350, %v8348
    %v8475 = vpack.c.b16 %v8351, %v8349
    %v8476 = vpack.c.b16 %v8354, %v8352
    %v8477 = vpack.c.b16 %v8355, %v8353
    %v8478 = vpack.c.b16 %v8358, %v8356
    %v8479 = vpack.c.b16 %v8359, %v8357
    %v8480 = vpack.c.b16 %v8362, %v8360
    %v8481 = vpack.c.b16 %v8363, %v8361
    %v8482 = vpack.c.b16 %v8366, %v8364
    %v8483 = vpack.c.b16 %v8367, %v8365
    %v8484 = vpack.c.b16 %v8370, %v8368
    %v8485 = vpack.c.b16 %v8371, %v8369
    %v8486 = vpack.c.b16 %v8374, %v8372
    %v8487 = vpack.c.b16 %v8375, %v8373
    %v8488 = vpack.c.b16 %v8378, %v8376
    %v8489 = vpack.c.b16 %v8379, %v8377
    %v8490 = vpack.c.b16 %v8382, %v8380
    %v8491 = vpack.c.b16 %v8383, %v8381
    %v8492 = vpack.c.b16 %v8386, %v8384
    %v8493 = vpack.c.b16 %v8387, %v8385
    %v8494 = vpack.c.b16 %v8390, %v8388
    %v8495 = vpack.c.b16 %v8391, %v8389
    %v8496 = vpack.c.b16 %v8394, %v8392
    %v8497 = vpack.c.b16 %v8395, %v8393
    %v8498 = vpack.c.b16 %v8398, %v8396
    %v8499 = vpack.c.b16 %v8399, %v8397
    %v8500 = vpack.c.b16 %v8402, %v8400
    %v8501 = vpack.c.b16 %v8403, %v8401
    %v8502 = vpack.c.b16 %v8406, %v8404
    %v8503 = vpack.c.b16 %v8407, %v8405
    %v8504 = vpack.c.b16 %v8410, %v8408
    %v8505 = vpack.c.b16 %v8411, %v8409
    %v8506 = vpack.c.b16 %v8414, %v8412
    %v8507 = vpack.c.b16 %v8415, %v8413
    %v8508 = vpack.c.b16 %v8418, %v8416
    %v8509 = vpack.c.b16 %v8419, %v8417
    %v8510 = vpack.c.b16 %v8422, %v8420
    %v8511 = vpack.c.b16 %v8423, %v8421
    %v8512 = vpack.c.b16 %v8426, %v8424
    %v8513 = vpack.c.b16 %v8427, %v8425
    %v8514 = vpack.c.b16 %v8430, %v8428
    %v8515 = vpack.c.b16 %v8431, %v8429
    %v8516 = vpack.c.b16 %v8434, %v8432
    %v8517 = vpack.c.b16 %v8435, %v8433
    %v8518 = vpack.c.b16 %v8438, %v8436
    %v8519 = vpack.c.b16 %v8439, %v8437
    %v8520 = vpack.c.b16 %v8442, %v8440
    %v8521 = vpack.c.b16 %v8443, %v8441
    %v8522 = vpack.c.b16 %v8446, %v8444
    %v8523 = vpack.c.b16 %v8447, %v8445
    %v8524 = vpack.c.b16 %v8450, %v8448
    %v8525 = vpack.c.b16 %v8451, %v8449
    %v8526 = vpack.c.b16 %v8454, %v8452
    %v8527 = vpack.c.b16 %v8455, %v8453
    %v8528 = vpack.c.b16 %v8458, %v8456
    %v8529 = vpack.c.b16 %v8459, %v8457
    %v8530 = vpack.c.b16 %v8462, %v8460
    %v8531 = vpack.c.b16 %v8463, %v8461
    %v8532 = vpack.c.b16 %v8466, %v8464
    %v8533 = vpack.c.b16 %v8467, %v8465
    %v8534 = vpack.c.b16 %v8470, %v8468
    %v8535 = vpack.c.b16 %v8471, %v8469
    %8600 = vmatprep.subr.bf16.mxu0 %v8473
    %8601 = vmatpush1.bf16.msra.mxu0 %v8472
    %8602 = vmatprep.subr.bf16.mxu0 %v8475
    %8603 = vmatpush1.bf16.msra.mxu0 %v8474
    %8604 = vmatprep.subr.bf16.mxu0 %v8477
    %8605 = vmatpush1.bf16.msra.mxu0 %v8476
    %8606 = vmatprep.subr.bf16.mxu0 %v8479
    %8607 = vmatpush1.bf16.msra.mxu0 %v8478
    %8608 = vmatprep.subr.bf16.mxu0 %v8481
    %8609 = vmatpush1.bf16.msra.mxu0 %v8480
    %8610 = vmatprep.subr.bf16.mxu0 %v8483
    %8611 = vmatpush1.bf16.msra.mxu0 %v8482
    %8612 = vmatprep.subr.bf16.mxu0 %v8485
    %8613 = vmatpush1.bf16.msra.mxu0 %v8484
    %8614 = vmatprep.subr.bf16.mxu0 %v8487
    %8615 = vmatpush1.bf16.msra.mxu0 %v8486
    %8616 = vmatprep.subr.bf16.mxu0 %v8489
    %8617 = vmatpush1.bf16.msra.mxu0 %v8488
    %8618 = vmatprep.subr.bf16.mxu0 %v8491
    %8619 = vmatpush1.bf16.msra.mxu0 %v8490
    %8620 = vmatprep.subr.bf16.mxu0 %v8493
    %8621 = vmatpush1.bf16.msra.mxu0 %v8492
    %8622 = vmatprep.subr.bf16.mxu0 %v8495
    %8623 = vmatpush1.bf16.msra.mxu0 %v8494
    %8624 = vmatprep.subr.bf16.mxu0 %v8497
    %8625 = vmatpush1.bf16.msra.mxu0 %v8496
    %8626 = vmatprep.subr.bf16.mxu0 %v8499
    %8627 = vmatpush1.bf16.msra.mxu0 %v8498
    %8628 = vmatprep.subr.bf16.mxu0 %v8501
    %8629 = vmatpush1.bf16.msra.mxu0 %v8500
    %8630 = vmatprep.subr.bf16.mxu0 %v8503
    %8631 = vmatpush1.bf16.msra.mxu0 %v8502
    %8632 = vmatprep.mubr.bf16.mxu0 %v8212
    %8633 = vmatmul.mubr.bf16.gmra.mrb[0].mxu0 %v8211
    %v8634 = vpop.f32.mrb[0].mxu0
    %v8635 = vadd.f32 0.0, %v8634
    %v8636 = vpop.f32.mrb[0].mxu0
    %v8637 = vadd.f32 0.0, %v8636
    %v8638 = vpop.f32.mrb[0].mxu0
    %v8639 = vadd.f32 0.0, %v8638
    %v8640 = vpop.f32.mrb[0].mxu0
    %v8641 = vadd.f32 0.0, %v8640
    %8642 = vdwg.mxu0
    %8643 = vmatprep.subr.bf16.mxu0 %v8505
    %8644 = vmatpush1.bf16.msra.mxu0 %v8504
    %8645 = vmatprep.subr.bf16.mxu0 %v8507
    %8646 = vmatpush1.bf16.msra.mxu0 %v8506
    %8647 = vmatprep.subr.bf16.mxu0 %v8509
    %8648 = vmatpush1.bf16.msra.mxu0 %v8508
    %8649 = vmatprep.subr.bf16.mxu0 %v8511
    %8650 = vmatpush1.bf16.msra.mxu0 %v8510
    %8651 = vmatprep.subr.bf16.mxu0 %v8513
    %8652 = vmatpush1.bf16.msra.mxu0 %v8512
    %8653 = vmatprep.subr.bf16.mxu0 %v8515
    %8654 = vmatpush1.bf16.msra.mxu0 %v8514
    %8655 = vmatprep.subr.bf16.mxu0 %v8517
    %8656 = vmatpush1.bf16.msra.mxu0 %v8516
    %8657 = vmatprep.subr.bf16.mxu0 %v8519
    %8658 = vmatpush1.bf16.msra.mxu0 %v8518
    %8659 = vmatprep.subr.bf16.mxu0 %v8521
    %8660 = vmatpush1.bf16.msra.mxu0 %v8520
    %8661 = vmatprep.subr.bf16.mxu0 %v8523
    %8662 = vmatpush1.bf16.msra.mxu0 %v8522
    %8663 = vmatprep.subr.bf16.mxu0 %v8525
    %8664 = vmatpush1.bf16.msra.mxu0 %v8524
    %8665 = vmatprep.subr.bf16.mxu0 %v8527
    %8666 = vmatpush1.bf16.msra.mxu0 %v8526
    %8667 = vmatprep.subr.bf16.mxu0 %v8529
    %8668 = vmatpush1.bf16.msra.mxu0 %v8528
    %8669 = vmatprep.subr.bf16.mxu0 %v8531
    %8670 = vmatpush1.bf16.msra.mxu0 %v8530
    %8671 = vmatprep.subr.bf16.mxu0 %v8533
    %8672 = vmatpush1.bf16.msra.mxu0 %v8532
    %8673 = vmatprep.subr.bf16.mxu0 %v8535
    %8674 = vmatpush1.bf16.msra.mxu0 %v8534
    %8675 = vmatprep.mubr.bf16.mxu0 %v8214
    %8676 = vmatmul.mubr.bf16.gmra.mrb[0].mxu0 %v8213
    %v8677 = vpop.f32.mrb[0].mxu0
    %v8678 = vadd.f32 %v8635, %v8677
    %v8679 = vpop.f32.mrb[0].mxu0
    %v8680 = vadd.f32 %v8637, %v8679
    %v8681 = vpop.f32.mrb[0].mxu0
    %v8682 = vadd.f32 %v8639, %v8681
    %v8683 = vpop.f32.mrb[0].mxu0
    %v8684 = vadd.f32 %v8641, %v8683
    %8685 = vdwg.mxu0
    %v8686 = vadd.f32 %v8106, %v8678
    %v8687 = vadd.f32 %v8108, %v8680
    %v8688 = vadd.f32 %v8110, %v8682
    %v8689 = vadd.f32 %v8112, %v8684
    %s8690 = scalar_lea.vmem %s10, 24
    %v8691 = vld [vmem:[%s8690] sm:$0xf]
    %v8692 = vld [vmem:[%s8690 + $0x4] sm:$0xf]
    %v8695 = vunpack.c.l.b16 %v8691
    %v8696 = vunpack.c.l.b16 %v8692
    %v8697 = vpack.c.b16 %v8696, %v8695
    %v8699 = vsel %vm6978, %v8697, 0
    %8701 = vmatprep.subr.bf16.mxu0 %v6964
    %8702 = vmatpush1.bf16.msra.mxu0 %v6963
    %8703 = vmatprep.subr.bf16.mxu0 %v6968
    %8704 = vmatpush1.bf16.msra.mxu0 %v6967
    %8705 = vmatprep.subr.bf16.mxu0 0
    %8706 = vmatpush1.bf16.msra.mxu0 0
    %8707 = vmatprep.subr.bf16.mxu0 0
    %8708 = vmatpush1.bf16.msra.mxu0 0
    %8709 = vmatprep.subr.bf16.mxu0 0
    %8710 = vmatpush1.bf16.msra.mxu0 0
    %8711 = vmatprep.subr.bf16.mxu0 0
    %8712 = vmatpush1.bf16.msra.mxu0 0
    %8713 = vmatprep.subr.bf16.mxu0 0
    %8714 = vmatpush1.bf16.msra.mxu0 0
    %8715 = vmatprep.subr.bf16.mxu0 0
    %8716 = vmatpush1.bf16.msra.mxu0 0
    %8717 = vmatprep.subr.bf16.mxu0 0
    %8718 = vmatpush1.bf16.msra.mxu0 0
    %8719 = vmatprep.subr.bf16.mxu0 0
    %8720 = vmatpush1.bf16.msra.mxu0 0
    %8721 = vmatprep.subr.bf16.mxu0 0
    %8722 = vmatpush1.bf16.msra.mxu0 0
    %8723 = vmatprep.subr.bf16.mxu0 0
    %8724 = vmatpush1.bf16.msra.mxu0 0
    %8725 = vmatprep.subr.bf16.mxu0 0
    %8726 = vmatpush1.bf16.msra.mxu0 0
    %8727 = vmatprep.subr.bf16.mxu0 0
    %8728 = vmatpush1.bf16.msra.mxu0 0
    %8729 = vmatprep.subr.bf16.mxu0 0
    %8730 = vmatpush1.bf16.msra.mxu0 0
    %8731 = vmatprep.subr.bf16.mxu0 0
    %8732 = vmatpush1.bf16.msra.mxu0 0
    %8733 = vmatprep.mubr.bf16.mxu0 0
    %8734 = vmatmul.mubr.bf16.gmra.mrb[0].mxu0 %v8699
    %v8735 = vpop.f32.mrb[0].mxu0
    %v8736 = vadd.f32 0.0, %v8735
    %v8737 = vpop.f32.mrb[0].mxu0
    %v8738 = vadd.f32 0.0, %v8737
    %v8739 = vpop.f32.mrb[0].mxu0
    %v8740 = vadd.f32 0.0, %v8739
    %v8741 = vpop.f32.mrb[0].mxu0
    %v8742 = vadd.f32 0.0, %v8741
    %8743 = vdwg.mxu0
    %8744 = vmatprep.subr.bf16.mxu0 %v6966
    %8745 = vmatpush1.bf16.msra.mxu0 %v6965
    %8746 = vmatprep.subr.bf16.mxu0 %v6970
    %8747 = vmatpush1.bf16.msra.mxu0 %v6969
    %8748 = vmatprep.subr.bf16.mxu0 0
    %8749 = vmatpush1.bf16.msra.mxu0 0
    %8750 = vmatprep.subr.bf16.mxu0 0
    %8751 = vmatpush1.bf16.msra.mxu0 0
    %8752 = vmatprep.subr.bf16.mxu0 0
    %8753 = vmatpush1.bf16.msra.mxu0 0
    %8754 = vmatprep.subr.bf16.mxu0 0
    %8755 = vmatpush1.bf16.msra.mxu0 0
    %8756 = vmatprep.subr.bf16.mxu0 0
    %8757 = vmatpush1.bf16.msra.mxu0 0
    %8758 = vmatprep.subr.bf16.mxu0 0
    %8759 = vmatpush1.bf16.msra.mxu0 0
    %8760 = vmatprep.subr.bf16.mxu0 0
    %8761 = vmatpush1.bf16.msra.mxu0 0
    %8762 = vmatprep.subr.bf16.mxu0 0
    %8763 = vmatpush1.bf16.msra.mxu0 0
    %8764 = vmatprep.subr.bf16.mxu0 0
    %8765 = vmatpush1.bf16.msra.mxu0 0
    %8766 = vmatprep.subr.bf16.mxu0 0
    %8767 = vmatpush1.bf16.msra.mxu0 0
    %8768 = vmatprep.subr.bf16.mxu0 0
    %8769 = vmatpush1.bf16.msra.mxu0 0
    %8770 = vmatprep.subr.bf16.mxu0 0
    %8771 = vmatpush1.bf16.msra.mxu0 0
    %8772 = vmatprep.subr.bf16.mxu0 0
    %8773 = vmatpush1.bf16.msra.mxu0 0
    %8774 = vmatprep.subr.bf16.mxu0 0
    %8775 = vmatpush1.bf16.msra.mxu0 0
    %8776 = vmatprep.mubr.bf16.mxu0 0
    %8777 = vmatmul.mubr.bf16.gmra.mrb[0].mxu0 %v8699
    %v8778 = vpop.f32.mrb[0].mxu0
    %v8779 = vadd.f32 0.0, %v8778
    %v8780 = vpop.f32.mrb[0].mxu0
    %v8781 = vadd.f32 0.0, %v8780
    %v8782 = vpop.f32.mrb[0].mxu0
    %v8783 = vadd.f32 0.0, %v8782
    %v8784 = vpop.f32.mrb[0].mxu0
    %v8785 = vadd.f32 0.0, %v8784
    %8786 = vdwg.mxu0
    %v8787 = vpack.c.bf16 %v8740, %v8736
    %v8788 = vpack.c.bf16 %v8742, %v8738
    %v8789 = vpack.c.bf16 %v8783, %v8779
    %v8790 = vpack.c.bf16 %v8785, %v8781
    %s8791 = scalar_lea.vmem [#allocation14], 1536
    %v8792 = vld [vmem:[%s8791] sm:$0xff]
    %v8793 = vld [vmem:[%s8791 + $0x8] sm:$0xff]
    %v8794 = vld [vmem:[%s8791 + $0x10] sm:$0xff]
    %v8795 = vld [vmem:[%s8791 + $0x18] sm:$0xff]
    %v8796 = vld [vmem:[%s8791 + $0x20] sm:$0xff]
    %v8797 = vld [vmem:[%s8791 + $0x28] sm:$0xff]
    %v8798 = vld [vmem:[%s8791 + $0x30] sm:$0xff]
    %v8799 = vld [vmem:[%s8791 + $0x38] sm:$0xff]
    %v8800 = vld [vmem:[%s8791 + $0x40] sm:$0xff]
    %v8801 = vld [vmem:[%s8791 + $0x48] sm:$0xff]
    %v8802 = vld [vmem:[%s8791 + $0x50] sm:$0xff]
    %v8803 = vld [vmem:[%s8791 + $0x58] sm:$0xff]
    %v8804 = vld [vmem:[%s8791 + $0x60] sm:$0xff]
    %v8805 = vld [vmem:[%s8791 + $0x68] sm:$0xff]
    %v8806 = vld [vmem:[%s8791 + $0x70] sm:$0xff]
    %v8807 = vld [vmem:[%s8791 + $0x78] sm:$0xff]
    %v8808 = vld [vmem:[%s8791 + $0x80] sm:$0xff]
    %v8809 = vld [vmem:[%s8791 + $0x88] sm:$0xff]
    %v8810 = vld [vmem:[%s8791 + $0x90] sm:$0xff]
    %v8811 = vld [vmem:[%s8791 + $0x98] sm:$0xff]
    %v8812 = vld [vmem:[%s8791 + $0xa0] sm:$0xff]
    %v8813 = vld [vmem:[%s8791 + $0xa8] sm:$0xff]
    %v8814 = vld [vmem:[%s8791 + $0xb0] sm:$0xff]
    %v8815 = vld [vmem:[%s8791 + $0xb8] sm:$0xff]
    %v8816 = vld [vmem:[%s8791 + $0xc0] sm:$0xff]
    %v8817 = vld [vmem:[%s8791 + $0xc8] sm:$0xff]
    %v8818 = vld [vmem:[%s8791 + $0xd0] sm:$0xff]
    %v8819 = vld [vmem:[%s8791 + $0xd8] sm:$0xff]
    %v8820 = vld [vmem:[%s8791 + $0xe0] sm:$0xff]
    %v8821 = vld [vmem:[%s8791 + $0xe8] sm:$0xff]
    %v8822 = vld [vmem:[%s8791 + $0xf0] sm:$0xff]
    %v8823 = vld [vmem:[%s8791 + $0xf8] sm:$0xff]
    %v8824 = vld [vmem:[%s8791 + $0x100] sm:$0xff]
    %v8825 = vld [vmem:[%s8791 + $0x108] sm:$0xff]
    %v8826 = vld [vmem:[%s8791 + $0x110] sm:$0xff]
    %v8827 = vld [vmem:[%s8791 + $0x118] sm:$0xff]
    %v8828 = vld [vmem:[%s8791 + $0x120] sm:$0xff]
    %v8829 = vld [vmem:[%s8791 + $0x128] sm:$0xff]
    %v8830 = vld [vmem:[%s8791 + $0x130] sm:$0xff]
    %v8831 = vld [vmem:[%s8791 + $0x138] sm:$0xff]
    %v8832 = vld [vmem:[%s8791 + $0x140] sm:$0xff]
    %v8833 = vld [vmem:[%s8791 + $0x148] sm:$0xff]
    %v8834 = vld [vmem:[%s8791 + $0x150] sm:$0xff]
    %v8835 = vld [vmem:[%s8791 + $0x158] sm:$0xff]
    %v8836 = vld [vmem:[%s8791 + $0x160] sm:$0xff]
    %v8837 = vld [vmem:[%s8791 + $0x168] sm:$0xff]
    %v8838 = vld [vmem:[%s8791 + $0x170] sm:$0xff]
    %v8839 = vld [vmem:[%s8791 + $0x178] sm:$0xff]
    %v8840 = vld [vmem:[%s8791 + $0x180] sm:$0xff]
    %v8841 = vld [vmem:[%s8791 + $0x188] sm:$0xff]
    %v8842 = vld [vmem:[%s8791 + $0x190] sm:$0xff]
    %v8843 = vld [vmem:[%s8791 + $0x198] sm:$0xff]
    %v8844 = vld [vmem:[%s8791 + $0x1a0] sm:$0xff]
    %v8845 = vld [vmem:[%s8791 + $0x1a8] sm:$0xff]
    %v8846 = vld [vmem:[%s8791 + $0x1b0] sm:$0xff]
    %v8847 = vld [vmem:[%s8791 + $0x1b8] sm:$0xff]
    %v8848 = vld [vmem:[%s8791 + $0x1c0] sm:$0xff]
    %v8849 = vld [vmem:[%s8791 + $0x1c8] sm:$0xff]
    %v8850 = vld [vmem:[%s8791 + $0x1d0] sm:$0xff]
    %v8851 = vld [vmem:[%s8791 + $0x1d8] sm:$0xff]
    %v8852 = vld [vmem:[%s8791 + $0x1e0] sm:$0xff]
    %v8853 = vld [vmem:[%s8791 + $0x1e8] sm:$0xff]
    %v8854 = vld [vmem:[%s8791 + $0x1f0] sm:$0xff]
    %v8855 = vld [vmem:[%s8791 + $0x1f8] sm:$0xff]
    %v8920 = vunpack.c.l.b16 %v8792
    %v8921 = vunpack.c.h.b16 %v8792
    %v8922 = vunpack.c.l.b16 %v8793
    %v8923 = vunpack.c.h.b16 %v8793
    %v8924 = vunpack.c.l.b16 %v8794
    %v8925 = vunpack.c.h.b16 %v8794
    %v8926 = vunpack.c.l.b16 %v8795
    %v8927 = vunpack.c.h.b16 %v8795
    %v8928 = vunpack.c.l.b16 %v8796
    %v8929 = vunpack.c.h.b16 %v8796
    %v8930 = vunpack.c.l.b16 %v8797
    %v8931 = vunpack.c.h.b16 %v8797
    %v8932 = vunpack.c.l.b16 %v8798
    %v8933 = vunpack.c.h.b16 %v8798
    %v8934 = vunpack.c.l.b16 %v8799
    %v8935 = vunpack.c.h.b16 %v8799
    %v8936 = vunpack.c.l.b16 %v8800
    %v8937 = vunpack.c.h.b16 %v8800
    %v8938 = vunpack.c.l.b16 %v8801
    %v8939 = vunpack.c.h.b16 %v8801
    %v8940 = vunpack.c.l.b16 %v8802
    %v8941 = vunpack.c.h.b16 %v8802
    %v8942 = vunpack.c.l.b16 %v8803
    %v8943 = vunpack.c.h.b16 %v8803
    %v8944 = vunpack.c.l.b16 %v8804
    %v8945 = vunpack.c.h.b16 %v8804
    %v8946 = vunpack.c.l.b16 %v8805
    %v8947 = vunpack.c.h.b16 %v8805
    %v8948 = vunpack.c.l.b16 %v8806
    %v8949 = vunpack.c.h.b16 %v8806
    %v8950 = vunpack.c.l.b16 %v8807
    %v8951 = vunpack.c.h.b16 %v8807
    %v8952 = vunpack.c.l.b16 %v8808
    %v8953 = vunpack.c.h.b16 %v8808
    %v8954 = vunpack.c.l.b16 %v8809
    %v8955 = vunpack.c.h.b16 %v8809
    %v8956 = vunpack.c.l.b16 %v8810
    %v8957 = vunpack.c.h.b16 %v8810
    %v8958 = vunpack.c.l.b16 %v8811
    %v8959 = vunpack.c.h.b16 %v8811
    %v8960 = vunpack.c.l.b16 %v8812
    %v8961 = vunpack.c.h.b16 %v8812
    %v8962 = vunpack.c.l.b16 %v8813
    %v8963 = vunpack.c.h.b16 %v8813
    %v8964 = vunpack.c.l.b16 %v8814
    %v8965 = vunpack.c.h.b16 %v8814
    %v8966 = vunpack.c.l.b16 %v8815
    %v8967 = vunpack.c.h.b16 %v8815
    %v8968 = vunpack.c.l.b16 %v8816
    %v8969 = vunpack.c.h.b16 %v8816
    %v8970 = vunpack.c.l.b16 %v8817
    %v8971 = vunpack.c.h.b16 %v8817
    %v8972 = vunpack.c.l.b16 %v8818
    %v8973 = vunpack.c.h.b16 %v8818
    %v8974 = vunpack.c.l.b16 %v8819
    %v8975 = vunpack.c.h.b16 %v8819
    %v8976 = vunpack.c.l.b16 %v8820
    %v8977 = vunpack.c.h.b16 %v8820
    %v8978 = vunpack.c.l.b16 %v8821
    %v8979 = vunpack.c.h.b16 %v8821
    %v8980 = vunpack.c.l.b16 %v8822
    %v8981 = vunpack.c.h.b16 %v8822
    %v8982 = vunpack.c.l.b16 %v8823
    %v8983 = vunpack.c.h.b16 %v8823
    %v8984 = vunpack.c.l.b16 %v8824
    %v8985 = vunpack.c.h.b16 %v8824
    %v8986 = vunpack.c.l.b16 %v8825
    %v8987 = vunpack.c.h.b16 %v8825
    %v8988 = vunpack.c.l.b16 %v8826
    %v8989 = vunpack.c.h.b16 %v8826
    %v8990 = vunpack.c.l.b16 %v8827
    %v8991 = vunpack.c.h.b16 %v8827
    %v8992 = vunpack.c.l.b16 %v8828
    %v8993 = vunpack.c.h.b16 %v8828
    %v8994 = vunpack.c.l.b16 %v8829
    %v8995 = vunpack.c.h.b16 %v8829
    %v8996 = vunpack.c.l.b16 %v8830
    %v8997 = vunpack.c.h.b16 %v8830
    %v8998 = vunpack.c.l.b16 %v8831
    %v8999 = vunpack.c.h.b16 %v8831
    %v9000 = vunpack.c.l.b16 %v8832
    %v9001 = vunpack.c.h.b16 %v8832
    %v9002 = vunpack.c.l.b16 %v8833
    %v9003 = vunpack.c.h.b16 %v8833
    %v9004 = vunpack.c.l.b16 %v8834
    %v9005 = vunpack.c.h.b16 %v8834
    %v9006 = vunpack.c.l.b16 %v8835
    %v9007 = vunpack.c.h.b16 %v8835
    %v9008 = vunpack.c.l.b16 %v8836
    %v9009 = vunpack.c.h.b16 %v8836
    %v9010 = vunpack.c.l.b16 %v8837
    %v9011 = vunpack.c.h.b16 %v8837
    %v9012 = vunpack.c.l.b16 %v8838
    %v9013 = vunpack.c.h.b16 %v8838
    %v9014 = vunpack.c.l.b16 %v8839
    %v9015 = vunpack.c.h.b16 %v8839
    %v9016 = vunpack.c.l.b16 %v8840
    %v9017 = vunpack.c.h.b16 %v8840
    %v9018 = vunpack.c.l.b16 %v8841
    %v9019 = vunpack.c.h.b16 %v8841
    %v9020 = vunpack.c.l.b16 %v8842
    %v9021 = vunpack.c.h.b16 %v8842
    %v9022 = vunpack.c.l.b16 %v8843
    %v9023 = vunpack.c.h.b16 %v8843
    %v9024 = vunpack.c.l.b16 %v8844
    %v9025 = vunpack.c.h.b16 %v8844
    %v9026 = vunpack.c.l.b16 %v8845
    %v9027 = vunpack.c.h.b16 %v8845
    %v9028 = vunpack.c.l.b16 %v8846
    %v9029 = vunpack.c.h.b16 %v8846
    %v9030 = vunpack.c.l.b16 %v8847
    %v9031 = vunpack.c.h.b16 %v8847
    %v9032 = vunpack.c.l.b16 %v8848
    %v9033 = vunpack.c.h.b16 %v8848
    %v9034 = vunpack.c.l.b16 %v8849
    %v9035 = vunpack.c.h.b16 %v8849
    %v9036 = vunpack.c.l.b16 %v8850
    %v9037 = vunpack.c.h.b16 %v8850
    %v9038 = vunpack.c.l.b16 %v8851
    %v9039 = vunpack.c.h.b16 %v8851
    %v9040 = vunpack.c.l.b16 %v8852
    %v9041 = vunpack.c.h.b16 %v8852
    %v9042 = vunpack.c.l.b16 %v8853
    %v9043 = vunpack.c.h.b16 %v8853
    %v9044 = vunpack.c.l.b16 %v8854
    %v9045 = vunpack.c.h.b16 %v8854
    %v9046 = vunpack.c.l.b16 %v8855
    %v9047 = vunpack.c.h.b16 %v8855
    %v9048 = vpack.c.b16 %v8922, %v8920
    %v9049 = vpack.c.b16 %v8923, %v8921
    %v9050 = vpack.c.b16 %v8926, %v8924
    %v9051 = vpack.c.b16 %v8927, %v8925
    %v9052 = vpack.c.b16 %v8930, %v8928
    %v9053 = vpack.c.b16 %v8931, %v8929
    %v9054 = vpack.c.b16 %v8934, %v8932
    %v9055 = vpack.c.b16 %v8935, %v8933
    %v9056 = vpack.c.b16 %v8938, %v8936
    %v9057 = vpack.c.b16 %v8939, %v8937
    %v9058 = vpack.c.b16 %v8942, %v8940
    %v9059 = vpack.c.b16 %v8943, %v8941
    %v9060 = vpack.c.b16 %v8946, %v8944
    %v9061 = vpack.c.b16 %v8947, %v8945
    %v9062 = vpack.c.b16 %v8950, %v8948
    %v9063 = vpack.c.b16 %v8951, %v8949
    %v9064 = vpack.c.b16 %v8954, %v8952
    %v9065 = vpack.c.b16 %v8955, %v8953
    %v9066 = vpack.c.b16 %v8958, %v8956
    %v9067 = vpack.c.b16 %v8959, %v8957
    %v9068 = vpack.c.b16 %v8962, %v8960
    %v9069 = vpack.c.b16 %v8963, %v8961
    %v9070 = vpack.c.b16 %v8966, %v8964
    %v9071 = vpack.c.b16 %v8967, %v8965
    %v9072 = vpack.c.b16 %v8970, %v8968
    %v9073 = vpack.c.b16 %v8971, %v8969
    %v9074 = vpack.c.b16 %v8974, %v8972
    %v9075 = vpack.c.b16 %v8975, %v8973
    %v9076 = vpack.c.b16 %v8978, %v8976
    %v9077 = vpack.c.b16 %v8979, %v8977
    %v9078 = vpack.c.b16 %v8982, %v8980
    %v9079 = vpack.c.b16 %v8983, %v8981
    %v9080 = vpack.c.b16 %v8986, %v8984
    %v9081 = vpack.c.b16 %v8987, %v8985
    %v9082 = vpack.c.b16 %v8990, %v8988
    %v9083 = vpack.c.b16 %v8991, %v8989
    %v9084 = vpack.c.b16 %v8994, %v8992
    %v9085 = vpack.c.b16 %v8995, %v8993
    %v9086 = vpack.c.b16 %v8998, %v8996
    %v9087 = vpack.c.b16 %v8999, %v8997
    %v9088 = vpack.c.b16 %v9002, %v9000
    %v9089 = vpack.c.b16 %v9003, %v9001
    %v9090 = vpack.c.b16 %v9006, %v9004
    %v9091 = vpack.c.b16 %v9007, %v9005
    %v9092 = vpack.c.b16 %v9010, %v9008
    %v9093 = vpack.c.b16 %v9011, %v9009
    %v9094 = vpack.c.b16 %v9014, %v9012
    %v9095 = vpack.c.b16 %v9015, %v9013
    %v9096 = vpack.c.b16 %v9018, %v9016
    %v9097 = vpack.c.b16 %v9019, %v9017
    %v9098 = vpack.c.b16 %v9022, %v9020
    %v9099 = vpack.c.b16 %v9023, %v9021
    %v9100 = vpack.c.b16 %v9026, %v9024
    %v9101 = vpack.c.b16 %v9027, %v9025
    %v9102 = vpack.c.b16 %v9030, %v9028
    %v9103 = vpack.c.b16 %v9031, %v9029
    %v9104 = vpack.c.b16 %v9034, %v9032
    %v9105 = vpack.c.b16 %v9035, %v9033
    %v9106 = vpack.c.b16 %v9038, %v9036
    %v9107 = vpack.c.b16 %v9039, %v9037
    %v9108 = vpack.c.b16 %v9042, %v9040
    %v9109 = vpack.c.b16 %v9043, %v9041
    %v9110 = vpack.c.b16 %v9046, %v9044
    %v9111 = vpack.c.b16 %v9047, %v9045
    %9176 = vmatprep.subr.bf16.mxu0 %v9049
    %9177 = vmatpush1.bf16.msra.mxu0 %v9048
    %9178 = vmatprep.subr.bf16.mxu0 %v9051
    %9179 = vmatpush1.bf16.msra.mxu0 %v9050
    %9180 = vmatprep.subr.bf16.mxu0 %v9053
    %9181 = vmatpush1.bf16.msra.mxu0 %v9052
    %9182 = vmatprep.subr.bf16.mxu0 %v9055
    %9183 = vmatpush1.bf16.msra.mxu0 %v9054
    %9184 = vmatprep.subr.bf16.mxu0 %v9057
    %9185 = vmatpush1.bf16.msra.mxu0 %v9056
    %9186 = vmatprep.subr.bf16.mxu0 %v9059
    %9187 = vmatpush1.bf16.msra.mxu0 %v9058
    %9188 = vmatprep.subr.bf16.mxu0 %v9061
    %9189 = vmatpush1.bf16.msra.mxu0 %v9060
    %9190 = vmatprep.subr.bf16.mxu0 %v9063
    %9191 = vmatpush1.bf16.msra.mxu0 %v9062
    %9192 = vmatprep.subr.bf16.mxu0 %v9065
    %9193 = vmatpush1.bf16.msra.mxu0 %v9064
    %9194 = vmatprep.subr.bf16.mxu0 %v9067
    %9195 = vmatpush1.bf16.msra.mxu0 %v9066
    %9196 = vmatprep.subr.bf16.mxu0 %v9069
    %9197 = vmatpush1.bf16.msra.mxu0 %v9068
    %9198 = vmatprep.subr.bf16.mxu0 %v9071
    %9199 = vmatpush1.bf16.msra.mxu0 %v9070
    %9200 = vmatprep.subr.bf16.mxu0 %v9073
    %9201 = vmatpush1.bf16.msra.mxu0 %v9072
    %9202 = vmatprep.subr.bf16.mxu0 %v9075
    %9203 = vmatpush1.bf16.msra.mxu0 %v9074
    %9204 = vmatprep.subr.bf16.mxu0 %v9077
    %9205 = vmatpush1.bf16.msra.mxu0 %v9076
    %9206 = vmatprep.subr.bf16.mxu0 %v9079
    %9207 = vmatpush1.bf16.msra.mxu0 %v9078
    %9208 = vmatprep.mubr.bf16.mxu0 %v8788
    %9209 = vmatmul.mubr.bf16.gmra.mrb[0].mxu0 %v8787
    %v9210 = vpop.f32.mrb[0].mxu0
    %v9211 = vadd.f32 0.0, %v9210
    %v9212 = vpop.f32.mrb[0].mxu0
    %v9213 = vadd.f32 0.0, %v9212
    %v9214 = vpop.f32.mrb[0].mxu0
    %v9215 = vadd.f32 0.0, %v9214
    %v9216 = vpop.f32.mrb[0].mxu0
    %v9217 = vadd.f32 0.0, %v9216
    %9218 = vdwg.mxu0
    %9219 = vmatprep.subr.bf16.mxu0 %v9081
    %9220 = vmatpush1.bf16.msra.mxu0 %v9080
    %9221 = vmatprep.subr.bf16.mxu0 %v9083
    %9222 = vmatpush1.bf16.msra.mxu0 %v9082
    %9223 = vmatprep.subr.bf16.mxu0 %v9085
    %9224 = vmatpush1.bf16.msra.mxu0 %v9084
    %9225 = vmatprep.subr.bf16.mxu0 %v9087
    %9226 = vmatpush1.bf16.msra.mxu0 %v9086
    %9227 = vmatprep.subr.bf16.mxu0 %v9089
    %9228 = vmatpush1.bf16.msra.mxu0 %v9088
    %9229 = vmatprep.subr.bf16.mxu0 %v9091
    %9230 = vmatpush1.bf16.msra.mxu0 %v9090
    %9231 = vmatprep.subr.bf16.mxu0 %v9093
    %9232 = vmatpush1.bf16.msra.mxu0 %v9092
    %9233 = vmatprep.subr.bf16.mxu0 %v9095
    %9234 = vmatpush1.bf16.msra.mxu0 %v9094
    %9235 = vmatprep.subr.bf16.mxu0 %v9097
    %9236 = vmatpush1.bf16.msra.mxu0 %v9096
    %9237 = vmatprep.subr.bf16.mxu0 %v9099
    %9238 = vmatpush1.bf16.msra.mxu0 %v9098
    %9239 = vmatprep.subr.bf16.mxu0 %v9101
    %9240 = vmatpush1.bf16.msra.mxu0 %v9100
    %9241 = vmatprep.subr.bf16.mxu0 %v9103
    %9242 = vmatpush1.bf16.msra.mxu0 %v9102
    %9243 = vmatprep.subr.bf16.mxu0 %v9105
    %9244 = vmatpush1.bf16.msra.mxu0 %v9104
    %9245 = vmatprep.subr.bf16.mxu0 %v9107
    %9246 = vmatpush1.bf16.msra.mxu0 %v9106
    %9247 = vmatprep.subr.bf16.mxu0 %v9109
    %9248 = vmatpush1.bf16.msra.mxu0 %v9108
    %9249 = vmatprep.subr.bf16.mxu0 %v9111
    %9250 = vmatpush1.bf16.msra.mxu0 %v9110
    %9251 = vmatprep.mubr.bf16.mxu0 %v8790
    %9252 = vmatmul.mubr.bf16.gmra.mrb[0].mxu0 %v8789
    %v9253 = vpop.f32.mrb[0].mxu0
    %v9254 = vadd.f32 %v9211, %v9253
    %v9255 = vpop.f32.mrb[0].mxu0
    %v9256 = vadd.f32 %v9213, %v9255
    %v9257 = vpop.f32.mrb[0].mxu0
    %v9258 = vadd.f32 %v9215, %v9257
    %v9259 = vpop.f32.mrb[0].mxu0
    %v9260 = vadd.f32 %v9217, %v9259
    %9261 = vdwg.mxu0
    %v9262 = vadd.f32 %v8686, %v9254
    %v9263 = vadd.f32 %v8687, %v9256
    %v9264 = vadd.f32 %v8688, %v9258
    %v9265 = vadd.f32 %v8689, %v9260
    %v9266 = vld [vmem:[#allocation16] sm:$0x3]
    %v9268 = vlaneseq
    %v9269 = vshrl.u32 %v9268, 7
    %v9270 = vsub.s32 0, %v9269
    %v9271 = vrot.slane %v9266, %v9270
    %v9272 = vlaneseq
    %v9273 = vshrl.u32 %v9272, 7
    %v9274 = vsub.s32 1, %v9273
    %v9275 = vrot.slane %v9266, %v9274
    %v9278 = vadd.f32 %v9262, %v9271
    %v9279 = vadd.f32 %v9263, %v9275
    %v9280 = vadd.f32 %v9264, %v9271
    %v9281 = vadd.f32 %v9265, %v9275
    %vm9282 = vcmp.gt.f32.partialorder %v9278, 0.0
    %vm9283 = vcmp.gt.f32.partialorder %v9279, 0.0
    %vm9284 = vcmp.gt.f32.partialorder %v9280, 0.0
    %vm9285 = vcmp.gt.f32.partialorder %v9281, 0.0
    %v9286 = vmul.f32 %v9278, 0.2
    %v9287 = vmul.f32 %v9279, 0.2
    %v9288 = vmul.f32 %v9280, 0.2
    %v9289 = vmul.f32 %v9281, 0.2
    %v9290 = vsel %vm9282, %v9278, %v9286
    %v9291 = vsel %vm9283, %v9279, %v9287
    %v9292 = vsel %vm9284, %v9280, %v9288
    %v9293 = vsel %vm9285, %v9281, %v9289
    %v9294 = vpack.c.bf16 %v9292, %v9290
    %v9295 = vpack.c.bf16 %v9293, %v9291
    %v9296 = vld [vmem:[#allocation17] sm:$0xff]
    %v9297 = vld [vmem:[#allocation17 + $0x8] sm:$0xff]
    %v9298 = vld [vmem:[#allocation17 + $0x10] sm:$0xff]
    %v9299 = vld [vmem:[#allocation17 + $0x18] sm:$0xff]
    %v9300 = vld [vmem:[#allocation17 + $0x20] sm:$0xff]
    %v9301 = vld [vmem:[#allocation17 + $0x28] sm:$0xff]
    %v9302 = vld [vmem:[#allocation17 + $0x30] sm:$0xff]
    %v9303 = vld [vmem:[#allocation17 + $0x38] sm:$0xff]
    %v9304 = vld [vmem:[#allocation17 + $0x40] sm:$0xff]
    %v9305 = vld [vmem:[#allocation17 + $0x48] sm:$0xff]
    %v9306 = vld [vmem:[#allocation17 + $0x50] sm:$0xff]
    %v9307 = vld [vmem:[#allocation17 + $0x58] sm:$0xff]
    %v9308 = vld [vmem:[#allocation17 + $0x60] sm:$0xff]
    %v9309 = vld [vmem:[#allocation17 + $0x68] sm:$0xff]
    %v9310 = vld [vmem:[#allocation17 + $0x70] sm:$0xff]
    %v9311 = vld [vmem:[#allocation17 + $0x78] sm:$0xff]
    %v9312 = vld [vmem:[#allocation17 + $0x80] sm:$0xff]
    %v9313 = vld [vmem:[#allocation17 + $0x88] sm:$0xff]
    %v9314 = vld [vmem:[#allocation17 + $0x90] sm:$0xff]
    %v9315 = vld [vmem:[#allocation17 + $0x98] sm:$0xff]
    %v9316 = vld [vmem:[#allocation17 + $0xa0] sm:$0xff]
    %v9317 = vld [vmem:[#allocation17 + $0xa8] sm:$0xff]
    %v9318 = vld [vmem:[#allocation17 + $0xb0] sm:$0xff]
    %v9319 = vld [vmem:[#allocation17 + $0xb8] sm:$0xff]
    %v9320 = vld [vmem:[#allocation17 + $0xc0] sm:$0xff]
    %v9321 = vld [vmem:[#allocation17 + $0xc8] sm:$0xff]
    %v9322 = vld [vmem:[#allocation17 + $0xd0] sm:$0xff]
    %v9323 = vld [vmem:[#allocation17 + $0xd8] sm:$0xff]
    %v9324 = vld [vmem:[#allocation17 + $0xe0] sm:$0xff]
    %v9325 = vld [vmem:[#allocation17 + $0xe8] sm:$0xff]
    %v9326 = vld [vmem:[#allocation17 + $0xf0] sm:$0xff]
    %v9327 = vld [vmem:[#allocation17 + $0xf8] sm:$0xff]
    %v9328 = vld [vmem:[#allocation17 + $0x100] sm:$0xff]
    %v9329 = vld [vmem:[#allocation17 + $0x108] sm:$0xff]
    %v9330 = vld [vmem:[#allocation17 + $0x110] sm:$0xff]
    %v9331 = vld [vmem:[#allocation17 + $0x118] sm:$0xff]
    %v9332 = vld [vmem:[#allocation17 + $0x120] sm:$0xff]
    %v9333 = vld [vmem:[#allocation17 + $0x128] sm:$0xff]
    %v9334 = vld [vmem:[#allocation17 + $0x130] sm:$0xff]
    %v9335 = vld [vmem:[#allocation17 + $0x138] sm:$0xff]
    %v9336 = vld [vmem:[#allocation17 + $0x140] sm:$0xff]
    %v9337 = vld [vmem:[#allocation17 + $0x148] sm:$0xff]
    %v9338 = vld [vmem:[#allocation17 + $0x150] sm:$0xff]
    %v9339 = vld [vmem:[#allocation17 + $0x158] sm:$0xff]
    %v9340 = vld [vmem:[#allocation17 + $0x160] sm:$0xff]
    %v9341 = vld [vmem:[#allocation17 + $0x168] sm:$0xff]
    %v9342 = vld [vmem:[#allocation17 + $0x170] sm:$0xff]
    %v9343 = vld [vmem:[#allocation17 + $0x178] sm:$0xff]
    %v9344 = vld [vmem:[#allocation17 + $0x180] sm:$0xff]
    %v9345 = vld [vmem:[#allocation17 + $0x188] sm:$0xff]
    %v9346 = vld [vmem:[#allocation17 + $0x190] sm:$0xff]
    %v9347 = vld [vmem:[#allocation17 + $0x198] sm:$0xff]
    %v9348 = vld [vmem:[#allocation17 + $0x1a0] sm:$0xff]
    %v9349 = vld [vmem:[#allocation17 + $0x1a8] sm:$0xff]
    %v9350 = vld [vmem:[#allocation17 + $0x1b0] sm:$0xff]
    %v9351 = vld [vmem:[#allocation17 + $0x1b8] sm:$0xff]
    %v9352 = vld [vmem:[#allocation17 + $0x1c0] sm:$0xff]
    %v9353 = vld [vmem:[#allocation17 + $0x1c8] sm:$0xff]
    %v9354 = vld [vmem:[#allocation17 + $0x1d0] sm:$0xff]
    %v9355 = vld [vmem:[#allocation17 + $0x1d8] sm:$0xff]
    %v9356 = vld [vmem:[#allocation17 + $0x1e0] sm:$0xff]
    %v9357 = vld [vmem:[#allocation17 + $0x1e8] sm:$0xff]
    %v9358 = vld [vmem:[#allocation17 + $0x1f0] sm:$0xff]
    %v9359 = vld [vmem:[#allocation17 + $0x1f8] sm:$0xff]
    %v9424 = vunpack.c.l.b16 %v9296
    %v9425 = vunpack.c.h.b16 %v9296
    %v9426 = vunpack.c.l.b16 %v9297
    %v9427 = vunpack.c.h.b16 %v9297
    %v9428 = vunpack.c.l.b16 %v9298
    %v9429 = vunpack.c.h.b16 %v9298
    %v9430 = vunpack.c.l.b16 %v9299
    %v9431 = vunpack.c.h.b16 %v9299
    %v9432 = vunpack.c.l.b16 %v9300
    %v9433 = vunpack.c.h.b16 %v9300
    %v9434 = vunpack.c.l.b16 %v9301
    %v9435 = vunpack.c.h.b16 %v9301
    %v9436 = vunpack.c.l.b16 %v9302
    %v9437 = vunpack.c.h.b16 %v9302
    %v9438 = vunpack.c.l.b16 %v9303
    %v9439 = vunpack.c.h.b16 %v9303
    %v9440 = vunpack.c.l.b16 %v9304
    %v9441 = vunpack.c.h.b16 %v9304
    %v9442 = vunpack.c.l.b16 %v9305
    %v9443 = vunpack.c.h.b16 %v9305
    %v9444 = vunpack.c.l.b16 %v9306
    %v9445 = vunpack.c.h.b16 %v9306
    %v9446 = vunpack.c.l.b16 %v9307
    %v9447 = vunpack.c.h.b16 %v9307
    %v9448 = vunpack.c.l.b16 %v9308
    %v9449 = vunpack.c.h.b16 %v9308
    %v9450 = vunpack.c.l.b16 %v9309
    %v9451 = vunpack.c.h.b16 %v9309
    %v9452 = vunpack.c.l.b16 %v9310
    %v9453 = vunpack.c.h.b16 %v9310
    %v9454 = vunpack.c.l.b16 %v9311
    %v9455 = vunpack.c.h.b16 %v9311
    %v9456 = vunpack.c.l.b16 %v9312
    %v9457 = vunpack.c.h.b16 %v9312
    %v9458 = vunpack.c.l.b16 %v9313
    %v9459 = vunpack.c.h.b16 %v9313
    %v9460 = vunpack.c.l.b16 %v9314
    %v9461 = vunpack.c.h.b16 %v9314
    %v9462 = vunpack.c.l.b16 %v9315
    %v9463 = vunpack.c.h.b16 %v9315
    %v9464 = vunpack.c.l.b16 %v9316
    %v9465 = vunpack.c.h.b16 %v9316
    %v9466 = vunpack.c.l.b16 %v9317
    %v9467 = vunpack.c.h.b16 %v9317
    %v9468 = vunpack.c.l.b16 %v9318
    %v9469 = vunpack.c.h.b16 %v9318
    %v9470 = vunpack.c.l.b16 %v9319
    %v9471 = vunpack.c.h.b16 %v9319
    %v9472 = vunpack.c.l.b16 %v9320
    %v9473 = vunpack.c.h.b16 %v9320
    %v9474 = vunpack.c.l.b16 %v9321
    %v9475 = vunpack.c.h.b16 %v9321
    %v9476 = vunpack.c.l.b16 %v9322
    %v9477 = vunpack.c.h.b16 %v9322
    %v9478 = vunpack.c.l.b16 %v9323
    %v9479 = vunpack.c.h.b16 %v9323
    %v9480 = vunpack.c.l.b16 %v9324
    %v9481 = vunpack.c.h.b16 %v9324
    %v9482 = vunpack.c.l.b16 %v9325
    %v9483 = vunpack.c.h.b16 %v9325
    %v9484 = vunpack.c.l.b16 %v9326
    %v9485 = vunpack.c.h.b16 %v9326
    %v9486 = vunpack.c.l.b16 %v9327
    %v9487 = vunpack.c.h.b16 %v9327
    %v9488 = vunpack.c.l.b16 %v9328
    %v9489 = vunpack.c.h.b16 %v9328
    %v9490 = vunpack.c.l.b16 %v9329
    %v9491 = vunpack.c.h.b16 %v9329
    %v9492 = vunpack.c.l.b16 %v9330
    %v9493 = vunpack.c.h.b16 %v9330
    %v9494 = vunpack.c.l.b16 %v9331
    %v9495 = vunpack.c.h.b16 %v9331
    %v9496 = vunpack.c.l.b16 %v9332
    %v9497 = vunpack.c.h.b16 %v9332
    %v9498 = vunpack.c.l.b16 %v9333
    %v9499 = vunpack.c.h.b16 %v9333
    %v9500 = vunpack.c.l.b16 %v9334
    %v9501 = vunpack.c.h.b16 %v9334
    %v9502 = vunpack.c.l.b16 %v9335
    %v9503 = vunpack.c.h.b16 %v9335
    %v9504 = vunpack.c.l.b16 %v9336
    %v9505 = vunpack.c.h.b16 %v9336
    %v9506 = vunpack.c.l.b16 %v9337
    %v9507 = vunpack.c.h.b16 %v9337
    %v9508 = vunpack.c.l.b16 %v9338
    %v9509 = vunpack.c.h.b16 %v9338
    %v9510 = vunpack.c.l.b16 %v9339
    %v9511 = vunpack.c.h.b16 %v9339
    %v9512 = vunpack.c.l.b16 %v9340
    %v9513 = vunpack.c.h.b16 %v9340
    %v9514 = vunpack.c.l.b16 %v9341
    %v9515 = vunpack.c.h.b16 %v9341
    %v9516 = vunpack.c.l.b16 %v9342
    %v9517 = vunpack.c.h.b16 %v9342
    %v9518 = vunpack.c.l.b16 %v9343
    %v9519 = vunpack.c.h.b16 %v9343
    %v9520 = vunpack.c.l.b16 %v9344
    %v9521 = vunpack.c.h.b16 %v9344
    %v9522 = vunpack.c.l.b16 %v9345
    %v9523 = vunpack.c.h.b16 %v9345
    %v9524 = vunpack.c.l.b16 %v9346
    %v9525 = vunpack.c.h.b16 %v9346
    %v9526 = vunpack.c.l.b16 %v9347
    %v9527 = vunpack.c.h.b16 %v9347
    %v9528 = vunpack.c.l.b16 %v9348
    %v9529 = vunpack.c.h.b16 %v9348
    %v9530 = vunpack.c.l.b16 %v9349
    %v9531 = vunpack.c.h.b16 %v9349
    %v9532 = vunpack.c.l.b16 %v9350
    %v9533 = vunpack.c.h.b16 %v9350
    %v9534 = vunpack.c.l.b16 %v9351
    %v9535 = vunpack.c.h.b16 %v9351
    %v9536 = vunpack.c.l.b16 %v9352
    %v9537 = vunpack.c.h.b16 %v9352
    %v9538 = vunpack.c.l.b16 %v9353
    %v9539 = vunpack.c.h.b16 %v9353
    %v9540 = vunpack.c.l.b16 %v9354
    %v9541 = vunpack.c.h.b16 %v9354
    %v9542 = vunpack.c.l.b16 %v9355
    %v9543 = vunpack.c.h.b16 %v9355
    %v9544 = vunpack.c.l.b16 %v9356
    %v9545 = vunpack.c.h.b16 %v9356
    %v9546 = vunpack.c.l.b16 %v9357
    %v9547 = vunpack.c.h.b16 %v9357
    %v9548 = vunpack.c.l.b16 %v9358
    %v9549 = vunpack.c.h.b16 %v9358
    %v9550 = vunpack.c.l.b16 %v9359
    %v9551 = vunpack.c.h.b16 %v9359
    %v9552 = vpack.c.b16 %v9428, %v9424
    %v9553 = vpack.c.b16 %v9429, %v9425
    %v9554 = vpack.c.b16 %v9430, %v9426
    %v9555 = vpack.c.b16 %v9431, %v9427
    %v9556 = vpack.c.b16 %v9436, %v9432
    %v9557 = vpack.c.b16 %v9437, %v9433
    %v9558 = vpack.c.b16 %v9438, %v9434
    %v9559 = vpack.c.b16 %v9439, %v9435
    %v9560 = vpack.c.b16 %v9444, %v9440
    %v9561 = vpack.c.b16 %v9445, %v9441
    %v9562 = vpack.c.b16 %v9446, %v9442
    %v9563 = vpack.c.b16 %v9447, %v9443
    %v9564 = vpack.c.b16 %v9452, %v9448
    %v9565 = vpack.c.b16 %v9453, %v9449
    %v9566 = vpack.c.b16 %v9454, %v9450
    %v9567 = vpack.c.b16 %v9455, %v9451
    %v9568 = vpack.c.b16 %v9460, %v9456
    %v9569 = vpack.c.b16 %v9461, %v9457
    %v9570 = vpack.c.b16 %v9462, %v9458
    %v9571 = vpack.c.b16 %v9463, %v9459
    %v9572 = vpack.c.b16 %v9468, %v9464
    %v9573 = vpack.c.b16 %v9469, %v9465
    %v9574 = vpack.c.b16 %v9470, %v9466
    %v9575 = vpack.c.b16 %v9471, %v9467
    %v9576 = vpack.c.b16 %v9476, %v9472
    %v9577 = vpack.c.b16 %v9477, %v9473
    %v9578 = vpack.c.b16 %v9478, %v9474
    %v9579 = vpack.c.b16 %v9479, %v9475
    %v9580 = vpack.c.b16 %v9484, %v9480
    %v9581 = vpack.c.b16 %v9485, %v9481
    %v9582 = vpack.c.b16 %v9486, %v9482
    %v9583 = vpack.c.b16 %v9487, %v9483
    %v9584 = vpack.c.b16 %v9492, %v9488
    %v9585 = vpack.c.b16 %v9493, %v9489
    %v9586 = vpack.c.b16 %v9494, %v9490
    %v9587 = vpack.c.b16 %v9495, %v9491
    %v9588 = vpack.c.b16 %v9500, %v9496
    %v9589 = vpack.c.b16 %v9501, %v9497
    %v9590 = vpack.c.b16 %v9502, %v9498
    %v9591 = vpack.c.b16 %v9503, %v9499
    %v9592 = vpack.c.b16 %v9508, %v9504
    %v9593 = vpack.c.b16 %v9509, %v9505
    %v9594 = vpack.c.b16 %v9510, %v9506
    %v9595 = vpack.c.b16 %v9511, %v9507
    %v9596 = vpack.c.b16 %v9516, %v9512
    %v9597 = vpack.c.b16 %v9517, %v9513
    %v9598 = vpack.c.b16 %v9518, %v9514
    %v9599 = vpack.c.b16 %v9519, %v9515
    %v9600 = vpack.c.b16 %v9524, %v9520
    %v9601 = vpack.c.b16 %v9525, %v9521
    %v9602 = vpack.c.b16 %v9526, %v9522
    %v9603 = vpack.c.b16 %v9527, %v9523
    %v9604 = vpack.c.b16 %v9532, %v9528
    %v9605 = vpack.c.b16 %v9533, %v9529
    %v9606 = vpack.c.b16 %v9534, %v9530
    %v9607 = vpack.c.b16 %v9535, %v9531
    %v9608 = vpack.c.b16 %v9540, %v9536
    %v9609 = vpack.c.b16 %v9541, %v9537
    %v9610 = vpack.c.b16 %v9542, %v9538
    %v9611 = vpack.c.b16 %v9543, %v9539
    %v9612 = vpack.c.b16 %v9548, %v9544
    %v9613 = vpack.c.b16 %v9549, %v9545
    %v9614 = vpack.c.b16 %v9550, %v9546
    %v9615 = vpack.c.b16 %v9551, %v9547
    %9680 = vmatprep.subr.bf16.mxu0 %v9553
    %9681 = vmatpush1.bf16.msra.mxu0 %v9552
    %9682 = vmatprep.subr.bf16.mxu0 %v9557
    %9683 = vmatpush1.bf16.msra.mxu0 %v9556
    %9684 = vmatprep.subr.bf16.mxu0 %v9561
    %9685 = vmatpush1.bf16.msra.mxu0 %v9560
    %9686 = vmatprep.subr.bf16.mxu0 %v9565
    %9687 = vmatpush1.bf16.msra.mxu0 %v9564
    %9688 = vmatprep.subr.bf16.mxu0 %v9569
    %9689 = vmatpush1.bf16.msra.mxu0 %v9568
    %9690 = vmatprep.subr.bf16.mxu0 %v9573
    %9691 = vmatpush1.bf16.msra.mxu0 %v9572
    %9692 = vmatprep.subr.bf16.mxu0 %v9577
    %9693 = vmatpush1.bf16.msra.mxu0 %v9576
    %9694 = vmatprep.subr.bf16.mxu0 %v9581
    %9695 = vmatpush1.bf16.msra.mxu0 %v9580
    %9696 = vmatprep.subr.bf16.mxu0 %v9585
    %9697 = vmatpush1.bf16.msra.mxu0 %v9584
    %9698 = vmatprep.subr.bf16.mxu0 %v9589
    %9699 = vmatpush1.bf16.msra.mxu0 %v9588
    %9700 = vmatprep.subr.bf16.mxu0 %v9593
    %9701 = vmatpush1.bf16.msra.mxu0 %v9592
    %9702 = vmatprep.subr.bf16.mxu0 %v9597
    %9703 = vmatpush1.bf16.msra.mxu0 %v9596
    %9704 = vmatprep.subr.bf16.mxu0 %v9601
    %9705 = vmatpush1.bf16.msra.mxu0 %v9600
    %9706 = vmatprep.subr.bf16.mxu0 %v9605
    %9707 = vmatpush1.bf16.msra.mxu0 %v9604
    %9708 = vmatprep.subr.bf16.mxu0 %v9609
    %9709 = vmatpush1.bf16.msra.mxu0 %v9608
    %9710 = vmatprep.subr.bf16.mxu0 %v9613
    %9711 = vmatpush1.bf16.msra.mxu0 %v9612
    %9712 = vmatprep.mubr.bf16.mxu0 %v9295
    %9713 = vmatmul.mubr.bf16.gmra.mrb[0].mxu0 %v9294
    %v9714 = vpop.f32.mrb[0].mxu0
    %v9715 = vadd.f32 0.0, %v9714
    %v9716 = vpop.f32.mrb[0].mxu0
    %v9717 = vadd.f32 0.0, %v9716
    %v9718 = vpop.f32.mrb[0].mxu0
    %v9719 = vadd.f32 0.0, %v9718
    %v9720 = vpop.f32.mrb[0].mxu0
    %v9721 = vadd.f32 0.0, %v9720
    %9722 = vdwg.mxu0
    %9723 = vmatprep.subr.bf16.mxu0 %v9555
    %9724 = vmatpush1.bf16.msra.mxu0 %v9554
    %9725 = vmatprep.subr.bf16.mxu0 %v9559
    %9726 = vmatpush1.bf16.msra.mxu0 %v9558
    %9727 = vmatprep.subr.bf16.mxu0 %v9563
    %9728 = vmatpush1.bf16.msra.mxu0 %v9562
    %9729 = vmatprep.subr.bf16.mxu0 %v9567
    %9730 = vmatpush1.bf16.msra.mxu0 %v9566
    %9731 = vmatprep.subr.bf16.mxu0 %v9571
    %9732 = vmatpush1.bf16.msra.mxu0 %v9570
    %9733 = vmatprep.subr.bf16.mxu0 %v9575
    %9734 = vmatpush1.bf16.msra.mxu0 %v9574
    %9735 = vmatprep.subr.bf16.mxu0 %v9579
    %9736 = vmatpush1.bf16.msra.mxu0 %v9578
    %9737 = vmatprep.subr.bf16.mxu0 %v9583
    %9738 = vmatpush1.bf16.msra.mxu0 %v9582
    %9739 = vmatprep.subr.bf16.mxu0 %v9587
    %9740 = vmatpush1.bf16.msra.mxu0 %v9586
    %9741 = vmatprep.subr.bf16.mxu0 %v9591
    %9742 = vmatpush1.bf16.msra.mxu0 %v9590
    %9743 = vmatprep.subr.bf16.mxu0 %v9595
    %9744 = vmatpush1.bf16.msra.mxu0 %v9594
    %9745 = vmatprep.subr.bf16.mxu0 %v9599
    %9746 = vmatpush1.bf16.msra.mxu0 %v9598
    %9747 = vmatprep.subr.bf16.mxu0 %v9603
    %9748 = vmatpush1.bf16.msra.mxu0 %v9602
    %9749 = vmatprep.subr.bf16.mxu0 %v9607
    %9750 = vmatpush1.bf16.msra.mxu0 %v9606
    %9751 = vmatprep.subr.bf16.mxu0 %v9611
    %9752 = vmatpush1.bf16.msra.mxu0 %v9610
    %9753 = vmatprep.subr.bf16.mxu0 %v9615
    %9754 = vmatpush1.bf16.msra.mxu0 %v9614
    %9755 = vmatprep.mubr.bf16.mxu0 %v9295
    %9756 = vmatmul.mubr.bf16.gmra.mrb[0].mxu0 %v9294
    %v9757 = vpop.f32.mrb[0].mxu0
    %v9758 = vadd.f32 0.0, %v9757
    %v9759 = vpop.f32.mrb[0].mxu0
    %v9760 = vadd.f32 0.0, %v9759
    %v9761 = vpop.f32.mrb[0].mxu0
    %v9762 = vadd.f32 0.0, %v9761
    %v9763 = vpop.f32.mrb[0].mxu0
    %v9764 = vadd.f32 0.0, %v9763
    %9765 = vdwg.mxu0
    %v9766 = vpack.c.bf16 %v9719, %v9715
    %v9767 = vpack.c.bf16 %v9721, %v9717
    %v9768 = vpack.c.bf16 %v9762, %v9758
    %v9769 = vpack.c.bf16 %v9764, %v9760
    %v9770 = vld [vmem:[%s14] sm:$0xf]
    %vm9771 = vcmask 130048
    %v9773 = vsel %vm9771, %v9770, 0
    %9775 = vmatprep.subr.bf16.mxu0 %v9767
    %9776 = vmatpush1.bf16.msra.mxu0 %v9766
    %9777 = vmatprep.subr.bf16.mxu0 0
    %9778 = vmatpush1.bf16.msra.mxu0 0
    %9779 = vmatprep.subr.bf16.mxu0 0
    %9780 = vmatpush1.bf16.msra.mxu0 0
    %9781 = vmatprep.subr.bf16.mxu0 0
    %9782 = vmatpush1.bf16.msra.mxu0 0
    %9783 = vmatprep.subr.bf16.mxu0 0
    %9784 = vmatpush1.bf16.msra.mxu0 0
    %9785 = vmatprep.subr.bf16.mxu0 0
    %9786 = vmatpush1.bf16.msra.mxu0 0
    %9787 = vmatprep.subr.bf16.mxu0 0
    %9788 = vmatpush1.bf16.msra.mxu0 0
    %9789 = vmatprep.subr.bf16.mxu0 0
    %9790 = vmatpush1.bf16.msra.mxu0 0
    %9791 = vmatprep.subr.bf16.mxu0 0
    %9792 = vmatpush1.bf16.msra.mxu0 0
    %9793 = vmatprep.subr.bf16.mxu0 0
    %9794 = vmatpush1.bf16.msra.mxu0 0
    %9795 = vmatprep.subr.bf16.mxu0 0
    %9796 = vmatpush1.bf16.msra.mxu0 0
    %9797 = vmatprep.subr.bf16.mxu0 0
    %9798 = vmatpush1.bf16.msra.mxu0 0
    %9799 = vmatprep.subr.bf16.mxu0 0
    %9800 = vmatpush1.bf16.msra.mxu0 0
    %9801 = vmatprep.subr.bf16.mxu0 0
    %9802 = vmatpush1.bf16.msra.mxu0 0
    %9803 = vmatprep.subr.bf16.mxu0 0
    %9804 = vmatpush1.bf16.msra.mxu0 0
    %9805 = vmatprep.subr.bf16.mxu0 0
    %9806 = vmatpush1.bf16.msra.mxu0 0
    %9807 = vmatprep.mubr.bf16.mxu0 0
    %9808 = vmatmul.mubr.bf16.gmra.mrb[0].mxu0 %v9773
    %v9809 = vpop.f32.mrb[0].mxu0
    %v9810 = vadd.f32 0.0, %v9809
    %v9811 = vpop.f32.mrb[0].mxu0
    %v9812 = vadd.f32 0.0, %v9811
    %v9813 = vpop.f32.mrb[0].mxu0
    %v9814 = vpop.f32.mrb[0].mxu0
    %9815 = vdwg.mxu0
    %9816 = vmatprep.subr.bf16.mxu0 %v9769
    %9817 = vmatpush1.bf16.msra.mxu0 %v9768
    %9818 = vmatprep.subr.bf16.mxu0 0
    %9819 = vmatpush1.bf16.msra.mxu0 0
    %9820 = vmatprep.subr.bf16.mxu0 0
    %9821 = vmatpush1.bf16.msra.mxu0 0
    %9822 = vmatprep.subr.bf16.mxu0 0
    %9823 = vmatpush1.bf16.msra.mxu0 0
    %9824 = vmatprep.subr.bf16.mxu0 0
    %9825 = vmatpush1.bf16.msra.mxu0 0
    %9826 = vmatprep.subr.bf16.mxu0 0
    %9827 = vmatpush1.bf16.msra.mxu0 0
    %9828 = vmatprep.subr.bf16.mxu0 0
    %9829 = vmatpush1.bf16.msra.mxu0 0
    %9830 = vmatprep.subr.bf16.mxu0 0
    %9831 = vmatpush1.bf16.msra.mxu0 0
    %9832 = vmatprep.subr.bf16.mxu0 0
    %9833 = vmatpush1.bf16.msra.mxu0 0
    %9834 = vmatprep.subr.bf16.mxu0 0
    %9835 = vmatpush1.bf16.msra.mxu0 0
    %9836 = vmatprep.subr.bf16.mxu0 0
    %9837 = vmatpush1.bf16.msra.mxu0 0
    %9838 = vmatprep.subr.bf16.mxu0 0
    %9839 = vmatpush1.bf16.msra.mxu0 0
    %9840 = vmatprep.subr.bf16.mxu0 0
    %9841 = vmatpush1.bf16.msra.mxu0 0
    %9842 = vmatprep.subr.bf16.mxu0 0
    %9843 = vmatpush1.bf16.msra.mxu0 0
    %9844 = vmatprep.subr.bf16.mxu0 0
    %9845 = vmatpush1.bf16.msra.mxu0 0
    %9846 = vmatprep.subr.bf16.mxu0 0
    %9847 = vmatpush1.bf16.msra.mxu0 0
    %9848 = vmatprep.mubr.bf16.mxu0 0
    %9849 = vmatmul.mubr.bf16.gmra.mrb[0].mxu0 %v9773
    %v9850 = vpop.f32.mrb[0].mxu0
    %v9851 = vadd.f32 0.0, %v9850
    %v9852 = vpop.f32.mrb[0].mxu0
    %v9853 = vadd.f32 0.0, %v9852
    %v9854 = vpop.f32.mrb[0].mxu0
    %v9855 = vpop.f32.mrb[0].mxu0
    %9856 = vdwg.mxu0
    %v9857 = vpack.c.bf16 %v9810, %v9810
    %v9858 = vpack.c.bf16 %v9812, %v9812
    %v9859 = vpack.c.bf16 %v9851, %v9851
    %v9860 = vpack.c.bf16 %v9853, %v9853
    %v9861 = vld [vmem:[#allocation19] sm:$0xff]
    %v9862 = vld [vmem:[#allocation19 + $0x8] sm:$0xff]
    %v9863 = vld [vmem:[#allocation19 + $0x10] sm:$0xff]
    %v9864 = vld [vmem:[#allocation19 + $0x18] sm:$0xff]
    %v9865 = vld [vmem:[#allocation19 + $0x20] sm:$0xff]
    %v9866 = vld [vmem:[#allocation19 + $0x28] sm:$0xff]
    %v9867 = vld [vmem:[#allocation19 + $0x30] sm:$0xff]
    %v9868 = vld [vmem:[#allocation19 + $0x38] sm:$0xff]
    %v9869 = vld [vmem:[#allocation19 + $0x40] sm:$0xff]
    %v9870 = vld [vmem:[#allocation19 + $0x48] sm:$0xff]
    %v9871 = vld [vmem:[#allocation19 + $0x50] sm:$0xff]
    %v9872 = vld [vmem:[#allocation19 + $0x58] sm:$0xff]
    %v9873 = vld [vmem:[#allocation19 + $0x60] sm:$0xff]
    %v9874 = vld [vmem:[#allocation19 + $0x68] sm:$0xff]
    %v9875 = vld [vmem:[#allocation19 + $0x70] sm:$0xff]
    %v9876 = vld [vmem:[#allocation19 + $0x78] sm:$0xff]
    %v9877 = vld [vmem:[#allocation19 + $0x80] sm:$0xff]
    %v9878 = vld [vmem:[#allocation19 + $0x88] sm:$0xff]
    %v9879 = vld [vmem:[#allocation19 + $0x90] sm:$0xff]
    %v9880 = vld [vmem:[#allocation19 + $0x98] sm:$0xff]
    %v9881 = vld [vmem:[#allocation19 + $0xa0] sm:$0xff]
    %v9882 = vld [vmem:[#allocation19 + $0xa8] sm:$0xff]
    %v9883 = vld [vmem:[#allocation19 + $0xb0] sm:$0xff]
    %v9884 = vld [vmem:[#allocation19 + $0xb8] sm:$0xff]
    %v9885 = vld [vmem:[#allocation19 + $0xc0] sm:$0xff]
    %v9886 = vld [vmem:[#allocation19 + $0xc8] sm:$0xff]
    %v9887 = vld [vmem:[#allocation19 + $0xd0] sm:$0xff]
    %v9888 = vld [vmem:[#allocation19 + $0xd8] sm:$0xff]
    %v9889 = vld [vmem:[#allocation19 + $0xe0] sm:$0xff]
    %v9890 = vld [vmem:[#allocation19 + $0xe8] sm:$0xff]
    %v9891 = vld [vmem:[#allocation19 + $0xf0] sm:$0xff]
    %v9892 = vld [vmem:[#allocation19 + $0xf8] sm:$0xff]
    %v9893 = vld [vmem:[#allocation19 + $0x100] sm:$0xff]
    %v9894 = vld [vmem:[#allocation19 + $0x108] sm:$0xff]
    %v9895 = vld [vmem:[#allocation19 + $0x110] sm:$0xff]
    %v9896 = vld [vmem:[#allocation19 + $0x118] sm:$0xff]
    %v9897 = vld [vmem:[#allocation19 + $0x120] sm:$0xff]
    %v9898 = vld [vmem:[#allocation19 + $0x128] sm:$0xff]
    %v9899 = vld [vmem:[#allocation19 + $0x130] sm:$0xff]
    %v9900 = vld [vmem:[#allocation19 + $0x138] sm:$0xff]
    %v9901 = vld [vmem:[#allocation19 + $0x140] sm:$0xff]
    %v9902 = vld [vmem:[#allocation19 + $0x148] sm:$0xff]
    %v9903 = vld [vmem:[#allocation19 + $0x150] sm:$0xff]
    %v9904 = vld [vmem:[#allocation19 + $0x158] sm:$0xff]
    %v9905 = vld [vmem:[#allocation19 + $0x160] sm:$0xff]
    %v9906 = vld [vmem:[#allocation19 + $0x168] sm:$0xff]
    %v9907 = vld [vmem:[#allocation19 + $0x170] sm:$0xff]
    %v9908 = vld [vmem:[#allocation19 + $0x178] sm:$0xff]
    %v9909 = vld [vmem:[#allocation19 + $0x180] sm:$0xff]
    %v9910 = vld [vmem:[#allocation19 + $0x188] sm:$0xff]
    %v9911 = vld [vmem:[#allocation19 + $0x190] sm:$0xff]
    %v9912 = vld [vmem:[#allocation19 + $0x198] sm:$0xff]
    %v9913 = vld [vmem:[#allocation19 + $0x1a0] sm:$0xff]
    %v9914 = vld [vmem:[#allocation19 + $0x1a8] sm:$0xff]
    %v9915 = vld [vmem:[#allocation19 + $0x1b0] sm:$0xff]
    %v9916 = vld [vmem:[#allocation19 + $0x1b8] sm:$0xff]
    %v9917 = vld [vmem:[#allocation19 + $0x1c0] sm:$0xff]
    %v9918 = vld [vmem:[#allocation19 + $0x1c8] sm:$0xff]
    %v9919 = vld [vmem:[#allocation19 + $0x1d0] sm:$0xff]
    %v9920 = vld [vmem:[#allocation19 + $0x1d8] sm:$0xff]
    %v9921 = vld [vmem:[#allocation19 + $0x1e0] sm:$0xff]
    %v9922 = vld [vmem:[#allocation19 + $0x1e8] sm:$0xff]
    %v9923 = vld [vmem:[#allocation19 + $0x1f0] sm:$0xff]
    %v9924 = vld [vmem:[#allocation19 + $0x1f8] sm:$0xff]
    %s9925 = scalar_lea.vmem %s14, 4
    %v9926 = vld [vmem:[%s9925] sm:$0xf]
    %v9928 = vsel %vm9771, %v9926, 0
    %9930 = vmatprep.subr.bf16.mxu0 %v9767
    %9931 = vmatpush1.bf16.msra.mxu0 %v9766
    %9932 = vmatprep.subr.bf16.mxu0 0
    %9933 = vmatpush1.bf16.msra.mxu0 0
    %9934 = vmatprep.subr.bf16.mxu0 0
    %9935 = vmatpush1.bf16.msra.mxu0 0
    %9936 = vmatprep.subr.bf16.mxu0 0
    %9937 = vmatpush1.bf16.msra.mxu0 0
    %9938 = vmatprep.subr.bf16.mxu0 0
    %9939 = vmatpush1.bf16.msra.mxu0 0
    %9940 = vmatprep.subr.bf16.mxu0 0
    %9941 = vmatpush1.bf16.msra.mxu0 0
    %9942 = vmatprep.subr.bf16.mxu0 0
    %9943 = vmatpush1.bf16.msra.mxu0 0
    %9944 = vmatprep.subr.bf16.mxu0 0
    %9945 = vmatpush1.bf16.msra.mxu0 0
    %9946 = vmatprep.subr.bf16.mxu0 0
    %9947 = vmatpush1.bf16.msra.mxu0 0
    %9948 = vmatprep.subr.bf16.mxu0 0
    %9949 = vmatpush1.bf16.msra.mxu0 0
    %9950 = vmatprep.subr.bf16.mxu0 0
    %9951 = vmatpush1.bf16.msra.mxu0 0
    %9952 = vmatprep.subr.bf16.mxu0 0
    %9953 = vmatpush1.bf16.msra.mxu0 0
    %9954 = vmatprep.subr.bf16.mxu0 0
    %9955 = vmatpush1.bf16.msra.mxu0 0
    %9956 = vmatprep.subr.bf16.mxu0 0
    %9957 = vmatpush1.bf16.msra.mxu0 0
    %9958 = vmatprep.subr.bf16.mxu0 0
    %9959 = vmatpush1.bf16.msra.mxu0 0
    %9960 = vmatprep.subr.bf16.mxu0 0
    %9961 = vmatpush1.bf16.msra.mxu0 0
    %9962 = vmatprep.mubr.bf16.mxu0 0
    %9963 = vmatmul.mubr.bf16.gmra.mrb[0].mxu0 %v9928
    %v9964 = vpop.f32.mrb[0].mxu0
    %v9965 = vadd.f32 0.0, %v9964
    %v9966 = vpop.f32.mrb[0].mxu0
    %v9967 = vadd.f32 0.0, %v9966
    %v9968 = vpop.f32.mrb[0].mxu0
    %v9969 = vpop.f32.mrb[0].mxu0
    %9970 = vdwg.mxu0
    %9971 = vmatprep.subr.bf16.mxu0 %v9769
    %9972 = vmatpush1.bf16.msra.mxu0 %v9768
    %9973 = vmatprep.subr.bf16.mxu0 0
    %9974 = vmatpush1.bf16.msra.mxu0 0
    %9975 = vmatprep.subr.bf16.mxu0 0
    %9976 = vmatpush1.bf16.msra.mxu0 0
    %9977 = vmatprep.subr.bf16.mxu0 0
    %9978 = vmatpush1.bf16.msra.mxu0 0
    %9979 = vmatprep.subr.bf16.mxu0 0
    %9980 = vmatpush1.bf16.msra.mxu0 0
    %9981 = vmatprep.subr.bf16.mxu0 0
    %9982 = vmatpush1.bf16.msra.mxu0 0
    %9983 = vmatprep.subr.bf16.mxu0 0
    %9984 = vmatpush1.bf16.msra.mxu0 0
    %9985 = vmatprep.subr.bf16.mxu0 0
    %9986 = vmatpush1.bf16.msra.mxu0 0
    %9987 = vmatprep.subr.bf16.mxu0 0
    %9988 = vmatpush1.bf16.msra.mxu0 0
    %9989 = vmatprep.subr.bf16.mxu0 0
    %9990 = vmatpush1.bf16.msra.mxu0 0
    %9991 = vmatprep.subr.bf16.mxu0 0
    %9992 = vmatpush1.bf16.msra.mxu0 0
    %9993 = vmatprep.subr.bf16.mxu0 0
    %9994 = vmatpush1.bf16.msra.mxu0 0
    %9995 = vmatprep.subr.bf16.mxu0 0
    %9996 = vmatpush1.bf16.msra.mxu0 0
    %9997 = vmatprep.subr.bf16.mxu0 0
    %9998 = vmatpush1.bf16.msra.mxu0 0
    %9999 = vmatprep.subr.bf16.mxu0 0
    %10000 = vmatpush1.bf16.msra.mxu0 0
    %10001 = vmatprep.subr.bf16.mxu0 0
    %10002 = vmatpush1.bf16.msra.mxu0 0
    %10003 = vmatprep.mubr.bf16.mxu0 0
    %10004 = vmatmul.mubr.bf16.gmra.mrb[0].mxu0 %v9928
    %v10005 = vpop.f32.mrb[0].mxu0
    %v10006 = vadd.f32 0.0, %v10005
    %v10007 = vpop.f32.mrb[0].mxu0
    %v10008 = vadd.f32 0.0, %v10007
    %v10009 = vpop.f32.mrb[0].mxu0
    %v10010 = vpop.f32.mrb[0].mxu0
    %10011 = vdwg.mxu0
    %v10012 = vpack.c.bf16 %v9965, %v9965
    %v10013 = vpack.c.bf16 %v9967, %v9967
    %v10014 = vpack.c.bf16 %v10006, %v10006
    %v10015 = vpack.c.bf16 %v10008, %v10008
    %s10016 = scalar_lea.vmem [#allocation19], 512
    %v10017 = vld [vmem:[%s10016] sm:$0xff]
    %v10018 = vld [vmem:[%s10016 + $0x8] sm:$0xff]
    %v10019 = vld [vmem:[%s10016 + $0x10] sm:$0xff]
    %v10020 = vld [vmem:[%s10016 + $0x18] sm:$0xff]
    %v10021 = vld [vmem:[%s10016 + $0x20] sm:$0xff]
    %v10022 = vld [vmem:[%s10016 + $0x28] sm:$0xff]
    %v10023 = vld [vmem:[%s10016 + $0x30] sm:$0xff]
    %v10024 = vld [vmem:[%s10016 + $0x38] sm:$0xff]
    %v10025 = vld [vmem:[%s10016 + $0x40] sm:$0xff]
    %v10026 = vld [vmem:[%s10016 + $0x48] sm:$0xff]
    %v10027 = vld [vmem:[%s10016 + $0x50] sm:$0xff]
    %v10028 = vld [vmem:[%s10016 + $0x58] sm:$0xff]
    %v10029 = vld [vmem:[%s10016 + $0x60] sm:$0xff]
    %v10030 = vld [vmem:[%s10016 + $0x68] sm:$0xff]
    %v10031 = vld [vmem:[%s10016 + $0x70] sm:$0xff]
    %v10032 = vld [vmem:[%s10016 + $0x78] sm:$0xff]
    %v10033 = vld [vmem:[%s10016 + $0x80] sm:$0xff]
    %v10034 = vld [vmem:[%s10016 + $0x88] sm:$0xff]
    %v10035 = vld [vmem:[%s10016 + $0x90] sm:$0xff]
    %v10036 = vld [vmem:[%s10016 + $0x98] sm:$0xff]
    %v10037 = vld [vmem:[%s10016 + $0xa0] sm:$0xff]
    %v10038 = vld [vmem:[%s10016 + $0xa8] sm:$0xff]
    %v10039 = vld [vmem:[%s10016 + $0xb0] sm:$0xff]
    %v10040 = vld [vmem:[%s10016 + $0xb8] sm:$0xff]
    %v10041 = vld [vmem:[%s10016 + $0xc0] sm:$0xff]
    %v10042 = vld [vmem:[%s10016 + $0xc8] sm:$0xff]
    %v10043 = vld [vmem:[%s10016 + $0xd0] sm:$0xff]
    %v10044 = vld [vmem:[%s10016 + $0xd8] sm:$0xff]
    %v10045 = vld [vmem:[%s10016 + $0xe0] sm:$0xff]
    %v10046 = vld [vmem:[%s10016 + $0xe8] sm:$0xff]
    %v10047 = vld [vmem:[%s10016 + $0xf0] sm:$0xff]
    %v10048 = vld [vmem:[%s10016 + $0xf8] sm:$0xff]
    %v10049 = vld [vmem:[%s10016 + $0x100] sm:$0xff]
    %v10050 = vld [vmem:[%s10016 + $0x108] sm:$0xff]
    %v10051 = vld [vmem:[%s10016 + $0x110] sm:$0xff]
    %v10052 = vld [vmem:[%s10016 + $0x118] sm:$0xff]
    %v10053 = vld [vmem:[%s10016 + $0x120] sm:$0xff]
    %v10054 = vld [vmem:[%s10016 + $0x128] sm:$0xff]
    %v10055 = vld [vmem:[%s10016 + $0x130] sm:$0xff]
    %v10056 = vld [vmem:[%s10016 + $0x138] sm:$0xff]
    %v10057 = vld [vmem:[%s10016 + $0x140] sm:$0xff]
    %v10058 = vld [vmem:[%s10016 + $0x148] sm:$0xff]
    %v10059 = vld [vmem:[%s10016 + $0x150] sm:$0xff]
    %v10060 = vld [vmem:[%s10016 + $0x158] sm:$0xff]
    %v10061 = vld [vmem:[%s10016 + $0x160] sm:$0xff]
    %v10062 = vld [vmem:[%s10016 + $0x168] sm:$0xff]
    %v10063 = vld [vmem:[%s10016 + $0x170] sm:$0xff]
    %v10064 = vld [vmem:[%s10016 + $0x178] sm:$0xff]
    %v10065 = vld [vmem:[%s10016 + $0x180] sm:$0xff]
    %v10066 = vld [vmem:[%s10016 + $0x188] sm:$0xff]
    %v10067 = vld [vmem:[%s10016 + $0x190] sm:$0xff]
    %v10068 = vld [vmem:[%s10016 + $0x198] sm:$0xff]
    %v10069 = vld [vmem:[%s10016 + $0x1a0] sm:$0xff]
    %v10070 = vld [vmem:[%s10016 + $0x1a8] sm:$0xff]
    %v10071 = vld [vmem:[%s10016 + $0x1b0] sm:$0xff]
    %v10072 = vld [vmem:[%s10016 + $0x1b8] sm:$0xff]
    %v10073 = vld [vmem:[%s10016 + $0x1c0] sm:$0xff]
    %v10074 = vld [vmem:[%s10016 + $0x1c8] sm:$0xff]
    %v10075 = vld [vmem:[%s10016 + $0x1d0] sm:$0xff]
    %v10076 = vld [vmem:[%s10016 + $0x1d8] sm:$0xff]
    %v10077 = vld [vmem:[%s10016 + $0x1e0] sm:$0xff]
    %v10078 = vld [vmem:[%s10016 + $0x1e8] sm:$0xff]
    %v10079 = vld [vmem:[%s10016 + $0x1f0] sm:$0xff]
    %v10080 = vld [vmem:[%s10016 + $0x1f8] sm:$0xff]
    %v10145 = vunpack.c.l.b16 %v10017
    %v10146 = vunpack.c.h.b16 %v10017
    %v10147 = vunpack.c.l.b16 %v10018
    %v10148 = vunpack.c.h.b16 %v10018
    %v10149 = vunpack.c.l.b16 %v10019
    %v10150 = vunpack.c.h.b16 %v10019
    %v10151 = vunpack.c.l.b16 %v10020
    %v10152 = vunpack.c.h.b16 %v10020
    %v10153 = vunpack.c.l.b16 %v10021
    %v10154 = vunpack.c.h.b16 %v10021
    %v10155 = vunpack.c.l.b16 %v10022
    %v10156 = vunpack.c.h.b16 %v10022
    %v10157 = vunpack.c.l.b16 %v10023
    %v10158 = vunpack.c.h.b16 %v10023
    %v10159 = vunpack.c.l.b16 %v10024
    %v10160 = vunpack.c.h.b16 %v10024
    %v10161 = vunpack.c.l.b16 %v10025
    %v10162 = vunpack.c.h.b16 %v10025
    %v10163 = vunpack.c.l.b16 %v10026
    %v10164 = vunpack.c.h.b16 %v10026
    %v10165 = vunpack.c.l.b16 %v10027
    %v10166 = vunpack.c.h.b16 %v10027
    %v10167 = vunpack.c.l.b16 %v10028
    %v10168 = vunpack.c.h.b16 %v10028
    %v10169 = vunpack.c.l.b16 %v10029
    %v10170 = vunpack.c.h.b16 %v10029
    %v10171 = vunpack.c.l.b16 %v10030
    %v10172 = vunpack.c.h.b16 %v10030
    %v10173 = vunpack.c.l.b16 %v10031
    %v10174 = vunpack.c.h.b16 %v10031
    %v10175 = vunpack.c.l.b16 %v10032
    %v10176 = vunpack.c.h.b16 %v10032
    %v10177 = vunpack.c.l.b16 %v10033
    %v10178 = vunpack.c.h.b16 %v10033
    %v10179 = vunpack.c.l.b16 %v10034
    %v10180 = vunpack.c.h.b16 %v10034
    %v10181 = vunpack.c.l.b16 %v10035
    %v10182 = vunpack.c.h.b16 %v10035
    %v10183 = vunpack.c.l.b16 %v10036
    %v10184 = vunpack.c.h.b16 %v10036
    %v10185 = vunpack.c.l.b16 %v10037
    %v10186 = vunpack.c.h.b16 %v10037
    %v10187 = vunpack.c.l.b16 %v10038
    %v10188 = vunpack.c.h.b16 %v10038
    %v10189 = vunpack.c.l.b16 %v10039
    %v10190 = vunpack.c.h.b16 %v10039
    %v10191 = vunpack.c.l.b16 %v10040
    %v10192 = vunpack.c.h.b16 %v10040
    %v10193 = vunpack.c.l.b16 %v10041
    %v10194 = vunpack.c.h.b16 %v10041
    %v10195 = vunpack.c.l.b16 %v10042
    %v10196 = vunpack.c.h.b16 %v10042
    %v10197 = vunpack.c.l.b16 %v10043
    %v10198 = vunpack.c.h.b16 %v10043
    %v10199 = vunpack.c.l.b16 %v10044
    %v10200 = vunpack.c.h.b16 %v10044
    %v10201 = vunpack.c.l.b16 %v10045
    %v10202 = vunpack.c.h.b16 %v10045
    %v10203 = vunpack.c.l.b16 %v10046
    %v10204 = vunpack.c.h.b16 %v10046
    %v10205 = vunpack.c.l.b16 %v10047
    %v10206 = vunpack.c.h.b16 %v10047
    %v10207 = vunpack.c.l.b16 %v10048
    %v10208 = vunpack.c.h.b16 %v10048
    %v10209 = vunpack.c.l.b16 %v10049
    %v10210 = vunpack.c.h.b16 %v10049
    %v10211 = vunpack.c.l.b16 %v10050
    %v10212 = vunpack.c.h.b16 %v10050
    %v10213 = vunpack.c.l.b16 %v10051
    %v10214 = vunpack.c.h.b16 %v10051
    %v10215 = vunpack.c.l.b16 %v10052
    %v10216 = vunpack.c.h.b16 %v10052
    %v10217 = vunpack.c.l.b16 %v10053
    %v10218 = vunpack.c.h.b16 %v10053
    %v10219 = vunpack.c.l.b16 %v10054
    %v10220 = vunpack.c.h.b16 %v10054
    %v10221 = vunpack.c.l.b16 %v10055
    %v10222 = vunpack.c.h.b16 %v10055
    %v10223 = vunpack.c.l.b16 %v10056
    %v10224 = vunpack.c.h.b16 %v10056
    %v10225 = vunpack.c.l.b16 %v10057
    %v10226 = vunpack.c.h.b16 %v10057
    %v10227 = vunpack.c.l.b16 %v10058
    %v10228 = vunpack.c.h.b16 %v10058
    %v10229 = vunpack.c.l.b16 %v10059
    %v10230 = vunpack.c.h.b16 %v10059
    %v10231 = vunpack.c.l.b16 %v10060
    %v10232 = vunpack.c.h.b16 %v10060
    %v10233 = vunpack.c.l.b16 %v10061
    %v10234 = vunpack.c.h.b16 %v10061
    %v10235 = vunpack.c.l.b16 %v10062
    %v10236 = vunpack.c.h.b16 %v10062
    %v10237 = vunpack.c.l.b16 %v10063
    %v10238 = vunpack.c.h.b16 %v10063
    %v10239 = vunpack.c.l.b16 %v10064
    %v10240 = vunpack.c.h.b16 %v10064
    %v10241 = vunpack.c.l.b16 %v10065
    %v10242 = vunpack.c.h.b16 %v10065
    %v10243 = vunpack.c.l.b16 %v10066
    %v10244 = vunpack.c.h.b16 %v10066
    %v10245 = vunpack.c.l.b16 %v10067
    %v10246 = vunpack.c.h.b16 %v10067
    %v10247 = vunpack.c.l.b16 %v10068
    %v10248 = vunpack.c.h.b16 %v10068
    %v10249 = vunpack.c.l.b16 %v10069
    %v10250 = vunpack.c.h.b16 %v10069
    %v10251 = vunpack.c.l.b16 %v10070
    %v10252 = vunpack.c.h.b16 %v10070
    %v10253 = vunpack.c.l.b16 %v10071
    %v10254 = vunpack.c.h.b16 %v10071
    %v10255 = vunpack.c.l.b16 %v10072
    %v10256 = vunpack.c.h.b16 %v10072
    %v10257 = vunpack.c.l.b16 %v10073
    %v10258 = vunpack.c.h.b16 %v10073
    %v10259 = vunpack.c.l.b16 %v10074
    %v10260 = vunpack.c.h.b16 %v10074
    %v10261 = vunpack.c.l.b16 %v10075
    %v10262 = vunpack.c.h.b16 %v10075
    %v10263 = vunpack.c.l.b16 %v10076
    %v10264 = vunpack.c.h.b16 %v10076
    %v10265 = vunpack.c.l.b16 %v10077
    %v10266 = vunpack.c.h.b16 %v10077
    %v10267 = vunpack.c.l.b16 %v10078
    %v10268 = vunpack.c.h.b16 %v10078
    %v10269 = vunpack.c.l.b16 %v10079
    %v10270 = vunpack.c.h.b16 %v10079
    %v10271 = vunpack.c.l.b16 %v10080
    %v10272 = vunpack.c.h.b16 %v10080
    %v10273 = vpack.c.b16 %v10147, %v10145
    %v10274 = vpack.c.b16 %v10148, %v10146
    %v10275 = vpack.c.b16 %v10151, %v10149
    %v10276 = vpack.c.b16 %v10152, %v10150
    %v10277 = vpack.c.b16 %v10155, %v10153
    %v10278 = vpack.c.b16 %v10156, %v10154
    %v10279 = vpack.c.b16 %v10159, %v10157
    %v10280 = vpack.c.b16 %v10160, %v10158
    %v10281 = vpack.c.b16 %v10163, %v10161
    %v10282 = vpack.c.b16 %v10164, %v10162
    %v10283 = vpack.c.b16 %v10167, %v10165
    %v10284 = vpack.c.b16 %v10168, %v10166
    %v10285 = vpack.c.b16 %v10171, %v10169
    %v10286 = vpack.c.b16 %v10172, %v10170
    %v10287 = vpack.c.b16 %v10175, %v10173
    %v10288 = vpack.c.b16 %v10176, %v10174
    %v10289 = vpack.c.b16 %v10179, %v10177
    %v10290 = vpack.c.b16 %v10180, %v10178
    %v10291 = vpack.c.b16 %v10183, %v10181
    %v10292 = vpack.c.b16 %v10184, %v10182
    %v10293 = vpack.c.b16 %v10187, %v10185
    %v10294 = vpack.c.b16 %v10188, %v10186
    %v10295 = vpack.c.b16 %v10191, %v10189
    %v10296 = vpack.c.b16 %v10192, %v10190
    %v10297 = vpack.c.b16 %v10195, %v10193
    %v10298 = vpack.c.b16 %v10196, %v10194
    %v10299 = vpack.c.b16 %v10199, %v10197
    %v10300 = vpack.c.b16 %v10200, %v10198
    %v10301 = vpack.c.b16 %v10203, %v10201
    %v10302 = vpack.c.b16 %v10204, %v10202
    %v10303 = vpack.c.b16 %v10207, %v10205
    %v10304 = vpack.c.b16 %v10208, %v10206
    %v10305 = vpack.c.b16 %v10211, %v10209
    %v10306 = vpack.c.b16 %v10212, %v10210
    %v10307 = vpack.c.b16 %v10215, %v10213
    %v10308 = vpack.c.b16 %v10216, %v10214
    %v10309 = vpack.c.b16 %v10219, %v10217
    %v10310 = vpack.c.b16 %v10220, %v10218
    %v10311 = vpack.c.b16 %v10223, %v10221
    %v10312 = vpack.c.b16 %v10224, %v10222
    %v10313 = vpack.c.b16 %v10227, %v10225
    %v10314 = vpack.c.b16 %v10228, %v10226
    %v10315 = vpack.c.b16 %v10231, %v10229
    %v10316 = vpack.c.b16 %v10232, %v10230
    %v10317 = vpack.c.b16 %v10235, %v10233
    %v10318 = vpack.c.b16 %v10236, %v10234
    %v10319 = vpack.c.b16 %v10239, %v10237
    %v10320 = vpack.c.b16 %v10240, %v10238
    %v10321 = vpack.c.b16 %v10243, %v10241
    %v10322 = vpack.c.b16 %v10244, %v10242
    %v10323 = vpack.c.b16 %v10247, %v10245
    %v10324 = vpack.c.b16 %v10248, %v10246
    %v10325 = vpack.c.b16 %v10251, %v10249
    %v10326 = vpack.c.b16 %v10252, %v10250
    %v10327 = vpack.c.b16 %v10255, %v10253
    %v10328 = vpack.c.b16 %v10256, %v10254
    %v10329 = vpack.c.b16 %v10259, %v10257
    %v10330 = vpack.c.b16 %v10260, %v10258
    %v10331 = vpack.c.b16 %v10263, %v10261
    %v10332 = vpack.c.b16 %v10264, %v10262
    %v10333 = vpack.c.b16 %v10267, %v10265
    %v10334 = vpack.c.b16 %v10268, %v10266
    %v10335 = vpack.c.b16 %v10271, %v10269
    %v10336 = vpack.c.b16 %v10272, %v10270
    %10401 = vmatprep.subr.bf16.mxu0 %v10274
    %10402 = vmatpush1.bf16.msra.mxu0 %v10273
    %10403 = vmatprep.subr.bf16.mxu0 %v10276
    %10404 = vmatpush1.bf16.msra.mxu0 %v10275
    %10405 = vmatprep.subr.bf16.mxu0 %v10278
    %10406 = vmatpush1.bf16.msra.mxu0 %v10277
    %10407 = vmatprep.subr.bf16.mxu0 %v10280
    %10408 = vmatpush1.bf16.msra.mxu0 %v10279
    %10409 = vmatprep.subr.bf16.mxu0 %v10282
    %10410 = vmatpush1.bf16.msra.mxu0 %v10281
    %10411 = vmatprep.subr.bf16.mxu0 %v10284
    %10412 = vmatpush1.bf16.msra.mxu0 %v10283
    %10413 = vmatprep.subr.bf16.mxu0 %v10286
    %10414 = vmatpush1.bf16.msra.mxu0 %v10285
    %10415 = vmatprep.subr.bf16.mxu0 %v10288
    %10416 = vmatpush1.bf16.msra.mxu0 %v10287
    %10417 = vmatprep.subr.bf16.mxu0 %v10290
    %10418 = vmatpush1.bf16.msra.mxu0 %v10289
    %10419 = vmatprep.subr.bf16.mxu0 %v10292
    %10420 = vmatpush1.bf16.msra.mxu0 %v10291
    %10421 = vmatprep.subr.bf16.mxu0 %v10294
    %10422 = vmatpush1.bf16.msra.mxu0 %v10293
    %10423 = vmatprep.subr.bf16.mxu0 %v10296
    %10424 = vmatpush1.bf16.msra.mxu0 %v10295
    %10425 = vmatprep.subr.bf16.mxu0 %v10298
    %10426 = vmatpush1.bf16.msra.mxu0 %v10297
    %10427 = vmatprep.subr.bf16.mxu0 %v10300
    %10428 = vmatpush1.bf16.msra.mxu0 %v10299
    %10429 = vmatprep.subr.bf16.mxu0 %v10302
    %10430 = vmatpush1.bf16.msra.mxu0 %v10301
    %10431 = vmatprep.subr.bf16.mxu0 %v10304
    %10432 = vmatpush1.bf16.msra.mxu0 %v10303
    %10433 = vmatprep.mubr.bf16.mxu0 %v10013
    %10434 = vmatmul.mubr.bf16.gmra.mrb[0].mxu0 %v10012
    %v10435 = vpop.f32.mrb[0].mxu0
    %v10436 = vadd.f32 0.0, %v10435
    %v10437 = vpop.f32.mrb[0].mxu0
    %v10438 = vadd.f32 0.0, %v10437
    %v10439 = vpop.f32.mrb[0].mxu0
    %v10440 = vpop.f32.mrb[0].mxu0
    %10441 = vdwg.mxu0
    %10442 = vmatprep.subr.bf16.mxu0 %v10306
    %10443 = vmatpush1.bf16.msra.mxu0 %v10305
    %10444 = vmatprep.subr.bf16.mxu0 %v10308
    %10445 = vmatpush1.bf16.msra.mxu0 %v10307
    %10446 = vmatprep.subr.bf16.mxu0 %v10310
    %10447 = vmatpush1.bf16.msra.mxu0 %v10309
    %10448 = vmatprep.subr.bf16.mxu0 %v10312
    %10449 = vmatpush1.bf16.msra.mxu0 %v10311
    %10450 = vmatprep.subr.bf16.mxu0 %v10314
    %10451 = vmatpush1.bf16.msra.mxu0 %v10313
    %10452 = vmatprep.subr.bf16.mxu0 %v10316
    %10453 = vmatpush1.bf16.msra.mxu0 %v10315
    %10454 = vmatprep.subr.bf16.mxu0 %v10318
    %10455 = vmatpush1.bf16.msra.mxu0 %v10317
    %10456 = vmatprep.subr.bf16.mxu0 %v10320
    %10457 = vmatpush1.bf16.msra.mxu0 %v10319
    %10458 = vmatprep.subr.bf16.mxu0 %v10322
    %10459 = vmatpush1.bf16.msra.mxu0 %v10321
    %10460 = vmatprep.subr.bf16.mxu0 %v10324
    %10461 = vmatpush1.bf16.msra.mxu0 %v10323
    %10462 = vmatprep.subr.bf16.mxu0 %v10326
    %10463 = vmatpush1.bf16.msra.mxu0 %v10325
    %10464 = vmatprep.subr.bf16.mxu0 %v10328
    %10465 = vmatpush1.bf16.msra.mxu0 %v10327
    %10466 = vmatprep.subr.bf16.mxu0 %v10330
    %10467 = vmatpush1.bf16.msra.mxu0 %v10329
    %10468 = vmatprep.subr.bf16.mxu0 %v10332
    %10469 = vmatpush1.bf16.msra.mxu0 %v10331
    %10470 = vmatprep.subr.bf16.mxu0 %v10334
    %10471 = vmatpush1.bf16.msra.mxu0 %v10333
    %10472 = vmatprep.subr.bf16.mxu0 %v10336
    %10473 = vmatpush1.bf16.msra.mxu0 %v10335
    %10474 = vmatprep.mubr.bf16.mxu0 %v10015
    %10475 = vmatmul.mubr.bf16.gmra.mrb[0].mxu0 %v10014
    %v10476 = vpop.f32.mrb[0].mxu0
    %v10477 = vadd.f32 %v10436, %v10476
    %v10478 = vpop.f32.mrb[0].mxu0
    %v10479 = vadd.f32 %v10438, %v10478
    %v10480 = vpop.f32.mrb[0].mxu0
    %v10481 = vpop.f32.mrb[0].mxu0
    %10482 = vdwg.mxu0
    %v10547 = vunpack.c.l.b16 %v9861
    %v10548 = vunpack.c.h.b16 %v9861
    %v10549 = vunpack.c.l.b16 %v9862
    %v10550 = vunpack.c.h.b16 %v9862
    %v10551 = vunpack.c.l.b16 %v9863
    %v10552 = vunpack.c.h.b16 %v9863
    %v10553 = vunpack.c.l.b16 %v9864
    %v10554 = vunpack.c.h.b16 %v9864
    %v10555 = vunpack.c.l.b16 %v9865
    %v10556 = vunpack.c.h.b16 %v9865
    %v10557 = vunpack.c.l.b16 %v9866
    %v10558 = vunpack.c.h.b16 %v9866
    %v10559 = vunpack.c.l.b16 %v9867
    %v10560 = vunpack.c.h.b16 %v9867
    %v10561 = vunpack.c.l.b16 %v9868
    %v10562 = vunpack.c.h.b16 %v9868
    %v10563 = vunpack.c.l.b16 %v9869
    %v10564 = vunpack.c.h.b16 %v9869
    %v10565 = vunpack.c.l.b16 %v9870
    %v10566 = vunpack.c.h.b16 %v9870
    %v10567 = vunpack.c.l.b16 %v9871
    %v10568 = vunpack.c.h.b16 %v9871
    %v10569 = vunpack.c.l.b16 %v9872
    %v10570 = vunpack.c.h.b16 %v9872
    %v10571 = vunpack.c.l.b16 %v9873
    %v10572 = vunpack.c.h.b16 %v9873
    %v10573 = vunpack.c.l.b16 %v9874
    %v10574 = vunpack.c.h.b16 %v9874
    %v10575 = vunpack.c.l.b16 %v9875
    %v10576 = vunpack.c.h.b16 %v9875
    %v10577 = vunpack.c.l.b16 %v9876
    %v10578 = vunpack.c.h.b16 %v9876
    %v10579 = vunpack.c.l.b16 %v9877
    %v10580 = vunpack.c.h.b16 %v9877
    %v10581 = vunpack.c.l.b16 %v9878
    %v10582 = vunpack.c.h.b16 %v9878
    %v10583 = vunpack.c.l.b16 %v9879
    %v10584 = vunpack.c.h.b16 %v9879
    %v10585 = vunpack.c.l.b16 %v9880
    %v10586 = vunpack.c.h.b16 %v9880
    %v10587 = vunpack.c.l.b16 %v9881
    %v10588 = vunpack.c.h.b16 %v9881
    %v10589 = vunpack.c.l.b16 %v9882
    %v10590 = vunpack.c.h.b16 %v9882
    %v10591 = vunpack.c.l.b16 %v9883
    %v10592 = vunpack.c.h.b16 %v9883
    %v10593 = vunpack.c.l.b16 %v9884
    %v10594 = vunpack.c.h.b16 %v9884
    %v10595 = vunpack.c.l.b16 %v9885
    %v10596 = vunpack.c.h.b16 %v9885
    %v10597 = vunpack.c.l.b16 %v9886
    %v10598 = vunpack.c.h.b16 %v9886
    %v10599 = vunpack.c.l.b16 %v9887
    %v10600 = vunpack.c.h.b16 %v9887
    %v10601 = vunpack.c.l.b16 %v9888
    %v10602 = vunpack.c.h.b16 %v9888
    %v10603 = vunpack.c.l.b16 %v9889
    %v10604 = vunpack.c.h.b16 %v9889
    %v10605 = vunpack.c.l.b16 %v9890
    %v10606 = vunpack.c.h.b16 %v9890
    %v10607 = vunpack.c.l.b16 %v9891
    %v10608 = vunpack.c.h.b16 %v9891
    %v10609 = vunpack.c.l.b16 %v9892
    %v10610 = vunpack.c.h.b16 %v9892
    %v10611 = vunpack.c.l.b16 %v9893
    %v10612 = vunpack.c.h.b16 %v9893
    %v10613 = vunpack.c.l.b16 %v9894
    %v10614 = vunpack.c.h.b16 %v9894
    %v10615 = vunpack.c.l.b16 %v9895
    %v10616 = vunpack.c.h.b16 %v9895
    %v10617 = vunpack.c.l.b16 %v9896
    %v10618 = vunpack.c.h.b16 %v9896
    %v10619 = vunpack.c.l.b16 %v9897
    %v10620 = vunpack.c.h.b16 %v9897
    %v10621 = vunpack.c.l.b16 %v9898
    %v10622 = vunpack.c.h.b16 %v9898
    %v10623 = vunpack.c.l.b16 %v9899
    %v10624 = vunpack.c.h.b16 %v9899
    %v10625 = vunpack.c.l.b16 %v9900
    %v10626 = vunpack.c.h.b16 %v9900
    %v10627 = vunpack.c.l.b16 %v9901
    %v10628 = vunpack.c.h.b16 %v9901
    %v10629 = vunpack.c.l.b16 %v9902
    %v10630 = vunpack.c.h.b16 %v9902
    %v10631 = vunpack.c.l.b16 %v9903
    %v10632 = vunpack.c.h.b16 %v9903
    %v10633 = vunpack.c.l.b16 %v9904
    %v10634 = vunpack.c.h.b16 %v9904
    %v10635 = vunpack.c.l.b16 %v9905
    %v10636 = vunpack.c.h.b16 %v9905
    %v10637 = vunpack.c.l.b16 %v9906
    %v10638 = vunpack.c.h.b16 %v9906
    %v10639 = vunpack.c.l.b16 %v9907
    %v10640 = vunpack.c.h.b16 %v9907
    %v10641 = vunpack.c.l.b16 %v9908
    %v10642 = vunpack.c.h.b16 %v9908
    %v10643 = vunpack.c.l.b16 %v9909
    %v10644 = vunpack.c.h.b16 %v9909
    %v10645 = vunpack.c.l.b16 %v9910
    %v10646 = vunpack.c.h.b16 %v9910
    %v10647 = vunpack.c.l.b16 %v9911
    %v10648 = vunpack.c.h.b16 %v9911
    %v10649 = vunpack.c.l.b16 %v9912
    %v10650 = vunpack.c.h.b16 %v9912
    %v10651 = vunpack.c.l.b16 %v9913
    %v10652 = vunpack.c.h.b16 %v9913
    %v10653 = vunpack.c.l.b16 %v9914
    %v10654 = vunpack.c.h.b16 %v9914
    %v10655 = vunpack.c.l.b16 %v9915
    %v10656 = vunpack.c.h.b16 %v9915
    %v10657 = vunpack.c.l.b16 %v9916
    %v10658 = vunpack.c.h.b16 %v9916
    %v10659 = vunpack.c.l.b16 %v9917
    %v10660 = vunpack.c.h.b16 %v9917
    %v10661 = vunpack.c.l.b16 %v9918
    %v10662 = vunpack.c.h.b16 %v9918
    %v10663 = vunpack.c.l.b16 %v9919
    %v10664 = vunpack.c.h.b16 %v9919
    %v10665 = vunpack.c.l.b16 %v9920
    %v10666 = vunpack.c.h.b16 %v9920
    %v10667 = vunpack.c.l.b16 %v9921
    %v10668 = vunpack.c.h.b16 %v9921
    %v10669 = vunpack.c.l.b16 %v9922
    %v10670 = vunpack.c.h.b16 %v9922
    %v10671 = vunpack.c.l.b16 %v9923
    %v10672 = vunpack.c.h.b16 %v9923
    %v10673 = vunpack.c.l.b16 %v9924
    %v10674 = vunpack.c.h.b16 %v9924
    %v10675 = vpack.c.b16 %v10549, %v10547
    %v10676 = vpack.c.b16 %v10550, %v10548
    %v10677 = vpack.c.b16 %v10553, %v10551
    %v10678 = vpack.c.b16 %v10554, %v10552
    %v10679 = vpack.c.b16 %v10557, %v10555
    %v10680 = vpack.c.b16 %v10558, %v10556
    %v10681 = vpack.c.b16 %v10561, %v10559
    %v10682 = vpack.c.b16 %v10562, %v10560
    %v10683 = vpack.c.b16 %v10565, %v10563
    %v10684 = vpack.c.b16 %v10566, %v10564
    %v10685 = vpack.c.b16 %v10569, %v10567
    %v10686 = vpack.c.b16 %v10570, %v10568
    %v10687 = vpack.c.b16 %v10573, %v10571
    %v10688 = vpack.c.b16 %v10574, %v10572
    %v10689 = vpack.c.b16 %v10577, %v10575
    %v10690 = vpack.c.b16 %v10578, %v10576
    %v10691 = vpack.c.b16 %v10581, %v10579
    %v10692 = vpack.c.b16 %v10582, %v10580
    %v10693 = vpack.c.b16 %v10585, %v10583
    %v10694 = vpack.c.b16 %v10586, %v10584
    %v10695 = vpack.c.b16 %v10589, %v10587
    %v10696 = vpack.c.b16 %v10590, %v10588
    %v10697 = vpack.c.b16 %v10593, %v10591
    %v10698 = vpack.c.b16 %v10594, %v10592
    %v10699 = vpack.c.b16 %v10597, %v10595
    %v10700 = vpack.c.b16 %v10598, %v10596
    %v10701 = vpack.c.b16 %v10601, %v10599
    %v10702 = vpack.c.b16 %v10602, %v10600
    %v10703 = vpack.c.b16 %v10605, %v10603
    %v10704 = vpack.c.b16 %v10606, %v10604
    %v10705 = vpack.c.b16 %v10609, %v10607
    %v10706 = vpack.c.b16 %v10610, %v10608
    %v10707 = vpack.c.b16 %v10613, %v10611
    %v10708 = vpack.c.b16 %v10614, %v10612
    %v10709 = vpack.c.b16 %v10617, %v10615
    %v10710 = vpack.c.b16 %v10618, %v10616
    %v10711 = vpack.c.b16 %v10621, %v10619
    %v10712 = vpack.c.b16 %v10622, %v10620
    %v10713 = vpack.c.b16 %v10625, %v10623
    %v10714 = vpack.c.b16 %v10626, %v10624
    %v10715 = vpack.c.b16 %v10629, %v10627
    %v10716 = vpack.c.b16 %v10630, %v10628
    %v10717 = vpack.c.b16 %v10633, %v10631
    %v10718 = vpack.c.b16 %v10634, %v10632
    %v10719 = vpack.c.b16 %v10637, %v10635
    %v10720 = vpack.c.b16 %v10638, %v10636
    %v10721 = vpack.c.b16 %v10641, %v10639
    %v10722 = vpack.c.b16 %v10642, %v10640
    %v10723 = vpack.c.b16 %v10645, %v10643
    %v10724 = vpack.c.b16 %v10646, %v10644
    %v10725 = vpack.c.b16 %v10649, %v10647
    %v10726 = vpack.c.b16 %v10650, %v10648
    %v10727 = vpack.c.b16 %v10653, %v10651
    %v10728 = vpack.c.b16 %v10654, %v10652
    %v10729 = vpack.c.b16 %v10657, %v10655
    %v10730 = vpack.c.b16 %v10658, %v10656
    %v10731 = vpack.c.b16 %v10661, %v10659
    %v10732 = vpack.c.b16 %v10662, %v10660
    %v10733 = vpack.c.b16 %v10665, %v10663
    %v10734 = vpack.c.b16 %v10666, %v10664
    %v10735 = vpack.c.b16 %v10669, %v10667
    %v10736 = vpack.c.b16 %v10670, %v10668
    %v10737 = vpack.c.b16 %v10673, %v10671
    %v10738 = vpack.c.b16 %v10674, %v10672
    %10803 = vmatprep.subr.bf16.mxu0 %v10676
    %10804 = vmatpush1.bf16.msra.mxu0 %v10675
    %10805 = vmatprep.subr.bf16.mxu0 %v10678
    %10806 = vmatpush1.bf16.msra.mxu0 %v10677
    %10807 = vmatprep.subr.bf16.mxu0 %v10680
    %10808 = vmatpush1.bf16.msra.mxu0 %v10679
    %10809 = vmatprep.subr.bf16.mxu0 %v10682
    %10810 = vmatpush1.bf16.msra.mxu0 %v10681
    %10811 = vmatprep.subr.bf16.mxu0 %v10684
    %10812 = vmatpush1.bf16.msra.mxu0 %v10683
    %10813 = vmatprep.subr.bf16.mxu0 %v10686
    %10814 = vmatpush1.bf16.msra.mxu0 %v10685
    %10815 = vmatprep.subr.bf16.mxu0 %v10688
    %10816 = vmatpush1.bf16.msra.mxu0 %v10687
    %10817 = vmatprep.subr.bf16.mxu0 %v10690
    %10818 = vmatpush1.bf16.msra.mxu0 %v10689
    %10819 = vmatprep.subr.bf16.mxu0 %v10692
    %10820 = vmatpush1.bf16.msra.mxu0 %v10691
    %10821 = vmatprep.subr.bf16.mxu0 %v10694
    %10822 = vmatpush1.bf16.msra.mxu0 %v10693
    %10823 = vmatprep.subr.bf16.mxu0 %v10696
    %10824 = vmatpush1.bf16.msra.mxu0 %v10695
    %10825 = vmatprep.subr.bf16.mxu0 %v10698
    %10826 = vmatpush1.bf16.msra.mxu0 %v10697
    %10827 = vmatprep.subr.bf16.mxu0 %v10700
    %10828 = vmatpush1.bf16.msra.mxu0 %v10699
    %10829 = vmatprep.subr.bf16.mxu0 %v10702
    %10830 = vmatpush1.bf16.msra.mxu0 %v10701
    %10831 = vmatprep.subr.bf16.mxu0 %v10704
    %10832 = vmatpush1.bf16.msra.mxu0 %v10703
    %10833 = vmatprep.subr.bf16.mxu0 %v10706
    %10834 = vmatpush1.bf16.msra.mxu0 %v10705
    %10835 = vmatprep.mubr.bf16.mxu0 %v9858
    %10836 = vmatmul.mubr.bf16.gmra.mrb[0].mxu0 %v9857
    %v10837 = vpop.f32.mrb[0].mxu0
    %v10838 = vadd.f32 %v10477, %v10837
    %v10839 = vpop.f32.mrb[0].mxu0
    %v10840 = vadd.f32 %v10479, %v10839
    %v10841 = vpop.f32.mrb[0].mxu0
    %v10842 = vpop.f32.mrb[0].mxu0
    %10843 = vdwg.mxu0
    %10844 = vmatprep.subr.bf16.mxu0 %v10708
    %10845 = vmatpush1.bf16.msra.mxu0 %v10707
    %10846 = vmatprep.subr.bf16.mxu0 %v10710
    %10847 = vmatpush1.bf16.msra.mxu0 %v10709
    %10848 = vmatprep.subr.bf16.mxu0 %v10712
    %10849 = vmatpush1.bf16.msra.mxu0 %v10711
    %10850 = vmatprep.subr.bf16.mxu0 %v10714
    %10851 = vmatpush1.bf16.msra.mxu0 %v10713
    %10852 = vmatprep.subr.bf16.mxu0 %v10716
    %10853 = vmatpush1.bf16.msra.mxu0 %v10715
    %10854 = vmatprep.subr.bf16.mxu0 %v10718
    %10855 = vmatpush1.bf16.msra.mxu0 %v10717
    %10856 = vmatprep.subr.bf16.mxu0 %v10720
    %10857 = vmatpush1.bf16.msra.mxu0 %v10719
    %10858 = vmatprep.subr.bf16.mxu0 %v10722
    %10859 = vmatpush1.bf16.msra.mxu0 %v10721
    %10860 = vmatprep.subr.bf16.mxu0 %v10724
    %10861 = vmatpush1.bf16.msra.mxu0 %v10723
    %10862 = vmatprep.subr.bf16.mxu0 %v10726
    %10863 = vmatpush1.bf16.msra.mxu0 %v10725
    %10864 = vmatprep.subr.bf16.mxu0 %v10728
    %10865 = vmatpush1.bf16.msra.mxu0 %v10727
    %10866 = vmatprep.subr.bf16.mxu0 %v10730
    %10867 = vmatpush1.bf16.msra.mxu0 %v10729
    %10868 = vmatprep.subr.bf16.mxu0 %v10732
    %10869 = vmatpush1.bf16.msra.mxu0 %v10731
    %10870 = vmatprep.subr.bf16.mxu0 %v10734
    %10871 = vmatpush1.bf16.msra.mxu0 %v10733
    %10872 = vmatprep.subr.bf16.mxu0 %v10736
    %10873 = vmatpush1.bf16.msra.mxu0 %v10735
    %10874 = vmatprep.subr.bf16.mxu0 %v10738
    %10875 = vmatpush1.bf16.msra.mxu0 %v10737
    %10876 = vmatprep.mubr.bf16.mxu0 %v9860
    %10877 = vmatmul.mubr.bf16.gmra.mrb[0].mxu0 %v9859
    %v10878 = vpop.f32.mrb[0].mxu0
    %v10879 = vadd.f32 %v10838, %v10878
    %v10880 = vpop.f32.mrb[0].mxu0
    %v10881 = vadd.f32 %v10840, %v10880
    %v10882 = vpop.f32.mrb[0].mxu0
    %v10883 = vpop.f32.mrb[0].mxu0
    %10884 = vdwg.mxu0
    %s10885 = scalar_lea.vmem %s14, 8
    %v10886 = vld [vmem:[%s10885] sm:$0xf]
    %v10888 = vsel %vm9771, %v10886, 0
    %10890 = vmatprep.subr.bf16.mxu0 %v9767
    %10891 = vmatpush1.bf16.msra.mxu0 %v9766
    %10892 = vmatprep.subr.bf16.mxu0 0
    %10893 = vmatpush1.bf16.msra.mxu0 0
    %10894 = vmatprep.subr.bf16.mxu0 0
    %10895 = vmatpush1.bf16.msra.mxu0 0
    %10896 = vmatprep.subr.bf16.mxu0 0
    %10897 = vmatpush1.bf16.msra.mxu0 0
    %10898 = vmatprep.subr.bf16.mxu0 0
    %10899 = vmatpush1.bf16.msra.mxu0 0
    %10900 = vmatprep.subr.bf16.mxu0 0
    %10901 = vmatpush1.bf16.msra.mxu0 0
    %10902 = vmatprep.subr.bf16.mxu0 0
    %10903 = vmatpush1.bf16.msra.mxu0 0
    %10904 = vmatprep.subr.bf16.mxu0 0
    %10905 = vmatpush1.bf16.msra.mxu0 0
    %10906 = vmatprep.subr.bf16.mxu0 0
    %10907 = vmatpush1.bf16.msra.mxu0 0
    %10908 = vmatprep.subr.bf16.mxu0 0
    %10909 = vmatpush1.bf16.msra.mxu0 0
    %10910 = vmatprep.subr.bf16.mxu0 0
    %10911 = vmatpush1.bf16.msra.mxu0 0
    %10912 = vmatprep.subr.bf16.mxu0 0
    %10913 = vmatpush1.bf16.msra.mxu0 0
    %10914 = vmatprep.subr.bf16.mxu0 0
    %10915 = vmatpush1.bf16.msra.mxu0 0
    %10916 = vmatprep.subr.bf16.mxu0 0
    %10917 = vmatpush1.bf16.msra.mxu0 0
    %10918 = vmatprep.subr.bf16.mxu0 0
    %10919 = vmatpush1.bf16.msra.mxu0 0
    %10920 = vmatprep.subr.bf16.mxu0 0
    %10921 = vmatpush1.bf16.msra.mxu0 0
    %10922 = vmatprep.mubr.bf16.mxu0 0
    %10923 = vmatmul.mubr.bf16.gmra.mrb[0].mxu0 %v10888
    %v10924 = vpop.f32.mrb[0].mxu0
    %v10925 = vadd.f32 0.0, %v10924
    %v10926 = vpop.f32.mrb[0].mxu0
    %v10927 = vadd.f32 0.0, %v10926
    %v10928 = vpop.f32.mrb[0].mxu0
    %v10929 = vpop.f32.mrb[0].mxu0
    %10930 = vdwg.mxu0
    %10931 = vmatprep.subr.bf16.mxu0 %v9769
    %10932 = vmatpush1.bf16.msra.mxu0 %v9768
    %10933 = vmatprep.subr.bf16.mxu0 0
    %10934 = vmatpush1.bf16.msra.mxu0 0
    %10935 = vmatprep.subr.bf16.mxu0 0
    %10936 = vmatpush1.bf16.msra.mxu0 0
    %10937 = vmatprep.subr.bf16.mxu0 0
    %10938 = vmatpush1.bf16.msra.mxu0 0
    %10939 = vmatprep.subr.bf16.mxu0 0
    %10940 = vmatpush1.bf16.msra.mxu0 0
    %10941 = vmatprep.subr.bf16.mxu0 0
    %10942 = vmatpush1.bf16.msra.mxu0 0
    %10943 = vmatprep.subr.bf16.mxu0 0
    %10944 = vmatpush1.bf16.msra.mxu0 0
    %10945 = vmatprep.subr.bf16.mxu0 0
    %10946 = vmatpush1.bf16.msra.mxu0 0
    %10947 = vmatprep.subr.bf16.mxu0 0
    %10948 = vmatpush1.bf16.msra.mxu0 0
    %10949 = vmatprep.subr.bf16.mxu0 0
    %10950 = vmatpush1.bf16.msra.mxu0 0
    %10951 = vmatprep.subr.bf16.mxu0 0
    %10952 = vmatpush1.bf16.msra.mxu0 0
    %10953 = vmatprep.subr.bf16.mxu0 0
    %10954 = vmatpush1.bf16.msra.mxu0 0
    %10955 = vmatprep.subr.bf16.mxu0 0
    %10956 = vmatpush1.bf16.msra.mxu0 0
    %10957 = vmatprep.subr.bf16.mxu0 0
    %10958 = vmatpush1.bf16.msra.mxu0 0
    %10959 = vmatprep.subr.bf16.mxu0 0
    %10960 = vmatpush1.bf16.msra.mxu0 0
    %10961 = vmatprep.subr.bf16.mxu0 0
    %10962 = vmatpush1.bf16.msra.mxu0 0
    %10963 = vmatprep.mubr.bf16.mxu0 0
    %10964 = vmatmul.mubr.bf16.gmra.mrb[0].mxu0 %v10888
    %v10965 = vpop.f32.mrb[0].mxu0
    %v10966 = vadd.f32 0.0, %v10965
    %v10967 = vpop.f32.mrb[0].mxu0
    %v10968 = vadd.f32 0.0, %v10967
    %v10969 = vpop.f32.mrb[0].mxu0
    %v10970 = vpop.f32.mrb[0].mxu0
    %10971 = vdwg.mxu0
    %v10972 = vpack.c.bf16 %v10925, %v10925
    %v10973 = vpack.c.bf16 %v10927, %v10927
    %v10974 = vpack.c.bf16 %v10966, %v10966
    %v10975 = vpack.c.bf16 %v10968, %v10968
    %s10976 = scalar_lea.vmem [#allocation19], 1024
    %v10977 = vld [vmem:[%s10976] sm:$0xff]
    %v10978 = vld [vmem:[%s10976 + $0x8] sm:$0xff]
    %v10979 = vld [vmem:[%s10976 + $0x10] sm:$0xff]
    %v10980 = vld [vmem:[%s10976 + $0x18] sm:$0xff]
    %v10981 = vld [vmem:[%s10976 + $0x20] sm:$0xff]
    %v10982 = vld [vmem:[%s10976 + $0x28] sm:$0xff]
    %v10983 = vld [vmem:[%s10976 + $0x30] sm:$0xff]
    %v10984 = vld [vmem:[%s10976 + $0x38] sm:$0xff]
    %v10985 = vld [vmem:[%s10976 + $0x40] sm:$0xff]
    %v10986 = vld [vmem:[%s10976 + $0x48] sm:$0xff]
    %v10987 = vld [vmem:[%s10976 + $0x50] sm:$0xff]
    %v10988 = vld [vmem:[%s10976 + $0x58] sm:$0xff]
    %v10989 = vld [vmem:[%s10976 + $0x60] sm:$0xff]
    %v10990 = vld [vmem:[%s10976 + $0x68] sm:$0xff]
    %v10991 = vld [vmem:[%s10976 + $0x70] sm:$0xff]
    %v10992 = vld [vmem:[%s10976 + $0x78] sm:$0xff]
    %v10993 = vld [vmem:[%s10976 + $0x80] sm:$0xff]
    %v10994 = vld [vmem:[%s10976 + $0x88] sm:$0xff]
    %v10995 = vld [vmem:[%s10976 + $0x90] sm:$0xff]
    %v10996 = vld [vmem:[%s10976 + $0x98] sm:$0xff]
    %v10997 = vld [vmem:[%s10976 + $0xa0] sm:$0xff]
    %v10998 = vld [vmem:[%s10976 + $0xa8] sm:$0xff]
    %v10999 = vld [vmem:[%s10976 + $0xb0] sm:$0xff]
    %v11000 = vld [vmem:[%s10976 + $0xb8] sm:$0xff]
    %v11001 = vld [vmem:[%s10976 + $0xc0] sm:$0xff]
    %v11002 = vld [vmem:[%s10976 + $0xc8] sm:$0xff]
    %v11003 = vld [vmem:[%s10976 + $0xd0] sm:$0xff]
    %v11004 = vld [vmem:[%s10976 + $0xd8] sm:$0xff]
    %v11005 = vld [vmem:[%s10976 + $0xe0] sm:$0xff]
    %v11006 = vld [vmem:[%s10976 + $0xe8] sm:$0xff]
    %v11007 = vld [vmem:[%s10976 + $0xf0] sm:$0xff]
    %v11008 = vld [vmem:[%s10976 + $0xf8] sm:$0xff]
    %v11009 = vld [vmem:[%s10976 + $0x100] sm:$0xff]
    %v11010 = vld [vmem:[%s10976 + $0x108] sm:$0xff]
    %v11011 = vld [vmem:[%s10976 + $0x110] sm:$0xff]
    %v11012 = vld [vmem:[%s10976 + $0x118] sm:$0xff]
    %v11013 = vld [vmem:[%s10976 + $0x120] sm:$0xff]
    %v11014 = vld [vmem:[%s10976 + $0x128] sm:$0xff]
    %v11015 = vld [vmem:[%s10976 + $0x130] sm:$0xff]
    %v11016 = vld [vmem:[%s10976 + $0x138] sm:$0xff]
    %v11017 = vld [vmem:[%s10976 + $0x140] sm:$0xff]
    %v11018 = vld [vmem:[%s10976 + $0x148] sm:$0xff]
    %v11019 = vld [vmem:[%s10976 + $0x150] sm:$0xff]
    %v11020 = vld [vmem:[%s10976 + $0x158] sm:$0xff]
    %v11021 = vld [vmem:[%s10976 + $0x160] sm:$0xff]
    %v11022 = vld [vmem:[%s10976 + $0x168] sm:$0xff]
    %v11023 = vld [vmem:[%s10976 + $0x170] sm:$0xff]
    %v11024 = vld [vmem:[%s10976 + $0x178] sm:$0xff]
    %v11025 = vld [vmem:[%s10976 + $0x180] sm:$0xff]
    %v11026 = vld [vmem:[%s10976 + $0x188] sm:$0xff]
    %v11027 = vld [vmem:[%s10976 + $0x190] sm:$0xff]
    %v11028 = vld [vmem:[%s10976 + $0x198] sm:$0xff]
    %v11029 = vld [vmem:[%s10976 + $0x1a0] sm:$0xff]
    %v11030 = vld [vmem:[%s10976 + $0x1a8] sm:$0xff]
    %v11031 = vld [vmem:[%s10976 + $0x1b0] sm:$0xff]
    %v11032 = vld [vmem:[%s10976 + $0x1b8] sm:$0xff]
    %v11033 = vld [vmem:[%s10976 + $0x1c0] sm:$0xff]
    %v11034 = vld [vmem:[%s10976 + $0x1c8] sm:$0xff]
    %v11035 = vld [vmem:[%s10976 + $0x1d0] sm:$0xff]
    %v11036 = vld [vmem:[%s10976 + $0x1d8] sm:$0xff]
    %v11037 = vld [vmem:[%s10976 + $0x1e0] sm:$0xff]
    %v11038 = vld [vmem:[%s10976 + $0x1e8] sm:$0xff]
    %v11039 = vld [vmem:[%s10976 + $0x1f0] sm:$0xff]
    %v11040 = vld [vmem:[%s10976 + $0x1f8] sm:$0xff]
    %v11105 = vunpack.c.l.b16 %v10977
    %v11106 = vunpack.c.h.b16 %v10977
    %v11107 = vunpack.c.l.b16 %v10978
    %v11108 = vunpack.c.h.b16 %v10978
    %v11109 = vunpack.c.l.b16 %v10979
    %v11110 = vunpack.c.h.b16 %v10979
    %v11111 = vunpack.c.l.b16 %v10980
    %v11112 = vunpack.c.h.b16 %v10980
    %v11113 = vunpack.c.l.b16 %v10981
    %v11114 = vunpack.c.h.b16 %v10981
    %v11115 = vunpack.c.l.b16 %v10982
    %v11116 = vunpack.c.h.b16 %v10982
    %v11117 = vunpack.c.l.b16 %v10983
    %v11118 = vunpack.c.h.b16 %v10983
    %v11119 = vunpack.c.l.b16 %v10984
    %v11120 = vunpack.c.h.b16 %v10984
    %v11121 = vunpack.c.l.b16 %v10985
    %v11122 = vunpack.c.h.b16 %v10985
    %v11123 = vunpack.c.l.b16 %v10986
    %v11124 = vunpack.c.h.b16 %v10986
    %v11125 = vunpack.c.l.b16 %v10987
    %v11126 = vunpack.c.h.b16 %v10987
    %v11127 = vunpack.c.l.b16 %v10988
    %v11128 = vunpack.c.h.b16 %v10988
    %v11129 = vunpack.c.l.b16 %v10989
    %v11130 = vunpack.c.h.b16 %v10989
    %v11131 = vunpack.c.l.b16 %v10990
    %v11132 = vunpack.c.h.b16 %v10990
    %v11133 = vunpack.c.l.b16 %v10991
    %v11134 = vunpack.c.h.b16 %v10991
    %v11135 = vunpack.c.l.b16 %v10992
    %v11136 = vunpack.c.h.b16 %v10992
    %v11137 = vunpack.c.l.b16 %v10993
    %v11138 = vunpack.c.h.b16 %v10993
    %v11139 = vunpack.c.l.b16 %v10994
    %v11140 = vunpack.c.h.b16 %v10994
    %v11141 = vunpack.c.l.b16 %v10995
    %v11142 = vunpack.c.h.b16 %v10995
    %v11143 = vunpack.c.l.b16 %v10996
    %v11144 = vunpack.c.h.b16 %v10996
    %v11145 = vunpack.c.l.b16 %v10997
    %v11146 = vunpack.c.h.b16 %v10997
    %v11147 = vunpack.c.l.b16 %v10998
    %v11148 = vunpack.c.h.b16 %v10998
    %v11149 = vunpack.c.l.b16 %v10999
    %v11150 = vunpack.c.h.b16 %v10999
    %v11151 = vunpack.c.l.b16 %v11000
    %v11152 = vunpack.c.h.b16 %v11000
    %v11153 = vunpack.c.l.b16 %v11001
    %v11154 = vunpack.c.h.b16 %v11001
    %v11155 = vunpack.c.l.b16 %v11002
    %v11156 = vunpack.c.h.b16 %v11002
    %v11157 = vunpack.c.l.b16 %v11003
    %v11158 = vunpack.c.h.b16 %v11003
    %v11159 = vunpack.c.l.b16 %v11004
    %v11160 = vunpack.c.h.b16 %v11004
    %v11161 = vunpack.c.l.b16 %v11005
    %v11162 = vunpack.c.h.b16 %v11005
    %v11163 = vunpack.c.l.b16 %v11006
    %v11164 = vunpack.c.h.b16 %v11006
    %v11165 = vunpack.c.l.b16 %v11007
    %v11166 = vunpack.c.h.b16 %v11007
    %v11167 = vunpack.c.l.b16 %v11008
    %v11168 = vunpack.c.h.b16 %v11008
    %v11169 = vunpack.c.l.b16 %v11009
    %v11170 = vunpack.c.h.b16 %v11009
    %v11171 = vunpack.c.l.b16 %v11010
    %v11172 = vunpack.c.h.b16 %v11010
    %v11173 = vunpack.c.l.b16 %v11011
    %v11174 = vunpack.c.h.b16 %v11011
    %v11175 = vunpack.c.l.b16 %v11012
    %v11176 = vunpack.c.h.b16 %v11012
    %v11177 = vunpack.c.l.b16 %v11013
    %v11178 = vunpack.c.h.b16 %v11013
    %v11179 = vunpack.c.l.b16 %v11014
    %v11180 = vunpack.c.h.b16 %v11014
    %v11181 = vunpack.c.l.b16 %v11015
    %v11182 = vunpack.c.h.b16 %v11015
    %v11183 = vunpack.c.l.b16 %v11016
    %v11184 = vunpack.c.h.b16 %v11016
    %v11185 = vunpack.c.l.b16 %v11017
    %v11186 = vunpack.c.h.b16 %v11017
    %v11187 = vunpack.c.l.b16 %v11018
    %v11188 = vunpack.c.h.b16 %v11018
    %v11189 = vunpack.c.l.b16 %v11019
    %v11190 = vunpack.c.h.b16 %v11019
    %v11191 = vunpack.c.l.b16 %v11020
    %v11192 = vunpack.c.h.b16 %v11020
    %v11193 = vunpack.c.l.b16 %v11021
    %v11194 = vunpack.c.h.b16 %v11021
    %v11195 = vunpack.c.l.b16 %v11022
    %v11196 = vunpack.c.h.b16 %v11022
    %v11197 = vunpack.c.l.b16 %v11023
    %v11198 = vunpack.c.h.b16 %v11023
    %v11199 = vunpack.c.l.b16 %v11024
    %v11200 = vunpack.c.h.b16 %v11024
    %v11201 = vunpack.c.l.b16 %v11025
    %v11202 = vunpack.c.h.b16 %v11025
    %v11203 = vunpack.c.l.b16 %v11026
    %v11204 = vunpack.c.h.b16 %v11026
    %v11205 = vunpack.c.l.b16 %v11027
    %v11206 = vunpack.c.h.b16 %v11027
    %v11207 = vunpack.c.l.b16 %v11028
    %v11208 = vunpack.c.h.b16 %v11028
    %v11209 = vunpack.c.l.b16 %v11029
    %v11210 = vunpack.c.h.b16 %v11029
    %v11211 = vunpack.c.l.b16 %v11030
    %v11212 = vunpack.c.h.b16 %v11030
    %v11213 = vunpack.c.l.b16 %v11031
    %v11214 = vunpack.c.h.b16 %v11031
    %v11215 = vunpack.c.l.b16 %v11032
    %v11216 = vunpack.c.h.b16 %v11032
    %v11217 = vunpack.c.l.b16 %v11033
    %v11218 = vunpack.c.h.b16 %v11033
    %v11219 = vunpack.c.l.b16 %v11034
    %v11220 = vunpack.c.h.b16 %v11034
    %v11221 = vunpack.c.l.b16 %v11035
    %v11222 = vunpack.c.h.b16 %v11035
    %v11223 = vunpack.c.l.b16 %v11036
    %v11224 = vunpack.c.h.b16 %v11036
    %v11225 = vunpack.c.l.b16 %v11037
    %v11226 = vunpack.c.h.b16 %v11037
    %v11227 = vunpack.c.l.b16 %v11038
    %v11228 = vunpack.c.h.b16 %v11038
    %v11229 = vunpack.c.l.b16 %v11039
    %v11230 = vunpack.c.h.b16 %v11039
    %v11231 = vunpack.c.l.b16 %v11040
    %v11232 = vunpack.c.h.b16 %v11040
    %v11233 = vpack.c.b16 %v11107, %v11105
    %v11234 = vpack.c.b16 %v11108, %v11106
    %v11235 = vpack.c.b16 %v11111, %v11109
    %v11236 = vpack.c.b16 %v11112, %v11110
    %v11237 = vpack.c.b16 %v11115, %v11113
    %v11238 = vpack.c.b16 %v11116, %v11114
    %v11239 = vpack.c.b16 %v11119, %v11117
    %v11240 = vpack.c.b16 %v11120, %v11118
    %v11241 = vpack.c.b16 %v11123, %v11121
    %v11242 = vpack.c.b16 %v11124, %v11122
    %v11243 = vpack.c.b16 %v11127, %v11125
    %v11244 = vpack.c.b16 %v11128, %v11126
    %v11245 = vpack.c.b16 %v11131, %v11129
    %v11246 = vpack.c.b16 %v11132, %v11130
    %v11247 = vpack.c.b16 %v11135, %v11133
    %v11248 = vpack.c.b16 %v11136, %v11134
    %v11249 = vpack.c.b16 %v11139, %v11137
    %v11250 = vpack.c.b16 %v11140, %v11138
    %v11251 = vpack.c.b16 %v11143, %v11141
    %v11252 = vpack.c.b16 %v11144, %v11142
    %v11253 = vpack.c.b16 %v11147, %v11145
    %v11254 = vpack.c.b16 %v11148, %v11146
    %v11255 = vpack.c.b16 %v11151, %v11149
    %v11256 = vpack.c.b16 %v11152, %v11150
    %v11257 = vpack.c.b16 %v11155, %v11153
    %v11258 = vpack.c.b16 %v11156, %v11154
    %v11259 = vpack.c.b16 %v11159, %v11157
    %v11260 = vpack.c.b16 %v11160, %v11158
    %v11261 = vpack.c.b16 %v11163, %v11161
    %v11262 = vpack.c.b16 %v11164, %v11162
    %v11263 = vpack.c.b16 %v11167, %v11165
    %v11264 = vpack.c.b16 %v11168, %v11166
    %v11265 = vpack.c.b16 %v11171, %v11169
    %v11266 = vpack.c.b16 %v11172, %v11170
    %v11267 = vpack.c.b16 %v11175, %v11173
    %v11268 = vpack.c.b16 %v11176, %v11174
    %v11269 = vpack.c.b16 %v11179, %v11177
    %v11270 = vpack.c.b16 %v11180, %v11178
    %v11271 = vpack.c.b16 %v11183, %v11181
    %v11272 = vpack.c.b16 %v11184, %v11182
    %v11273 = vpack.c.b16 %v11187, %v11185
    %v11274 = vpack.c.b16 %v11188, %v11186
    %v11275 = vpack.c.b16 %v11191, %v11189
    %v11276 = vpack.c.b16 %v11192, %v11190
    %v11277 = vpack.c.b16 %v11195, %v11193
    %v11278 = vpack.c.b16 %v11196, %v11194
    %v11279 = vpack.c.b16 %v11199, %v11197
    %v11280 = vpack.c.b16 %v11200, %v11198
    %v11281 = vpack.c.b16 %v11203, %v11201
    %v11282 = vpack.c.b16 %v11204, %v11202
    %v11283 = vpack.c.b16 %v11207, %v11205
    %v11284 = vpack.c.b16 %v11208, %v11206
    %v11285 = vpack.c.b16 %v11211, %v11209
    %v11286 = vpack.c.b16 %v11212, %v11210
    %v11287 = vpack.c.b16 %v11215, %v11213
    %v11288 = vpack.c.b16 %v11216, %v11214
    %v11289 = vpack.c.b16 %v11219, %v11217
    %v11290 = vpack.c.b16 %v11220, %v11218
    %v11291 = vpack.c.b16 %v11223, %v11221
    %v11292 = vpack.c.b16 %v11224, %v11222
    %v11293 = vpack.c.b16 %v11227, %v11225
    %v11294 = vpack.c.b16 %v11228, %v11226
    %v11295 = vpack.c.b16 %v11231, %v11229
    %v11296 = vpack.c.b16 %v11232, %v11230
    %11361 = vmatprep.subr.bf16.mxu0 %v11234
    %11362 = vmatpush1.bf16.msra.mxu0 %v11233
    %11363 = vmatprep.subr.bf16.mxu0 %v11236
    %11364 = vmatpush1.bf16.msra.mxu0 %v11235
    %11365 = vmatprep.subr.bf16.mxu0 %v11238
    %11366 = vmatpush1.bf16.msra.mxu0 %v11237
    %11367 = vmatprep.subr.bf16.mxu0 %v11240
    %11368 = vmatpush1.bf16.msra.mxu0 %v11239
    %11369 = vmatprep.subr.bf16.mxu0 %v11242
    %11370 = vmatpush1.bf16.msra.mxu0 %v11241
    %11371 = vmatprep.subr.bf16.mxu0 %v11244
    %11372 = vmatpush1.bf16.msra.mxu0 %v11243
    %11373 = vmatprep.subr.bf16.mxu0 %v11246
    %11374 = vmatpush1.bf16.msra.mxu0 %v11245
    %11375 = vmatprep.subr.bf16.mxu0 %v11248
    %11376 = vmatpush1.bf16.msra.mxu0 %v11247
    %11377 = vmatprep.subr.bf16.mxu0 %v11250
    %11378 = vmatpush1.bf16.msra.mxu0 %v11249
    %11379 = vmatprep.subr.bf16.mxu0 %v11252
    %11380 = vmatpush1.bf16.msra.mxu0 %v11251
    %11381 = vmatprep.subr.bf16.mxu0 %v11254
    %11382 = vmatpush1.bf16.msra.mxu0 %v11253
    %11383 = vmatprep.subr.bf16.mxu0 %v11256
    %11384 = vmatpush1.bf16.msra.mxu0 %v11255
    %11385 = vmatprep.subr.bf16.mxu0 %v11258
    %11386 = vmatpush1.bf16.msra.mxu0 %v11257
    %11387 = vmatprep.subr.bf16.mxu0 %v11260
    %11388 = vmatpush1.bf16.msra.mxu0 %v11259
    %11389 = vmatprep.subr.bf16.mxu0 %v11262
    %11390 = vmatpush1.bf16.msra.mxu0 %v11261
    %11391 = vmatprep.subr.bf16.mxu0 %v11264
    %11392 = vmatpush1.bf16.msra.mxu0 %v11263
    %11393 = vmatprep.mubr.bf16.mxu0 %v10973
    %11394 = vmatmul.mubr.bf16.gmra.mrb[0].mxu0 %v10972
    %v11395 = vpop.f32.mrb[0].mxu0
    %v11396 = vadd.f32 0.0, %v11395
    %v11397 = vpop.f32.mrb[0].mxu0
    %v11398 = vadd.f32 0.0, %v11397
    %v11399 = vpop.f32.mrb[0].mxu0
    %v11400 = vpop.f32.mrb[0].mxu0
    %11401 = vdwg.mxu0
    %11402 = vmatprep.subr.bf16.mxu0 %v11266
    %11403 = vmatpush1.bf16.msra.mxu0 %v11265
    %11404 = vmatprep.subr.bf16.mxu0 %v11268
    %11405 = vmatpush1.bf16.msra.mxu0 %v11267
    %11406 = vmatprep.subr.bf16.mxu0 %v11270
    %11407 = vmatpush1.bf16.msra.mxu0 %v11269
    %11408 = vmatprep.subr.bf16.mxu0 %v11272
    %11409 = vmatpush1.bf16.msra.mxu0 %v11271
    %11410 = vmatprep.subr.bf16.mxu0 %v11274
    %11411 = vmatpush1.bf16.msra.mxu0 %v11273
    %11412 = vmatprep.subr.bf16.mxu0 %v11276
    %11413 = vmatpush1.bf16.msra.mxu0 %v11275
    %11414 = vmatprep.subr.bf16.mxu0 %v11278
    %11415 = vmatpush1.bf16.msra.mxu0 %v11277
    %11416 = vmatprep.subr.bf16.mxu0 %v11280
    %11417 = vmatpush1.bf16.msra.mxu0 %v11279
    %11418 = vmatprep.subr.bf16.mxu0 %v11282
    %11419 = vmatpush1.bf16.msra.mxu0 %v11281
    %11420 = vmatprep.subr.bf16.mxu0 %v11284
    %11421 = vmatpush1.bf16.msra.mxu0 %v11283
    %11422 = vmatprep.subr.bf16.mxu0 %v11286
    %11423 = vmatpush1.bf16.msra.mxu0 %v11285
    %11424 = vmatprep.subr.bf16.mxu0 %v11288
    %11425 = vmatpush1.bf16.msra.mxu0 %v11287
    %11426 = vmatprep.subr.bf16.mxu0 %v11290
    %11427 = vmatpush1.bf16.msra.mxu0 %v11289
    %11428 = vmatprep.subr.bf16.mxu0 %v11292
    %11429 = vmatpush1.bf16.msra.mxu0 %v11291
    %11430 = vmatprep.subr.bf16.mxu0 %v11294
    %11431 = vmatpush1.bf16.msra.mxu0 %v11293
    %11432 = vmatprep.subr.bf16.mxu0 %v11296
    %11433 = vmatpush1.bf16.msra.mxu0 %v11295
    %11434 = vmatprep.mubr.bf16.mxu0 %v10975
    %11435 = vmatmul.mubr.bf16.gmra.mrb[0].mxu0 %v10974
    %v11436 = vpop.f32.mrb[0].mxu0
    %v11437 = vadd.f32 %v11396, %v11436
    %v11438 = vpop.f32.mrb[0].mxu0
    %v11439 = vadd.f32 %v11398, %v11438
    %v11440 = vpop.f32.mrb[0].mxu0
    %v11441 = vpop.f32.mrb[0].mxu0
    %11442 = vdwg.mxu0
    %v11443 = vadd.f32 %v10879, %v11437
    %v11444 = vadd.f32 %v10881, %v11439
    %s11445 = scalar_lea.vmem %s14, 12
    %v11446 = vld [vmem:[%s11445] sm:$0xf]
    %v11448 = vsel %vm9771, %v11446, 0
    %11450 = vmatprep.subr.bf16.mxu0 %v9767
    %11451 = vmatpush1.bf16.msra.mxu0 %v9766
    %11452 = vmatprep.subr.bf16.mxu0 0
    %11453 = vmatpush1.bf16.msra.mxu0 0
    %11454 = vmatprep.subr.bf16.mxu0 0
    %11455 = vmatpush1.bf16.msra.mxu0 0
    %11456 = vmatprep.subr.bf16.mxu0 0
    %11457 = vmatpush1.bf16.msra.mxu0 0
    %11458 = vmatprep.subr.bf16.mxu0 0
    %11459 = vmatpush1.bf16.msra.mxu0 0
    %11460 = vmatprep.subr.bf16.mxu0 0
    %11461 = vmatpush1.bf16.msra.mxu0 0
    %11462 = vmatprep.subr.bf16.mxu0 0
    %11463 = vmatpush1.bf16.msra.mxu0 0
    %11464 = vmatprep.subr.bf16.mxu0 0
    %11465 = vmatpush1.bf16.msra.mxu0 0
    %11466 = vmatprep.subr.bf16.mxu0 0
    %11467 = vmatpush1.bf16.msra.mxu0 0
    %11468 = vmatprep.subr.bf16.mxu0 0
    %11469 = vmatpush1.bf16.msra.mxu0 0
    %11470 = vmatprep.subr.bf16.mxu0 0
    %11471 = vmatpush1.bf16.msra.mxu0 0
    %11472 = vmatprep.subr.bf16.mxu0 0
    %11473 = vmatpush1.bf16.msra.mxu0 0
    %11474 = vmatprep.subr.bf16.mxu0 0
    %11475 = vmatpush1.bf16.msra.mxu0 0
    %11476 = vmatprep.subr.bf16.mxu0 0
    %11477 = vmatpush1.bf16.msra.mxu0 0
    %11478 = vmatprep.subr.bf16.mxu0 0
    %11479 = vmatpush1.bf16.msra.mxu0 0
    %11480 = vmatprep.subr.bf16.mxu0 0
    %11481 = vmatpush1.bf16.msra.mxu0 0
    %11482 = vmatprep.mubr.bf16.mxu0 0
    %11483 = vmatmul.mubr.bf16.gmra.mrb[0].mxu0 %v11448
    %v11484 = vpop.f32.mrb[0].mxu0
    %v11485 = vadd.f32 0.0, %v11484
    %v11486 = vpop.f32.mrb[0].mxu0
    %v11487 = vadd.f32 0.0, %v11486
    %v11488 = vpop.f32.mrb[0].mxu0
    %v11489 = vpop.f32.mrb[0].mxu0
    %11490 = vdwg.mxu0
    %11491 = vmatprep.subr.bf16.mxu0 %v9769
    %11492 = vmatpush1.bf16.msra.mxu0 %v9768
    %11493 = vmatprep.subr.bf16.mxu0 0
    %11494 = vmatpush1.bf16.msra.mxu0 0
    %11495 = vmatprep.subr.bf16.mxu0 0
    %11496 = vmatpush1.bf16.msra.mxu0 0
    %11497 = vmatprep.subr.bf16.mxu0 0
    %11498 = vmatpush1.bf16.msra.mxu0 0
    %11499 = vmatprep.subr.bf16.mxu0 0
    %11500 = vmatpush1.bf16.msra.mxu0 0
    %11501 = vmatprep.subr.bf16.mxu0 0
    %11502 = vmatpush1.bf16.msra.mxu0 0
    %11503 = vmatprep.subr.bf16.mxu0 0
    %11504 = vmatpush1.bf16.msra.mxu0 0
    %11505 = vmatprep.subr.bf16.mxu0 0
    %11506 = vmatpush1.bf16.msra.mxu0 0
    %11507 = vmatprep.subr.bf16.mxu0 0
    %11508 = vmatpush1.bf16.msra.mxu0 0
    %11509 = vmatprep.subr.bf16.mxu0 0
    %11510 = vmatpush1.bf16.msra.mxu0 0
    %11511 = vmatprep.subr.bf16.mxu0 0
    %11512 = vmatpush1.bf16.msra.mxu0 0
    %11513 = vmatprep.subr.bf16.mxu0 0
    %11514 = vmatpush1.bf16.msra.mxu0 0
    %11515 = vmatprep.subr.bf16.mxu0 0
    %11516 = vmatpush1.bf16.msra.mxu0 0
    %11517 = vmatprep.subr.bf16.mxu0 0
    %11518 = vmatpush1.bf16.msra.mxu0 0
    %11519 = vmatprep.subr.bf16.mxu0 0
    %11520 = vmatpush1.bf16.msra.mxu0 0
    %11521 = vmatprep.subr.bf16.mxu0 0
    %11522 = vmatpush1.bf16.msra.mxu0 0
    %11523 = vmatprep.mubr.bf16.mxu0 0
    %11524 = vmatmul.mubr.bf16.gmra.mrb[0].mxu0 %v11448
    %v11525 = vpop.f32.mrb[0].mxu0
    %v11526 = vadd.f32 0.0, %v11525
    %v11527 = vpop.f32.mrb[0].mxu0
    %v11528 = vadd.f32 0.0, %v11527
    %v11529 = vpop.f32.mrb[0].mxu0
    %v11530 = vpop.f32.mrb[0].mxu0
    %11531 = vdwg.mxu0
    %v11532 = vpack.c.bf16 %v11485, %v11485
    %v11533 = vpack.c.bf16 %v11487, %v11487
    %v11534 = vpack.c.bf16 %v11526, %v11526
    %v11535 = vpack.c.bf16 %v11528, %v11528
    %s11536 = scalar_lea.vmem [#allocation19], 1536
    %v11537 = vld [vmem:[%s11536] sm:$0xff]
    %v11538 = vld [vmem:[%s11536 + $0x8] sm:$0xff]
    %v11539 = vld [vmem:[%s11536 + $0x10] sm:$0xff]
    %v11540 = vld [vmem:[%s11536 + $0x18] sm:$0xff]
    %v11541 = vld [vmem:[%s11536 + $0x20] sm:$0xff]
    %v11542 = vld [vmem:[%s11536 + $0x28] sm:$0xff]
    %v11543 = vld [vmem:[%s11536 + $0x30] sm:$0xff]
    %v11544 = vld [vmem:[%s11536 + $0x38] sm:$0xff]
    %v11545 = vld [vmem:[%s11536 + $0x40] sm:$0xff]
    %v11546 = vld [vmem:[%s11536 + $0x48] sm:$0xff]
    %v11547 = vld [vmem:[%s11536 + $0x50] sm:$0xff]
    %v11548 = vld [vmem:[%s11536 + $0x58] sm:$0xff]
    %v11549 = vld [vmem:[%s11536 + $0x60] sm:$0xff]
    %v11550 = vld [vmem:[%s11536 + $0x68] sm:$0xff]
    %v11551 = vld [vmem:[%s11536 + $0x70] sm:$0xff]
    %v11552 = vld [vmem:[%s11536 + $0x78] sm:$0xff]
    %v11553 = vld [vmem:[%s11536 + $0x80] sm:$0xff]
    %v11554 = vld [vmem:[%s11536 + $0x88] sm:$0xff]
    %v11555 = vld [vmem:[%s11536 + $0x90] sm:$0xff]
    %v11556 = vld [vmem:[%s11536 + $0x98] sm:$0xff]
    %v11557 = vld [vmem:[%s11536 + $0xa0] sm:$0xff]
    %v11558 = vld [vmem:[%s11536 + $0xa8] sm:$0xff]
    %v11559 = vld [vmem:[%s11536 + $0xb0] sm:$0xff]
    %v11560 = vld [vmem:[%s11536 + $0xb8] sm:$0xff]
    %v11561 = vld [vmem:[%s11536 + $0xc0] sm:$0xff]
    %v11562 = vld [vmem:[%s11536 + $0xc8] sm:$0xff]
    %v11563 = vld [vmem:[%s11536 + $0xd0] sm:$0xff]
    %v11564 = vld [vmem:[%s11536 + $0xd8] sm:$0xff]
    %v11565 = vld [vmem:[%s11536 + $0xe0] sm:$0xff]
    %v11566 = vld [vmem:[%s11536 + $0xe8] sm:$0xff]
    %v11567 = vld [vmem:[%s11536 + $0xf0] sm:$0xff]
    %v11568 = vld [vmem:[%s11536 + $0xf8] sm:$0xff]
    %v11569 = vld [vmem:[%s11536 + $0x100] sm:$0xff]
    %v11570 = vld [vmem:[%s11536 + $0x108] sm:$0xff]
    %v11571 = vld [vmem:[%s11536 + $0x110] sm:$0xff]
    %v11572 = vld [vmem:[%s11536 + $0x118] sm:$0xff]
    %v11573 = vld [vmem:[%s11536 + $0x120] sm:$0xff]
    %v11574 = vld [vmem:[%s11536 + $0x128] sm:$0xff]
    %v11575 = vld [vmem:[%s11536 + $0x130] sm:$0xff]
    %v11576 = vld [vmem:[%s11536 + $0x138] sm:$0xff]
    %v11577 = vld [vmem:[%s11536 + $0x140] sm:$0xff]
    %v11578 = vld [vmem:[%s11536 + $0x148] sm:$0xff]
    %v11579 = vld [vmem:[%s11536 + $0x150] sm:$0xff]
    %v11580 = vld [vmem:[%s11536 + $0x158] sm:$0xff]
    %v11581 = vld [vmem:[%s11536 + $0x160] sm:$0xff]
    %v11582 = vld [vmem:[%s11536 + $0x168] sm:$0xff]
    %v11583 = vld [vmem:[%s11536 + $0x170] sm:$0xff]
    %v11584 = vld [vmem:[%s11536 + $0x178] sm:$0xff]
    %v11585 = vld [vmem:[%s11536 + $0x180] sm:$0xff]
    %v11586 = vld [vmem:[%s11536 + $0x188] sm:$0xff]
    %v11587 = vld [vmem:[%s11536 + $0x190] sm:$0xff]
    %v11588 = vld [vmem:[%s11536 + $0x198] sm:$0xff]
    %v11589 = vld [vmem:[%s11536 + $0x1a0] sm:$0xff]
    %v11590 = vld [vmem:[%s11536 + $0x1a8] sm:$0xff]
    %v11591 = vld [vmem:[%s11536 + $0x1b0] sm:$0xff]
    %v11592 = vld [vmem:[%s11536 + $0x1b8] sm:$0xff]
    %v11593 = vld [vmem:[%s11536 + $0x1c0] sm:$0xff]
    %v11594 = vld [vmem:[%s11536 + $0x1c8] sm:$0xff]
    %v11595 = vld [vmem:[%s11536 + $0x1d0] sm:$0xff]
    %v11596 = vld [vmem:[%s11536 + $0x1d8] sm:$0xff]
    %v11597 = vld [vmem:[%s11536 + $0x1e0] sm:$0xff]
    %v11598 = vld [vmem:[%s11536 + $0x1e8] sm:$0xff]
    %v11599 = vld [vmem:[%s11536 + $0x1f0] sm:$0xff]
    %v11600 = vld [vmem:[%s11536 + $0x1f8] sm:$0xff]
    %v11665 = vunpack.c.l.b16 %v11537
    %v11666 = vunpack.c.h.b16 %v11537
    %v11667 = vunpack.c.l.b16 %v11538
    %v11668 = vunpack.c.h.b16 %v11538
    %v11669 = vunpack.c.l.b16 %v11539
    %v11670 = vunpack.c.h.b16 %v11539
    %v11671 = vunpack.c.l.b16 %v11540
    %v11672 = vunpack.c.h.b16 %v11540
    %v11673 = vunpack.c.l.b16 %v11541
    %v11674 = vunpack.c.h.b16 %v11541
    %v11675 = vunpack.c.l.b16 %v11542
    %v11676 = vunpack.c.h.b16 %v11542
    %v11677 = vunpack.c.l.b16 %v11543
    %v11678 = vunpack.c.h.b16 %v11543
    %v11679 = vunpack.c.l.b16 %v11544
    %v11680 = vunpack.c.h.b16 %v11544
    %v11681 = vunpack.c.l.b16 %v11545
    %v11682 = vunpack.c.h.b16 %v11545
    %v11683 = vunpack.c.l.b16 %v11546
    %v11684 = vunpack.c.h.b16 %v11546
    %v11685 = vunpack.c.l.b16 %v11547
    %v11686 = vunpack.c.h.b16 %v11547
    %v11687 = vunpack.c.l.b16 %v11548
    %v11688 = vunpack.c.h.b16 %v11548
    %v11689 = vunpack.c.l.b16 %v11549
    %v11690 = vunpack.c.h.b16 %v11549
    %v11691 = vunpack.c.l.b16 %v11550
    %v11692 = vunpack.c.h.b16 %v11550
    %v11693 = vunpack.c.l.b16 %v11551
    %v11694 = vunpack.c.h.b16 %v11551
    %v11695 = vunpack.c.l.b16 %v11552
    %v11696 = vunpack.c.h.b16 %v11552
    %v11697 = vunpack.c.l.b16 %v11553
    %v11698 = vunpack.c.h.b16 %v11553
    %v11699 = vunpack.c.l.b16 %v11554
    %v11700 = vunpack.c.h.b16 %v11554
    %v11701 = vunpack.c.l.b16 %v11555
    %v11702 = vunpack.c.h.b16 %v11555
    %v11703 = vunpack.c.l.b16 %v11556
    %v11704 = vunpack.c.h.b16 %v11556
    %v11705 = vunpack.c.l.b16 %v11557
    %v11706 = vunpack.c.h.b16 %v11557
    %v11707 = vunpack.c.l.b16 %v11558
    %v11708 = vunpack.c.h.b16 %v11558
    %v11709 = vunpack.c.l.b16 %v11559
    %v11710 = vunpack.c.h.b16 %v11559
    %v11711 = vunpack.c.l.b16 %v11560
    %v11712 = vunpack.c.h.b16 %v11560
    %v11713 = vunpack.c.l.b16 %v11561
    %v11714 = vunpack.c.h.b16 %v11561
    %v11715 = vunpack.c.l.b16 %v11562
    %v11716 = vunpack.c.h.b16 %v11562
    %v11717 = vunpack.c.l.b16 %v11563
    %v11718 = vunpack.c.h.b16 %v11563
    %v11719 = vunpack.c.l.b16 %v11564
    %v11720 = vunpack.c.h.b16 %v11564
    %v11721 = vunpack.c.l.b16 %v11565
    %v11722 = vunpack.c.h.b16 %v11565
    %v11723 = vunpack.c.l.b16 %v11566
    %v11724 = vunpack.c.h.b16 %v11566
    %v11725 = vunpack.c.l.b16 %v11567
    %v11726 = vunpack.c.h.b16 %v11567
    %v11727 = vunpack.c.l.b16 %v11568
    %v11728 = vunpack.c.h.b16 %v11568
    %v11729 = vunpack.c.l.b16 %v11569
    %v11730 = vunpack.c.h.b16 %v11569
    %v11731 = vunpack.c.l.b16 %v11570
    %v11732 = vunpack.c.h.b16 %v11570
    %v11733 = vunpack.c.l.b16 %v11571
    %v11734 = vunpack.c.h.b16 %v11571
    %v11735 = vunpack.c.l.b16 %v11572
    %v11736 = vunpack.c.h.b16 %v11572
    %v11737 = vunpack.c.l.b16 %v11573
    %v11738 = vunpack.c.h.b16 %v11573
    %v11739 = vunpack.c.l.b16 %v11574
    %v11740 = vunpack.c.h.b16 %v11574
    %v11741 = vunpack.c.l.b16 %v11575
    %v11742 = vunpack.c.h.b16 %v11575
    %v11743 = vunpack.c.l.b16 %v11576
    %v11744 = vunpack.c.h.b16 %v11576
    %v11745 = vunpack.c.l.b16 %v11577
    %v11746 = vunpack.c.h.b16 %v11577
    %v11747 = vunpack.c.l.b16 %v11578
    %v11748 = vunpack.c.h.b16 %v11578
    %v11749 = vunpack.c.l.b16 %v11579
    %v11750 = vunpack.c.h.b16 %v11579
    %v11751 = vunpack.c.l.b16 %v11580
    %v11752 = vunpack.c.h.b16 %v11580
    %v11753 = vunpack.c.l.b16 %v11581
    %v11754 = vunpack.c.h.b16 %v11581
    %v11755 = vunpack.c.l.b16 %v11582
    %v11756 = vunpack.c.h.b16 %v11582
    %v11757 = vunpack.c.l.b16 %v11583
    %v11758 = vunpack.c.h.b16 %v11583
    %v11759 = vunpack.c.l.b16 %v11584
    %v11760 = vunpack.c.h.b16 %v11584
    %v11761 = vunpack.c.l.b16 %v11585
    %v11762 = vunpack.c.h.b16 %v11585
    %v11763 = vunpack.c.l.b16 %v11586
    %v11764 = vunpack.c.h.b16 %v11586
    %v11765 = vunpack.c.l.b16 %v11587
    %v11766 = vunpack.c.h.b16 %v11587
    %v11767 = vunpack.c.l.b16 %v11588
    %v11768 = vunpack.c.h.b16 %v11588
    %v11769 = vunpack.c.l.b16 %v11589
    %v11770 = vunpack.c.h.b16 %v11589
    %v11771 = vunpack.c.l.b16 %v11590
    %v11772 = vunpack.c.h.b16 %v11590
    %v11773 = vunpack.c.l.b16 %v11591
    %v11774 = vunpack.c.h.b16 %v11591
    %v11775 = vunpack.c.l.b16 %v11592
    %v11776 = vunpack.c.h.b16 %v11592
    %v11777 = vunpack.c.l.b16 %v11593
    %v11778 = vunpack.c.h.b16 %v11593
    %v11779 = vunpack.c.l.b16 %v11594
    %v11780 = vunpack.c.h.b16 %v11594
    %v11781 = vunpack.c.l.b16 %v11595
    %v11782 = vunpack.c.h.b16 %v11595
    %v11783 = vunpack.c.l.b16 %v11596
    %v11784 = vunpack.c.h.b16 %v11596
    %v11785 = vunpack.c.l.b16 %v11597
    %v11786 = vunpack.c.h.b16 %v11597
    %v11787 = vunpack.c.l.b16 %v11598
    %v11788 = vunpack.c.h.b16 %v11598
    %v11789 = vunpack.c.l.b16 %v11599
    %v11790 = vunpack.c.h.b16 %v11599
    %v11791 = vunpack.c.l.b16 %v11600
    %v11792 = vunpack.c.h.b16 %v11600
    %v11793 = vpack.c.b16 %v11667, %v11665
    %v11794 = vpack.c.b16 %v11668, %v11666
    %v11795 = vpack.c.b16 %v11671, %v11669
    %v11796 = vpack.c.b16 %v11672, %v11670
    %v11797 = vpack.c.b16 %v11675, %v11673
    %v11798 = vpack.c.b16 %v11676, %v11674
    %v11799 = vpack.c.b16 %v11679, %v11677
    %v11800 = vpack.c.b16 %v11680, %v11678
    %v11801 = vpack.c.b16 %v11683, %v11681
    %v11802 = vpack.c.b16 %v11684, %v11682
    %v11803 = vpack.c.b16 %v11687, %v11685
    %v11804 = vpack.c.b16 %v11688, %v11686
    %v11805 = vpack.c.b16 %v11691, %v11689
    %v11806 = vpack.c.b16 %v11692, %v11690
    %v11807 = vpack.c.b16 %v11695, %v11693
    %v11808 = vpack.c.b16 %v11696, %v11694
    %v11809 = vpack.c.b16 %v11699, %v11697
    %v11810 = vpack.c.b16 %v11700, %v11698
    %v11811 = vpack.c.b16 %v11703, %v11701
    %v11812 = vpack.c.b16 %v11704, %v11702
    %v11813 = vpack.c.b16 %v11707, %v11705
    %v11814 = vpack.c.b16 %v11708, %v11706
    %v11815 = vpack.c.b16 %v11711, %v11709
    %v11816 = vpack.c.b16 %v11712, %v11710
    %v11817 = vpack.c.b16 %v11715, %v11713
    %v11818 = vpack.c.b16 %v11716, %v11714
    %v11819 = vpack.c.b16 %v11719, %v11717
    %v11820 = vpack.c.b16 %v11720, %v11718
    %v11821 = vpack.c.b16 %v11723, %v11721
    %v11822 = vpack.c.b16 %v11724, %v11722
    %v11823 = vpack.c.b16 %v11727, %v11725
    %v11824 = vpack.c.b16 %v11728, %v11726
    %v11825 = vpack.c.b16 %v11731, %v11729
    %v11826 = vpack.c.b16 %v11732, %v11730
    %v11827 = vpack.c.b16 %v11735, %v11733
    %v11828 = vpack.c.b16 %v11736, %v11734
    %v11829 = vpack.c.b16 %v11739, %v11737
    %v11830 = vpack.c.b16 %v11740, %v11738
    %v11831 = vpack.c.b16 %v11743, %v11741
    %v11832 = vpack.c.b16 %v11744, %v11742
    %v11833 = vpack.c.b16 %v11747, %v11745
    %v11834 = vpack.c.b16 %v11748, %v11746
    %v11835 = vpack.c.b16 %v11751, %v11749
    %v11836 = vpack.c.b16 %v11752, %v11750
    %v11837 = vpack.c.b16 %v11755, %v11753
    %v11838 = vpack.c.b16 %v11756, %v11754
    %v11839 = vpack.c.b16 %v11759, %v11757
    %v11840 = vpack.c.b16 %v11760, %v11758
    %v11841 = vpack.c.b16 %v11763, %v11761
    %v11842 = vpack.c.b16 %v11764, %v11762
    %v11843 = vpack.c.b16 %v11767, %v11765
    %v11844 = vpack.c.b16 %v11768, %v11766
    %v11845 = vpack.c.b16 %v11771, %v11769
    %v11846 = vpack.c.b16 %v11772, %v11770
    %v11847 = vpack.c.b16 %v11775, %v11773
    %v11848 = vpack.c.b16 %v11776, %v11774
    %v11849 = vpack.c.b16 %v11779, %v11777
    %v11850 = vpack.c.b16 %v11780, %v11778
    %v11851 = vpack.c.b16 %v11783, %v11781
    %v11852 = vpack.c.b16 %v11784, %v11782
    %v11853 = vpack.c.b16 %v11787, %v11785
    %v11854 = vpack.c.b16 %v11788, %v11786
    %v11855 = vpack.c.b16 %v11791, %v11789
    %v11856 = vpack.c.b16 %v11792, %v11790
    %11921 = vmatprep.subr.bf16.mxu0 %v11794
    %11922 = vmatpush1.bf16.msra.mxu0 %v11793
    %11923 = vmatprep.subr.bf16.mxu0 %v11796
    %11924 = vmatpush1.bf16.msra.mxu0 %v11795
    %11925 = vmatprep.subr.bf16.mxu0 %v11798
    %11926 = vmatpush1.bf16.msra.mxu0 %v11797
    %11927 = vmatprep.subr.bf16.mxu0 %v11800
    %11928 = vmatpush1.bf16.msra.mxu0 %v11799
    %11929 = vmatprep.subr.bf16.mxu0 %v11802
    %11930 = vmatpush1.bf16.msra.mxu0 %v11801
    %11931 = vmatprep.subr.bf16.mxu0 %v11804
    %11932 = vmatpush1.bf16.msra.mxu0 %v11803
    %11933 = vmatprep.subr.bf16.mxu0 %v11806
    %11934 = vmatpush1.bf16.msra.mxu0 %v11805
    %11935 = vmatprep.subr.bf16.mxu0 %v11808
    %11936 = vmatpush1.bf16.msra.mxu0 %v11807
    %11937 = vmatprep.subr.bf16.mxu0 %v11810
    %11938 = vmatpush1.bf16.msra.mxu0 %v11809
    %11939 = vmatprep.subr.bf16.mxu0 %v11812
    %11940 = vmatpush1.bf16.msra.mxu0 %v11811
    %11941 = vmatprep.subr.bf16.mxu0 %v11814
    %11942 = vmatpush1.bf16.msra.mxu0 %v11813
    %11943 = vmatprep.subr.bf16.mxu0 %v11816
    %11944 = vmatpush1.bf16.msra.mxu0 %v11815
    %11945 = vmatprep.subr.bf16.mxu0 %v11818
    %11946 = vmatpush1.bf16.msra.mxu0 %v11817
    %11947 = vmatprep.subr.bf16.mxu0 %v11820
    %11948 = vmatpush1.bf16.msra.mxu0 %v11819
    %11949 = vmatprep.subr.bf16.mxu0 %v11822
    %11950 = vmatpush1.bf16.msra.mxu0 %v11821
    %11951 = vmatprep.subr.bf16.mxu0 %v11824
    %11952 = vmatpush1.bf16.msra.mxu0 %v11823
    %11953 = vmatprep.mubr.bf16.mxu0 %v11533
    %11954 = vmatmul.mubr.bf16.gmra.mrb[0].mxu0 %v11532
    %v11955 = vpop.f32.mrb[0].mxu0
    %v11956 = vadd.f32 0.0, %v11955
    %v11957 = vpop.f32.mrb[0].mxu0
    %v11958 = vadd.f32 0.0, %v11957
    %v11959 = vpop.f32.mrb[0].mxu0
    %v11960 = vpop.f32.mrb[0].mxu0
    %11961 = vdwg.mxu0
    %11962 = vmatprep.subr.bf16.mxu0 %v11826
    %11963 = vmatpush1.bf16.msra.mxu0 %v11825
    %11964 = vmatprep.subr.bf16.mxu0 %v11828
    %11965 = vmatpush1.bf16.msra.mxu0 %v11827
    %11966 = vmatprep.subr.bf16.mxu0 %v11830
    %11967 = vmatpush1.bf16.msra.mxu0 %v11829
    %11968 = vmatprep.subr.bf16.mxu0 %v11832
    %11969 = vmatpush1.bf16.msra.mxu0 %v11831
    %11970 = vmatprep.subr.bf16.mxu0 %v11834
    %11971 = vmatpush1.bf16.msra.mxu0 %v11833
    %11972 = vmatprep.subr.bf16.mxu0 %v11836
    %11973 = vmatpush1.bf16.msra.mxu0 %v11835
    %11974 = vmatprep.subr.bf16.mxu0 %v11838
    %11975 = vmatpush1.bf16.msra.mxu0 %v11837
    %11976 = vmatprep.subr.bf16.mxu0 %v11840
    %11977 = vmatpush1.bf16.msra.mxu0 %v11839
    %11978 = vmatprep.subr.bf16.mxu0 %v11842
    %11979 = vmatpush1.bf16.msra.mxu0 %v11841
    %11980 = vmatprep.subr.bf16.mxu0 %v11844
    %11981 = vmatpush1.bf16.msra.mxu0 %v11843
    %11982 = vmatprep.subr.bf16.mxu0 %v11846
    %11983 = vmatpush1.bf16.msra.mxu0 %v11845
    %11984 = vmatprep.subr.bf16.mxu0 %v11848
    %11985 = vmatpush1.bf16.msra.mxu0 %v11847
    %11986 = vmatprep.subr.bf16.mxu0 %v11850
    %11987 = vmatpush1.bf16.msra.mxu0 %v11849
    %11988 = vmatprep.subr.bf16.mxu0 %v11852
    %11989 = vmatpush1.bf16.msra.mxu0 %v11851
    %11990 = vmatprep.subr.bf16.mxu0 %v11854
    %11991 = vmatpush1.bf16.msra.mxu0 %v11853
    %11992 = vmatprep.subr.bf16.mxu0 %v11856
    %11993 = vmatpush1.bf16.msra.mxu0 %v11855
    %11994 = vmatprep.mubr.bf16.mxu0 %v11535
    %11995 = vmatmul.mubr.bf16.gmra.mrb[0].mxu0 %v11534
    %v11996 = vpop.f32.mrb[0].mxu0
    %v11997 = vadd.f32 %v11956, %v11996
    %v11998 = vpop.f32.mrb[0].mxu0
    %v11999 = vadd.f32 %v11958, %v11998
    %v12000 = vpop.f32.mrb[0].mxu0
    %v12001 = vpop.f32.mrb[0].mxu0
    %12002 = vdwg.mxu0
    %v12003 = vadd.f32 %v11443, %v11997
    %v12004 = vadd.f32 %v11444, %v11999
    %v12005 = vld [vmem:[%s16] sm:$0x3]
    %v12007 = vlaneseq
    %v12008 = vshrl.u32 %v12007, 7
    %v12009 = vsub.s32 0, %v12008
    %v12010 = vrot.slane %v12005, %v12009
    %v12011 = vlaneseq
    %v12012 = vshrl.u32 %v12011, 7
    %v12013 = vsub.s32 1, %v12012
    %v12014 = vrot.slane %v12005, %v12013
    %v12017 = vadd.f32 %v12003, %v12010
    %v12018 = vadd.f32 %v12004, %v12014
    %vm12019 = vcmp.gt.f32.partialorder %v12017, 0.0
    %vm12020 = vcmp.gt.f32.partialorder %v12018, 0.0
    %v12021 = vmul.f32 %v12017, 0.2
    %v12022 = vmul.f32 %v12018, 0.2
    %v12023 = vsel %vm12019, %v12017, %v12021
    %v12024 = vsel %vm12020, %v12018, %v12022
    %v12025 = vpack.c.bf16 %v12023, %v12023
    %v12026 = vpack.c.bf16 %v12024, %v12024
    %v12027 = vld [vmem:[#allocation20] sm:$0xff]
    %v12028 = vld [vmem:[#allocation20 + $0x8] sm:$0xff]
    %v12029 = vld [vmem:[#allocation20 + $0x10] sm:$0xff]
    %v12030 = vld [vmem:[#allocation20 + $0x18] sm:$0xff]
    %v12031 = vld [vmem:[#allocation20 + $0x20] sm:$0xff]
    %v12032 = vld [vmem:[#allocation20 + $0x28] sm:$0xff]
    %v12033 = vld [vmem:[#allocation20 + $0x30] sm:$0xff]
    %v12034 = vld [vmem:[#allocation20 + $0x38] sm:$0xff]
    %v12035 = vld [vmem:[#allocation20 + $0x40] sm:$0xff]
    %v12036 = vld [vmem:[#allocation20 + $0x48] sm:$0xff]
    %v12037 = vld [vmem:[#allocation20 + $0x50] sm:$0xff]
    %v12038 = vld [vmem:[#allocation20 + $0x58] sm:$0xff]
    %v12039 = vld [vmem:[#allocation20 + $0x60] sm:$0xff]
    %v12040 = vld [vmem:[#allocation20 + $0x68] sm:$0xff]
    %v12041 = vld [vmem:[#allocation20 + $0x70] sm:$0xff]
    %v12042 = vld [vmem:[#allocation20 + $0x78] sm:$0xff]
    %v12043 = vld [vmem:[#allocation20 + $0x80] sm:$0xff]
    %v12044 = vld [vmem:[#allocation20 + $0x88] sm:$0xff]
    %v12045 = vld [vmem:[#allocation20 + $0x90] sm:$0xff]
    %v12046 = vld [vmem:[#allocation20 + $0x98] sm:$0xff]
    %v12047 = vld [vmem:[#allocation20 + $0xa0] sm:$0xff]
    %v12048 = vld [vmem:[#allocation20 + $0xa8] sm:$0xff]
    %v12049 = vld [vmem:[#allocation20 + $0xb0] sm:$0xff]
    %v12050 = vld [vmem:[#allocation20 + $0xb8] sm:$0xff]
    %v12051 = vld [vmem:[#allocation20 + $0xc0] sm:$0xff]
    %v12052 = vld [vmem:[#allocation20 + $0xc8] sm:$0xff]
    %v12053 = vld [vmem:[#allocation20 + $0xd0] sm:$0xff]
    %v12054 = vld [vmem:[#allocation20 + $0xd8] sm:$0xff]
    %v12055 = vld [vmem:[#allocation20 + $0xe0] sm:$0xff]
    %v12056 = vld [vmem:[#allocation20 + $0xe8] sm:$0xff]
    %v12057 = vld [vmem:[#allocation20 + $0xf0] sm:$0xff]
    %v12058 = vld [vmem:[#allocation20 + $0xf8] sm:$0xff]
    %v12091 = vunpack.c.l.b16 %v12027
    %v12092 = vunpack.c.h.b16 %v12027
    %v12093 = vunpack.c.l.b16 %v12028
    %v12094 = vunpack.c.h.b16 %v12028
    %v12095 = vunpack.c.l.b16 %v12029
    %v12096 = vunpack.c.h.b16 %v12029
    %v12097 = vunpack.c.l.b16 %v12030
    %v12098 = vunpack.c.h.b16 %v12030
    %v12099 = vunpack.c.l.b16 %v12031
    %v12100 = vunpack.c.h.b16 %v12031
    %v12101 = vunpack.c.l.b16 %v12032
    %v12102 = vunpack.c.h.b16 %v12032
    %v12103 = vunpack.c.l.b16 %v12033
    %v12104 = vunpack.c.h.b16 %v12033
    %v12105 = vunpack.c.l.b16 %v12034
    %v12106 = vunpack.c.h.b16 %v12034
    %v12107 = vunpack.c.l.b16 %v12035
    %v12108 = vunpack.c.h.b16 %v12035
    %v12109 = vunpack.c.l.b16 %v12036
    %v12110 = vunpack.c.h.b16 %v12036
    %v12111 = vunpack.c.l.b16 %v12037
    %v12112 = vunpack.c.h.b16 %v12037
    %v12113 = vunpack.c.l.b16 %v12038
    %v12114 = vunpack.c.h.b16 %v12038
    %v12115 = vunpack.c.l.b16 %v12039
    %v12116 = vunpack.c.h.b16 %v12039
    %v12117 = vunpack.c.l.b16 %v12040
    %v12118 = vunpack.c.h.b16 %v12040
    %v12119 = vunpack.c.l.b16 %v12041
    %v12120 = vunpack.c.h.b16 %v12041
    %v12121 = vunpack.c.l.b16 %v12042
    %v12122 = vunpack.c.h.b16 %v12042
    %v12123 = vunpack.c.l.b16 %v12043
    %v12124 = vunpack.c.h.b16 %v12043
    %v12125 = vunpack.c.l.b16 %v12044
    %v12126 = vunpack.c.h.b16 %v12044
    %v12127 = vunpack.c.l.b16 %v12045
    %v12128 = vunpack.c.h.b16 %v12045
    %v12129 = vunpack.c.l.b16 %v12046
    %v12130 = vunpack.c.h.b16 %v12046
    %v12131 = vunpack.c.l.b16 %v12047
    %v12132 = vunpack.c.h.b16 %v12047
    %v12133 = vunpack.c.l.b16 %v12048
    %v12134 = vunpack.c.h.b16 %v12048
    %v12135 = vunpack.c.l.b16 %v12049
    %v12136 = vunpack.c.h.b16 %v12049
    %v12137 = vunpack.c.l.b16 %v12050
    %v12138 = vunpack.c.h.b16 %v12050
    %v12139 = vunpack.c.l.b16 %v12051
    %v12140 = vunpack.c.h.b16 %v12051
    %v12141 = vunpack.c.l.b16 %v12052
    %v12142 = vunpack.c.h.b16 %v12052
    %v12143 = vunpack.c.l.b16 %v12053
    %v12144 = vunpack.c.h.b16 %v12053
    %v12145 = vunpack.c.l.b16 %v12054
    %v12146 = vunpack.c.h.b16 %v12054
    %v12147 = vunpack.c.l.b16 %v12055
    %v12148 = vunpack.c.h.b16 %v12055
    %v12149 = vunpack.c.l.b16 %v12056
    %v12150 = vunpack.c.h.b16 %v12056
    %v12151 = vunpack.c.l.b16 %v12057
    %v12152 = vunpack.c.h.b16 %v12057
    %v12153 = vunpack.c.l.b16 %v12058
    %v12154 = vunpack.c.h.b16 %v12058
    %v12155 = vpack.c.b16 %v12093, %v12091
    %v12156 = vpack.c.b16 %v12094, %v12092
    %v12157 = vpack.c.b16 %v12097, %v12095
    %v12158 = vpack.c.b16 %v12098, %v12096
    %v12159 = vpack.c.b16 %v12101, %v12099
    %v12160 = vpack.c.b16 %v12102, %v12100
    %v12161 = vpack.c.b16 %v12105, %v12103
    %v12162 = vpack.c.b16 %v12106, %v12104
    %v12163 = vpack.c.b16 %v12109, %v12107
    %v12164 = vpack.c.b16 %v12110, %v12108
    %v12165 = vpack.c.b16 %v12113, %v12111
    %v12166 = vpack.c.b16 %v12114, %v12112
    %v12167 = vpack.c.b16 %v12117, %v12115
    %v12168 = vpack.c.b16 %v12118, %v12116
    %v12169 = vpack.c.b16 %v12121, %v12119
    %v12170 = vpack.c.b16 %v12122, %v12120
    %v12171 = vpack.c.b16 %v12125, %v12123
    %v12172 = vpack.c.b16 %v12126, %v12124
    %v12173 = vpack.c.b16 %v12129, %v12127
    %v12174 = vpack.c.b16 %v12130, %v12128
    %v12175 = vpack.c.b16 %v12133, %v12131
    %v12176 = vpack.c.b16 %v12134, %v12132
    %v12177 = vpack.c.b16 %v12137, %v12135
    %v12178 = vpack.c.b16 %v12138, %v12136
    %v12179 = vpack.c.b16 %v12141, %v12139
    %v12180 = vpack.c.b16 %v12142, %v12140
    %v12181 = vpack.c.b16 %v12145, %v12143
    %v12182 = vpack.c.b16 %v12146, %v12144
    %v12183 = vpack.c.b16 %v12149, %v12147
    %v12184 = vpack.c.b16 %v12150, %v12148
    %v12185 = vpack.c.b16 %v12153, %v12151
    %v12186 = vpack.c.b16 %v12154, %v12152
    %12219 = vmatprep.subr.bf16.mxu0 %v12156
    %12220 = vmatpush1.bf16.msra.mxu0 %v12155
    %12221 = vmatprep.subr.bf16.mxu0 %v12158
    %12222 = vmatpush1.bf16.msra.mxu0 %v12157
    %12223 = vmatprep.subr.bf16.mxu0 %v12160
    %12224 = vmatpush1.bf16.msra.mxu0 %v12159
    %12225 = vmatprep.subr.bf16.mxu0 %v12162
    %12226 = vmatpush1.bf16.msra.mxu0 %v12161
    %12227 = vmatprep.subr.bf16.mxu0 %v12164
    %12228 = vmatpush1.bf16.msra.mxu0 %v12163
    %12229 = vmatprep.subr.bf16.mxu0 %v12166
    %12230 = vmatpush1.bf16.msra.mxu0 %v12165
    %12231 = vmatprep.subr.bf16.mxu0 %v12168
    %12232 = vmatpush1.bf16.msra.mxu0 %v12167
    %12233 = vmatprep.subr.bf16.mxu0 %v12170
    %12234 = vmatpush1.bf16.msra.mxu0 %v12169
    %12235 = vmatprep.subr.bf16.mxu0 %v12172
    %12236 = vmatpush1.bf16.msra.mxu0 %v12171
    %12237 = vmatprep.subr.bf16.mxu0 %v12174
    %12238 = vmatpush1.bf16.msra.mxu0 %v12173
    %12239 = vmatprep.subr.bf16.mxu0 %v12176
    %12240 = vmatpush1.bf16.msra.mxu0 %v12175
    %12241 = vmatprep.subr.bf16.mxu0 %v12178
    %12242 = vmatpush1.bf16.msra.mxu0 %v12177
    %12243 = vmatprep.subr.bf16.mxu0 %v12180
    %12244 = vmatpush1.bf16.msra.mxu0 %v12179
    %12245 = vmatprep.subr.bf16.mxu0 %v12182
    %12246 = vmatpush1.bf16.msra.mxu0 %v12181
    %12247 = vmatprep.subr.bf16.mxu0 %v12184
    %12248 = vmatpush1.bf16.msra.mxu0 %v12183
    %12249 = vmatprep.subr.bf16.mxu0 %v12186
    %12250 = vmatpush1.bf16.msra.mxu0 %v12185
    %12251 = vmatprep.mubr.bf16.mxu0 %v12026
    %12252 = vmatmul.mubr.bf16.gmra.mrb[0].mxu0 %v12025
    %v12253 = vpop.f32.mrb[0].mxu0
    %v12254 = vadd.f32 0.0, %v12253
    %v12255 = vpop.f32.mrb[0].mxu0
    %v12256 = vadd.f32 0.0, %v12255
    %v12257 = vpop.f32.mrb[0].mxu0
    %v12258 = vpop.f32.mrb[0].mxu0
    %12259 = vdwg.mxu0
    %v12260 = vpack.c.bf16 %v12254, %v12254
    %v12261 = vpack.c.bf16 %v12256, %v12256
    %v12262 = vld [vmem:[%s18] sm:$0x1]
    %vm12263 = vcmask 64512
    %v12265 = vsel %vm12263, %v12262, 0
    %vm12267 = vcmask 1043456
    %v12269 = vsel %vm12267, %v12260, 0
    %v12272 = vsel %vm12267, %v12261, 0
    %12274 = vmatprep.subr.bf16.mxu0 %v12272
    %12275 = vmatpush1.bf16.msra.mxu0 %v12269
    %12276 = vmatprep.subr.bf16.mxu0 0
    %12277 = vmatpush1.bf16.msra.mxu0 0
    %12278 = vmatprep.subr.bf16.mxu0 0
    %12279 = vmatpush1.bf16.msra.mxu0 0
    %12280 = vmatprep.subr.bf16.mxu0 0
    %12281 = vmatpush1.bf16.msra.mxu0 0
    %12282 = vmatprep.subr.bf16.mxu0 0
    %12283 = vmatpush1.bf16.msra.mxu0 0
    %12284 = vmatprep.subr.bf16.mxu0 0
    %12285 = vmatpush1.bf16.msra.mxu0 0
    %12286 = vmatprep.subr.bf16.mxu0 0
    %12287 = vmatpush1.bf16.msra.mxu0 0
    %12288 = vmatprep.subr.bf16.mxu0 0
    %12289 = vmatpush1.bf16.msra.mxu0 0
    %12290 = vmatprep.subr.bf16.mxu0 0
    %12291 = vmatpush1.bf16.msra.mxu0 0
    %12292 = vmatprep.subr.bf16.mxu0 0
    %12293 = vmatpush1.bf16.msra.mxu0 0
    %12294 = vmatprep.subr.bf16.mxu0 0
    %12295 = vmatpush1.bf16.msra.mxu0 0
    %12296 = vmatprep.subr.bf16.mxu0 0
    %12297 = vmatpush1.bf16.msra.mxu0 0
    %12298 = vmatprep.subr.bf16.mxu0 0
    %12299 = vmatpush1.bf16.msra.mxu0 0
    %12300 = vmatprep.subr.bf16.mxu0 0
    %12301 = vmatpush1.bf16.msra.mxu0 0
    %12302 = vmatprep.subr.bf16.mxu0 0
    %12303 = vmatpush1.bf16.msra.mxu0 0
    %12304 = vmatprep.subr.bf16.mxu0 0
    %12305 = vmatpush1.bf16.msra.mxu0 0
    %12306 = vmatprep.mubr.bf16.mxu0 0
    %12307 = vmatmul.mubr.bf16.gmra.mrb[0].mxu0 %v12265
    %v12308 = vpop.f32.mrb[0].mxu0
    %v12309 = vadd.f32 0.0, %v12308
    %v12310 = vpop.f32.mrb[0].mxu0
    %v12311 = vadd.f32 0.0, %v12310
    %v12312 = vpop.f32.mrb[0].mxu0
    %v12313 = vpop.f32.mrb[0].mxu0
    %12314 = vdwg.mxu0
    %v12315 = vpack.c.bf16 %v12309, %v12309
    %v12316 = vpack.c.bf16 %v12311, %v12311
    %v12317 = vld [vmem:[%s19] sm:$0xf]
    %v12318 = vld [vmem:[%s19 + $0x4] sm:$0xf]
    %v12319 = vld [vmem:[%s19 + $0x8] sm:$0xf]
    %v12320 = vld [vmem:[%s19 + $0xc] sm:$0xf]
    %v12321 = vld [vmem:[%s19 + $0x10] sm:$0xf]
    %v12322 = vld [vmem:[%s19 + $0x14] sm:$0xf]
    %v12323 = vld [vmem:[%s19 + $0x18] sm:$0xf]
    %v12324 = vld [vmem:[%s19 + $0x1c] sm:$0xf]
    %v12325 = vld [vmem:[%s19 + $0x20] sm:$0xf]
    %v12326 = vld [vmem:[%s19 + $0x24] sm:$0xf]
    %v12327 = vld [vmem:[%s19 + $0x28] sm:$0xf]
    %v12328 = vld [vmem:[%s19 + $0x2c] sm:$0xf]
    %v12329 = vld [vmem:[%s19 + $0x30] sm:$0xf]
    %v12330 = vld [vmem:[%s19 + $0x34] sm:$0xf]
    %v12331 = vld [vmem:[%s19 + $0x38] sm:$0xf]
    %v12332 = vld [vmem:[%s19 + $0x3c] sm:$0xf]
    %v12333 = vld [vmem:[%s19 + $0x40] sm:$0xf]
    %v12334 = vld [vmem:[%s19 + $0x44] sm:$0xf]
    %v12335 = vld [vmem:[%s19 + $0x48] sm:$0xf]
    %v12336 = vld [vmem:[%s19 + $0x4c] sm:$0xf]
    %v12337 = vld [vmem:[%s19 + $0x50] sm:$0xf]
    %v12338 = vld [vmem:[%s19 + $0x54] sm:$0xf]
    %v12339 = vld [vmem:[%s19 + $0x58] sm:$0xf]
    %v12340 = vld [vmem:[%s19 + $0x5c] sm:$0xf]
    %v12341 = vld [vmem:[%s19 + $0x60] sm:$0xf]
    %v12342 = vld [vmem:[%s19 + $0x64] sm:$0xf]
    %v12343 = vld [vmem:[%s19 + $0x68] sm:$0xf]
    %v12344 = vld [vmem:[%s19 + $0x6c] sm:$0xf]
    %v12345 = vld [vmem:[%s19 + $0x70] sm:$0xf]
    %v12346 = vld [vmem:[%s19 + $0x74] sm:$0xf]
    %v12347 = vld [vmem:[%s19 + $0x78] sm:$0xf]
    %v12348 = vld [vmem:[%s19 + $0x7c] sm:$0xf]
    %s12349 = scalar_lea.vmem %s18, 1
    %v12350 = vld [vmem:[%s12349] sm:$0x1]
    %v12352 = vsel %vm12263, %v12350, 0
    %12354 = vmatprep.subr.bf16.mxu0 %v12272
    %12355 = vmatpush1.bf16.msra.mxu0 %v12269
    %12356 = vmatprep.subr.bf16.mxu0 0
    %12357 = vmatpush1.bf16.msra.mxu0 0
    %12358 = vmatprep.subr.bf16.mxu0 0
    %12359 = vmatpush1.bf16.msra.mxu0 0
    %12360 = vmatprep.subr.bf16.mxu0 0
    %12361 = vmatpush1.bf16.msra.mxu0 0
    %12362 = vmatprep.subr.bf16.mxu0 0
    %12363 = vmatpush1.bf16.msra.mxu0 0
    %12364 = vmatprep.subr.bf16.mxu0 0
    %12365 = vmatpush1.bf16.msra.mxu0 0
    %12366 = vmatprep.subr.bf16.mxu0 0
    %12367 = vmatpush1.bf16.msra.mxu0 0
    %12368 = vmatprep.subr.bf16.mxu0 0
    %12369 = vmatpush1.bf16.msra.mxu0 0
    %12370 = vmatprep.subr.bf16.mxu0 0
    %12371 = vmatpush1.bf16.msra.mxu0 0
    %12372 = vmatprep.subr.bf16.mxu0 0
    %12373 = vmatpush1.bf16.msra.mxu0 0
    %12374 = vmatprep.subr.bf16.mxu0 0
    %12375 = vmatpush1.bf16.msra.mxu0 0
    %12376 = vmatprep.subr.bf16.mxu0 0
    %12377 = vmatpush1.bf16.msra.mxu0 0
    %12378 = vmatprep.subr.bf16.mxu0 0
    %12379 = vmatpush1.bf16.msra.mxu0 0
    %12380 = vmatprep.subr.bf16.mxu0 0
    %12381 = vmatpush1.bf16.msra.mxu0 0
    %12382 = vmatprep.subr.bf16.mxu0 0
    %12383 = vmatpush1.bf16.msra.mxu0 0
    %12384 = vmatprep.subr.bf16.mxu0 0
    %12385 = vmatpush1.bf16.msra.mxu0 0
    %12386 = vmatprep.mubr.bf16.mxu0 0
    %12387 = vmatmul.mubr.bf16.gmra.mrb[0].mxu0 %v12352
    %v12388 = vpop.f32.mrb[0].mxu0
    %v12389 = vadd.f32 0.0, %v12388
    %v12390 = vpop.f32.mrb[0].mxu0
    %v12391 = vadd.f32 0.0, %v12390
    %v12392 = vpop.f32.mrb[0].mxu0
    %v12393 = vpop.f32.mrb[0].mxu0
    %12394 = vdwg.mxu0
    %v12395 = vpack.c.bf16 %v12389, %v12389
    %v12396 = vpack.c.bf16 %v12391, %v12391
    %s12397 = scalar_lea.vmem %s19, 128
    %v12398 = vld [vmem:[%s12397] sm:$0xf]
    %v12399 = vld [vmem:[%s12397 + $0x4] sm:$0xf]
    %v12400 = vld [vmem:[%s12397 + $0x8] sm:$0xf]
    %v12401 = vld [vmem:[%s12397 + $0xc] sm:$0xf]
    %v12402 = vld [vmem:[%s12397 + $0x10] sm:$0xf]
    %v12403 = vld [vmem:[%s12397 + $0x14] sm:$0xf]
    %v12404 = vld [vmem:[%s12397 + $0x18] sm:$0xf]
    %v12405 = vld [vmem:[%s12397 + $0x1c] sm:$0xf]
    %v12406 = vld [vmem:[%s12397 + $0x20] sm:$0xf]
    %v12407 = vld [vmem:[%s12397 + $0x24] sm:$0xf]
    %v12408 = vld [vmem:[%s12397 + $0x28] sm:$0xf]
    %v12409 = vld [vmem:[%s12397 + $0x2c] sm:$0xf]
    %v12410 = vld [vmem:[%s12397 + $0x30] sm:$0xf]
    %v12411 = vld [vmem:[%s12397 + $0x34] sm:$0xf]
    %v12412 = vld [vmem:[%s12397 + $0x38] sm:$0xf]
    %v12413 = vld [vmem:[%s12397 + $0x3c] sm:$0xf]
    %v12414 = vld [vmem:[%s12397 + $0x40] sm:$0xf]
    %v12415 = vld [vmem:[%s12397 + $0x44] sm:$0xf]
    %v12416 = vld [vmem:[%s12397 + $0x48] sm:$0xf]
    %v12417 = vld [vmem:[%s12397 + $0x4c] sm:$0xf]
    %v12418 = vld [vmem:[%s12397 + $0x50] sm:$0xf]
    %v12419 = vld [vmem:[%s12397 + $0x54] sm:$0xf]
    %v12420 = vld [vmem:[%s12397 + $0x58] sm:$0xf]
    %v12421 = vld [vmem:[%s12397 + $0x5c] sm:$0xf]
    %v12422 = vld [vmem:[%s12397 + $0x60] sm:$0xf]
    %v12423 = vld [vmem:[%s12397 + $0x64] sm:$0xf]
    %v12424 = vld [vmem:[%s12397 + $0x68] sm:$0xf]
    %v12425 = vld [vmem:[%s12397 + $0x6c] sm:$0xf]
    %v12426 = vld [vmem:[%s12397 + $0x70] sm:$0xf]
    %v12427 = vld [vmem:[%s12397 + $0x74] sm:$0xf]
    %v12428 = vld [vmem:[%s12397 + $0x78] sm:$0xf]
    %v12429 = vld [vmem:[%s12397 + $0x7c] sm:$0xf]
    %v12462 = vunpack.c.l.b16 %v12398
    %v12463 = vunpack.c.l.b16 %v12399
    %v12464 = vunpack.c.l.b16 %v12400
    %v12465 = vunpack.c.l.b16 %v12401
    %v12466 = vunpack.c.l.b16 %v12402
    %v12467 = vunpack.c.l.b16 %v12403
    %v12468 = vunpack.c.l.b16 %v12404
    %v12469 = vunpack.c.l.b16 %v12405
    %v12470 = vunpack.c.l.b16 %v12406
    %v12471 = vunpack.c.l.b16 %v12407
    %v12472 = vunpack.c.l.b16 %v12408
    %v12473 = vunpack.c.l.b16 %v12409
    %v12474 = vunpack.c.l.b16 %v12410
    %v12475 = vunpack.c.l.b16 %v12411
    %v12476 = vunpack.c.l.b16 %v12412
    %v12477 = vunpack.c.l.b16 %v12413
    %v12478 = vunpack.c.l.b16 %v12414
    %v12479 = vunpack.c.l.b16 %v12415
    %v12480 = vunpack.c.l.b16 %v12416
    %v12481 = vunpack.c.l.b16 %v12417
    %v12482 = vunpack.c.l.b16 %v12418
    %v12483 = vunpack.c.l.b16 %v12419
    %v12484 = vunpack.c.l.b16 %v12420
    %v12485 = vunpack.c.l.b16 %v12421
    %v12486 = vunpack.c.l.b16 %v12422
    %v12487 = vunpack.c.l.b16 %v12423
    %v12488 = vunpack.c.l.b16 %v12424
    %v12489 = vunpack.c.l.b16 %v12425
    %v12490 = vunpack.c.l.b16 %v12426
    %v12491 = vunpack.c.l.b16 %v12427
    %v12492 = vunpack.c.l.b16 %v12428
    %v12493 = vunpack.c.l.b16 %v12429
    %v12494 = vpack.c.b16 %v12463, %v12462
    %v12495 = vpack.c.b16 %v12465, %v12464
    %v12496 = vpack.c.b16 %v12467, %v12466
    %v12497 = vpack.c.b16 %v12469, %v12468
    %v12498 = vpack.c.b16 %v12471, %v12470
    %v12499 = vpack.c.b16 %v12473, %v12472
    %v12500 = vpack.c.b16 %v12475, %v12474
    %v12501 = vpack.c.b16 %v12477, %v12476
    %v12502 = vpack.c.b16 %v12479, %v12478
    %v12503 = vpack.c.b16 %v12481, %v12480
    %v12504 = vpack.c.b16 %v12483, %v12482
    %v12505 = vpack.c.b16 %v12485, %v12484
    %v12506 = vpack.c.b16 %v12487, %v12486
    %v12507 = vpack.c.b16 %v12489, %v12488
    %v12508 = vpack.c.b16 %v12491, %v12490
    %v12509 = vpack.c.b16 %v12493, %v12492
    %12526 = vmatprep.subr.bf16.mxu0 0
    %12527 = vmatpush1.bf16.msra.mxu0 %v12494
    %12528 = vmatprep.subr.bf16.mxu0 0
    %12529 = vmatpush1.bf16.msra.mxu0 %v12495
    %12530 = vmatprep.subr.bf16.mxu0 0
    %12531 = vmatpush1.bf16.msra.mxu0 %v12496
    %12532 = vmatprep.subr.bf16.mxu0 0
    %12533 = vmatpush1.bf16.msra.mxu0 %v12497
    %12534 = vmatprep.subr.bf16.mxu0 0
    %12535 = vmatpush1.bf16.msra.mxu0 %v12498
    %12536 = vmatprep.subr.bf16.mxu0 0
    %12537 = vmatpush1.bf16.msra.mxu0 %v12499
    %12538 = vmatprep.subr.bf16.mxu0 0
    %12539 = vmatpush1.bf16.msra.mxu0 %v12500
    %12540 = vmatprep.subr.bf16.mxu0 0
    %12541 = vmatpush1.bf16.msra.mxu0 %v12501
    %12542 = vmatprep.subr.bf16.mxu0 0
    %12543 = vmatpush1.bf16.msra.mxu0 %v12502
    %12544 = vmatprep.subr.bf16.mxu0 0
    %12545 = vmatpush1.bf16.msra.mxu0 %v12503
    %12546 = vmatprep.subr.bf16.mxu0 0
    %12547 = vmatpush1.bf16.msra.mxu0 %v12504
    %12548 = vmatprep.subr.bf16.mxu0 0
    %12549 = vmatpush1.bf16.msra.mxu0 %v12505
    %12550 = vmatprep.subr.bf16.mxu0 0
    %12551 = vmatpush1.bf16.msra.mxu0 %v12506
    %12552 = vmatprep.subr.bf16.mxu0 0
    %12553 = vmatpush1.bf16.msra.mxu0 %v12507
    %12554 = vmatprep.subr.bf16.mxu0 0
    %12555 = vmatpush1.bf16.msra.mxu0 %v12508
    %12556 = vmatprep.subr.bf16.mxu0 0
    %12557 = vmatpush1.bf16.msra.mxu0 %v12509
    %12558 = vmatprep.mubr.bf16.mxu0 %v12396
    %12559 = vmatmul.mubr.bf16.gmra.mrb[0].mxu0 %v12395
    %v12560 = vpop.f32.mrb[0].mxu0
    %v12561 = vadd.f32 0.0, %v12560
    %v12562 = vpop.f32.mrb[0].mxu0
    %v12563 = vpop.f32.mrb[0].mxu0
    %v12564 = vpop.f32.mrb[0].mxu0
    %12565 = vdwg.mxu0
    %v12598 = vunpack.c.l.b16 %v12317
    %v12599 = vunpack.c.l.b16 %v12318
    %v12600 = vunpack.c.l.b16 %v12319
    %v12601 = vunpack.c.l.b16 %v12320
    %v12602 = vunpack.c.l.b16 %v12321
    %v12603 = vunpack.c.l.b16 %v12322
    %v12604 = vunpack.c.l.b16 %v12323
    %v12605 = vunpack.c.l.b16 %v12324
    %v12606 = vunpack.c.l.b16 %v12325
    %v12607 = vunpack.c.l.b16 %v12326
    %v12608 = vunpack.c.l.b16 %v12327
    %v12609 = vunpack.c.l.b16 %v12328
    %v12610 = vunpack.c.l.b16 %v12329
    %v12611 = vunpack.c.l.b16 %v12330
    %v12612 = vunpack.c.l.b16 %v12331
    %v12613 = vunpack.c.l.b16 %v12332
    %v12614 = vunpack.c.l.b16 %v12333
    %v12615 = vunpack.c.l.b16 %v12334
    %v12616 = vunpack.c.l.b16 %v12335
    %v12617 = vunpack.c.l.b16 %v12336
    %v12618 = vunpack.c.l.b16 %v12337
    %v12619 = vunpack.c.l.b16 %v12338
    %v12620 = vunpack.c.l.b16 %v12339
    %v12621 = vunpack.c.l.b16 %v12340
    %v12622 = vunpack.c.l.b16 %v12341
    %v12623 = vunpack.c.l.b16 %v12342
    %v12624 = vunpack.c.l.b16 %v12343
    %v12625 = vunpack.c.l.b16 %v12344
    %v12626 = vunpack.c.l.b16 %v12345
    %v12627 = vunpack.c.l.b16 %v12346
    %v12628 = vunpack.c.l.b16 %v12347
    %v12629 = vunpack.c.l.b16 %v12348
    %v12630 = vpack.c.b16 %v12599, %v12598
    %v12631 = vpack.c.b16 %v12601, %v12600
    %v12632 = vpack.c.b16 %v12603, %v12602
    %v12633 = vpack.c.b16 %v12605, %v12604
    %v12634 = vpack.c.b16 %v12607, %v12606
    %v12635 = vpack.c.b16 %v12609, %v12608
    %v12636 = vpack.c.b16 %v12611, %v12610
    %v12637 = vpack.c.b16 %v12613, %v12612
    %v12638 = vpack.c.b16 %v12615, %v12614
    %v12639 = vpack.c.b16 %v12617, %v12616
    %v12640 = vpack.c.b16 %v12619, %v12618
    %v12641 = vpack.c.b16 %v12621, %v12620
    %v12642 = vpack.c.b16 %v12623, %v12622
    %v12643 = vpack.c.b16 %v12625, %v12624
    %v12644 = vpack.c.b16 %v12627, %v12626
    %v12645 = vpack.c.b16 %v12629, %v12628
    %12662 = vmatprep.subr.bf16.mxu0 0
    %12663 = vmatpush1.bf16.msra.mxu0 %v12630
    %12664 = vmatprep.subr.bf16.mxu0 0
    %12665 = vmatpush1.bf16.msra.mxu0 %v12631
    %12666 = vmatprep.subr.bf16.mxu0 0
    %12667 = vmatpush1.bf16.msra.mxu0 %v12632
    %12668 = vmatprep.subr.bf16.mxu0 0
    %12669 = vmatpush1.bf16.msra.mxu0 %v12633
    %12670 = vmatprep.subr.bf16.mxu0 0
    %12671 = vmatpush1.bf16.msra.mxu0 %v12634
    %12672 = vmatprep.subr.bf16.mxu0 0
    %12673 = vmatpush1.bf16.msra.mxu0 %v12635
    %12674 = vmatprep.subr.bf16.mxu0 0
    %12675 = vmatpush1.bf16.msra.mxu0 %v12636
    %12676 = vmatprep.subr.bf16.mxu0 0
    %12677 = vmatpush1.bf16.msra.mxu0 %v12637
    %12678 = vmatprep.subr.bf16.mxu0 0
    %12679 = vmatpush1.bf16.msra.mxu0 %v12638
    %12680 = vmatprep.subr.bf16.mxu0 0
    %12681 = vmatpush1.bf16.msra.mxu0 %v12639
    %12682 = vmatprep.subr.bf16.mxu0 0
    %12683 = vmatpush1.bf16.msra.mxu0 %v12640
    %12684 = vmatprep.subr.bf16.mxu0 0
    %12685 = vmatpush1.bf16.msra.mxu0 %v12641
    %12686 = vmatprep.subr.bf16.mxu0 0
    %12687 = vmatpush1.bf16.msra.mxu0 %v12642
    %12688 = vmatprep.subr.bf16.mxu0 0
    %12689 = vmatpush1.bf16.msra.mxu0 %v12643
    %12690 = vmatprep.subr.bf16.mxu0 0
    %12691 = vmatpush1.bf16.msra.mxu0 %v12644
    %12692 = vmatprep.subr.bf16.mxu0 0
    %12693 = vmatpush1.bf16.msra.mxu0 %v12645
    %12694 = vmatprep.mubr.bf16.mxu0 %v12316
    %12695 = vmatmul.mubr.bf16.gmra.mrb[0].mxu0 %v12315
    %v12696 = vpop.f32.mrb[0].mxu0
    %v12697 = vadd.f32 %v12561, %v12696
    %v12698 = vpop.f32.mrb[0].mxu0
    %v12699 = vpop.f32.mrb[0].mxu0
    %v12700 = vpop.f32.mrb[0].mxu0
    %12701 = vdwg.mxu0
    %s12702 = scalar_lea.vmem %s18, 2
    %v12703 = vld [vmem:[%s12702] sm:$0x1]
    %v12705 = vsel %vm12263, %v12703, 0
    %12707 = vmatprep.subr.bf16.mxu0 %v12272
    %12708 = vmatpush1.bf16.msra.mxu0 %v12269
    %12709 = vmatprep.subr.bf16.mxu0 0
    %12710 = vmatpush1.bf16.msra.mxu0 0
    %12711 = vmatprep.subr.bf16.mxu0 0
    %12712 = vmatpush1.bf16.msra.mxu0 0
    %12713 = vmatprep.subr.bf16.mxu0 0
    %12714 = vmatpush1.bf16.msra.mxu0 0
    %12715 = vmatprep.subr.bf16.mxu0 0
    %12716 = vmatpush1.bf16.msra.mxu0 0
    %12717 = vmatprep.subr.bf16.mxu0 0
    %12718 = vmatpush1.bf16.msra.mxu0 0
    %12719 = vmatprep.subr.bf16.mxu0 0
    %12720 = vmatpush1.bf16.msra.mxu0 0
    %12721 = vmatprep.subr.bf16.mxu0 0
    %12722 = vmatpush1.bf16.msra.mxu0 0
    %12723 = vmatprep.subr.bf16.mxu0 0
    %12724 = vmatpush1.bf16.msra.mxu0 0
    %12725 = vmatprep.subr.bf16.mxu0 0
    %12726 = vmatpush1.bf16.msra.mxu0 0
    %12727 = vmatprep.subr.bf16.mxu0 0
    %12728 = vmatpush1.bf16.msra.mxu0 0
    %12729 = vmatprep.subr.bf16.mxu0 0
    %12730 = vmatpush1.bf16.msra.mxu0 0
    %12731 = vmatprep.subr.bf16.mxu0 0
    %12732 = vmatpush1.bf16.msra.mxu0 0
    %12733 = vmatprep.subr.bf16.mxu0 0
    %12734 = vmatpush1.bf16.msra.mxu0 0
    %12735 = vmatprep.subr.bf16.mxu0 0
    %12736 = vmatpush1.bf16.msra.mxu0 0
    %12737 = vmatprep.subr.bf16.mxu0 0
    %12738 = vmatpush1.bf16.msra.mxu0 0
    %12739 = vmatprep.mubr.bf16.mxu0 0
    %12740 = vmatmul.mubr.bf16.gmra.mrb[0].mxu0 %v12705
    %v12741 = vpop.f32.mrb[0].mxu0
    %v12742 = vadd.f32 0.0, %v12741
    %v12743 = vpop.f32.mrb[0].mxu0
    %v12744 = vadd.f32 0.0, %v12743
    %v12745 = vpop.f32.mrb[0].mxu0
    %v12746 = vpop.f32.mrb[0].mxu0
    %12747 = vdwg.mxu0
    %v12748 = vpack.c.bf16 %v12742, %v12742
    %v12749 = vpack.c.bf16 %v12744, %v12744
    %s12750 = scalar_lea.vmem %s19, 256
    %v12751 = vld [vmem:[%s12750] sm:$0xf]
    %v12752 = vld [vmem:[%s12750 + $0x4] sm:$0xf]
    %v12753 = vld [vmem:[%s12750 + $0x8] sm:$0xf]
    %v12754 = vld [vmem:[%s12750 + $0xc] sm:$0xf]
    %v12755 = vld [vmem:[%s12750 + $0x10] sm:$0xf]
    %v12756 = vld [vmem:[%s12750 + $0x14] sm:$0xf]
    %v12757 = vld [vmem:[%s12750 + $0x18] sm:$0xf]
    %v12758 = vld [vmem:[%s12750 + $0x1c] sm:$0xf]
    %v12759 = vld [vmem:[%s12750 + $0x20] sm:$0xf]
    %v12760 = vld [vmem:[%s12750 + $0x24] sm:$0xf]
    %v12761 = vld [vmem:[%s12750 + $0x28] sm:$0xf]
    %v12762 = vld [vmem:[%s12750 + $0x2c] sm:$0xf]
    %v12763 = vld [vmem:[%s12750 + $0x30] sm:$0xf]
    %v12764 = vld [vmem:[%s12750 + $0x34] sm:$0xf]
    %v12765 = vld [vmem:[%s12750 + $0x38] sm:$0xf]
    %v12766 = vld [vmem:[%s12750 + $0x3c] sm:$0xf]
    %v12767 = vld [vmem:[%s12750 + $0x40] sm:$0xf]
    %v12768 = vld [vmem:[%s12750 + $0x44] sm:$0xf]
    %v12769 = vld [vmem:[%s12750 + $0x48] sm:$0xf]
    %v12770 = vld [vmem:[%s12750 + $0x4c] sm:$0xf]
    %v12771 = vld [vmem:[%s12750 + $0x50] sm:$0xf]
    %v12772 = vld [vmem:[%s12750 + $0x54] sm:$0xf]
    %v12773 = vld [vmem:[%s12750 + $0x58] sm:$0xf]
    %v12774 = vld [vmem:[%s12750 + $0x5c] sm:$0xf]
    %v12775 = vld [vmem:[%s12750 + $0x60] sm:$0xf]
    %v12776 = vld [vmem:[%s12750 + $0x64] sm:$0xf]
    %v12777 = vld [vmem:[%s12750 + $0x68] sm:$0xf]
    %v12778 = vld [vmem:[%s12750 + $0x6c] sm:$0xf]
    %v12779 = vld [vmem:[%s12750 + $0x70] sm:$0xf]
    %v12780 = vld [vmem:[%s12750 + $0x74] sm:$0xf]
    %v12781 = vld [vmem:[%s12750 + $0x78] sm:$0xf]
    %v12782 = vld [vmem:[%s12750 + $0x7c] sm:$0xf]
    %v12815 = vunpack.c.l.b16 %v12751
    %v12816 = vunpack.c.l.b16 %v12752
    %v12817 = vunpack.c.l.b16 %v12753
    %v12818 = vunpack.c.l.b16 %v12754
    %v12819 = vunpack.c.l.b16 %v12755
    %v12820 = vunpack.c.l.b16 %v12756
    %v12821 = vunpack.c.l.b16 %v12757
    %v12822 = vunpack.c.l.b16 %v12758
    %v12823 = vunpack.c.l.b16 %v12759
    %v12824 = vunpack.c.l.b16 %v12760
    %v12825 = vunpack.c.l.b16 %v12761
    %v12826 = vunpack.c.l.b16 %v12762
    %v12827 = vunpack.c.l.b16 %v12763
    %v12828 = vunpack.c.l.b16 %v12764
    %v12829 = vunpack.c.l.b16 %v12765
    %v12830 = vunpack.c.l.b16 %v12766
    %v12831 = vunpack.c.l.b16 %v12767
    %v12832 = vunpack.c.l.b16 %v12768
    %v12833 = vunpack.c.l.b16 %v12769
    %v12834 = vunpack.c.l.b16 %v12770
    %v12835 = vunpack.c.l.b16 %v12771
    %v12836 = vunpack.c.l.b16 %v12772
    %v12837 = vunpack.c.l.b16 %v12773
    %v12838 = vunpack.c.l.b16 %v12774
    %v12839 = vunpack.c.l.b16 %v12775
    %v12840 = vunpack.c.l.b16 %v12776
    %v12841 = vunpack.c.l.b16 %v12777
    %v12842 = vunpack.c.l.b16 %v12778
    %v12843 = vunpack.c.l.b16 %v12779
    %v12844 = vunpack.c.l.b16 %v12780
    %v12845 = vunpack.c.l.b16 %v12781
    %v12846 = vunpack.c.l.b16 %v12782
    %v12847 = vpack.c.b16 %v12816, %v12815
    %v12848 = vpack.c.b16 %v12818, %v12817
    %v12849 = vpack.c.b16 %v12820, %v12819
    %v12850 = vpack.c.b16 %v12822, %v12821
    %v12851 = vpack.c.b16 %v12824, %v12823
    %v12852 = vpack.c.b16 %v12826, %v12825
    %v12853 = vpack.c.b16 %v12828, %v12827
    %v12854 = vpack.c.b16 %v12830, %v12829
    %v12855 = vpack.c.b16 %v12832, %v12831
    %v12856 = vpack.c.b16 %v12834, %v12833
    %v12857 = vpack.c.b16 %v12836, %v12835
    %v12858 = vpack.c.b16 %v12838, %v12837
    %v12859 = vpack.c.b16 %v12840, %v12839
    %v12860 = vpack.c.b16 %v12842, %v12841
    %v12861 = vpack.c.b16 %v12844, %v12843
    %v12862 = vpack.c.b16 %v12846, %v12845
    %12879 = vmatprep.subr.bf16.mxu0 0
    %12880 = vmatpush1.bf16.msra.mxu0 %v12847
    %12881 = vmatprep.subr.bf16.mxu0 0
    %12882 = vmatpush1.bf16.msra.mxu0 %v12848
    %12883 = vmatprep.subr.bf16.mxu0 0
    %12884 = vmatpush1.bf16.msra.mxu0 %v12849
    %12885 = vmatprep.subr.bf16.mxu0 0
    %12886 = vmatpush1.bf16.msra.mxu0 %v12850
    %12887 = vmatprep.subr.bf16.mxu0 0
    %12888 = vmatpush1.bf16.msra.mxu0 %v12851
    %12889 = vmatprep.subr.bf16.mxu0 0
    %12890 = vmatpush1.bf16.msra.mxu0 %v12852
    %12891 = vmatprep.subr.bf16.mxu0 0
    %12892 = vmatpush1.bf16.msra.mxu0 %v12853
    %12893 = vmatprep.subr.bf16.mxu0 0
    %12894 = vmatpush1.bf16.msra.mxu0 %v12854
    %12895 = vmatprep.subr.bf16.mxu0 0
    %12896 = vmatpush1.bf16.msra.mxu0 %v12855
    %12897 = vmatprep.subr.bf16.mxu0 0
    %12898 = vmatpush1.bf16.msra.mxu0 %v12856
    %12899 = vmatprep.subr.bf16.mxu0 0
    %12900 = vmatpush1.bf16.msra.mxu0 %v12857
    %12901 = vmatprep.subr.bf16.mxu0 0
    %12902 = vmatpush1.bf16.msra.mxu0 %v12858
    %12903 = vmatprep.subr.bf16.mxu0 0
    %12904 = vmatpush1.bf16.msra.mxu0 %v12859
    %12905 = vmatprep.subr.bf16.mxu0 0
    %12906 = vmatpush1.bf16.msra.mxu0 %v12860
    %12907 = vmatprep.subr.bf16.mxu0 0
    %12908 = vmatpush1.bf16.msra.mxu0 %v12861
    %12909 = vmatprep.subr.bf16.mxu0 0
    %12910 = vmatpush1.bf16.msra.mxu0 %v12862
    %12911 = vmatprep.mubr.bf16.mxu0 %v12749
    %12912 = vmatmul.mubr.bf16.gmra.mrb[0].mxu0 %v12748
    %v12913 = vpop.f32.mrb[0].mxu0
    %v12914 = vadd.f32 0.0, %v12913
    %v12915 = vpop.f32.mrb[0].mxu0
    %v12916 = vpop.f32.mrb[0].mxu0
    %v12917 = vpop.f32.mrb[0].mxu0
    %12918 = vdwg.mxu0
    %v12919 = vadd.f32 %v12697, %v12914
    %s12920 = scalar_lea.vmem %s18, 3
    %v12921 = vld [vmem:[%s12920] sm:$0x1]
    %v12923 = vsel %vm12263, %v12921, 0
    %12925 = vmatprep.subr.bf16.mxu0 %v12272
    %12926 = vmatpush1.bf16.msra.mxu0 %v12269
    %12927 = vmatprep.subr.bf16.mxu0 0
    %12928 = vmatpush1.bf16.msra.mxu0 0
    %12929 = vmatprep.subr.bf16.mxu0 0
    %12930 = vmatpush1.bf16.msra.mxu0 0
    %12931 = vmatprep.subr.bf16.mxu0 0
    %12932 = vmatpush1.bf16.msra.mxu0 0
    %12933 = vmatprep.subr.bf16.mxu0 0
    %12934 = vmatpush1.bf16.msra.mxu0 0
    %12935 = vmatprep.subr.bf16.mxu0 0
    %12936 = vmatpush1.bf16.msra.mxu0 0
    %12937 = vmatprep.subr.bf16.mxu0 0
    %12938 = vmatpush1.bf16.msra.mxu0 0
    %12939 = vmatprep.subr.bf16.mxu0 0
    %12940 = vmatpush1.bf16.msra.mxu0 0
    %12941 = vmatprep.subr.bf16.mxu0 0
    %12942 = vmatpush1.bf16.msra.mxu0 0
    %12943 = vmatprep.subr.bf16.mxu0 0
    %12944 = vmatpush1.bf16.msra.mxu0 0
    %12945 = vmatprep.subr.bf16.mxu0 0
    %12946 = vmatpush1.bf16.msra.mxu0 0
    %12947 = vmatprep.subr.bf16.mxu0 0
    %12948 = vmatpush1.bf16.msra.mxu0 0
    %12949 = vmatprep.subr.bf16.mxu0 0
    %12950 = vmatpush1.bf16.msra.mxu0 0
    %12951 = vmatprep.subr.bf16.mxu0 0
    %12952 = vmatpush1.bf16.msra.mxu0 0
    %12953 = vmatprep.subr.bf16.mxu0 0
    %12954 = vmatpush1.bf16.msra.mxu0 0
    %12955 = vmatprep.subr.bf16.mxu0 0
    %12956 = vmatpush1.bf16.msra.mxu0 0
    %12957 = vmatprep.mubr.bf16.mxu0 0
    %12958 = vmatmul.mubr.bf16.gmra.mrb[0].mxu0 %v12923
    %v12959 = vpop.f32.mrb[0].mxu0
    %v12960 = vadd.f32 0.0, %v12959
    %v12961 = vpop.f32.mrb[0].mxu0
    %v12962 = vadd.f32 0.0, %v12961
    %v12963 = vpop.f32.mrb[0].mxu0
    %v12964 = vpop.f32.mrb[0].mxu0
    %12965 = vdwg.mxu0
    %v12966 = vpack.c.bf16 %v12960, %v12960
    %v12967 = vpack.c.bf16 %v12962, %v12962
    %s12968 = scalar_lea.vmem %s19, 384
    %v12969 = vld [vmem:[%s12968] sm:$0xf]
    %v12970 = vld [vmem:[%s12968 + $0x4] sm:$0xf]
    %v12971 = vld [vmem:[%s12968 + $0x8] sm:$0xf]
    %v12972 = vld [vmem:[%s12968 + $0xc] sm:$0xf]
    %v12973 = vld [vmem:[%s12968 + $0x10] sm:$0xf]
    %v12974 = vld [vmem:[%s12968 + $0x14] sm:$0xf]
    %v12975 = vld [vmem:[%s12968 + $0x18] sm:$0xf]
    %v12976 = vld [vmem:[%s12968 + $0x1c] sm:$0xf]
    %v12977 = vld [vmem:[%s12968 + $0x20] sm:$0xf]
    %v12978 = vld [vmem:[%s12968 + $0x24] sm:$0xf]
    %v12979 = vld [vmem:[%s12968 + $0x28] sm:$0xf]
    %v12980 = vld [vmem:[%s12968 + $0x2c] sm:$0xf]
    %v12981 = vld [vmem:[%s12968 + $0x30] sm:$0xf]
    %v12982 = vld [vmem:[%s12968 + $0x34] sm:$0xf]
    %v12983 = vld [vmem:[%s12968 + $0x38] sm:$0xf]
    %v12984 = vld [vmem:[%s12968 + $0x3c] sm:$0xf]
    %v12985 = vld [vmem:[%s12968 + $0x40] sm:$0xf]
    %v12986 = vld [vmem:[%s12968 + $0x44] sm:$0xf]
    %v12987 = vld [vmem:[%s12968 + $0x48] sm:$0xf]
    %v12988 = vld [vmem:[%s12968 + $0x4c] sm:$0xf]
    %v12989 = vld [vmem:[%s12968 + $0x50] sm:$0xf]
    %v12990 = vld [vmem:[%s12968 + $0x54] sm:$0xf]
    %v12991 = vld [vmem:[%s12968 + $0x58] sm:$0xf]
    %v12992 = vld [vmem:[%s12968 + $0x5c] sm:$0xf]
    %v12993 = vld [vmem:[%s12968 + $0x60] sm:$0xf]
    %v12994 = vld [vmem:[%s12968 + $0x64] sm:$0xf]
    %v12995 = vld [vmem:[%s12968 + $0x68] sm:$0xf]
    %v12996 = vld [vmem:[%s12968 + $0x6c] sm:$0xf]
    %v12997 = vld [vmem:[%s12968 + $0x70] sm:$0xf]
    %v12998 = vld [vmem:[%s12968 + $0x74] sm:$0xf]
    %v12999 = vld [vmem:[%s12968 + $0x78] sm:$0xf]
    %v13000 = vld [vmem:[%s12968 + $0x7c] sm:$0xf]
    %v13033 = vunpack.c.l.b16 %v12969
    %v13034 = vunpack.c.l.b16 %v12970
    %v13035 = vunpack.c.l.b16 %v12971
    %v13036 = vunpack.c.l.b16 %v12972
    %v13037 = vunpack.c.l.b16 %v12973
    %v13038 = vunpack.c.l.b16 %v12974
    %v13039 = vunpack.c.l.b16 %v12975
    %v13040 = vunpack.c.l.b16 %v12976
    %v13041 = vunpack.c.l.b16 %v12977
    %v13042 = vunpack.c.l.b16 %v12978
    %v13043 = vunpack.c.l.b16 %v12979
    %v13044 = vunpack.c.l.b16 %v12980
    %v13045 = vunpack.c.l.b16 %v12981
    %v13046 = vunpack.c.l.b16 %v12982
    %v13047 = vunpack.c.l.b16 %v12983
    %v13048 = vunpack.c.l.b16 %v12984
    %v13049 = vunpack.c.l.b16 %v12985
    %v13050 = vunpack.c.l.b16 %v12986
    %v13051 = vunpack.c.l.b16 %v12987
    %v13052 = vunpack.c.l.b16 %v12988
    %v13053 = vunpack.c.l.b16 %v12989
    %v13054 = vunpack.c.l.b16 %v12990
    %v13055 = vunpack.c.l.b16 %v12991
    %v13056 = vunpack.c.l.b16 %v12992
    %v13057 = vunpack.c.l.b16 %v12993
    %v13058 = vunpack.c.l.b16 %v12994
    %v13059 = vunpack.c.l.b16 %v12995
    %v13060 = vunpack.c.l.b16 %v12996
    %v13061 = vunpack.c.l.b16 %v12997
    %v13062 = vunpack.c.l.b16 %v12998
    %v13063 = vunpack.c.l.b16 %v12999
    %v13064 = vunpack.c.l.b16 %v13000
    %v13065 = vpack.c.b16 %v13034, %v13033
    %v13066 = vpack.c.b16 %v13036, %v13035
    %v13067 = vpack.c.b16 %v13038, %v13037
    %v13068 = vpack.c.b16 %v13040, %v13039
    %v13069 = vpack.c.b16 %v13042, %v13041
    %v13070 = vpack.c.b16 %v13044, %v13043
    %v13071 = vpack.c.b16 %v13046, %v13045
    %v13072 = vpack.c.b16 %v13048, %v13047
    %v13073 = vpack.c.b16 %v13050, %v13049
    %v13074 = vpack.c.b16 %v13052, %v13051
    %v13075 = vpack.c.b16 %v13054, %v13053
    %v13076 = vpack.c.b16 %v13056, %v13055
    %v13077 = vpack.c.b16 %v13058, %v13057
    %v13078 = vpack.c.b16 %v13060, %v13059
    %v13079 = vpack.c.b16 %v13062, %v13061
    %v13080 = vpack.c.b16 %v13064, %v13063
    %13097 = vmatprep.subr.bf16.mxu0 0
    %13098 = vmatpush1.bf16.msra.mxu0 %v13065
    %13099 = vmatprep.subr.bf16.mxu0 0
    %13100 = vmatpush1.bf16.msra.mxu0 %v13066
    %13101 = vmatprep.subr.bf16.mxu0 0
    %13102 = vmatpush1.bf16.msra.mxu0 %v13067
    %13103 = vmatprep.subr.bf16.mxu0 0
    %13104 = vmatpush1.bf16.msra.mxu0 %v13068
    %13105 = vmatprep.subr.bf16.mxu0 0
    %13106 = vmatpush1.bf16.msra.mxu0 %v13069
    %13107 = vmatprep.subr.bf16.mxu0 0
    %13108 = vmatpush1.bf16.msra.mxu0 %v13070
    %13109 = vmatprep.subr.bf16.mxu0 0
    %13110 = vmatpush1.bf16.msra.mxu0 %v13071
    %13111 = vmatprep.subr.bf16.mxu0 0
    %13112 = vmatpush1.bf16.msra.mxu0 %v13072
    %13113 = vmatprep.subr.bf16.mxu0 0
    %13114 = vmatpush1.bf16.msra.mxu0 %v13073
    %13115 = vmatprep.subr.bf16.mxu0 0
    %13116 = vmatpush1.bf16.msra.mxu0 %v13074
    %13117 = vmatprep.subr.bf16.mxu0 0
    %13118 = vmatpush1.bf16.msra.mxu0 %v13075
    %13119 = vmatprep.subr.bf16.mxu0 0
    %13120 = vmatpush1.bf16.msra.mxu0 %v13076
    %13121 = vmatprep.subr.bf16.mxu0 0
    %13122 = vmatpush1.bf16.msra.mxu0 %v13077
    %13123 = vmatprep.subr.bf16.mxu0 0
    %13124 = vmatpush1.bf16.msra.mxu0 %v13078
    %13125 = vmatprep.subr.bf16.mxu0 0
    %13126 = vmatpush1.bf16.msra.mxu0 %v13079
    %13127 = vmatprep.subr.bf16.mxu0 0
    %13128 = vmatpush1.bf16.msra.mxu0 %v13080
    %13129 = vmatprep.mubr.bf16.mxu0 %v12967
    %13130 = vmatmul.mubr.bf16.gmra.mrb[0].mxu0 %v12966
    %v13131 = vpop.f32.mrb[0].mxu0
    %v13132 = vadd.f32 0.0, %v13131
    %v13133 = vpop.f32.mrb[0].mxu0
    %v13134 = vpop.f32.mrb[0].mxu0
    %v13135 = vpop.f32.mrb[0].mxu0
    %13136 = vdwg.mxu0
    %v13137 = vadd.f32 %v12919, %v13132
    %v13138 = vld [vmem:[#allocation2] sm:$0x1]
    %v13140 = vlaneseq
    %v13141 = vshrl.u32 %v13140, 7
    %v13142 = vsub.s32 0, %v13141
    %v13143 = vrot.slane %v13138, %v13142
    %v13145 = vadd.f32 %v13137, %v13143
    %v13146 = vsub.f32 0.0, %v13145
    %v13147 = vmul.f32 %v13146, 1.442695
    %v13148 = vpow.pop %v13147
    %v13149 = vadd.f32 %v13148, 1.0
    %v13150 = vrcp.pop %v13149
    %v13151 = vmul.f32 1.0, %v13150
    %vm13152 = vcmask 1024
    %13153 = vst.msk [vmem:[%s21] sm:$0x3] %vm13152, %v13151
    // Predicated region
    $region134: #{discriminator_forward.1} parent=1 // pred_check
      _
    $region135: #{discriminator_forward.1} parent=1 // pred_check_branch
      %13155 = sbr.rel (0) target = $region137
    $region136: #{discriminator_forward.1} parent=1 // pred_region
      _
    $region137: #{discriminator_forward.1} parent=1 // pred_fallthru
      _
    // Predicated region
    $region138: #{discriminator_forward.1} parent=1 // pred_check
      _
    $region139: #{discriminator_forward.1} parent=1 // pred_check_branch
      %13157 = sbr.rel (0) target = $region141
    $region140: #{discriminator_forward.1} parent=1 // pred_region
      _
    $region141: #{discriminator_forward.1} parent=1 // pred_fallthru
      _
    %13158 = vsyncpa [#allocation4], 1
    %13159 = vsyncpa [#allocation6], 1
    %13160 = vsyncpa [#allocation9], 1
    %13161 = vsyncpa [#allocation12], 1
    %13162 = vsyncpa [#allocation15], 1
    %13163 = vsyncpa [#allocation18], 1
    %13164 = vsyncpa [#allocation21], 1

</llo_original>
